<compile_context>
chip_gen: v7x
topology: tpu7x:2x2x1
jax: 0.10.0
libtpu: 0.0.40
codegen_flags: <defaults>
</compile_context>

<pallas_src>
import functools
import numpy as np
import jax
import jax.numpy as jnp
from jax import lax
from jax.experimental import pallas as pl
from jax.experimental.pallas import tpu as pltpu


def _elu(x):
    # ELU(alpha=1): x if x > 0 else exp(x) - 1
    return jnp.where(x > 0, x, jnp.exp(jnp.minimum(x, 0.0)) - 1.0)


def ext_resnet_block_kernel(x_ref, w1_ref, w2_ref, w3_ref,
                            g1_ref, b1_ref, g2_ref, b2_ref, g3_ref, b3_ref,
                            agg_ref, mask_ref, o_ref,
                            col_ref, pad_ref, res_ref,
                            *, offsets, qpad, rtot, dst0, cp, cout):
    mask = mask_ref[...]          # (1, Qpad) f32, zero on invalid / tail columns
    agg = agg_ref[...]            # (Cout, Cout) f32, group aggregation with 1/count folded in

    def fill_col(src):
        # src: (Cp, Rtot) bf16 value.  Stack the 27 statically lane-shifted windows
        # along the contraction (sublane) dim of the im2col scratch.
        for k, off in enumerate(offsets):               # static 27-way unrolled loop
            col_ref[pl.ds(k * cp, cp), :] = src[:, off:off + qpad]

    def conv(w_ref):
        # One lane-dense stacked-K bf16 matmul per conv; f32 accumulation in the MXU.
        return jnp.dot(w_ref[...], col_ref[...],
                       preferred_element_type=jnp.float32)       # (Cout, Qpad) f32

    def group_norm(a, g_ref, b_ref):
        # GroupNorm over the valid columns only; statistics in f32; two-pass variance.
        am = a * mask
        mean = jnp.dot(agg, jnp.sum(am, axis=1, keepdims=True),
                       preferred_element_type=jnp.float32)        # (Cout, 1) group mean
        d = a - mean
        dm = d * mask
        var = jnp.dot(agg, jnp.sum(dm * dm, axis=1, keepdims=True),
                      preferred_element_type=jnp.float32)         # (Cout, 1) group var
        inv = lax.rsqrt(var + 1e-5)
        return d * (inv * g_ref[...]) + b_ref[...]

    def store_pad(y):
        # (d,h,w) -> (d+1,h+1,w+1) is a constant flat-row (lane) shift; dst0 is 128-aligned.
        pad_ref[pl.ds(0, cout), pl.ds(dst0, qpad)] = (y * mask).astype(pad_ref.dtype)

    # Zero the never-overwritten regions of the pad slab (border strips + unused channel
    # rows); the interior [dst0, dst0+qpad) is rewritten before every conv that reads it.
    tail = rtot - dst0 - qpad
    pad_ref[:, pl.ds(0, dst0)] = jnp.zeros((cp, dst0), pad_ref.dtype)
    pad_ref[:, pl.ds(dst0 + qpad, tail)] = jnp.zeros((cp, tail), pad_ref.dtype)
    if cp > cout:
        pad_ref[pl.ds(cout, cp - cout), pl.ds(dst0, qpad)] = jnp.zeros(
            (cp - cout, qpad), pad_ref.dtype)

    # ---- conv1: conv -> GroupNorm -> ELU (this is also the residual) ----
    fill_col(x_ref[0])
    y1 = _elu(group_norm(conv(w1_ref), g1_ref, b1_ref))
    res_ref[...] = y1                     # park residual in VMEM scratch (kill live range)
    store_pad(y1)

    # ---- conv2: conv -> GroupNorm -> ELU ----
    fill_col(pad_ref[...])
    y2 = _elu(group_norm(conv(w2_ref), g2_ref, b2_ref))
    store_pad(y2)

    # ---- conv3: conv -> GroupNorm ('cg', no non-linearity), residual add, final ELU ----
    fill_col(pad_ref[...])
    y3 = group_norm(conv(w3_ref), g3_ref, b3_ref)
    o_ref[0] = (_elu(y3 + res_ref[...]) * mask).astype(o_ref.dtype)


def ext_resnet_block(x, params, num_groups=8):
    """x: (N, Cin, D, H, W) float32 (PyTorch NCDHW). Returns (N, Cout, D, H, W) float32."""
    w1, g1, b1, w2, g2, b2, w3, g3, b3 = params
    N, Cin, D, H, W = x.shape
    Cout = w1.shape[0]
    assert Cout % num_groups == 0
    gs = Cout // num_groups
    cp = max(Cin, Cout)                               # common channel count for all 3 convs
    Dp, Hp, Wp = D + 2, H + 2, W + 2

    qtot = D * Hp * Wp                                # conv-output columns actually computed
    qpad = -(-qtot // 128) * 128                      # lane-dense column count
    shift = Hp * Wp + Wp + 1                          # (d,h,w) -> (d+1,h+1,w+1) flat shift
    lead = (-shift) % 128                             # so the writeback lands 128-aligned
    dst0 = lead + shift
    off_max = 2 * shift
    rtot = -(-(lead + qpad + off_max) // 128) * 128   # slab columns (lane-aligned, read-safe)
    # tap k = kd*9 + kh*3 + kw reads slab columns lead + off_k + q
    offsets = tuple(lead + kd * Hp * Wp + kh * Wp + kw
                    for kd in range(3) for kh in range(3) for kw in range(3))

    # Channel-first padded input slab (channels padded to Cp), cast once to bf16.
    xp = jnp.pad(x, ((0, 0), (0, cp - Cin), (1, 1), (1, 1), (1, 1)))
    xf = xp.reshape(N, cp, Dp * Hp * Wp)
    xf = jnp.pad(xf, ((0, 0), (0, 0), (lead, rtot - lead - Dp * Hp * Wp)))
    xf = xf.astype(jnp.bfloat16)

    # Conv weights -> stacked-K bf16 matrices (Cout, 27*Cp), kd-major to match `offsets`.
    def flatten_w(w):
        co, ci = w.shape[0], w.shape[1]
        if ci < cp:
            w = jnp.pad(w, ((0, 0), (0, cp - ci), (0, 0), (0, 0), (0, 0)))
        return jnp.transpose(w, (0, 2, 3, 4, 1)).reshape(co, 27 * cp).astype(jnp.bfloat16)

    wf1, wf2, wf3 = flatten_w(w1), flatten_w(w2), flatten_w(w3)

    # Validity mask over output columns: lane-dense (1, Qpad), zero on halo/tail columns.
    q = np.arange(qpad)
    hh = (q % (Hp * Wp)) // Wp
    ww = q % Wp
    valid = (q < qtot) & (hh < H) & (ww < W)
    mask = jnp.asarray(valid.astype(np.float32).reshape(1, qpad))

    # GroupNorm aggregation matrix with 1/count folded in (no divides in the kernel).
    ci_idx = np.arange(Cout)
    same = (ci_idx[:, None] // gs) == (ci_idx[None, :] // gs)
    agg = jnp.asarray(same.astype(np.float32) / float(D * H * W * gs))

    g1r, b1r = g1.reshape(Cout, 1), b1.reshape(Cout, 1)
    g2r, b2r = g2.reshape(Cout, 1), b2.reshape(Cout, 1)
    g3r, b3r = g3.reshape(Cout, 1), b3.reshape(Cout, 1)

    kernel = functools.partial(
        ext_resnet_block_kernel, offsets=offsets, qpad=qpad, rtot=rtot,
        dst0=dst0, cp=cp, cout=Cout)

    # Per-sample VMEM footprint (double-buffered I/O blocks + scratch) with headroom;
    # keeps medium volumes from tripping the 16/32 MiB default scoped limit.
    vmem_est = (2 * cp * rtot * 2 + 2 * Cout * qpad * 4
                + 2 * 3 * Cout * 27 * cp * 2
                + 27 * cp * qpad * 2 + cp * rtot * 2 + Cout * qpad * 4
                + 6 * Cout * qpad * 4)
    vmem_limit = int(min(64 * 1024 * 1024, max(32 * 1024 * 1024, 2 * vmem_est)))

    gb_spec = pl.BlockSpec((Cout, 1), lambda n: (0, 0))
    out_flat = pl.pallas_call(
        kernel,
        out_shape=jax.ShapeDtypeStruct((N, Cout, qpad), jnp.float32),
        grid_spec=pltpu.PrefetchScalarGridSpec(
            num_scalar_prefetch=0,
            grid=(N,),
            in_specs=[
                pl.BlockSpec((1, cp, rtot), lambda n: (n, 0, 0)),
                pl.BlockSpec((Cout, 27 * cp), lambda n: (0, 0)),
                pl.BlockSpec((Cout, 27 * cp), lambda n: (0, 0)),
                pl.BlockSpec((Cout, 27 * cp), lambda n: (0, 0)),
                gb_spec, gb_spec, gb_spec, gb_spec, gb_spec, gb_spec,
                pl.BlockSpec((Cout, Cout), lambda n: (0, 0)),
                pl.BlockSpec((1, qpad), lambda n: (0, 0)),
            ],
            out_specs=pl.BlockSpec((1, Cout, qpad), lambda n: (n, 0, 0)),
            scratch_shapes=[
                pltpu.VMEM((27 * cp, qpad), jnp.bfloat16),   # im2col (stacked K)
                pltpu.VMEM((cp, rtot), jnp.bfloat16),        # zero-padded activation slab
                pltpu.VMEM((Cout, qpad), jnp.float32),       # residual y1
            ],
        ),
        compiler_params=pltpu.CompilerParams(
            dimension_semantics=("parallel",),
            vmem_limit_bytes=vmem_limit),
    )(xf, wf1, wf2, wf3, g1r, b1r, g2r, b2r, g3r, b3r, agg, mask)

    # (N, Cout, Qpad) -> NCDHW: slice valid columns, reshape, crop halo rows/cols.
    return out_flat[:, :, :qtot].reshape(N, Cout, D, Hp, Wp)[:, :, :, :H, :W]


# ----------------------------- pure-JAX reference -----------------------------
def _single_conv_ref(x, w, gamma, beta, num_groups, apply_elu):
    y = lax.conv_general_dilated(
        x, w, window_strides=(1, 1, 1),
        padding=((1, 1), (1, 1), (1, 1)),
        dimension_numbers=("NCDHW", "OIDHW", "NCDHW"),
        precision=lax.Precision.HIGHEST)
    N, C, D, H, W = y.shape
    yr = y.reshape(N, num_groups, -1)
    mean = yr.mean(axis=2, keepdims=True)
    var = yr.var(axis=2, keepdims=True)
    yn = ((yr - mean) / jnp.sqrt(var + 1e-5)).reshape(N, C, D, H, W)
    yn = yn * gamma.reshape(1, C, 1, 1, 1) + beta.reshape(1, C, 1, 1, 1)
    return _elu(yn) if apply_elu else yn


def ext_resnet_block_ref(x, params, num_groups=8):
    w1, g1, b1, w2, g2, b2, w3, g3, b3 = params
    out = _single_conv_ref(x, w1, g1, b1, num_groups, True)
    residual = out
    out = _single_conv_ref(out, w2, g2, b2, num_groups, True)
    out = _single_conv_ref(out, w3, g3, b3, num_groups, False)
    return _elu(out + residual)


if __name__ == "__main__":
    N, Cin, Cout, D, H, W = 2, 4, 16, 8, 8, 8   # out_channels divisible by num_groups=8
    key = jax.random.PRNGKey(0)
    ks = jax.random.split(key, 10)
    x = jax.random.normal(ks[0], (N, Cin, D, H, W), jnp.float32)
    w1 = 0.1 * jax.random.normal(ks[1], (Cout, Cin, 3, 3, 3), jnp.float32)
    w2 = 0.1 * jax.random.normal(ks[2], (Cout, Cout, 3, 3, 3), jnp.float32)
    w3 = 0.1 * jax.random.normal(ks[3], (Cout, Cout, 3, 3, 3), jnp.float32)
    g1 = 1.0 + 0.1 * jax.random.normal(ks[4], (Cout,), jnp.float32)
    b1 = 0.1 * jax.random.normal(ks[5], (Cout,), jnp.float32)
    g2 = 1.0 + 0.1 * jax.random.normal(ks[6], (Cout,), jnp.float32)
    b2 = 0.1 * jax.random.normal(ks[7], (Cout,), jnp.float32)
    g3 = 1.0 + 0.1 * jax.random.normal(ks[8], (Cout,), jnp.float32)
    b3 = 0.1 * jax.random.normal(ks[9], (Cout,), jnp.float32)
    params = (w1, g1, b1, w2, g2, b2, w3, g3, b3)

    out = jax.block_until_ready(ext_resnet_block(x, params))
    ref = jax.block_until_ready(ext_resnet_block_ref(x, params))
    np.testing.assert_allclose(np.asarray(out), np.asarray(ref), rtol=2e-2, atol=2e-2)
    print("KERNEL_OK")
</pallas_src>

<mosaic_0001>
module attributes {stable_mosaic.version = 11 : i64} {
  func.func @ext_resnet_block_kernel(%arg0: i32, %arg1: memref<1x16x1152xbf16, #tpu.memory_space<vmem>>, %arg2: memref<16x432xbf16, #tpu.memory_space<vmem>>, %arg3: memref<16x432xbf16, #tpu.memory_space<vmem>>, %arg4: memref<16x432xbf16, #tpu.memory_space<vmem>>, %arg5: memref<16x1xf32, #tpu.memory_space<vmem>>, %arg6: memref<16x1xf32, #tpu.memory_space<vmem>>, %arg7: memref<16x1xf32, #tpu.memory_space<vmem>>, %arg8: memref<16x1xf32, #tpu.memory_space<vmem>>, %arg9: memref<16x1xf32, #tpu.memory_space<vmem>>, %arg10: memref<16x1xf32, #tpu.memory_space<vmem>>, %arg11: memref<16x16xf32, #tpu.memory_space<vmem>>, %arg12: memref<1x896xf32, #tpu.memory_space<vmem>>, %arg13: memref<1x16x896xf32, #tpu.memory_space<vmem>>, %arg14: memref<432x896xbf16, #tpu.memory_space<vmem>>, %arg15: memref<16x1152xbf16, #tpu.memory_space<vmem>>, %arg16: memref<16x896xf32, #tpu.memory_space<vmem>>) attributes {dimension_semantics = [#tpu.dimension_semantics<parallel>], iteration_bounds = array<i64: 2>, scalar_prefetch = 0 : i64, scratch_operands = 3 : i64, tpu.core_type = #tpu.core_type<tc>, window_params = [{transform_indices = @transform_0, window_bounds = array<i64: 1, 16, 1152>}, {pipeline_mode = #tpu.pipeline_mode<synchronous>, transform_indices = @transform_1, window_bounds = array<i64: 16, 432>}, {pipeline_mode = #tpu.pipeline_mode<synchronous>, transform_indices = @transform_2, window_bounds = array<i64: 16, 432>}, {pipeline_mode = #tpu.pipeline_mode<synchronous>, transform_indices = @transform_3, window_bounds = array<i64: 16, 432>}, {pipeline_mode = #tpu.pipeline_mode<synchronous>, transform_indices = @transform_4, window_bounds = array<i64: 16, 1>}, {pipeline_mode = #tpu.pipeline_mode<synchronous>, transform_indices = @transform_5, window_bounds = array<i64: 16, 1>}, {pipeline_mode = #tpu.pipeline_mode<synchronous>, transform_indices = @transform_6, window_bounds = array<i64: 16, 1>}, {pipeline_mode = #tpu.pipeline_mode<synchronous>, transform_indices = @transform_7, window_bounds = array<i64: 16, 1>}, {pipeline_mode = #tpu.pipeline_mode<synchronous>, transform_indices = @transform_8, window_bounds = array<i64: 16, 1>}, {pipeline_mode = #tpu.pipeline_mode<synchronous>, transform_indices = @transform_9, window_bounds = array<i64: 16, 1>}, {pipeline_mode = #tpu.pipeline_mode<synchronous>, transform_indices = @transform_10, window_bounds = array<i64: 16, 16>}, {pipeline_mode = #tpu.pipeline_mode<synchronous>, transform_indices = @transform_11, window_bounds = array<i64: 1, 896>}, {transform_indices = @transform_12, window_bounds = array<i64: 1, 16, 896>}]} {
    %c0 = arith.constant 0 : index
    %c0_0 = arith.constant 0 : index
    %0 = vector.load %arg12[%c0, %c0_0] : memref<1x896xf32, #tpu.memory_space<vmem>>, vector<1x896xf32>
    %c0_1 = arith.constant 0 : index
    %c0_2 = arith.constant 0 : index
    %1 = vector.load %arg11[%c0_1, %c0_2] : memref<16x16xf32, #tpu.memory_space<vmem>>, vector<16x16xf32>
    %cst = arith.constant 0.000000e+00 : bf16
    %2 = vector.broadcast %cst : bf16 to vector<16x128xbf16>
    %c0_3 = arith.constant 0 : index
    %c0_4 = arith.constant 0 : index
    %3 = vector.load %arg15[%c0_3, %c0_4] : memref<16x1152xbf16, #tpu.memory_space<vmem>>, vector<16x128xbf16>
    tpu.vector_store %arg15[%c0_3, %c0_4], %2 {strides = array<i32>} : memref<16x1152xbf16, #tpu.memory_space<vmem>>, vector<16x128xbf16>,
    %cst_5 = arith.constant 0.000000e+00 : bf16
    %4 = vector.broadcast %cst_5 : bf16 to vector<16x128xbf16>
    %c0_6 = arith.constant 0 : index
    %c1024 = arith.constant 1024 : index
    %5 = vector.load %arg15[%c0_6, %c1024] : memref<16x1152xbf16, #tpu.memory_space<vmem>>, vector<16x128xbf16>
    tpu.vector_store %arg15[%c0_6, %c1024], %4 {strides = array<i32>} : memref<16x1152xbf16, #tpu.memory_space<vmem>>, vector<16x128xbf16>,
    %c0_7 = arith.constant 0 : index
    %c0_8 = arith.constant 0 : index
    %c0_9 = arith.constant 0 : index
    %6 = vector.load %arg1[%c0_7, %c0_8, %c0_9] : memref<1x16x1152xbf16, #tpu.memory_space<vmem>>, vector<1x16x1152xbf16>
    %7 = vector.shape_cast %6 : vector<1x16x1152xbf16> to vector<16x1152xbf16>
    %8 = vector.extract_strided_slice %7 {offsets = [0, 17], sizes = [16, 896], strides = [1, 1]} : vector<16x1152xbf16> to vector<16x896xbf16>
    %c0_10 = arith.constant 0 : index
    %c0_11 = arith.constant 0 : index
    %9 = vector.load %arg14[%c0_10, %c0_11] : memref<432x896xbf16, #tpu.memory_space<vmem>>, vector<16x896xbf16>
    tpu.vector_store %arg14[%c0_10, %c0_11], %8 {strides = array<i32>} : memref<432x896xbf16, #tpu.memory_space<vmem>>, vector<16x896xbf16>,
    %10 = vector.extract_strided_slice %7 {offsets = [0, 18], sizes = [16, 896], strides = [1, 1]} : vector<16x1152xbf16> to vector<16x896xbf16>
    %c16 = arith.constant 16 : index
    %c0_12 = arith.constant 0 : index
    %11 = vector.load %arg14[%c16, %c0_12] : memref<432x896xbf16, #tpu.memory_space<vmem>>, vector<16x896xbf16>
    tpu.vector_store %arg14[%c16, %c0_12], %10 {strides = array<i32>} : memref<432x896xbf16, #tpu.memory_space<vmem>>, vector<16x896xbf16>,
    %12 = vector.extract_strided_slice %7 {offsets = [0, 19], sizes = [16, 896], strides = [1, 1]} : vector<16x1152xbf16> to vector<16x896xbf16>
    %c32 = arith.constant 32 : index
    %c0_13 = arith.constant 0 : index
    %13 = vector.load %arg14[%c32, %c0_13] : memref<432x896xbf16, #tpu.memory_space<vmem>>, vector<16x896xbf16>
    tpu.vector_store %arg14[%c32, %c0_13], %12 {strides = array<i32>} : memref<432x896xbf16, #tpu.memory_space<vmem>>, vector<16x896xbf16>,
    %14 = vector.extract_strided_slice %7 {offsets = [0, 27], sizes = [16, 896], strides = [1, 1]} : vector<16x1152xbf16> to vector<16x896xbf16>
    %c48 = arith.constant 48 : index
    %c0_14 = arith.constant 0 : index
    %15 = vector.load %arg14[%c48, %c0_14] : memref<432x896xbf16, #tpu.memory_space<vmem>>, vector<16x896xbf16>
    tpu.vector_store %arg14[%c48, %c0_14], %14 {strides = array<i32>} : memref<432x896xbf16, #tpu.memory_space<vmem>>, vector<16x896xbf16>,
    %16 = vector.extract_strided_slice %7 {offsets = [0, 28], sizes = [16, 896], strides = [1, 1]} : vector<16x1152xbf16> to vector<16x896xbf16>
    %c64 = arith.constant 64 : index
    %c0_15 = arith.constant 0 : index
    %17 = vector.load %arg14[%c64, %c0_15] : memref<432x896xbf16, #tpu.memory_space<vmem>>, vector<16x896xbf16>
    tpu.vector_store %arg14[%c64, %c0_15], %16 {strides = array<i32>} : memref<432x896xbf16, #tpu.memory_space<vmem>>, vector<16x896xbf16>,
    %18 = vector.extract_strided_slice %7 {offsets = [0, 29], sizes = [16, 896], strides = [1, 1]} : vector<16x1152xbf16> to vector<16x896xbf16>
    %c80 = arith.constant 80 : index
    %c0_16 = arith.constant 0 : index
    %19 = vector.load %arg14[%c80, %c0_16] : memref<432x896xbf16, #tpu.memory_space<vmem>>, vector<16x896xbf16>
    tpu.vector_store %arg14[%c80, %c0_16], %18 {strides = array<i32>} : memref<432x896xbf16, #tpu.memory_space<vmem>>, vector<16x896xbf16>,
    %20 = vector.extract_strided_slice %7 {offsets = [0, 37], sizes = [16, 896], strides = [1, 1]} : vector<16x1152xbf16> to vector<16x896xbf16>
    %c96 = arith.constant 96 : index
    %c0_17 = arith.constant 0 : index
    %21 = vector.load %arg14[%c96, %c0_17] : memref<432x896xbf16, #tpu.memory_space<vmem>>, vector<16x896xbf16>
    tpu.vector_store %arg14[%c96, %c0_17], %20 {strides = array<i32>} : memref<432x896xbf16, #tpu.memory_space<vmem>>, vector<16x896xbf16>,
    %22 = vector.extract_strided_slice %7 {offsets = [0, 38], sizes = [16, 896], strides = [1, 1]} : vector<16x1152xbf16> to vector<16x896xbf16>
    %c112 = arith.constant 112 : index
    %c0_18 = arith.constant 0 : index
    %23 = vector.load %arg14[%c112, %c0_18] : memref<432x896xbf16, #tpu.memory_space<vmem>>, vector<16x896xbf16>
    tpu.vector_store %arg14[%c112, %c0_18], %22 {strides = array<i32>} : memref<432x896xbf16, #tpu.memory_space<vmem>>, vector<16x896xbf16>,
    %24 = vector.extract_strided_slice %7 {offsets = [0, 39], sizes = [16, 896], strides = [1, 1]} : vector<16x1152xbf16> to vector<16x896xbf16>
    %c128 = arith.constant 128 : index
    %c0_19 = arith.constant 0 : index
    %25 = vector.load %arg14[%c128, %c0_19] : memref<432x896xbf16, #tpu.memory_space<vmem>>, vector<16x896xbf16>
    tpu.vector_store %arg14[%c128, %c0_19], %24 {strides = array<i32>} : memref<432x896xbf16, #tpu.memory_space<vmem>>, vector<16x896xbf16>,
    %26 = vector.extract_strided_slice %7 {offsets = [0, 117], sizes = [16, 896], strides = [1, 1]} : vector<16x1152xbf16> to vector<16x896xbf16>
    %c144 = arith.constant 144 : index
    %c0_20 = arith.constant 0 : index
    %27 = vector.load %arg14[%c144, %c0_20] : memref<432x896xbf16, #tpu.memory_space<vmem>>, vector<16x896xbf16>
    tpu.vector_store %arg14[%c144, %c0_20], %26 {strides = array<i32>} : memref<432x896xbf16, #tpu.memory_space<vmem>>, vector<16x896xbf16>,
    %28 = vector.extract_strided_slice %7 {offsets = [0, 118], sizes = [16, 896], strides = [1, 1]} : vector<16x1152xbf16> to vector<16x896xbf16>
    %c160 = arith.constant 160 : index
    %c0_21 = arith.constant 0 : index
    %29 = vector.load %arg14[%c160, %c0_21] : memref<432x896xbf16, #tpu.memory_space<vmem>>, vector<16x896xbf16>
    tpu.vector_store %arg14[%c160, %c0_21], %28 {strides = array<i32>} : memref<432x896xbf16, #tpu.memory_space<vmem>>, vector<16x896xbf16>,
    %30 = vector.extract_strided_slice %7 {offsets = [0, 119], sizes = [16, 896], strides = [1, 1]} : vector<16x1152xbf16> to vector<16x896xbf16>
    %c176 = arith.constant 176 : index
    %c0_22 = arith.constant 0 : index
    %31 = vector.load %arg14[%c176, %c0_22] : memref<432x896xbf16, #tpu.memory_space<vmem>>, vector<16x896xbf16>
    tpu.vector_store %arg14[%c176, %c0_22], %30 {strides = array<i32>} : memref<432x896xbf16, #tpu.memory_space<vmem>>, vector<16x896xbf16>,
    %32 = vector.extract_strided_slice %7 {offsets = [0, 127], sizes = [16, 896], strides = [1, 1]} : vector<16x1152xbf16> to vector<16x896xbf16>
    %c192 = arith.constant 192 : index
    %c0_23 = arith.constant 0 : index
    %33 = vector.load %arg14[%c192, %c0_23] : memref<432x896xbf16, #tpu.memory_space<vmem>>, vector<16x896xbf16>
    tpu.vector_store %arg14[%c192, %c0_23], %32 {strides = array<i32>} : memref<432x896xbf16, #tpu.memory_space<vmem>>, vector<16x896xbf16>,
    %34 = vector.extract_strided_slice %7 {offsets = [0, 128], sizes = [16, 896], strides = [1, 1]} : vector<16x1152xbf16> to vector<16x896xbf16>
    %c208 = arith.constant 208 : index
    %c0_24 = arith.constant 0 : index
    %35 = vector.load %arg14[%c208, %c0_24] : memref<432x896xbf16, #tpu.memory_space<vmem>>, vector<16x896xbf16>
    tpu.vector_store %arg14[%c208, %c0_24], %34 {strides = array<i32>} : memref<432x896xbf16, #tpu.memory_space<vmem>>, vector<16x896xbf16>,
    %36 = vector.extract_strided_slice %7 {offsets = [0, 129], sizes = [16, 896], strides = [1, 1]} : vector<16x1152xbf16> to vector<16x896xbf16>
    %c224 = arith.constant 224 : index
    %c0_25 = arith.constant 0 : index
    %37 = vector.load %arg14[%c224, %c0_25] : memref<432x896xbf16, #tpu.memory_space<vmem>>, vector<16x896xbf16>
    tpu.vector_store %arg14[%c224, %c0_25], %36 {strides = array<i32>} : memref<432x896xbf16, #tpu.memory_space<vmem>>, vector<16x896xbf16>,
    %38 = vector.extract_strided_slice %7 {offsets = [0, 137], sizes = [16, 896], strides = [1, 1]} : vector<16x1152xbf16> to vector<16x896xbf16>
    %c240 = arith.constant 240 : index
    %c0_26 = arith.constant 0 : index
    %39 = vector.load %arg14[%c240, %c0_26] : memref<432x896xbf16, #tpu.memory_space<vmem>>, vector<16x896xbf16>
    tpu.vector_store %arg14[%c240, %c0_26], %38 {strides = array<i32>} : memref<432x896xbf16, #tpu.memory_space<vmem>>, vector<16x896xbf16>,
    %40 = vector.extract_strided_slice %7 {offsets = [0, 138], sizes = [16, 896], strides = [1, 1]} : vector<16x1152xbf16> to vector<16x896xbf16>
    %c256 = arith.constant 256 : index
    %c0_27 = arith.constant 0 : index
    %41 = vector.load %arg14[%c256, %c0_27] : memref<432x896xbf16, #tpu.memory_space<vmem>>, vector<16x896xbf16>
    tpu.vector_store %arg14[%c256, %c0_27], %40 {strides = array<i32>} : memref<432x896xbf16, #tpu.memory_space<vmem>>, vector<16x896xbf16>,
    %42 = vector.extract_strided_slice %7 {offsets = [0, 139], sizes = [16, 896], strides = [1, 1]} : vector<16x1152xbf16> to vector<16x896xbf16>
    %c272 = arith.constant 272 : index
    %c0_28 = arith.constant 0 : index
    %43 = vector.load %arg14[%c272, %c0_28] : memref<432x896xbf16, #tpu.memory_space<vmem>>, vector<16x896xbf16>
    tpu.vector_store %arg14[%c272, %c0_28], %42 {strides = array<i32>} : memref<432x896xbf16, #tpu.memory_space<vmem>>, vector<16x896xbf16>,
    %44 = vector.extract_strided_slice %7 {offsets = [0, 217], sizes = [16, 896], strides = [1, 1]} : vector<16x1152xbf16> to vector<16x896xbf16>
    %c288 = arith.constant 288 : index
    %c0_29 = arith.constant 0 : index
    %45 = vector.load %arg14[%c288, %c0_29] : memref<432x896xbf16, #tpu.memory_space<vmem>>, vector<16x896xbf16>
    tpu.vector_store %arg14[%c288, %c0_29], %44 {strides = array<i32>} : memref<432x896xbf16, #tpu.memory_space<vmem>>, vector<16x896xbf16>,
    %46 = vector.extract_strided_slice %7 {offsets = [0, 218], sizes = [16, 896], strides = [1, 1]} : vector<16x1152xbf16> to vector<16x896xbf16>
    %c304 = arith.constant 304 : index
    %c0_30 = arith.constant 0 : index
    %47 = vector.load %arg14[%c304, %c0_30] : memref<432x896xbf16, #tpu.memory_space<vmem>>, vector<16x896xbf16>
    tpu.vector_store %arg14[%c304, %c0_30], %46 {strides = array<i32>} : memref<432x896xbf16, #tpu.memory_space<vmem>>, vector<16x896xbf16>,
    %48 = vector.extract_strided_slice %7 {offsets = [0, 219], sizes = [16, 896], strides = [1, 1]} : vector<16x1152xbf16> to vector<16x896xbf16>
    %c320 = arith.constant 320 : index
    %c0_31 = arith.constant 0 : index
    %49 = vector.load %arg14[%c320, %c0_31] : memref<432x896xbf16, #tpu.memory_space<vmem>>, vector<16x896xbf16>
    tpu.vector_store %arg14[%c320, %c0_31], %48 {strides = array<i32>} : memref<432x896xbf16, #tpu.memory_space<vmem>>, vector<16x896xbf16>,
    %50 = vector.extract_strided_slice %7 {offsets = [0, 227], sizes = [16, 896], strides = [1, 1]} : vector<16x1152xbf16> to vector<16x896xbf16>
    %c336 = arith.constant 336 : index
    %c0_32 = arith.constant 0 : index
    %51 = vector.load %arg14[%c336, %c0_32] : memref<432x896xbf16, #tpu.memory_space<vmem>>, vector<16x896xbf16>
    tpu.vector_store %arg14[%c336, %c0_32], %50 {strides = array<i32>} : memref<432x896xbf16, #tpu.memory_space<vmem>>, vector<16x896xbf16>,
    %52 = vector.extract_strided_slice %7 {offsets = [0, 228], sizes = [16, 896], strides = [1, 1]} : vector<16x1152xbf16> to vector<16x896xbf16>
    %c352 = arith.constant 352 : index
    %c0_33 = arith.constant 0 : index
    %53 = vector.load %arg14[%c352, %c0_33] : memref<432x896xbf16, #tpu.memory_space<vmem>>, vector<16x896xbf16>
    tpu.vector_store %arg14[%c352, %c0_33], %52 {strides = array<i32>} : memref<432x896xbf16, #tpu.memory_space<vmem>>, vector<16x896xbf16>,
    %54 = vector.extract_strided_slice %7 {offsets = [0, 229], sizes = [16, 896], strides = [1, 1]} : vector<16x1152xbf16> to vector<16x896xbf16>
    %c368 = arith.constant 368 : index
    %c0_34 = arith.constant 0 : index
    %55 = vector.load %arg14[%c368, %c0_34] : memref<432x896xbf16, #tpu.memory_space<vmem>>, vector<16x896xbf16>
    tpu.vector_store %arg14[%c368, %c0_34], %54 {strides = array<i32>} : memref<432x896xbf16, #tpu.memory_space<vmem>>, vector<16x896xbf16>,
    %56 = vector.extract_strided_slice %7 {offsets = [0, 237], sizes = [16, 896], strides = [1, 1]} : vector<16x1152xbf16> to vector<16x896xbf16>
    %c384 = arith.constant 384 : index
    %c0_35 = arith.constant 0 : index
    %57 = vector.load %arg14[%c384, %c0_35] : memref<432x896xbf16, #tpu.memory_space<vmem>>, vector<16x896xbf16>
    tpu.vector_store %arg14[%c384, %c0_35], %56 {strides = array<i32>} : memref<432x896xbf16, #tpu.memory_space<vmem>>, vector<16x896xbf16>,
    %58 = vector.extract_strided_slice %7 {offsets = [0, 238], sizes = [16, 896], strides = [1, 1]} : vector<16x1152xbf16> to vector<16x896xbf16>
    %c400 = arith.constant 400 : index
    %c0_36 = arith.constant 0 : index
    %59 = vector.load %arg14[%c400, %c0_36] : memref<432x896xbf16, #tpu.memory_space<vmem>>, vector<16x896xbf16>
    tpu.vector_store %arg14[%c400, %c0_36], %58 {strides = array<i32>} : memref<432x896xbf16, #tpu.memory_space<vmem>>, vector<16x896xbf16>,
    %60 = vector.extract_strided_slice %7 {offsets = [0, 239], sizes = [16, 896], strides = [1, 1]} : vector<16x1152xbf16> to vector<16x896xbf16>
    %c416 = arith.constant 416 : index
    %c0_37 = arith.constant 0 : index
    %61 = vector.load %arg14[%c416, %c0_37] : memref<432x896xbf16, #tpu.memory_space<vmem>>, vector<16x896xbf16>
    tpu.vector_store %arg14[%c416, %c0_37], %60 {strides = array<i32>} : memref<432x896xbf16, #tpu.memory_space<vmem>>, vector<16x896xbf16>,
    %c0_38 = arith.constant 0 : index
    %c0_39 = arith.constant 0 : index
    %62 = vector.load %arg2[%c0_38, %c0_39] : memref<16x432xbf16, #tpu.memory_space<vmem>>, vector<16x432xbf16>
    %c0_40 = arith.constant 0 : index
    %c0_41 = arith.constant 0 : index
    %63 = vector.load %arg14[%c0_40, %c0_41] : memref<432x896xbf16, #tpu.memory_space<vmem>>, vector<432x896xbf16>
    %cst_42 = arith.constant dense<0.000000e+00> : vector<16x896xf32>
    %64 = tpu.matmul %62, %63, %cst_42 {dimension_numbers = #tpu.dot_dimension_numbers<[1], [0], [0], [1], [0, 0, 1, 1], [], []>} : vector<16x432xbf16>, vector<432x896xbf16>, vector<16x896xf32> -> vector<16x896xf32>
    %65 = vector.broadcast %0 : vector<1x896xf32> to vector<16x896xf32>
    %66 = arith.mulf %64, %65 : vector<16x896xf32>
    %cst_43 = arith.constant dense<0.000000e+00> : vector<16xf32>
    %67 = vector.multi_reduction <add>, %66, %cst_43 [1] : vector<16x896xf32> to vector<16xf32>
    %68 = vector.shape_cast %67 : vector<16xf32> to vector<16x1xf32>
    %cst_44 = arith.constant dense<0.000000e+00> : vector<16x1xf32>
    %69 = tpu.matmul %1, %68, %cst_44 {dimension_numbers = #tpu.dot_dimension_numbers<[1], [0], [0], [1], [0, 0, 1, 1], [], []>} : vector<16x16xf32>, vector<16x1xf32>, vector<16x1xf32> -> vector<16x1xf32>
    %70 = vector.broadcast %69 : vector<16x1xf32> to vector<16x896xf32>
    %71 = arith.subf %64, %70 : vector<16x896xf32>
    %72 = vector.broadcast %0 : vector<1x896xf32> to vector<16x896xf32>
    %73 = arith.mulf %71, %72 : vector<16x896xf32>
    %74 = arith.mulf %73, %73 : vector<16x896xf32>
    %cst_45 = arith.constant dense<0.000000e+00> : vector<16xf32>
    %75 = vector.multi_reduction <add>, %74, %cst_45 [1] : vector<16x896xf32> to vector<16xf32>
    %76 = vector.shape_cast %75 : vector<16xf32> to vector<16x1xf32>
    %cst_46 = arith.constant dense<0.000000e+00> : vector<16x1xf32>
    %77 = tpu.matmul %1, %76, %cst_46 {dimension_numbers = #tpu.dot_dimension_numbers<[1], [0], [0], [1], [0, 0, 1, 1], [], []>} : vector<16x16xf32>, vector<16x1xf32>, vector<16x1xf32> -> vector<16x1xf32>
    %cst_47 = arith.constant 9.99999974E-6 : f32
    %78 = vector.broadcast %cst_47 : f32 to vector<16x1xf32>
    %79 = arith.addf %77, %78 : vector<16x1xf32>
    %80 = math.rsqrt %79 : vector<16x1xf32>
    %c0_48 = arith.constant 0 : index
    %c0_49 = arith.constant 0 : index
    %81 = vector.load %arg5[%c0_48, %c0_49] : memref<16x1xf32, #tpu.memory_space<vmem>>, vector<16x1xf32>
    %82 = arith.mulf %80, %81 : vector<16x1xf32>
    %83 = vector.broadcast %82 : vector<16x1xf32> to vector<16x896xf32>
    %84 = arith.mulf %71, %83 : vector<16x896xf32>
    %c0_50 = arith.constant 0 : index
    %c0_51 = arith.constant 0 : index
    %85 = vector.load %arg6[%c0_50, %c0_51] : memref<16x1xf32, #tpu.memory_space<vmem>>, vector<16x1xf32>
    %86 = vector.broadcast %85 : vector<16x1xf32> to vector<16x896xf32>
    %87 = arith.addf %84, %86 : vector<16x896xf32>
    %cst_52 = arith.constant 0.000000e+00 : f32
    %88 = vector.broadcast %cst_52 : f32 to vector<16x896xf32>
    %89 = arith.cmpf ogt, %87, %88 : vector<16x896xf32>
    %cst_53 = arith.constant 0.000000e+00 : f32
    %90 = vector.broadcast %cst_53 : f32 to vector<16x896xf32>
    %91 = arith.minimumf %87, %90 : vector<16x896xf32>
    %92 = math.exp %91 : vector<16x896xf32>
    %cst_54 = arith.constant 1.000000e+00 : f32
    %93 = vector.broadcast %cst_54 : f32 to vector<16x896xf32>
    %94 = arith.subf %92, %93 : vector<16x896xf32>
    %95 = arith.select %89, %87, %94 : vector<16x896xi1>, vector<16x896xf32>
    %c0_55 = arith.constant 0 : index
    %c0_56 = arith.constant 0 : index
    %96 = vector.load %arg16[%c0_55, %c0_56] : memref<16x896xf32, #tpu.memory_space<vmem>>, vector<16x896xf32>
    tpu.vector_store %arg16[%c0_55, %c0_56], %95 {strides = array<i32>} : memref<16x896xf32, #tpu.memory_space<vmem>>, vector<16x896xf32>,
    %97 = vector.broadcast %0 : vector<1x896xf32> to vector<16x896xf32>
    %98 = arith.mulf %95, %97 : vector<16x896xf32>
    %99 = arith.truncf %98 : vector<16x896xf32> to vector<16x896xbf16>
    %c0_57 = arith.constant 0 : index
    %c128_58 = arith.constant 128 : index
    %100 = vector.load %arg15[%c0_57, %c128_58] : memref<16x1152xbf16, #tpu.memory_space<vmem>>, vector<16x896xbf16>
    tpu.vector_store %arg15[%c0_57, %c128_58], %99 {strides = array<i32>} : memref<16x1152xbf16, #tpu.memory_space<vmem>>, vector<16x896xbf16>,
    %c0_59 = arith.constant 0 : index
    %c0_60 = arith.constant 0 : index
    %101 = vector.load %arg15[%c0_59, %c0_60] : memref<16x1152xbf16, #tpu.memory_space<vmem>>, vector<16x1152xbf16>
    %102 = vector.extract_strided_slice %101 {offsets = [0, 17], sizes = [16, 896], strides = [1, 1]} : vector<16x1152xbf16> to vector<16x896xbf16>
    %c0_61 = arith.constant 0 : index
    %c0_62 = arith.constant 0 : index
    %103 = vector.load %arg14[%c0_61, %c0_62] : memref<432x896xbf16, #tpu.memory_space<vmem>>, vector<16x896xbf16>
    tpu.vector_store %arg14[%c0_61, %c0_62], %102 {strides = array<i32>} : memref<432x896xbf16, #tpu.memory_space<vmem>>, vector<16x896xbf16>,
    %104 = vector.extract_strided_slice %101 {offsets = [0, 18], sizes = [16, 896], strides = [1, 1]} : vector<16x1152xbf16> to vector<16x896xbf16>
    %c16_63 = arith.constant 16 : index
    %c0_64 = arith.constant 0 : index
    %105 = vector.load %arg14[%c16_63, %c0_64] : memref<432x896xbf16, #tpu.memory_space<vmem>>, vector<16x896xbf16>
    tpu.vector_store %arg14[%c16_63, %c0_64], %104 {strides = array<i32>} : memref<432x896xbf16, #tpu.memory_space<vmem>>, vector<16x896xbf16>,
    %106 = vector.extract_strided_slice %101 {offsets = [0, 19], sizes = [16, 896], strides = [1, 1]} : vector<16x1152xbf16> to vector<16x896xbf16>
    %c32_65 = arith.constant 32 : index
    %c0_66 = arith.constant 0 : index
    %107 = vector.load %arg14[%c32_65, %c0_66] : memref<432x896xbf16, #tpu.memory_space<vmem>>, vector<16x896xbf16>
    tpu.vector_store %arg14[%c32_65, %c0_66], %106 {strides = array<i32>} : memref<432x896xbf16, #tpu.memory_space<vmem>>, vector<16x896xbf16>,
    %108 = vector.extract_strided_slice %101 {offsets = [0, 27], sizes = [16, 896], strides = [1, 1]} : vector<16x1152xbf16> to vector<16x896xbf16>
    %c48_67 = arith.constant 48 : index
    %c0_68 = arith.constant 0 : index
    %109 = vector.load %arg14[%c48_67, %c0_68] : memref<432x896xbf16, #tpu.memory_space<vmem>>, vector<16x896xbf16>
    tpu.vector_store %arg14[%c48_67, %c0_68], %108 {strides = array<i32>} : memref<432x896xbf16, #tpu.memory_space<vmem>>, vector<16x896xbf16>,
    %110 = vector.extract_strided_slice %101 {offsets = [0, 28], sizes = [16, 896], strides = [1, 1]} : vector<16x1152xbf16> to vector<16x896xbf16>
    %c64_69 = arith.constant 64 : index
    %c0_70 = arith.constant 0 : index
    %111 = vector.load %arg14[%c64_69, %c0_70] : memref<432x896xbf16, #tpu.memory_space<vmem>>, vector<16x896xbf16>
    tpu.vector_store %arg14[%c64_69, %c0_70], %110 {strides = array<i32>} : memref<432x896xbf16, #tpu.memory_space<vmem>>, vector<16x896xbf16>,
    %112 = vector.extract_strided_slice %101 {offsets = [0, 29], sizes = [16, 896], strides = [1, 1]} : vector<16x1152xbf16> to vector<16x896xbf16>
    %c80_71 = arith.constant 80 : index
    %c0_72 = arith.constant 0 : index
    %113 = vector.load %arg14[%c80_71, %c0_72] : memref<432x896xbf16, #tpu.memory_space<vmem>>, vector<16x896xbf16>
    tpu.vector_store %arg14[%c80_71, %c0_72], %112 {strides = array<i32>} : memref<432x896xbf16, #tpu.memory_space<vmem>>, vector<16x896xbf16>,
    %114 = vector.extract_strided_slice %101 {offsets = [0, 37], sizes = [16, 896], strides = [1, 1]} : vector<16x1152xbf16> to vector<16x896xbf16>
    %c96_73 = arith.constant 96 : index
    %c0_74 = arith.constant 0 : index
    %115 = vector.load %arg14[%c96_73, %c0_74] : memref<432x896xbf16, #tpu.memory_space<vmem>>, vector<16x896xbf16>
    tpu.vector_store %arg14[%c96_73, %c0_74], %114 {strides = array<i32>} : memref<432x896xbf16, #tpu.memory_space<vmem>>, vector<16x896xbf16>,
    %116 = vector.extract_strided_slice %101 {offsets = [0, 38], sizes = [16, 896], strides = [1, 1]} : vector<16x1152xbf16> to vector<16x896xbf16>
    %c112_75 = arith.constant 112 : index
    %c0_76 = arith.constant 0 : index
    %117 = vector.load %arg14[%c112_75, %c0_76] : memref<432x896xbf16, #tpu.memory_space<vmem>>, vector<16x896xbf16>
    tpu.vector_store %arg14[%c112_75, %c0_76], %116 {strides = array<i32>} : memref<432x896xbf16, #tpu.memory_space<vmem>>, vector<16x896xbf16>,
    %118 = vector.extract_strided_slice %101 {offsets = [0, 39], sizes = [16, 896], strides = [1, 1]} : vector<16x1152xbf16> to vector<16x896xbf16>
    %c128_77 = arith.constant 128 : index
    %c0_78 = arith.constant 0 : index
    %119 = vector.load %arg14[%c128_77, %c0_78] : memref<432x896xbf16, #tpu.memory_space<vmem>>, vector<16x896xbf16>
    tpu.vector_store %arg14[%c128_77, %c0_78], %118 {strides = array<i32>} : memref<432x896xbf16, #tpu.memory_space<vmem>>, vector<16x896xbf16>,
    %120 = vector.extract_strided_slice %101 {offsets = [0, 117], sizes = [16, 896], strides = [1, 1]} : vector<16x1152xbf16> to vector<16x896xbf16>
    %c144_79 = arith.constant 144 : index
    %c0_80 = arith.constant 0 : index
    %121 = vector.load %arg14[%c144_79, %c0_80] : memref<432x896xbf16, #tpu.memory_space<vmem>>, vector<16x896xbf16>
    tpu.vector_store %arg14[%c144_79, %c0_80], %120 {strides = array<i32>} : memref<432x896xbf16, #tpu.memory_space<vmem>>, vector<16x896xbf16>,
    %122 = vector.extract_strided_slice %101 {offsets = [0, 118], sizes = [16, 896], strides = [1, 1]} : vector<16x1152xbf16> to vector<16x896xbf16>
    %c160_81 = arith.constant 160 : index
    %c0_82 = arith.constant 0 : index
    %123 = vector.load %arg14[%c160_81, %c0_82] : memref<432x896xbf16, #tpu.memory_space<vmem>>, vector<16x896xbf16>
    tpu.vector_store %arg14[%c160_81, %c0_82], %122 {strides = array<i32>} : memref<432x896xbf16, #tpu.memory_space<vmem>>, vector<16x896xbf16>,
    %124 = vector.extract_strided_slice %101 {offsets = [0, 119], sizes = [16, 896], strides = [1, 1]} : vector<16x1152xbf16> to vector<16x896xbf16>
    %c176_83 = arith.constant 176 : index
    %c0_84 = arith.constant 0 : index
    %125 = vector.load %arg14[%c176_83, %c0_84] : memref<432x896xbf16, #tpu.memory_space<vmem>>, vector<16x896xbf16>
    tpu.vector_store %arg14[%c176_83, %c0_84], %124 {strides = array<i32>} : memref<432x896xbf16, #tpu.memory_space<vmem>>, vector<16x896xbf16>,
    %126 = vector.extract_strided_slice %101 {offsets = [0, 127], sizes = [16, 896], strides = [1, 1]} : vector<16x1152xbf16> to vector<16x896xbf16>
    %c192_85 = arith.constant 192 : index
    %c0_86 = arith.constant 0 : index
    %127 = vector.load %arg14[%c192_85, %c0_86] : memref<432x896xbf16, #tpu.memory_space<vmem>>, vector<16x896xbf16>
    tpu.vector_store %arg14[%c192_85, %c0_86], %126 {strides = array<i32>} : memref<432x896xbf16, #tpu.memory_space<vmem>>, vector<16x896xbf16>,
    %128 = vector.extract_strided_slice %101 {offsets = [0, 128], sizes = [16, 896], strides = [1, 1]} : vector<16x1152xbf16> to vector<16x896xbf16>
    %c208_87 = arith.constant 208 : index
    %c0_88 = arith.constant 0 : index
    %129 = vector.load %arg14[%c208_87, %c0_88] : memref<432x896xbf16, #tpu.memory_space<vmem>>, vector<16x896xbf16>
    tpu.vector_store %arg14[%c208_87, %c0_88], %128 {strides = array<i32>} : memref<432x896xbf16, #tpu.memory_space<vmem>>, vector<16x896xbf16>,
    %130 = vector.extract_strided_slice %101 {offsets = [0, 129], sizes = [16, 896], strides = [1, 1]} : vector<16x1152xbf16> to vector<16x896xbf16>
    %c224_89 = arith.constant 224 : index
    %c0_90 = arith.constant 0 : index
    %131 = vector.load %arg14[%c224_89, %c0_90] : memref<432x896xbf16, #tpu.memory_space<vmem>>, vector<16x896xbf16>
    tpu.vector_store %arg14[%c224_89, %c0_90], %130 {strides = array<i32>} : memref<432x896xbf16, #tpu.memory_space<vmem>>, vector<16x896xbf16>,
    %132 = vector.extract_strided_slice %101 {offsets = [0, 137], sizes = [16, 896], strides = [1, 1]} : vector<16x1152xbf16> to vector<16x896xbf16>
    %c240_91 = arith.constant 240 : index
    %c0_92 = arith.constant 0 : index
    %133 = vector.load %arg14[%c240_91, %c0_92] : memref<432x896xbf16, #tpu.memory_space<vmem>>, vector<16x896xbf16>
    tpu.vector_store %arg14[%c240_91, %c0_92], %132 {strides = array<i32>} : memref<432x896xbf16, #tpu.memory_space<vmem>>, vector<16x896xbf16>,
    %134 = vector.extract_strided_slice %101 {offsets = [0, 138], sizes = [16, 896], strides = [1, 1]} : vector<16x1152xbf16> to vector<16x896xbf16>
    %c256_93 = arith.constant 256 : index
    %c0_94 = arith.constant 0 : index
    %135 = vector.load %arg14[%c256_93, %c0_94] : memref<432x896xbf16, #tpu.memory_space<vmem>>, vector<16x896xbf16>
    tpu.vector_store %arg14[%c256_93, %c0_94], %134 {strides = array<i32>} : memref<432x896xbf16, #tpu.memory_space<vmem>>, vector<16x896xbf16>,
    %136 = vector.extract_strided_slice %101 {offsets = [0, 139], sizes = [16, 896], strides = [1, 1]} : vector<16x1152xbf16> to vector<16x896xbf16>
    %c272_95 = arith.constant 272 : index
    %c0_96 = arith.constant 0 : index
    %137 = vector.load %arg14[%c272_95, %c0_96] : memref<432x896xbf16, #tpu.memory_space<vmem>>, vector<16x896xbf16>
    tpu.vector_store %arg14[%c272_95, %c0_96], %136 {strides = array<i32>} : memref<432x896xbf16, #tpu.memory_space<vmem>>, vector<16x896xbf16>,
    %138 = vector.extract_strided_slice %101 {offsets = [0, 217], sizes = [16, 896], strides = [1, 1]} : vector<16x1152xbf16> to vector<16x896xbf16>
    %c288_97 = arith.constant 288 : index
    %c0_98 = arith.constant 0 : index
    %139 = vector.load %arg14[%c288_97, %c0_98] : memref<432x896xbf16, #tpu.memory_space<vmem>>, vector<16x896xbf16>
    tpu.vector_store %arg14[%c288_97, %c0_98], %138 {strides = array<i32>} : memref<432x896xbf16, #tpu.memory_space<vmem>>, vector<16x896xbf16>,
    %140 = vector.extract_strided_slice %101 {offsets = [0, 218], sizes = [16, 896], strides = [1, 1]} : vector<16x1152xbf16> to vector<16x896xbf16>
    %c304_99 = arith.constant 304 : index
    %c0_100 = arith.constant 0 : index
    %141 = vector.load %arg14[%c304_99, %c0_100] : memref<432x896xbf16, #tpu.memory_space<vmem>>, vector<16x896xbf16>
    tpu.vector_store %arg14[%c304_99, %c0_100], %140 {strides = array<i32>} : memref<432x896xbf16, #tpu.memory_space<vmem>>, vector<16x896xbf16>,
    %142 = vector.extract_strided_slice %101 {offsets = [0, 219], sizes = [16, 896], strides = [1, 1]} : vector<16x1152xbf16> to vector<16x896xbf16>
    %c320_101 = arith.constant 320 : index
    %c0_102 = arith.constant 0 : index
    %143 = vector.load %arg14[%c320_101, %c0_102] : memref<432x896xbf16, #tpu.memory_space<vmem>>, vector<16x896xbf16>
    tpu.vector_store %arg14[%c320_101, %c0_102], %142 {strides = array<i32>} : memref<432x896xbf16, #tpu.memory_space<vmem>>, vector<16x896xbf16>,
    %144 = vector.extract_strided_slice %101 {offsets = [0, 227], sizes = [16, 896], strides = [1, 1]} : vector<16x1152xbf16> to vector<16x896xbf16>
    %c336_103 = arith.constant 336 : index
    %c0_104 = arith.constant 0 : index
    %145 = vector.load %arg14[%c336_103, %c0_104] : memref<432x896xbf16, #tpu.memory_space<vmem>>, vector<16x896xbf16>
    tpu.vector_store %arg14[%c336_103, %c0_104], %144 {strides = array<i32>} : memref<432x896xbf16, #tpu.memory_space<vmem>>, vector<16x896xbf16>,
    %146 = vector.extract_strided_slice %101 {offsets = [0, 228], sizes = [16, 896], strides = [1, 1]} : vector<16x1152xbf16> to vector<16x896xbf16>
    %c352_105 = arith.constant 352 : index
    %c0_106 = arith.constant 0 : index
    %147 = vector.load %arg14[%c352_105, %c0_106] : memref<432x896xbf16, #tpu.memory_space<vmem>>, vector<16x896xbf16>
    tpu.vector_store %arg14[%c352_105, %c0_106], %146 {strides = array<i32>} : memref<432x896xbf16, #tpu.memory_space<vmem>>, vector<16x896xbf16>,
    %148 = vector.extract_strided_slice %101 {offsets = [0, 229], sizes = [16, 896], strides = [1, 1]} : vector<16x1152xbf16> to vector<16x896xbf16>
    %c368_107 = arith.constant 368 : index
    %c0_108 = arith.constant 0 : index
    %149 = vector.load %arg14[%c368_107, %c0_108] : memref<432x896xbf16, #tpu.memory_space<vmem>>, vector<16x896xbf16>
    tpu.vector_store %arg14[%c368_107, %c0_108], %148 {strides = array<i32>} : memref<432x896xbf16, #tpu.memory_space<vmem>>, vector<16x896xbf16>,
    %150 = vector.extract_strided_slice %101 {offsets = [0, 237], sizes = [16, 896], strides = [1, 1]} : vector<16x1152xbf16> to vector<16x896xbf16>
    %c384_109 = arith.constant 384 : index
    %c0_110 = arith.constant 0 : index
    %151 = vector.load %arg14[%c384_109, %c0_110] : memref<432x896xbf16, #tpu.memory_space<vmem>>, vector<16x896xbf16>
    tpu.vector_store %arg14[%c384_109, %c0_110], %150 {strides = array<i32>} : memref<432x896xbf16, #tpu.memory_space<vmem>>, vector<16x896xbf16>,
    %152 = vector.extract_strided_slice %101 {offsets = [0, 238], sizes = [16, 896], strides = [1, 1]} : vector<16x1152xbf16> to vector<16x896xbf16>
    %c400_111 = arith.constant 400 : index
    %c0_112 = arith.constant 0 : index
    %153 = vector.load %arg14[%c400_111, %c0_112] : memref<432x896xbf16, #tpu.memory_space<vmem>>, vector<16x896xbf16>
    tpu.vector_store %arg14[%c400_111, %c0_112], %152 {strides = array<i32>} : memref<432x896xbf16, #tpu.memory_space<vmem>>, vector<16x896xbf16>,
    %154 = vector.extract_strided_slice %101 {offsets = [0, 239], sizes = [16, 896], strides = [1, 1]} : vector<16x1152xbf16> to vector<16x896xbf16>
    %c416_113 = arith.constant 416 : index
    %c0_114 = arith.constant 0 : index
    %155 = vector.load %arg14[%c416_113, %c0_114] : memref<432x896xbf16, #tpu.memory_space<vmem>>, vector<16x896xbf16>
    tpu.vector_store %arg14[%c416_113, %c0_114], %154 {strides = array<i32>} : memref<432x896xbf16, #tpu.memory_space<vmem>>, vector<16x896xbf16>,
    %c0_115 = arith.constant 0 : index
    %c0_116 = arith.constant 0 : index
    %156 = vector.load %arg3[%c0_115, %c0_116] : memref<16x432xbf16, #tpu.memory_space<vmem>>, vector<16x432xbf16>
    %c0_117 = arith.constant 0 : index
    %c0_118 = arith.constant 0 : index
    %157 = vector.load %arg14[%c0_117, %c0_118] : memref<432x896xbf16, #tpu.memory_space<vmem>>, vector<432x896xbf16>
    %cst_119 = arith.constant dense<0.000000e+00> : vector<16x896xf32>
    %158 = tpu.matmul %156, %157, %cst_119 {dimension_numbers = #tpu.dot_dimension_numbers<[1], [0], [0], [1], [0, 0, 1, 1], [], []>} : vector<16x432xbf16>, vector<432x896xbf16>, vector<16x896xf32> -> vector<16x896xf32>
    %159 = vector.broadcast %0 : vector<1x896xf32> to vector<16x896xf32>
    %160 = arith.mulf %158, %159 : vector<16x896xf32>
    %cst_120 = arith.constant dense<0.000000e+00> : vector<16xf32>
    %161 = vector.multi_reduction <add>, %160, %cst_120 [1] : vector<16x896xf32> to vector<16xf32>
    %162 = vector.shape_cast %161 : vector<16xf32> to vector<16x1xf32>
    %cst_121 = arith.constant dense<0.000000e+00> : vector<16x1xf32>
    %163 = tpu.matmul %1, %162, %cst_121 {dimension_numbers = #tpu.dot_dimension_numbers<[1], [0], [0], [1], [0, 0, 1, 1], [], []>} : vector<16x16xf32>, vector<16x1xf32>, vector<16x1xf32> -> vector<16x1xf32>
    %164 = vector.broadcast %163 : vector<16x1xf32> to vector<16x896xf32>
    %165 = arith.subf %158, %164 : vector<16x896xf32>
    %166 = vector.broadcast %0 : vector<1x896xf32> to vector<16x896xf32>
    %167 = arith.mulf %165, %166 : vector<16x896xf32>
    %168 = arith.mulf %167, %167 : vector<16x896xf32>
    %cst_122 = arith.constant dense<0.000000e+00> : vector<16xf32>
    %169 = vector.multi_reduction <add>, %168, %cst_122 [1] : vector<16x896xf32> to vector<16xf32>
    %170 = vector.shape_cast %169 : vector<16xf32> to vector<16x1xf32>
    %cst_123 = arith.constant dense<0.000000e+00> : vector<16x1xf32>
    %171 = tpu.matmul %1, %170, %cst_123 {dimension_numbers = #tpu.dot_dimension_numbers<[1], [0], [0], [1], [0, 0, 1, 1], [], []>} : vector<16x16xf32>, vector<16x1xf32>, vector<16x1xf32> -> vector<16x1xf32>
    %cst_124 = arith.constant 9.99999974E-6 : f32
    %172 = vector.broadcast %cst_124 : f32 to vector<16x1xf32>
    %173 = arith.addf %171, %172 : vector<16x1xf32>
    %174 = math.rsqrt %173 : vector<16x1xf32>
    %c0_125 = arith.constant 0 : index
    %c0_126 = arith.constant 0 : index
    %175 = vector.load %arg7[%c0_125, %c0_126] : memref<16x1xf32, #tpu.memory_space<vmem>>, vector<16x1xf32>
    %176 = arith.mulf %174, %175 : vector<16x1xf32>
    %177 = vector.broadcast %176 : vector<16x1xf32> to vector<16x896xf32>
    %178 = arith.mulf %165, %177 : vector<16x896xf32>
    %c0_127 = arith.constant 0 : index
    %c0_128 = arith.constant 0 : index
    %179 = vector.load %arg8[%c0_127, %c0_128] : memref<16x1xf32, #tpu.memory_space<vmem>>, vector<16x1xf32>
    %180 = vector.broadcast %179 : vector<16x1xf32> to vector<16x896xf32>
    %181 = arith.addf %178, %180 : vector<16x896xf32>
    %cst_129 = arith.constant 0.000000e+00 : f32
    %182 = vector.broadcast %cst_129 : f32 to vector<16x896xf32>
    %183 = arith.cmpf ogt, %181, %182 : vector<16x896xf32>
    %cst_130 = arith.constant 0.000000e+00 : f32
    %184 = vector.broadcast %cst_130 : f32 to vector<16x896xf32>
    %185 = arith.minimumf %181, %184 : vector<16x896xf32>
    %186 = math.exp %185 : vector<16x896xf32>
    %cst_131 = arith.constant 1.000000e+00 : f32
    %187 = vector.broadcast %cst_131 : f32 to vector<16x896xf32>
    %188 = arith.subf %186, %187 : vector<16x896xf32>
    %189 = arith.select %183, %181, %188 : vector<16x896xi1>, vector<16x896xf32>
    %190 = vector.broadcast %0 : vector<1x896xf32> to vector<16x896xf32>
    %191 = arith.mulf %189, %190 : vector<16x896xf32>
    %192 = arith.truncf %191 : vector<16x896xf32> to vector<16x896xbf16>
    %c0_132 = arith.constant 0 : index
    %c128_133 = arith.constant 128 : index
    %193 = vector.load %arg15[%c0_132, %c128_133] : memref<16x1152xbf16, #tpu.memory_space<vmem>>, vector<16x896xbf16>
    tpu.vector_store %arg15[%c0_132, %c128_133], %192 {strides = array<i32>} : memref<16x1152xbf16, #tpu.memory_space<vmem>>, vector<16x896xbf16>,
    %c0_134 = arith.constant 0 : index
    %c0_135 = arith.constant 0 : index
    %194 = vector.load %arg15[%c0_134, %c0_135] : memref<16x1152xbf16, #tpu.memory_space<vmem>>, vector<16x1152xbf16>
    %195 = vector.extract_strided_slice %194 {offsets = [0, 17], sizes = [16, 896], strides = [1, 1]} : vector<16x1152xbf16> to vector<16x896xbf16>
    %c0_136 = arith.constant 0 : index
    %c0_137 = arith.constant 0 : index
    %196 = vector.load %arg14[%c0_136, %c0_137] : memref<432x896xbf16, #tpu.memory_space<vmem>>, vector<16x896xbf16>
    tpu.vector_store %arg14[%c0_136, %c0_137], %195 {strides = array<i32>} : memref<432x896xbf16, #tpu.memory_space<vmem>>, vector<16x896xbf16>,
    %197 = vector.extract_strided_slice %194 {offsets = [0, 18], sizes = [16, 896], strides = [1, 1]} : vector<16x1152xbf16> to vector<16x896xbf16>
    %c16_138 = arith.constant 16 : index
    %c0_139 = arith.constant 0 : index
    %198 = vector.load %arg14[%c16_138, %c0_139] : memref<432x896xbf16, #tpu.memory_space<vmem>>, vector<16x896xbf16>
    tpu.vector_store %arg14[%c16_138, %c0_139], %197 {strides = array<i32>} : memref<432x896xbf16, #tpu.memory_space<vmem>>, vector<16x896xbf16>,
    %199 = vector.extract_strided_slice %194 {offsets = [0, 19], sizes = [16, 896], strides = [1, 1]} : vector<16x1152xbf16> to vector<16x896xbf16>
    %c32_140 = arith.constant 32 : index
    %c0_141 = arith.constant 0 : index
    %200 = vector.load %arg14[%c32_140, %c0_141] : memref<432x896xbf16, #tpu.memory_space<vmem>>, vector<16x896xbf16>
    tpu.vector_store %arg14[%c32_140, %c0_141], %199 {strides = array<i32>} : memref<432x896xbf16, #tpu.memory_space<vmem>>, vector<16x896xbf16>,
    %201 = vector.extract_strided_slice %194 {offsets = [0, 27], sizes = [16, 896], strides = [1, 1]} : vector<16x1152xbf16> to vector<16x896xbf16>
    %c48_142 = arith.constant 48 : index
    %c0_143 = arith.constant 0 : index
    %202 = vector.load %arg14[%c48_142, %c0_143] : memref<432x896xbf16, #tpu.memory_space<vmem>>, vector<16x896xbf16>
    tpu.vector_store %arg14[%c48_142, %c0_143], %201 {strides = array<i32>} : memref<432x896xbf16, #tpu.memory_space<vmem>>, vector<16x896xbf16>,
    %203 = vector.extract_strided_slice %194 {offsets = [0, 28], sizes = [16, 896], strides = [1, 1]} : vector<16x1152xbf16> to vector<16x896xbf16>
    %c64_144 = arith.constant 64 : index
    %c0_145 = arith.constant 0 : index
    %204 = vector.load %arg14[%c64_144, %c0_145] : memref<432x896xbf16, #tpu.memory_space<vmem>>, vector<16x896xbf16>
    tpu.vector_store %arg14[%c64_144, %c0_145], %203 {strides = array<i32>} : memref<432x896xbf16, #tpu.memory_space<vmem>>, vector<16x896xbf16>,
    %205 = vector.extract_strided_slice %194 {offsets = [0, 29], sizes = [16, 896], strides = [1, 1]} : vector<16x1152xbf16> to vector<16x896xbf16>
    %c80_146 = arith.constant 80 : index
    %c0_147 = arith.constant 0 : index
    %206 = vector.load %arg14[%c80_146, %c0_147] : memref<432x896xbf16, #tpu.memory_space<vmem>>, vector<16x896xbf16>
    tpu.vector_store %arg14[%c80_146, %c0_147], %205 {strides = array<i32>} : memref<432x896xbf16, #tpu.memory_space<vmem>>, vector<16x896xbf16>,
    %207 = vector.extract_strided_slice %194 {offsets = [0, 37], sizes = [16, 896], strides = [1, 1]} : vector<16x1152xbf16> to vector<16x896xbf16>
    %c96_148 = arith.constant 96 : index
    %c0_149 = arith.constant 0 : index
    %208 = vector.load %arg14[%c96_148, %c0_149] : memref<432x896xbf16, #tpu.memory_space<vmem>>, vector<16x896xbf16>
    tpu.vector_store %arg14[%c96_148, %c0_149], %207 {strides = array<i32>} : memref<432x896xbf16, #tpu.memory_space<vmem>>, vector<16x896xbf16>,
    %209 = vector.extract_strided_slice %194 {offsets = [0, 38], sizes = [16, 896], strides = [1, 1]} : vector<16x1152xbf16> to vector<16x896xbf16>
    %c112_150 = arith.constant 112 : index
    %c0_151 = arith.constant 0 : index
    %210 = vector.load %arg14[%c112_150, %c0_151] : memref<432x896xbf16, #tpu.memory_space<vmem>>, vector<16x896xbf16>
    tpu.vector_store %arg14[%c112_150, %c0_151], %209 {strides = array<i32>} : memref<432x896xbf16, #tpu.memory_space<vmem>>, vector<16x896xbf16>,
    %211 = vector.extract_strided_slice %194 {offsets = [0, 39], sizes = [16, 896], strides = [1, 1]} : vector<16x1152xbf16> to vector<16x896xbf16>
    %c128_152 = arith.constant 128 : index
    %c0_153 = arith.constant 0 : index
    %212 = vector.load %arg14[%c128_152, %c0_153] : memref<432x896xbf16, #tpu.memory_space<vmem>>, vector<16x896xbf16>
    tpu.vector_store %arg14[%c128_152, %c0_153], %211 {strides = array<i32>} : memref<432x896xbf16, #tpu.memory_space<vmem>>, vector<16x896xbf16>,
    %213 = vector.extract_strided_slice %194 {offsets = [0, 117], sizes = [16, 896], strides = [1, 1]} : vector<16x1152xbf16> to vector<16x896xbf16>
    %c144_154 = arith.constant 144 : index
    %c0_155 = arith.constant 0 : index
    %214 = vector.load %arg14[%c144_154, %c0_155] : memref<432x896xbf16, #tpu.memory_space<vmem>>, vector<16x896xbf16>
    tpu.vector_store %arg14[%c144_154, %c0_155], %213 {strides = array<i32>} : memref<432x896xbf16, #tpu.memory_space<vmem>>, vector<16x896xbf16>,
    %215 = vector.extract_strided_slice %194 {offsets = [0, 118], sizes = [16, 896], strides = [1, 1]} : vector<16x1152xbf16> to vector<16x896xbf16>
    %c160_156 = arith.constant 160 : index
    %c0_157 = arith.constant 0 : index
    %216 = vector.load %arg14[%c160_156, %c0_157] : memref<432x896xbf16, #tpu.memory_space<vmem>>, vector<16x896xbf16>
    tpu.vector_store %arg14[%c160_156, %c0_157], %215 {strides = array<i32>} : memref<432x896xbf16, #tpu.memory_space<vmem>>, vector<16x896xbf16>,
    %217 = vector.extract_strided_slice %194 {offsets = [0, 119], sizes = [16, 896], strides = [1, 1]} : vector<16x1152xbf16> to vector<16x896xbf16>
    %c176_158 = arith.constant 176 : index
    %c0_159 = arith.constant 0 : index
    %218 = vector.load %arg14[%c176_158, %c0_159] : memref<432x896xbf16, #tpu.memory_space<vmem>>, vector<16x896xbf16>
    tpu.vector_store %arg14[%c176_158, %c0_159], %217 {strides = array<i32>} : memref<432x896xbf16, #tpu.memory_space<vmem>>, vector<16x896xbf16>,
    %219 = vector.extract_strided_slice %194 {offsets = [0, 127], sizes = [16, 896], strides = [1, 1]} : vector<16x1152xbf16> to vector<16x896xbf16>
    %c192_160 = arith.constant 192 : index
    %c0_161 = arith.constant 0 : index
    %220 = vector.load %arg14[%c192_160, %c0_161] : memref<432x896xbf16, #tpu.memory_space<vmem>>, vector<16x896xbf16>
    tpu.vector_store %arg14[%c192_160, %c0_161], %219 {strides = array<i32>} : memref<432x896xbf16, #tpu.memory_space<vmem>>, vector<16x896xbf16>,
    %221 = vector.extract_strided_slice %194 {offsets = [0, 128], sizes = [16, 896], strides = [1, 1]} : vector<16x1152xbf16> to vector<16x896xbf16>
    %c208_162 = arith.constant 208 : index
    %c0_163 = arith.constant 0 : index
    %222 = vector.load %arg14[%c208_162, %c0_163] : memref<432x896xbf16, #tpu.memory_space<vmem>>, vector<16x896xbf16>
    tpu.vector_store %arg14[%c208_162, %c0_163], %221 {strides = array<i32>} : memref<432x896xbf16, #tpu.memory_space<vmem>>, vector<16x896xbf16>,
    %223 = vector.extract_strided_slice %194 {offsets = [0, 129], sizes = [16, 896], strides = [1, 1]} : vector<16x1152xbf16> to vector<16x896xbf16>
    %c224_164 = arith.constant 224 : index
    %c0_165 = arith.constant 0 : index
    %224 = vector.load %arg14[%c224_164, %c0_165] : memref<432x896xbf16, #tpu.memory_space<vmem>>, vector<16x896xbf16>
    tpu.vector_store %arg14[%c224_164, %c0_165], %223 {strides = array<i32>} : memref<432x896xbf16, #tpu.memory_space<vmem>>, vector<16x896xbf16>,
    %225 = vector.extract_strided_slice %194 {offsets = [0, 137], sizes = [16, 896], strides = [1, 1]} : vector<16x1152xbf16> to vector<16x896xbf16>
    %c240_166 = arith.constant 240 : index
    %c0_167 = arith.constant 0 : index
    %226 = vector.load %arg14[%c240_166, %c0_167] : memref<432x896xbf16, #tpu.memory_space<vmem>>, vector<16x896xbf16>
    tpu.vector_store %arg14[%c240_166, %c0_167], %225 {strides = array<i32>} : memref<432x896xbf16, #tpu.memory_space<vmem>>, vector<16x896xbf16>,
    %227 = vector.extract_strided_slice %194 {offsets = [0, 138], sizes = [16, 896], strides = [1, 1]} : vector<16x1152xbf16> to vector<16x896xbf16>
    %c256_168 = arith.constant 256 : index
    %c0_169 = arith.constant 0 : index
    %228 = vector.load %arg14[%c256_168, %c0_169] : memref<432x896xbf16, #tpu.memory_space<vmem>>, vector<16x896xbf16>
    tpu.vector_store %arg14[%c256_168, %c0_169], %227 {strides = array<i32>} : memref<432x896xbf16, #tpu.memory_space<vmem>>, vector<16x896xbf16>,
    %229 = vector.extract_strided_slice %194 {offsets = [0, 139], sizes = [16, 896], strides = [1, 1]} : vector<16x1152xbf16> to vector<16x896xbf16>
    %c272_170 = arith.constant 272 : index
    %c0_171 = arith.constant 0 : index
    %230 = vector.load %arg14[%c272_170, %c0_171] : memref<432x896xbf16, #tpu.memory_space<vmem>>, vector<16x896xbf16>
    tpu.vector_store %arg14[%c272_170, %c0_171], %229 {strides = array<i32>} : memref<432x896xbf16, #tpu.memory_space<vmem>>, vector<16x896xbf16>,
    %231 = vector.extract_strided_slice %194 {offsets = [0, 217], sizes = [16, 896], strides = [1, 1]} : vector<16x1152xbf16> to vector<16x896xbf16>
    %c288_172 = arith.constant 288 : index
    %c0_173 = arith.constant 0 : index
    %232 = vector.load %arg14[%c288_172, %c0_173] : memref<432x896xbf16, #tpu.memory_space<vmem>>, vector<16x896xbf16>
    tpu.vector_store %arg14[%c288_172, %c0_173], %231 {strides = array<i32>} : memref<432x896xbf16, #tpu.memory_space<vmem>>, vector<16x896xbf16>,
    %233 = vector.extract_strided_slice %194 {offsets = [0, 218], sizes = [16, 896], strides = [1, 1]} : vector<16x1152xbf16> to vector<16x896xbf16>
    %c304_174 = arith.constant 304 : index
    %c0_175 = arith.constant 0 : index
    %234 = vector.load %arg14[%c304_174, %c0_175] : memref<432x896xbf16, #tpu.memory_space<vmem>>, vector<16x896xbf16>
    tpu.vector_store %arg14[%c304_174, %c0_175], %233 {strides = array<i32>} : memref<432x896xbf16, #tpu.memory_space<vmem>>, vector<16x896xbf16>,
    %235 = vector.extract_strided_slice %194 {offsets = [0, 219], sizes = [16, 896], strides = [1, 1]} : vector<16x1152xbf16> to vector<16x896xbf16>
    %c320_176 = arith.constant 320 : index
    %c0_177 = arith.constant 0 : index
    %236 = vector.load %arg14[%c320_176, %c0_177] : memref<432x896xbf16, #tpu.memory_space<vmem>>, vector<16x896xbf16>
    tpu.vector_store %arg14[%c320_176, %c0_177], %235 {strides = array<i32>} : memref<432x896xbf16, #tpu.memory_space<vmem>>, vector<16x896xbf16>,
    %237 = vector.extract_strided_slice %194 {offsets = [0, 227], sizes = [16, 896], strides = [1, 1]} : vector<16x1152xbf16> to vector<16x896xbf16>
    %c336_178 = arith.constant 336 : index
    %c0_179 = arith.constant 0 : index
    %238 = vector.load %arg14[%c336_178, %c0_179] : memref<432x896xbf16, #tpu.memory_space<vmem>>, vector<16x896xbf16>
    tpu.vector_store %arg14[%c336_178, %c0_179], %237 {strides = array<i32>} : memref<432x896xbf16, #tpu.memory_space<vmem>>, vector<16x896xbf16>,
    %239 = vector.extract_strided_slice %194 {offsets = [0, 228], sizes = [16, 896], strides = [1, 1]} : vector<16x1152xbf16> to vector<16x896xbf16>
    %c352_180 = arith.constant 352 : index
    %c0_181 = arith.constant 0 : index
    %240 = vector.load %arg14[%c352_180, %c0_181] : memref<432x896xbf16, #tpu.memory_space<vmem>>, vector<16x896xbf16>
    tpu.vector_store %arg14[%c352_180, %c0_181], %239 {strides = array<i32>} : memref<432x896xbf16, #tpu.memory_space<vmem>>, vector<16x896xbf16>,
    %241 = vector.extract_strided_slice %194 {offsets = [0, 229], sizes = [16, 896], strides = [1, 1]} : vector<16x1152xbf16> to vector<16x896xbf16>
    %c368_182 = arith.constant 368 : index
    %c0_183 = arith.constant 0 : index
    %242 = vector.load %arg14[%c368_182, %c0_183] : memref<432x896xbf16, #tpu.memory_space<vmem>>, vector<16x896xbf16>
    tpu.vector_store %arg14[%c368_182, %c0_183], %241 {strides = array<i32>} : memref<432x896xbf16, #tpu.memory_space<vmem>>, vector<16x896xbf16>,
    %243 = vector.extract_strided_slice %194 {offsets = [0, 237], sizes = [16, 896], strides = [1, 1]} : vector<16x1152xbf16> to vector<16x896xbf16>
    %c384_184 = arith.constant 384 : index
    %c0_185 = arith.constant 0 : index
    %244 = vector.load %arg14[%c384_184, %c0_185] : memref<432x896xbf16, #tpu.memory_space<vmem>>, vector<16x896xbf16>
    tpu.vector_store %arg14[%c384_184, %c0_185], %243 {strides = array<i32>} : memref<432x896xbf16, #tpu.memory_space<vmem>>, vector<16x896xbf16>,
    %245 = vector.extract_strided_slice %194 {offsets = [0, 238], sizes = [16, 896], strides = [1, 1]} : vector<16x1152xbf16> to vector<16x896xbf16>
    %c400_186 = arith.constant 400 : index
    %c0_187 = arith.constant 0 : index
    %246 = vector.load %arg14[%c400_186, %c0_187] : memref<432x896xbf16, #tpu.memory_space<vmem>>, vector<16x896xbf16>
    tpu.vector_store %arg14[%c400_186, %c0_187], %245 {strides = array<i32>} : memref<432x896xbf16, #tpu.memory_space<vmem>>, vector<16x896xbf16>,
    %247 = vector.extract_strided_slice %194 {offsets = [0, 239], sizes = [16, 896], strides = [1, 1]} : vector<16x1152xbf16> to vector<16x896xbf16>
    %c416_188 = arith.constant 416 : index
    %c0_189 = arith.constant 0 : index
    %248 = vector.load %arg14[%c416_188, %c0_189] : memref<432x896xbf16, #tpu.memory_space<vmem>>, vector<16x896xbf16>
    tpu.vector_store %arg14[%c416_188, %c0_189], %247 {strides = array<i32>} : memref<432x896xbf16, #tpu.memory_space<vmem>>, vector<16x896xbf16>,
    %c0_190 = arith.constant 0 : index
    %c0_191 = arith.constant 0 : index
    %249 = vector.load %arg4[%c0_190, %c0_191] : memref<16x432xbf16, #tpu.memory_space<vmem>>, vector<16x432xbf16>
    %c0_192 = arith.constant 0 : index
    %c0_193 = arith.constant 0 : index
    %250 = vector.load %arg14[%c0_192, %c0_193] : memref<432x896xbf16, #tpu.memory_space<vmem>>, vector<432x896xbf16>
    %cst_194 = arith.constant dense<0.000000e+00> : vector<16x896xf32>
    %251 = tpu.matmul %249, %250, %cst_194 {dimension_numbers = #tpu.dot_dimension_numbers<[1], [0], [0], [1], [0, 0, 1, 1], [], []>} : vector<16x432xbf16>, vector<432x896xbf16>, vector<16x896xf32> -> vector<16x896xf32>
    %252 = vector.broadcast %0 : vector<1x896xf32> to vector<16x896xf32>
    %253 = arith.mulf %251, %252 : vector<16x896xf32>
    %cst_195 = arith.constant dense<0.000000e+00> : vector<16xf32>
    %254 = vector.multi_reduction <add>, %253, %cst_195 [1] : vector<16x896xf32> to vector<16xf32>
    %255 = vector.shape_cast %254 : vector<16xf32> to vector<16x1xf32>
    %cst_196 = arith.constant dense<0.000000e+00> : vector<16x1xf32>
    %256 = tpu.matmul %1, %255, %cst_196 {dimension_numbers = #tpu.dot_dimension_numbers<[1], [0], [0], [1], [0, 0, 1, 1], [], []>} : vector<16x16xf32>, vector<16x1xf32>, vector<16x1xf32> -> vector<16x1xf32>
    %257 = vector.broadcast %256 : vector<16x1xf32> to vector<16x896xf32>
    %258 = arith.subf %251, %257 : vector<16x896xf32>
    %259 = vector.broadcast %0 : vector<1x896xf32> to vector<16x896xf32>
    %260 = arith.mulf %258, %259 : vector<16x896xf32>
    %261 = arith.mulf %260, %260 : vector<16x896xf32>
    %cst_197 = arith.constant dense<0.000000e+00> : vector<16xf32>
    %262 = vector.multi_reduction <add>, %261, %cst_197 [1] : vector<16x896xf32> to vector<16xf32>
    %263 = vector.shape_cast %262 : vector<16xf32> to vector<16x1xf32>
    %cst_198 = arith.constant dense<0.000000e+00> : vector<16x1xf32>
    %264 = tpu.matmul %1, %263, %cst_198 {dimension_numbers = #tpu.dot_dimension_numbers<[1], [0], [0], [1], [0, 0, 1, 1], [], []>} : vector<16x16xf32>, vector<16x1xf32>, vector<16x1xf32> -> vector<16x1xf32>
    %cst_199 = arith.constant 9.99999974E-6 : f32
    %265 = vector.broadcast %cst_199 : f32 to vector<16x1xf32>
    %266 = arith.addf %264, %265 : vector<16x1xf32>
    %267 = math.rsqrt %266 : vector<16x1xf32>
    %c0_200 = arith.constant 0 : index
    %c0_201 = arith.constant 0 : index
    %268 = vector.load %arg9[%c0_200, %c0_201] : memref<16x1xf32, #tpu.memory_space<vmem>>, vector<16x1xf32>
    %269 = arith.mulf %267, %268 : vector<16x1xf32>
    %270 = vector.broadcast %269 : vector<16x1xf32> to vector<16x896xf32>
    %271 = arith.mulf %258, %270 : vector<16x896xf32>
    %c0_202 = arith.constant 0 : index
    %c0_203 = arith.constant 0 : index
    %272 = vector.load %arg10[%c0_202, %c0_203] : memref<16x1xf32, #tpu.memory_space<vmem>>, vector<16x1xf32>
    %273 = vector.broadcast %272 : vector<16x1xf32> to vector<16x896xf32>
    %274 = arith.addf %271, %273 : vector<16x896xf32>
    %c0_204 = arith.constant 0 : index
    %c0_205 = arith.constant 0 : index
    %275 = vector.load %arg16[%c0_204, %c0_205] : memref<16x896xf32, #tpu.memory_space<vmem>>, vector<16x896xf32>
    %276 = arith.addf %274, %275 : vector<16x896xf32>
    %cst_206 = arith.constant 0.000000e+00 : f32
    %277 = vector.broadcast %cst_206 : f32 to vector<16x896xf32>
    %278 = arith.cmpf ogt, %276, %277 : vector<16x896xf32>
    %cst_207 = arith.constant 0.000000e+00 : f32
    %279 = vector.broadcast %cst_207 : f32 to vector<16x896xf32>
    %280 = arith.minimumf %276, %279 : vector<16x896xf32>
    %281 = math.exp %280 : vector<16x896xf32>
    %cst_208 = arith.constant 1.000000e+00 : f32
    %282 = vector.broadcast %cst_208 : f32 to vector<16x896xf32>
    %283 = arith.subf %281, %282 : vector<16x896xf32>
    %284 = arith.select %278, %276, %283 : vector<16x896xi1>, vector<16x896xf32>
    %285 = vector.broadcast %0 : vector<1x896xf32> to vector<16x896xf32>
    %286 = arith.mulf %284, %285 : vector<16x896xf32>
    %c0_209 = arith.constant 0 : index
    %c0_210 = arith.constant 0 : index
    %c0_211 = arith.constant 0 : index
    %287 = vector.load %arg13[%c0_209, %c0_210, %c0_211] : memref<1x16x896xf32, #tpu.memory_space<vmem>>, vector<1x16x896xf32>
    %288 = vector.shape_cast %287 : vector<1x16x896xf32> to vector<16x896xf32>
    %289 = vector.shape_cast %286 : vector<16x896xf32> to vector<1x16x896xf32>
    tpu.vector_store %arg13[%c0_209, %c0_210, %c0_211], %289 {strides = array<i32>} : memref<1x16x896xf32, #tpu.memory_space<vmem>>, vector<1x16x896xf32>,
    return
  }
  func.func @transform_0(%arg0: i32) -> (i32, i32, i32) {
    %c0_i32 = arith.constant 0 : i32
    %c0_i32_0 = arith.constant 0 : i32
    %c0_i32_1 = arith.constant 0 : i32
    return %arg0, %c0_i32, %c0_i32_0 : i32, i32, i32
  }
  func.func @transform_1(%arg0: i32) -> (i32, i32) {
    %c0_i32 = arith.constant 0 : i32
    %c0_i32_0 = arith.constant 0 : i32
    %c0_i32_1 = arith.constant 0 : i32
    return %c0_i32, %c0_i32_0 : i32, i32
  }
  func.func @transform_2(%arg0: i32) -> (i32, i32) {
    %c0_i32 = arith.constant 0 : i32
    %c0_i32_0 = arith.constant 0 : i32
    %c0_i32_1 = arith.constant 0 : i32
    return %c0_i32, %c0_i32_0 : i32, i32
  }
  func.func @transform_3(%arg0: i32) -> (i32, i32) {
    %c0_i32 = arith.constant 0 : i32
    %c0_i32_0 = arith.constant 0 : i32
    %c0_i32_1 = arith.constant 0 : i32
    return %c0_i32, %c0_i32_0 : i32, i32
  }
  func.func @transform_4(%arg0: i32) -> (i32, i32) {
    %c0_i32 = arith.constant 0 : i32
    %c0_i32_0 = arith.constant 0 : i32
    %c0_i32_1 = arith.constant 0 : i32
    return %c0_i32, %c0_i32_0 : i32, i32
  }
  func.func @transform_5(%arg0: i32) -> (i32, i32) {
    %c0_i32 = arith.constant 0 : i32
    %c0_i32_0 = arith.constant 0 : i32
    %c0_i32_1 = arith.constant 0 : i32
    return %c0_i32, %c0_i32_0 : i32, i32
  }
  func.func @transform_6(%arg0: i32) -> (i32, i32) {
    %c0_i32 = arith.constant 0 : i32
    %c0_i32_0 = arith.constant 0 : i32
    %c0_i32_1 = arith.constant 0 : i32
    return %c0_i32, %c0_i32_0 : i32, i32
  }
  func.func @transform_7(%arg0: i32) -> (i32, i32) {
    %c0_i32 = arith.constant 0 : i32
    %c0_i32_0 = arith.constant 0 : i32
    %c0_i32_1 = arith.constant 0 : i32
    return %c0_i32, %c0_i32_0 : i32, i32
  }
  func.func @transform_8(%arg0: i32) -> (i32, i32) {
    %c0_i32 = arith.constant 0 : i32
    %c0_i32_0 = arith.constant 0 : i32
    %c0_i32_1 = arith.constant 0 : i32
    return %c0_i32, %c0_i32_0 : i32, i32
  }
  func.func @transform_9(%arg0: i32) -> (i32, i32) {
    %c0_i32 = arith.constant 0 : i32
    %c0_i32_0 = arith.constant 0 : i32
    %c0_i32_1 = arith.constant 0 : i32
    return %c0_i32, %c0_i32_0 : i32, i32
  }
  func.func @transform_10(%arg0: i32) -> (i32, i32) {
    %c0_i32 = arith.constant 0 : i32
    %c0_i32_0 = arith.constant 0 : i32
    %c0_i32_1 = arith.constant 0 : i32
    return %c0_i32, %c0_i32_0 : i32, i32
  }
  func.func @transform_11(%arg0: i32) -> (i32, i32) {
    %c0_i32 = arith.constant 0 : i32
    %c0_i32_0 = arith.constant 0 : i32
    %c0_i32_1 = arith.constant 0 : i32
    return %c0_i32, %c0_i32_0 : i32, i32
  }
  func.func @transform_12(%arg0: i32) -> (i32, i32, i32) {
    %c0_i32 = arith.constant 0 : i32
    %c0_i32_0 = arith.constant 0 : i32
    %c0_i32_1 = arith.constant 0 : i32
    return %arg0, %c0_i32, %c0_i32_0 : i32, i32, i32
  }
}

</mosaic_0001>

<llo_original>
// kernel: tpu_custom_call.1
$region0: #{tpu_custom_call.1}
  #allocation0 [shape = 'u32[]', space=smem, size = 0x4, offset = 0x4, fixed_abs, tag = 'smem constant byte address 0x4 - core index']
  #allocation1 [shape = 'u32[144,128]{1,0:T(1,128)}', space=vmem, size = 0x12000, scoped, tag = 'internal scratch']
  #allocation2 [shape = 'bf16[432,896]{1,0:T(16,128)(2,1)}', space=vmem, size = 0xbd000, scoped, tag = 'scratch operand']
  #allocation3 [shape = 'bf16[16,1152]{1,0:T(16,128)(2,1)}', space=vmem, size = 0x9000, scoped, tag = 'scratch operand']
  #allocation4 [shape = 'f32[16,896]{1,0:T(8,128)}', space=vmem, size = 0xe000, scoped, tag = 'scratch operand']
  %s0 = inlined_call_operand.hbm [shape: bf16[2,16,1152], index: 0, kind: input, shape index: {}]
  %s1 = inlined_call_operand.vmem [shape: bf16[16,432], index: 1, kind: input, shape index: {}]
  %s2 = inlined_call_operand.vmem [shape: bf16[16,432], index: 2, kind: input, shape index: {}]
  %s3 = inlined_call_operand.vmem [shape: bf16[16,432], index: 3, kind: input, shape index: {}]
  %s4 = inlined_call_operand.vmem [shape: f32[16,1], index: 4, kind: input, shape index: {}]
  %s5 = inlined_call_operand.vmem [shape: f32[16,1], index: 5, kind: input, shape index: {}]
  %s6 = inlined_call_operand.vmem [shape: f32[16,1], index: 6, kind: input, shape index: {}]
  %s7 = inlined_call_operand.vmem [shape: f32[16,1], index: 7, kind: input, shape index: {}]
  %s8 = inlined_call_operand.vmem [shape: f32[16,1], index: 8, kind: input, shape index: {}]
  %s9 = inlined_call_operand.vmem [shape: f32[16,1], index: 9, kind: input, shape index: {}]
  %s10 = inlined_call_operand.vmem [shape: f32[16,16], index: 10, kind: input, shape index: {}]
  %s11 = inlined_call_operand.vmem [shape: f32[1,896], index: 11, kind: input, shape index: {}]
  %s12 = inlined_call_operand.hbm [shape: f32[2,16,896], index: 12, kind: output, shape index: {}]
  %s13 = sld [smem:[#allocation0]]
  $region85: #{tpu_custom_call.1} parent=0
    _
  %s15 = ssub.s32 1, %s13
  %s16 = scalar_select 0, %s15, %s13
  $region1: #{tpu_custom_call.1} parent=0
    #allocation5 [shape = 'u8[73728]{0}', space=vmem, size = 0x12000, scoped, tag = 'input window, operand 0']
    #allocation6 [shape = 's32[2]{0}', space=sflag, size = 0x8, scoped, tag = 'scoped memory for tpu_custom_call.1']
    #allocation7 [shape = 's32[2]{0}', space=sflag, size = 0x8, scoped, tag = 'scoped memory for tpu_custom_call.1']
    #allocation8 [shape = 'u8[114688]{0}', space=vmem, size = 0x1c000, scoped, tag = 'output window, operand 0']
    %17 = vsyncpa [#allocation6], 0
    %s18 = scalar_lea.sflag [#allocation6], 1
    %19 = vsyncpa %s18, 0
    %20 = vsyncpa [#allocation7], 0
    %s21 = scalar_lea.sflag [#allocation7], 1
    %22 = vsyncpa %s21, 0
    loop: start=0, step=1, limit=4
    $region2: #{tpu_custom_call.1} parent=1 // loop_pre_header
      _
    $region3: #{tpu_custom_call.1} parent=1 // loop_header
      %s24 = sphi 0, %s28
      %p25 = scmp.ge.s32.totalorder %s24, 4
      %s34 = sphi 0, %s36
      %s37 = sphi 0, %s34
      %s38 = sphi 0, %s37
      %s54 = sphi 0, %s38
      %s58 = sphi 0, %s58
      %s60 = sphi 0, %s58
      %s61 = sphi 0, %s60
      %s75 = sphi 0, %s61
      %s79 = sphi 0, %s79
      %s81 = sphi 0, %s79
      %s82 = sphi 0, %s81
      %s96 = sphi 0, %s82
      %s100 = sphi 0, %s100
      %s102 = sphi 0, %s100
      %s103 = sphi 0, %s102
      %s117 = sphi 0, %s103
      %s121 = sphi 0, %s121
      %s123 = sphi 0, %s121
      %s124 = sphi 0, %s123
      %s138 = sphi 0, %s124
      %s142 = sphi 0, %s142
      %s144 = sphi 0, %s142
      %s145 = sphi 0, %s144
      %s159 = sphi 0, %s145
      %s163 = sphi 0, %s163
      %s165 = sphi 0, %s163
      %s166 = sphi 0, %s165
      %s180 = sphi 0, %s166
      %s184 = sphi 0, %s184
      %s186 = sphi 0, %s184
      %s187 = sphi 0, %s186
      %s201 = sphi 0, %s187
      %s205 = sphi 0, %s205
      %s207 = sphi 0, %s205
      %s208 = sphi 0, %s207
      %s222 = sphi 0, %s208
      %s226 = sphi 0, %s226
      %s228 = sphi 0, %s226
      %s229 = sphi 0, %s228
      %s243 = sphi 0, %s229
      %s247 = sphi 0, %s247
      %s249 = sphi 0, %s247
      %s250 = sphi 0, %s249
      %s264 = sphi 0, %s250
      %s268 = sphi 0, %s268
      %s270 = sphi 0, %s268
      %s271 = sphi 0, %s270
      %s285 = sphi 0, %s271
      %s291 = sphi 0, %s293
      %s294 = sphi 0, %s291
      %s295 = sphi 0, %s294
      %s311 = sphi 0, %s295
    $region4: #{tpu_custom_call.1} parent=1 // loop_header_branch
      %27 = sbr.rel (%p25) target = $region8
    $region5: #{tpu_custom_call.1} parent=1 // loop_body
      %s29 = ssub.s32 %s24, 1
      %s30 = ssub.s32 %s24, 2
      %s31 = sadd.s32 %s24, 1
      %s32 = ssub.s32 %s24, %s31
      %p33 = scmp.eq.s32.totalorder %s32, 0
      %s35 = sadd.s32 %s34, 1
      %s36 = scalar_select %p33, %s34, %s35
      %p39 = pneg %p33
      %p40 = scmp.eq.s32.totalorder %s24, 1
      %p41 = por %p39, %p40
      %p42 = scmp.ne.s32.totalorder %s34, %s37
      %p43 = scmp.eq.s32.totalorder %s24, 0
      %p44 = por %p42, %p43
      %p45 = scmp.ne.s32.totalorder %s34, %s37
      %p46 = scmp.eq.s32.totalorder %s29, 1
      %p47 = por %p45, %p46
      %p48 = scmp.ne.s32.totalorder %s37, %s38
      %p49 = scmp.eq.s32.totalorder %s29, 0
      %p50 = por %p48, %p49
      %p51 = scmp.ne.s32.totalorder %s37, %s38
      %p52 = scmp.eq.s32.totalorder %s30, 1
      %p53 = por %p51, %p52
      %p55 = scmp.ne.s32.totalorder %s38, %s54
      %p56 = scmp.eq.s32.totalorder %s30, 0
      %p57 = por %p55, %p56
      %s59 = sadd.s32 %s58, 1
      %p62 = scmp.eq.s32.totalorder %s24, 1
      %p63 = scmp.ne.s32.totalorder %s58, %s60
      %p64 = scmp.eq.s32.totalorder %s24, 0
      %p65 = por %p63, %p64
      %p66 = scmp.ne.s32.totalorder %s58, %s60
      %p67 = scmp.eq.s32.totalorder %s29, 1
      %p68 = por %p66, %p67
      %p69 = scmp.ne.s32.totalorder %s60, %s61
      %p70 = scmp.eq.s32.totalorder %s29, 0
      %p71 = por %p69, %p70
      %p72 = scmp.ne.s32.totalorder %s60, %s61
      %p73 = scmp.eq.s32.totalorder %s30, 1
      %p74 = por %p72, %p73
      %p76 = scmp.ne.s32.totalorder %s61, %s75
      %p77 = scmp.eq.s32.totalorder %s30, 0
      %p78 = por %p76, %p77
      %s80 = sadd.s32 %s79, 1
      %p83 = scmp.eq.s32.totalorder %s24, 1
      %p84 = scmp.ne.s32.totalorder %s79, %s81
      %p85 = scmp.eq.s32.totalorder %s24, 0
      %p86 = por %p84, %p85
      %p87 = scmp.ne.s32.totalorder %s79, %s81
      %p88 = scmp.eq.s32.totalorder %s29, 1
      %p89 = por %p87, %p88
      %p90 = scmp.ne.s32.totalorder %s81, %s82
      %p91 = scmp.eq.s32.totalorder %s29, 0
      %p92 = por %p90, %p91
      %p93 = scmp.ne.s32.totalorder %s81, %s82
      %p94 = scmp.eq.s32.totalorder %s30, 1
      %p95 = por %p93, %p94
      %p97 = scmp.ne.s32.totalorder %s82, %s96
      %p98 = scmp.eq.s32.totalorder %s30, 0
      %p99 = por %p97, %p98
      %s101 = sadd.s32 %s100, 1
      %p104 = scmp.eq.s32.totalorder %s24, 1
      %p105 = scmp.ne.s32.totalorder %s100, %s102
      %p106 = scmp.eq.s32.totalorder %s24, 0
      %p107 = por %p105, %p106
      %p108 = scmp.ne.s32.totalorder %s100, %s102
      %p109 = scmp.eq.s32.totalorder %s29, 1
      %p110 = por %p108, %p109
      %p111 = scmp.ne.s32.totalorder %s102, %s103
      %p112 = scmp.eq.s32.totalorder %s29, 0
      %p113 = por %p111, %p112
      %p114 = scmp.ne.s32.totalorder %s102, %s103
      %p115 = scmp.eq.s32.totalorder %s30, 1
      %p116 = por %p114, %p115
      %p118 = scmp.ne.s32.totalorder %s103, %s117
      %p119 = scmp.eq.s32.totalorder %s30, 0
      %p120 = por %p118, %p119
      %s122 = sadd.s32 %s121, 1
      %p125 = scmp.eq.s32.totalorder %s24, 1
      %p126 = scmp.ne.s32.totalorder %s121, %s123
      %p127 = scmp.eq.s32.totalorder %s24, 0
      %p128 = por %p126, %p127
      %p129 = scmp.ne.s32.totalorder %s121, %s123
      %p130 = scmp.eq.s32.totalorder %s29, 1
      %p131 = por %p129, %p130
      %p132 = scmp.ne.s32.totalorder %s123, %s124
      %p133 = scmp.eq.s32.totalorder %s29, 0
      %p134 = por %p132, %p133
      %p135 = scmp.ne.s32.totalorder %s123, %s124
      %p136 = scmp.eq.s32.totalorder %s30, 1
      %p137 = por %p135, %p136
      %p139 = scmp.ne.s32.totalorder %s124, %s138
      %p140 = scmp.eq.s32.totalorder %s30, 0
      %p141 = por %p139, %p140
      %s143 = sadd.s32 %s142, 1
      %p146 = scmp.eq.s32.totalorder %s24, 1
      %p147 = scmp.ne.s32.totalorder %s142, %s144
      %p148 = scmp.eq.s32.totalorder %s24, 0
      %p149 = por %p147, %p148
      %p150 = scmp.ne.s32.totalorder %s142, %s144
      %p151 = scmp.eq.s32.totalorder %s29, 1
      %p152 = por %p150, %p151
      %p153 = scmp.ne.s32.totalorder %s144, %s145
      %p154 = scmp.eq.s32.totalorder %s29, 0
      %p155 = por %p153, %p154
      %p156 = scmp.ne.s32.totalorder %s144, %s145
      %p157 = scmp.eq.s32.totalorder %s30, 1
      %p158 = por %p156, %p157
      %p160 = scmp.ne.s32.totalorder %s145, %s159
      %p161 = scmp.eq.s32.totalorder %s30, 0
      %p162 = por %p160, %p161
      %s164 = sadd.s32 %s163, 1
      %p167 = scmp.eq.s32.totalorder %s24, 1
      %p168 = scmp.ne.s32.totalorder %s163, %s165
      %p169 = scmp.eq.s32.totalorder %s24, 0
      %p170 = por %p168, %p169
      %p171 = scmp.ne.s32.totalorder %s163, %s165
      %p172 = scmp.eq.s32.totalorder %s29, 1
      %p173 = por %p171, %p172
      %p174 = scmp.ne.s32.totalorder %s165, %s166
      %p175 = scmp.eq.s32.totalorder %s29, 0
      %p176 = por %p174, %p175
      %p177 = scmp.ne.s32.totalorder %s165, %s166
      %p178 = scmp.eq.s32.totalorder %s30, 1
      %p179 = por %p177, %p178
      %p181 = scmp.ne.s32.totalorder %s166, %s180
      %p182 = scmp.eq.s32.totalorder %s30, 0
      %p183 = por %p181, %p182
      %s185 = sadd.s32 %s184, 1
      %p188 = scmp.eq.s32.totalorder %s24, 1
      %p189 = scmp.ne.s32.totalorder %s184, %s186
      %p190 = scmp.eq.s32.totalorder %s24, 0
      %p191 = por %p189, %p190
      %p192 = scmp.ne.s32.totalorder %s184, %s186
      %p193 = scmp.eq.s32.totalorder %s29, 1
      %p194 = por %p192, %p193
      %p195 = scmp.ne.s32.totalorder %s186, %s187
      %p196 = scmp.eq.s32.totalorder %s29, 0
      %p197 = por %p195, %p196
      %p198 = scmp.ne.s32.totalorder %s186, %s187
      %p199 = scmp.eq.s32.totalorder %s30, 1
      %p200 = por %p198, %p199
      %p202 = scmp.ne.s32.totalorder %s187, %s201
      %p203 = scmp.eq.s32.totalorder %s30, 0
      %p204 = por %p202, %p203
      %s206 = sadd.s32 %s205, 1
      %p209 = scmp.eq.s32.totalorder %s24, 1
      %p210 = scmp.ne.s32.totalorder %s205, %s207
      %p211 = scmp.eq.s32.totalorder %s24, 0
      %p212 = por %p210, %p211
      %p213 = scmp.ne.s32.totalorder %s205, %s207
      %p214 = scmp.eq.s32.totalorder %s29, 1
      %p215 = por %p213, %p214
      %p216 = scmp.ne.s32.totalorder %s207, %s208
      %p217 = scmp.eq.s32.totalorder %s29, 0
      %p218 = por %p216, %p217
      %p219 = scmp.ne.s32.totalorder %s207, %s208
      %p220 = scmp.eq.s32.totalorder %s30, 1
      %p221 = por %p219, %p220
      %p223 = scmp.ne.s32.totalorder %s208, %s222
      %p224 = scmp.eq.s32.totalorder %s30, 0
      %p225 = por %p223, %p224
      %s227 = sadd.s32 %s226, 1
      %p230 = scmp.eq.s32.totalorder %s24, 1
      %p231 = scmp.ne.s32.totalorder %s226, %s228
      %p232 = scmp.eq.s32.totalorder %s24, 0
      %p233 = por %p231, %p232
      %p234 = scmp.ne.s32.totalorder %s226, %s228
      %p235 = scmp.eq.s32.totalorder %s29, 1
      %p236 = por %p234, %p235
      %p237 = scmp.ne.s32.totalorder %s228, %s229
      %p238 = scmp.eq.s32.totalorder %s29, 0
      %p239 = por %p237, %p238
      %p240 = scmp.ne.s32.totalorder %s228, %s229
      %p241 = scmp.eq.s32.totalorder %s30, 1
      %p242 = por %p240, %p241
      %p244 = scmp.ne.s32.totalorder %s229, %s243
      %p245 = scmp.eq.s32.totalorder %s30, 0
      %p246 = por %p244, %p245
      %s248 = sadd.s32 %s247, 1
      %p251 = scmp.eq.s32.totalorder %s24, 1
      %p252 = scmp.ne.s32.totalorder %s247, %s249
      %p253 = scmp.eq.s32.totalorder %s24, 0
      %p254 = por %p252, %p253
      %p255 = scmp.ne.s32.totalorder %s247, %s249
      %p256 = scmp.eq.s32.totalorder %s29, 1
      %p257 = por %p255, %p256
      %p258 = scmp.ne.s32.totalorder %s249, %s250
      %p259 = scmp.eq.s32.totalorder %s29, 0
      %p260 = por %p258, %p259
      %p261 = scmp.ne.s32.totalorder %s249, %s250
      %p262 = scmp.eq.s32.totalorder %s30, 1
      %p263 = por %p261, %p262
      %p265 = scmp.ne.s32.totalorder %s250, %s264
      %p266 = scmp.eq.s32.totalorder %s30, 0
      %p267 = por %p265, %p266
      %s269 = sadd.s32 %s268, 1
      %p272 = scmp.eq.s32.totalorder %s24, 1
      %p273 = scmp.ne.s32.totalorder %s268, %s270
      %p274 = scmp.eq.s32.totalorder %s24, 0
      %p275 = por %p273, %p274
      %p276 = scmp.ne.s32.totalorder %s268, %s270
      %p277 = scmp.eq.s32.totalorder %s29, 1
      %p278 = por %p276, %p277
      %p279 = scmp.ne.s32.totalorder %s270, %s271
      %p280 = scmp.eq.s32.totalorder %s29, 0
      %p281 = por %p279, %p280
      %p282 = scmp.ne.s32.totalorder %s270, %s271
      %p283 = scmp.eq.s32.totalorder %s30, 1
      %p284 = por %p282, %p283
      %p286 = scmp.ne.s32.totalorder %s271, %s285
      %p287 = scmp.eq.s32.totalorder %s30, 0
      %p288 = por %p286, %p287
      %s289 = ssub.s32 %s24, %s31
      %p290 = scmp.eq.s32.totalorder %s289, 0
      %s292 = sadd.s32 %s291, 1
      %s293 = scalar_select %p290, %s291, %s292
      %p296 = pneg %p290
      %p297 = scmp.eq.s32.totalorder %s24, 1
      %p298 = por %p296, %p297
      %p299 = scmp.ne.s32.totalorder %s291, %s294
      %p300 = scmp.eq.s32.totalorder %s24, 0
      %p301 = por %p299, %p300
      %p302 = scmp.ne.s32.totalorder %s291, %s294
      %p303 = scmp.eq.s32.totalorder %s29, 1
      %p304 = por %p302, %p303
      %p305 = scmp.ne.s32.totalorder %s294, %s295
      %p306 = scmp.eq.s32.totalorder %s29, 0
      %p307 = por %p305, %p306
      %p308 = scmp.ne.s32.totalorder %s294, %s295
      %p309 = scmp.eq.s32.totalorder %s30, 1
      %p310 = por %p308, %p309
      %p312 = scmp.ne.s32.totalorder %s295, %s311
      %p313 = scmp.eq.s32.totalorder %s30, 0
      %p314 = por %p312, %p313
      %p315 = scmp.le.s32.totalorder 1, %s24
      %p316 = scmp.lt.s32.totalorder %s24, 3
      %p317 = pnand %p315, %p316
      %p318 = pneg %p317
      // Predicated region
      $region9: #{tpu_custom_call.1} parent=5 // pred_check
        _
      $region10: #{tpu_custom_call.1} parent=5 // pred_check_branch
        %320 = sbr.rel (%p317) target = $region12
      $region11: #{tpu_custom_call.1} parent=5 // pred_region
        %s321 = ssub.s32 %s24, 1
        // Predicated region
        $region13: #{tpu_custom_call.1} parent=11 // pred_check
          %p322 = pneg %p71
        $region14: #{tpu_custom_call.1} parent=11 // pred_check_branch
          %324 = sbr.rel (%p322) target = $region16
        $region15: #{tpu_custom_call.1} parent=11 // pred_region
          _
        $region16: #{tpu_custom_call.1} parent=11 // pred_fallthru
          _
        // Predicated region
        $region17: #{tpu_custom_call.1} parent=11 // pred_check
          %p325 = pneg %p92
        $region18: #{tpu_custom_call.1} parent=11 // pred_check_branch
          %327 = sbr.rel (%p325) target = $region20
        $region19: #{tpu_custom_call.1} parent=11 // pred_region
          _
        $region20: #{tpu_custom_call.1} parent=11 // pred_fallthru
          _
        // Predicated region
        $region21: #{tpu_custom_call.1} parent=11 // pred_check
          %p328 = pneg %p113
        $region22: #{tpu_custom_call.1} parent=11 // pred_check_branch
          %330 = sbr.rel (%p328) target = $region24
        $region23: #{tpu_custom_call.1} parent=11 // pred_region
          _
        $region24: #{tpu_custom_call.1} parent=11 // pred_fallthru
          _
        // Predicated region
        $region25: #{tpu_custom_call.1} parent=11 // pred_check
          %p331 = pneg %p134
        $region26: #{tpu_custom_call.1} parent=11 // pred_check_branch
          %333 = sbr.rel (%p331) target = $region28
        $region27: #{tpu_custom_call.1} parent=11 // pred_region
          _
        $region28: #{tpu_custom_call.1} parent=11 // pred_fallthru
          _
        // Predicated region
        $region29: #{tpu_custom_call.1} parent=11 // pred_check
          %p334 = pneg %p155
        $region30: #{tpu_custom_call.1} parent=11 // pred_check_branch
          %336 = sbr.rel (%p334) target = $region32
        $region31: #{tpu_custom_call.1} parent=11 // pred_region
          _
        $region32: #{tpu_custom_call.1} parent=11 // pred_fallthru
          _
        // Predicated region
        $region33: #{tpu_custom_call.1} parent=11 // pred_check
          %p337 = pneg %p176
        $region34: #{tpu_custom_call.1} parent=11 // pred_check_branch
          %339 = sbr.rel (%p337) target = $region36
        $region35: #{tpu_custom_call.1} parent=11 // pred_region
          _
        $region36: #{tpu_custom_call.1} parent=11 // pred_fallthru
          _
        // Predicated region
        $region37: #{tpu_custom_call.1} parent=11 // pred_check
          %p340 = pneg %p197
        $region38: #{tpu_custom_call.1} parent=11 // pred_check_branch
          %342 = sbr.rel (%p340) target = $region40
        $region39: #{tpu_custom_call.1} parent=11 // pred_region
          _
        $region40: #{tpu_custom_call.1} parent=11 // pred_fallthru
          _
        // Predicated region
        $region41: #{tpu_custom_call.1} parent=11 // pred_check
          %p343 = pneg %p218
        $region42: #{tpu_custom_call.1} parent=11 // pred_check_branch
          %345 = sbr.rel (%p343) target = $region44
        $region43: #{tpu_custom_call.1} parent=11 // pred_region
          _
        $region44: #{tpu_custom_call.1} parent=11 // pred_fallthru
          _
        // Predicated region
        $region45: #{tpu_custom_call.1} parent=11 // pred_check
          %p346 = pneg %p239
        $region46: #{tpu_custom_call.1} parent=11 // pred_check_branch
          %348 = sbr.rel (%p346) target = $region48
        $region47: #{tpu_custom_call.1} parent=11 // pred_region
          _
        $region48: #{tpu_custom_call.1} parent=11 // pred_fallthru
          _
        // Predicated region
        $region49: #{tpu_custom_call.1} parent=11 // pred_check
          %p349 = pneg %p260
        $region50: #{tpu_custom_call.1} parent=11 // pred_check_branch
          %351 = sbr.rel (%p349) target = $region52
        $region51: #{tpu_custom_call.1} parent=11 // pred_region
          _
        $region52: #{tpu_custom_call.1} parent=11 // pred_fallthru
          _
        // Predicated region
        $region53: #{tpu_custom_call.1} parent=11 // pred_check
          %p352 = pneg %p281
        $region54: #{tpu_custom_call.1} parent=11 // pred_check_branch
          %354 = sbr.rel (%p352) target = $region56
        $region55: #{tpu_custom_call.1} parent=11 // pred_region
          _
        $region56: #{tpu_custom_call.1} parent=11 // pred_fallthru
          _
      $region12: #{tpu_custom_call.1} parent=5 // pred_fallthru
        _
      %p355 = scmp.lt.s32.totalorder %s24, 2
      // Predicated region
      $region57: #{tpu_custom_call.1} parent=5 // pred_check
        %p356 = pneg %p355
      $region58: #{tpu_custom_call.1} parent=5 // pred_check_branch
        %358 = sbr.rel (%p356) target = $region60
      $region59: #{tpu_custom_call.1} parent=5 // pred_region
        // Predicated region
        $region61: #{tpu_custom_call.1} parent=59 // pred_check
          %p359 = pneg %p44
        $region62: #{tpu_custom_call.1} parent=59 // pred_check_branch
          %361 = sbr.rel (%p359) target = $region64
        $region63: #{tpu_custom_call.1} parent=59 // pred_region
          %s362 = sand.u32 %s34, 1
          %s363 = scalar_lea.sflag [#allocation6], %s362
          %s364 = sand.u32 %s34, 1
          %s365 = smul.addr %s364, 72
          %s366 = scalar_lea.vmem [#allocation5], %s365
          %s368 = ssub.s32 1152, 1152
          %369 = vsyncadd %s363, %s368
          %s370 = smul.addr %s24, 18
          %s371 = smul.addr %s370, 64
          %s372 = scalar_lea.hbm %s0, %s371
          %s373 = sshll.u32 %s366, 4
          %s374 = int_to_ptr.vmem [resolvable:$true] %s373
          %379 = dma.hbm_to_vmem [thread:$0]  %s372, 1152, %s374, %s363, 576, 576, 36
        $region64: #{tpu_custom_call.1} parent=59 // pred_fallthru
          _
      $region60: #{tpu_custom_call.1} parent=5 // pred_fallthru
        _
      %p380 = scmp.le.s32.totalorder 1, %s24
      %p381 = scmp.lt.s32.totalorder %s24, 3
      %p382 = pnand %p380, %p381
      %p383 = pneg %p382
      // Predicated region
      $region65: #{tpu_custom_call.1} parent=5 // pred_check
        _
      $region66: #{tpu_custom_call.1} parent=5 // pred_check_branch
        %385 = sbr.rel (%p382) target = $region68
      $region67: #{tpu_custom_call.1} parent=5 // pred_region
        %s386 = ssub.s32 %s24, 1
        %s387 = sand.u32 %s37, 1
        %s388 = scalar_lea.sflag [#allocation6], %s387
        %s389 = sand.u32 %s37, 1
        %s390 = smul.addr %s389, 72
        %s391 = scalar_lea.vmem [#allocation5], %s390
        // Predicated region
        $region69: #{tpu_custom_call.1} parent=67 // pred_check
          %p392 = pneg %p50
        $region70: #{tpu_custom_call.1} parent=67 // pred_check_branch
          %394 = sbr.rel (%p392) target = $region72
        $region71: #{tpu_custom_call.1} parent=67 // pred_region
          %395 = dma.done %s388, 1152
        $region72: #{tpu_custom_call.1} parent=67 // pred_fallthru
          _
        %s396 = sand.u32 %s37, 1
        %s397 = scalar_lea.sflag [#allocation6], %s396
        %s398 = sand.u32 %s37, 1
        %s399 = smul.addr %s398, 72
        %s400 = scalar_lea.vmem [#allocation5], %s399
        %p401 = pneg %p50
        %p402 = pneg %p47
        %p403 = pneg %p71
        %p404 = pneg %p68
        %p405 = pneg %p92
        %p406 = pneg %p89
        %p407 = pneg %p113
        %p408 = pneg %p110
        %p409 = pneg %p134
        %p410 = pneg %p131
        %p411 = pneg %p155
        %p412 = pneg %p152
        %p413 = pneg %p176
        %p414 = pneg %p173
        %p415 = pneg %p197
        %p416 = pneg %p194
        %p417 = pneg %p218
        %p418 = pneg %p215
        %p419 = pneg %p239
        %p420 = pneg %p236
        %p421 = pneg %p260
        %p422 = pneg %p257
        %p423 = pneg %p281
        %p424 = pneg %p278
        %p425 = pneg %p307
        %p426 = pneg %p304
        %s427 = sand.u32 %s294, 1
        %s428 = scalar_lea.sflag [#allocation7], %s427
        %s429 = sand.u32 %s294, 1
        %s430 = smul.addr %s429, 112
        %s431 = scalar_lea.vmem [#allocation8], %s430
        %v433 = vld [vmem:[%s11] sm:$0xff]
        %v434 = vld [vmem:[%s10] sm:$0xff]
        %v435 = vld [vmem:[%s10 + $0x8] sm:$0xff]
        %436 = vst [vmem:[#allocation3] sm:$0xff] 0
        %437 = vst [vmem:[#allocation3 + $0x40] sm:$0xff] 0
        %v438 = vld [vmem:[%s391] sm:$0xff]
        %v439 = vld [vmem:[%s391 + $0x8] sm:$0xff]
        %v440 = vld [vmem:[%s391 + $0x10] sm:$0xff]
        %v441 = vld [vmem:[%s391 + $0x18] sm:$0xff]
        %v442 = vld [vmem:[%s391 + $0x20] sm:$0xf]
        %v443 = vld [vmem:[%s391 + $0x24] sm:$0xff]
        %v444 = vld [vmem:[%s391 + $0x2c] sm:$0xff]
        %v445 = vld [vmem:[%s391 + $0x34] sm:$0xff]
        %v446 = vld [vmem:[%s391 + $0x3c] sm:$0xff]
        %v447 = vld [vmem:[%s391 + $0x44] sm:$0xf]
        %v456 = vunpack.c.l.b16 %v438
        %v457 = vunpack.c.h.b16 %v438
        %v458 = vunpack.c.l.b16 %v439
        %v459 = vunpack.c.h.b16 %v439
        %v460 = vunpack.c.l.b16 %v440
        %v461 = vunpack.c.h.b16 %v440
        %v462 = vunpack.c.l.b16 %v441
        %v463 = vunpack.c.h.b16 %v441
        %v464 = vunpack.c.l.b16 %v443
        %v465 = vunpack.c.h.b16 %v443
        %v466 = vunpack.c.l.b16 %v444
        %v467 = vunpack.c.h.b16 %v444
        %v468 = vunpack.c.l.b16 %v445
        %v469 = vunpack.c.h.b16 %v445
        %v470 = vunpack.c.l.b16 %v446
        %v471 = vunpack.c.h.b16 %v446
        %v472 = vpack.c.b16 %v464, %v456
        %v473 = vpack.c.b16 %v465, %v457
        %v474 = vpack.c.b16 %v466, %v458
        %v475 = vpack.c.b16 %v467, %v459
        %v476 = vpack.c.b16 %v468, %v460
        %v477 = vpack.c.b16 %v469, %v461
        %v478 = vpack.c.b16 %v470, %v462
        %v479 = vpack.c.b16 %v471, %v463
        %480 = vrot.lane.b32.xlu0 %v472, 111
        %v481 = vpop.permute.xlu0 %480
        %482 = vrot.lane.b32.xlu0 %v473, 111
        %v483 = vpop.permute.xlu0 %482
        %484 = vrot.lane.b32.xlu0 %v474, 111
        %v485 = vpop.permute.xlu0 %484
        %486 = vrot.lane.b32.xlu0 %v475, 111
        %v487 = vpop.permute.xlu0 %486
        %488 = vrot.lane.b32.xlu0 %v476, 111
        %v489 = vpop.permute.xlu0 %488
        %490 = vrot.lane.b32.xlu0 %v477, 111
        %v491 = vpop.permute.xlu0 %490
        %492 = vrot.lane.b32.xlu0 %v478, 111
        %v493 = vpop.permute.xlu0 %492
        %494 = vrot.lane.b32.xlu0 %v479, 111
        %v495 = vpop.permute.xlu0 %494
        %vm496 = vcmask 908288
        %v497 = vsel %vm496, %v481, %v483
        %v498 = vsel %vm496, %v483, %v485
        %v499 = vsel %vm496, %v485, %v487
        %v500 = vsel %vm496, %v487, %v489
        %v501 = vsel %vm496, %v489, %v491
        %v502 = vsel %vm496, %v491, %v493
        %v503 = vsel %vm496, %v493, %v495
        %511 = vst [vmem:[#allocation2] sm:$0xff] %v497
        %512 = vst [vmem:[#allocation2 + $0x8] sm:$0xff] %v498
        %513 = vst [vmem:[#allocation2 + $0x10] sm:$0xff] %v499
        %514 = vst [vmem:[#allocation2 + $0x18] sm:$0xff] %v500
        %515 = vst [vmem:[#allocation2 + $0x20] sm:$0xff] %v501
        %516 = vst [vmem:[#allocation2 + $0x28] sm:$0xff] %v502
        %517 = vst [vmem:[#allocation2 + $0x30] sm:$0xff] %v503
        %518 = vrot.lane.b32.xlu0 %v472, 110
        %v519 = vpop.permute.xlu0 %518
        %520 = vrot.lane.b32.xlu0 %v473, 110
        %v521 = vpop.permute.xlu0 %520
        %522 = vrot.lane.b32.xlu0 %v474, 110
        %v523 = vpop.permute.xlu0 %522
        %524 = vrot.lane.b32.xlu0 %v475, 110
        %v525 = vpop.permute.xlu0 %524
        %526 = vrot.lane.b32.xlu0 %v476, 110
        %v527 = vpop.permute.xlu0 %526
        %528 = vrot.lane.b32.xlu0 %v477, 110
        %v529 = vpop.permute.xlu0 %528
        %530 = vrot.lane.b32.xlu0 %v478, 110
        %v531 = vpop.permute.xlu0 %530
        %532 = vrot.lane.b32.xlu0 %v479, 110
        %v533 = vpop.permute.xlu0 %532
        %vm534 = vcmask 900096
        %v535 = vsel %vm534, %v519, %v521
        %v536 = vsel %vm534, %v521, %v523
        %v537 = vsel %vm534, %v523, %v525
        %v538 = vsel %vm534, %v525, %v527
        %v539 = vsel %vm534, %v527, %v529
        %v540 = vsel %vm534, %v529, %v531
        %v541 = vsel %vm534, %v531, %v533
        %549 = vst [vmem:[#allocation2 + $0x38] sm:$0xff] %v535
        %550 = vst [vmem:[#allocation2 + $0x40] sm:$0xff] %v536
        %551 = vst [vmem:[#allocation2 + $0x48] sm:$0xff] %v537
        %552 = vst [vmem:[#allocation2 + $0x50] sm:$0xff] %v538
        %553 = vst [vmem:[#allocation2 + $0x58] sm:$0xff] %v539
        %554 = vst [vmem:[#allocation2 + $0x60] sm:$0xff] %v540
        %555 = vst [vmem:[#allocation2 + $0x68] sm:$0xff] %v541
        %556 = vrot.lane.b32.xlu0 %v472, 109
        %v557 = vpop.permute.xlu0 %556
        %558 = vrot.lane.b32.xlu0 %v473, 109
        %v559 = vpop.permute.xlu0 %558
        %560 = vrot.lane.b32.xlu0 %v474, 109
        %v561 = vpop.permute.xlu0 %560
        %562 = vrot.lane.b32.xlu0 %v475, 109
        %v563 = vpop.permute.xlu0 %562
        %564 = vrot.lane.b32.xlu0 %v476, 109
        %v565 = vpop.permute.xlu0 %564
        %566 = vrot.lane.b32.xlu0 %v477, 109
        %v567 = vpop.permute.xlu0 %566
        %568 = vrot.lane.b32.xlu0 %v478, 109
        %v569 = vpop.permute.xlu0 %568
        %570 = vrot.lane.b32.xlu0 %v479, 109
        %v571 = vpop.permute.xlu0 %570
        %vm572 = vcmask 891904
        %v573 = vsel %vm572, %v557, %v559
        %v574 = vsel %vm572, %v559, %v561
        %v575 = vsel %vm572, %v561, %v563
        %v576 = vsel %vm572, %v563, %v565
        %v577 = vsel %vm572, %v565, %v567
        %v578 = vsel %vm572, %v567, %v569
        %v579 = vsel %vm572, %v569, %v571
        %587 = vst [vmem:[#allocation2 + $0x70] sm:$0xff] %v573
        %588 = vst [vmem:[#allocation2 + $0x78] sm:$0xff] %v574
        %589 = vst [vmem:[#allocation2 + $0x80] sm:$0xff] %v575
        %590 = vst [vmem:[#allocation2 + $0x88] sm:$0xff] %v576
        %591 = vst [vmem:[#allocation2 + $0x90] sm:$0xff] %v577
        %592 = vst [vmem:[#allocation2 + $0x98] sm:$0xff] %v578
        %593 = vst [vmem:[#allocation2 + $0xa0] sm:$0xff] %v579
        %594 = vrot.lane.b32.xlu0 %v472, 101
        %v595 = vpop.permute.xlu0 %594
        %596 = vrot.lane.b32.xlu0 %v473, 101
        %v597 = vpop.permute.xlu0 %596
        %598 = vrot.lane.b32.xlu0 %v474, 101
        %v599 = vpop.permute.xlu0 %598
        %600 = vrot.lane.b32.xlu0 %v475, 101
        %v601 = vpop.permute.xlu0 %600
        %602 = vrot.lane.b32.xlu0 %v476, 101
        %v603 = vpop.permute.xlu0 %602
        %604 = vrot.lane.b32.xlu0 %v477, 101
        %v605 = vpop.permute.xlu0 %604
        %606 = vrot.lane.b32.xlu0 %v478, 101
        %v607 = vpop.permute.xlu0 %606
        %608 = vrot.lane.b32.xlu0 %v479, 101
        %v609 = vpop.permute.xlu0 %608
        %vm610 = vcmask 826368
        %v611 = vsel %vm610, %v595, %v597
        %v612 = vsel %vm610, %v597, %v599
        %v613 = vsel %vm610, %v599, %v601
        %v614 = vsel %vm610, %v601, %v603
        %v615 = vsel %vm610, %v603, %v605
        %v616 = vsel %vm610, %v605, %v607
        %v617 = vsel %vm610, %v607, %v609
        %625 = vst [vmem:[#allocation2 + $0xa8] sm:$0xff] %v611
        %626 = vst [vmem:[#allocation2 + $0xb0] sm:$0xff] %v612
        %627 = vst [vmem:[#allocation2 + $0xb8] sm:$0xff] %v613
        %628 = vst [vmem:[#allocation2 + $0xc0] sm:$0xff] %v614
        %629 = vst [vmem:[#allocation2 + $0xc8] sm:$0xff] %v615
        %630 = vst [vmem:[#allocation2 + $0xd0] sm:$0xff] %v616
        %631 = vst [vmem:[#allocation2 + $0xd8] sm:$0xff] %v617
        %632 = vrot.lane.b32.xlu0 %v472, 100
        %v633 = vpop.permute.xlu0 %632
        %634 = vrot.lane.b32.xlu0 %v473, 100
        %v635 = vpop.permute.xlu0 %634
        %636 = vrot.lane.b32.xlu0 %v474, 100
        %v637 = vpop.permute.xlu0 %636
        %638 = vrot.lane.b32.xlu0 %v475, 100
        %v639 = vpop.permute.xlu0 %638
        %640 = vrot.lane.b32.xlu0 %v476, 100
        %v641 = vpop.permute.xlu0 %640
        %642 = vrot.lane.b32.xlu0 %v477, 100
        %v643 = vpop.permute.xlu0 %642
        %644 = vrot.lane.b32.xlu0 %v478, 100
        %v645 = vpop.permute.xlu0 %644
        %646 = vrot.lane.b32.xlu0 %v479, 100
        %v647 = vpop.permute.xlu0 %646
        %vm648 = vcmask 818176
        %v649 = vsel %vm648, %v633, %v635
        %v650 = vsel %vm648, %v635, %v637
        %v651 = vsel %vm648, %v637, %v639
        %v652 = vsel %vm648, %v639, %v641
        %v653 = vsel %vm648, %v641, %v643
        %v654 = vsel %vm648, %v643, %v645
        %v655 = vsel %vm648, %v645, %v647
        %663 = vst [vmem:[#allocation2 + $0xe0] sm:$0xff] %v649
        %664 = vst [vmem:[#allocation2 + $0xe8] sm:$0xff] %v650
        %665 = vst [vmem:[#allocation2 + $0xf0] sm:$0xff] %v651
        %666 = vst [vmem:[#allocation2 + $0xf8] sm:$0xff] %v652
        %667 = vst [vmem:[#allocation2 + $0x100] sm:$0xff] %v653
        %668 = vst [vmem:[#allocation2 + $0x108] sm:$0xff] %v654
        %669 = vst [vmem:[#allocation2 + $0x110] sm:$0xff] %v655
        %670 = vrot.lane.b32.xlu0 %v472, 99
        %v671 = vpop.permute.xlu0 %670
        %672 = vrot.lane.b32.xlu0 %v473, 99
        %v673 = vpop.permute.xlu0 %672
        %674 = vrot.lane.b32.xlu0 %v474, 99
        %v675 = vpop.permute.xlu0 %674
        %676 = vrot.lane.b32.xlu0 %v475, 99
        %v677 = vpop.permute.xlu0 %676
        %678 = vrot.lane.b32.xlu0 %v476, 99
        %v679 = vpop.permute.xlu0 %678
        %680 = vrot.lane.b32.xlu0 %v477, 99
        %v681 = vpop.permute.xlu0 %680
        %682 = vrot.lane.b32.xlu0 %v478, 99
        %v683 = vpop.permute.xlu0 %682
        %684 = vrot.lane.b32.xlu0 %v479, 99
        %v685 = vpop.permute.xlu0 %684
        %vm686 = vcmask 809984
        %v687 = vsel %vm686, %v671, %v673
        %v688 = vsel %vm686, %v673, %v675
        %v689 = vsel %vm686, %v675, %v677
        %v690 = vsel %vm686, %v677, %v679
        %v691 = vsel %vm686, %v679, %v681
        %v692 = vsel %vm686, %v681, %v683
        %v693 = vsel %vm686, %v683, %v685
        %701 = vst [vmem:[#allocation2 + $0x118] sm:$0xff] %v687
        %702 = vst [vmem:[#allocation2 + $0x120] sm:$0xff] %v688
        %703 = vst [vmem:[#allocation2 + $0x128] sm:$0xff] %v689
        %704 = vst [vmem:[#allocation2 + $0x130] sm:$0xff] %v690
        %705 = vst [vmem:[#allocation2 + $0x138] sm:$0xff] %v691
        %706 = vst [vmem:[#allocation2 + $0x140] sm:$0xff] %v692
        %707 = vst [vmem:[#allocation2 + $0x148] sm:$0xff] %v693
        %708 = vrot.lane.b32.xlu0 %v472, 91
        %v709 = vpop.permute.xlu0 %708
        %710 = vrot.lane.b32.xlu0 %v473, 91
        %v711 = vpop.permute.xlu0 %710
        %712 = vrot.lane.b32.xlu0 %v474, 91
        %v713 = vpop.permute.xlu0 %712
        %714 = vrot.lane.b32.xlu0 %v475, 91
        %v715 = vpop.permute.xlu0 %714
        %716 = vrot.lane.b32.xlu0 %v476, 91
        %v717 = vpop.permute.xlu0 %716
        %718 = vrot.lane.b32.xlu0 %v477, 91
        %v719 = vpop.permute.xlu0 %718
        %720 = vrot.lane.b32.xlu0 %v478, 91
        %v721 = vpop.permute.xlu0 %720
        %722 = vrot.lane.b32.xlu0 %v479, 91
        %v723 = vpop.permute.xlu0 %722
        %vm724 = vcmask 744448
        %v725 = vsel %vm724, %v709, %v711
        %v726 = vsel %vm724, %v711, %v713
        %v727 = vsel %vm724, %v713, %v715
        %v728 = vsel %vm724, %v715, %v717
        %v729 = vsel %vm724, %v717, %v719
        %v730 = vsel %vm724, %v719, %v721
        %v731 = vsel %vm724, %v721, %v723
        %739 = vst [vmem:[#allocation2 + $0x150] sm:$0xff] %v725
        %740 = vst [vmem:[#allocation2 + $0x158] sm:$0xff] %v726
        %741 = vst [vmem:[#allocation2 + $0x160] sm:$0xff] %v727
        %742 = vst [vmem:[#allocation2 + $0x168] sm:$0xff] %v728
        %743 = vst [vmem:[#allocation2 + $0x170] sm:$0xff] %v729
        %744 = vst [vmem:[#allocation2 + $0x178] sm:$0xff] %v730
        %745 = vst [vmem:[#allocation2 + $0x180] sm:$0xff] %v731
        %746 = vrot.lane.b32.xlu0 %v472, 90
        %v747 = vpop.permute.xlu0 %746
        %748 = vrot.lane.b32.xlu0 %v473, 90
        %v749 = vpop.permute.xlu0 %748
        %750 = vrot.lane.b32.xlu0 %v474, 90
        %v751 = vpop.permute.xlu0 %750
        %752 = vrot.lane.b32.xlu0 %v475, 90
        %v753 = vpop.permute.xlu0 %752
        %754 = vrot.lane.b32.xlu0 %v476, 90
        %v755 = vpop.permute.xlu0 %754
        %756 = vrot.lane.b32.xlu0 %v477, 90
        %v757 = vpop.permute.xlu0 %756
        %758 = vrot.lane.b32.xlu0 %v478, 90
        %v759 = vpop.permute.xlu0 %758
        %760 = vrot.lane.b32.xlu0 %v479, 90
        %v761 = vpop.permute.xlu0 %760
        %vm762 = vcmask 736256
        %v763 = vsel %vm762, %v747, %v749
        %v764 = vsel %vm762, %v749, %v751
        %v765 = vsel %vm762, %v751, %v753
        %v766 = vsel %vm762, %v753, %v755
        %v767 = vsel %vm762, %v755, %v757
        %v768 = vsel %vm762, %v757, %v759
        %v769 = vsel %vm762, %v759, %v761
        %777 = vst [vmem:[#allocation2 + $0x188] sm:$0xff] %v763
        %778 = vst [vmem:[#allocation2 + $0x190] sm:$0xff] %v764
        %779 = vst [vmem:[#allocation2 + $0x198] sm:$0xff] %v765
        %780 = vst [vmem:[#allocation2 + $0x1a0] sm:$0xff] %v766
        %781 = vst [vmem:[#allocation2 + $0x1a8] sm:$0xff] %v767
        %782 = vst [vmem:[#allocation2 + $0x1b0] sm:$0xff] %v768
        %783 = vst [vmem:[#allocation2 + $0x1b8] sm:$0xff] %v769
        %784 = vrot.lane.b32.xlu0 %v472, 89
        %v785 = vpop.permute.xlu0 %784
        %786 = vrot.lane.b32.xlu0 %v473, 89
        %v787 = vpop.permute.xlu0 %786
        %788 = vrot.lane.b32.xlu0 %v474, 89
        %v789 = vpop.permute.xlu0 %788
        %790 = vrot.lane.b32.xlu0 %v475, 89
        %v791 = vpop.permute.xlu0 %790
        %792 = vrot.lane.b32.xlu0 %v476, 89
        %v793 = vpop.permute.xlu0 %792
        %794 = vrot.lane.b32.xlu0 %v477, 89
        %v795 = vpop.permute.xlu0 %794
        %796 = vrot.lane.b32.xlu0 %v478, 89
        %v797 = vpop.permute.xlu0 %796
        %798 = vrot.lane.b32.xlu0 %v479, 89
        %v799 = vpop.permute.xlu0 %798
        %vm800 = vcmask 728064
        %v801 = vsel %vm800, %v785, %v787
        %v802 = vsel %vm800, %v787, %v789
        %v803 = vsel %vm800, %v789, %v791
        %v804 = vsel %vm800, %v791, %v793
        %v805 = vsel %vm800, %v793, %v795
        %v806 = vsel %vm800, %v795, %v797
        %v807 = vsel %vm800, %v797, %v799
        %815 = vst [vmem:[#allocation2 + $0x1c0] sm:$0xff] %v801
        %816 = vst [vmem:[#allocation2 + $0x1c8] sm:$0xff] %v802
        %817 = vst [vmem:[#allocation2 + $0x1d0] sm:$0xff] %v803
        %818 = vst [vmem:[#allocation2 + $0x1d8] sm:$0xff] %v804
        %819 = vst [vmem:[#allocation2 + $0x1e0] sm:$0xff] %v805
        %820 = vst [vmem:[#allocation2 + $0x1e8] sm:$0xff] %v806
        %821 = vst [vmem:[#allocation2 + $0x1f0] sm:$0xff] %v807
        %822 = vrot.lane.b32.xlu0 %v472, 11
        %v823 = vpop.permute.xlu0 %822
        %824 = vrot.lane.b32.xlu0 %v473, 11
        %v825 = vpop.permute.xlu0 %824
        %826 = vrot.lane.b32.xlu0 %v474, 11
        %v827 = vpop.permute.xlu0 %826
        %828 = vrot.lane.b32.xlu0 %v475, 11
        %v829 = vpop.permute.xlu0 %828
        %830 = vrot.lane.b32.xlu0 %v476, 11
        %v831 = vpop.permute.xlu0 %830
        %832 = vrot.lane.b32.xlu0 %v477, 11
        %v833 = vpop.permute.xlu0 %832
        %834 = vrot.lane.b32.xlu0 %v478, 11
        %v835 = vpop.permute.xlu0 %834
        %836 = vrot.lane.b32.xlu0 %v479, 11
        %v837 = vpop.permute.xlu0 %836
        %vm838 = vcmask 89088
        %v839 = vsel %vm838, %v823, %v825
        %v840 = vsel %vm838, %v825, %v827
        %v841 = vsel %vm838, %v827, %v829
        %v842 = vsel %vm838, %v829, %v831
        %v843 = vsel %vm838, %v831, %v833
        %v844 = vsel %vm838, %v833, %v835
        %v845 = vsel %vm838, %v835, %v837
        %853 = vst [vmem:[#allocation2 + $0x1f8] sm:$0xff] %v839
        %854 = vst [vmem:[#allocation2 + $0x200] sm:$0xff] %v840
        %855 = vst [vmem:[#allocation2 + $0x208] sm:$0xff] %v841
        %856 = vst [vmem:[#allocation2 + $0x210] sm:$0xff] %v842
        %857 = vst [vmem:[#allocation2 + $0x218] sm:$0xff] %v843
        %858 = vst [vmem:[#allocation2 + $0x220] sm:$0xff] %v844
        %859 = vst [vmem:[#allocation2 + $0x228] sm:$0xff] %v845
        %860 = vrot.lane.b32.xlu0 %v472, 10
        %v861 = vpop.permute.xlu0 %860
        %862 = vrot.lane.b32.xlu0 %v473, 10
        %v863 = vpop.permute.xlu0 %862
        %864 = vrot.lane.b32.xlu0 %v474, 10
        %v865 = vpop.permute.xlu0 %864
        %866 = vrot.lane.b32.xlu0 %v475, 10
        %v867 = vpop.permute.xlu0 %866
        %868 = vrot.lane.b32.xlu0 %v476, 10
        %v869 = vpop.permute.xlu0 %868
        %870 = vrot.lane.b32.xlu0 %v477, 10
        %v871 = vpop.permute.xlu0 %870
        %872 = vrot.lane.b32.xlu0 %v478, 10
        %v873 = vpop.permute.xlu0 %872
        %874 = vrot.lane.b32.xlu0 %v479, 10
        %v875 = vpop.permute.xlu0 %874
        %vm876 = vcmask 80896
        %v877 = vsel %vm876, %v861, %v863
        %v878 = vsel %vm876, %v863, %v865
        %v879 = vsel %vm876, %v865, %v867
        %v880 = vsel %vm876, %v867, %v869
        %v881 = vsel %vm876, %v869, %v871
        %v882 = vsel %vm876, %v871, %v873
        %v883 = vsel %vm876, %v873, %v875
        %891 = vst [vmem:[#allocation2 + $0x230] sm:$0xff] %v877
        %892 = vst [vmem:[#allocation2 + $0x238] sm:$0xff] %v878
        %893 = vst [vmem:[#allocation2 + $0x240] sm:$0xff] %v879
        %894 = vst [vmem:[#allocation2 + $0x248] sm:$0xff] %v880
        %895 = vst [vmem:[#allocation2 + $0x250] sm:$0xff] %v881
        %896 = vst [vmem:[#allocation2 + $0x258] sm:$0xff] %v882
        %897 = vst [vmem:[#allocation2 + $0x260] sm:$0xff] %v883
        %898 = vrot.lane.b32.xlu0 %v472, 9
        %v899 = vpop.permute.xlu0 %898
        %900 = vrot.lane.b32.xlu0 %v473, 9
        %v901 = vpop.permute.xlu0 %900
        %902 = vrot.lane.b32.xlu0 %v474, 9
        %v903 = vpop.permute.xlu0 %902
        %904 = vrot.lane.b32.xlu0 %v475, 9
        %v905 = vpop.permute.xlu0 %904
        %906 = vrot.lane.b32.xlu0 %v476, 9
        %v907 = vpop.permute.xlu0 %906
        %908 = vrot.lane.b32.xlu0 %v477, 9
        %v909 = vpop.permute.xlu0 %908
        %910 = vrot.lane.b32.xlu0 %v478, 9
        %v911 = vpop.permute.xlu0 %910
        %912 = vrot.lane.b32.xlu0 %v479, 9
        %v913 = vpop.permute.xlu0 %912
        %vm914 = vcmask 72704
        %v915 = vsel %vm914, %v899, %v901
        %v916 = vsel %vm914, %v901, %v903
        %v917 = vsel %vm914, %v903, %v905
        %v918 = vsel %vm914, %v905, %v907
        %v919 = vsel %vm914, %v907, %v909
        %v920 = vsel %vm914, %v909, %v911
        %v921 = vsel %vm914, %v911, %v913
        %929 = vst [vmem:[#allocation2 + $0x268] sm:$0xff] %v915
        %930 = vst [vmem:[#allocation2 + $0x270] sm:$0xff] %v916
        %931 = vst [vmem:[#allocation2 + $0x278] sm:$0xff] %v917
        %932 = vst [vmem:[#allocation2 + $0x280] sm:$0xff] %v918
        %933 = vst [vmem:[#allocation2 + $0x288] sm:$0xff] %v919
        %934 = vst [vmem:[#allocation2 + $0x290] sm:$0xff] %v920
        %935 = vst [vmem:[#allocation2 + $0x298] sm:$0xff] %v921
        %936 = vrot.lane.b32.xlu0 %v472, 1
        %v937 = vpop.permute.xlu0 %936
        %938 = vrot.lane.b32.xlu0 %v473, 1
        %v939 = vpop.permute.xlu0 %938
        %940 = vrot.lane.b32.xlu0 %v474, 1
        %v941 = vpop.permute.xlu0 %940
        %942 = vrot.lane.b32.xlu0 %v475, 1
        %v943 = vpop.permute.xlu0 %942
        %944 = vrot.lane.b32.xlu0 %v476, 1
        %v945 = vpop.permute.xlu0 %944
        %946 = vrot.lane.b32.xlu0 %v477, 1
        %v947 = vpop.permute.xlu0 %946
        %948 = vrot.lane.b32.xlu0 %v478, 1
        %v949 = vpop.permute.xlu0 %948
        %950 = vrot.lane.b32.xlu0 %v479, 1
        %v951 = vpop.permute.xlu0 %950
        %vm952 = vcmask 7168
        %v953 = vsel %vm952, %v937, %v939
        %v954 = vsel %vm952, %v939, %v941
        %v955 = vsel %vm952, %v941, %v943
        %v956 = vsel %vm952, %v943, %v945
        %v957 = vsel %vm952, %v945, %v947
        %v958 = vsel %vm952, %v947, %v949
        %v959 = vsel %vm952, %v949, %v951
        %967 = vst [vmem:[#allocation2 + $0x2a0] sm:$0xff] %v953
        %968 = vst [vmem:[#allocation2 + $0x2a8] sm:$0xff] %v954
        %969 = vst [vmem:[#allocation2 + $0x2b0] sm:$0xff] %v955
        %970 = vst [vmem:[#allocation2 + $0x2b8] sm:$0xff] %v956
        %971 = vst [vmem:[#allocation2 + $0x2c0] sm:$0xff] %v957
        %972 = vst [vmem:[#allocation2 + $0x2c8] sm:$0xff] %v958
        %973 = vst [vmem:[#allocation2 + $0x2d0] sm:$0xff] %v959
        %981 = vst [vmem:[#allocation2 + $0x2d8] sm:$0xff] %v473
        %982 = vst [vmem:[#allocation2 + $0x2e0] sm:$0xff] %v474
        %983 = vst [vmem:[#allocation2 + $0x2e8] sm:$0xff] %v475
        %984 = vst [vmem:[#allocation2 + $0x2f0] sm:$0xff] %v476
        %985 = vst [vmem:[#allocation2 + $0x2f8] sm:$0xff] %v477
        %986 = vst [vmem:[#allocation2 + $0x300] sm:$0xff] %v478
        %987 = vst [vmem:[#allocation2 + $0x308] sm:$0xff] %v479
        %v990 = vunpack.c.l.b16 %v442
        %v991 = vunpack.c.l.b16 %v447
        %v992 = vpack.c.b16 %v991, %v990
        %993 = vrot.lane.b32.xlu0 %v473, 127
        %v994 = vpop.permute.xlu0 %993
        %995 = vrot.lane.b32.xlu0 %v474, 127
        %v996 = vpop.permute.xlu0 %995
        %997 = vrot.lane.b32.xlu0 %v475, 127
        %v998 = vpop.permute.xlu0 %997
        %999 = vrot.lane.b32.xlu0 %v476, 127
        %v1000 = vpop.permute.xlu0 %999
        %1001 = vrot.lane.b32.xlu0 %v477, 127
        %v1002 = vpop.permute.xlu0 %1001
        %1003 = vrot.lane.b32.xlu0 %v478, 127
        %v1004 = vpop.permute.xlu0 %1003
        %1005 = vrot.lane.b32.xlu0 %v479, 127
        %v1006 = vpop.permute.xlu0 %1005
        %1007 = vrot.lane.b32.xlu0 %v992, 127
        %v1008 = vpop.permute.xlu0 %1007
        %vm1009 = vcmask 1039360
        %v1010 = vsel %vm1009, %v994, %v996
        %v1011 = vsel %vm1009, %v996, %v998
        %v1012 = vsel %vm1009, %v998, %v1000
        %v1013 = vsel %vm1009, %v1000, %v1002
        %v1014 = vsel %vm1009, %v1002, %v1004
        %v1015 = vsel %vm1009, %v1004, %v1006
        %v1016 = vsel %vm1009, %v1006, %v1008
        %1024 = vst [vmem:[#allocation2 + $0x310] sm:$0xff] %v1010
        %1025 = vst [vmem:[#allocation2 + $0x318] sm:$0xff] %v1011
        %1026 = vst [vmem:[#allocation2 + $0x320] sm:$0xff] %v1012
        %1027 = vst [vmem:[#allocation2 + $0x328] sm:$0xff] %v1013
        %1028 = vst [vmem:[#allocation2 + $0x330] sm:$0xff] %v1014
        %1029 = vst [vmem:[#allocation2 + $0x338] sm:$0xff] %v1015
        %1030 = vst [vmem:[#allocation2 + $0x340] sm:$0xff] %v1016
        %1031 = vrot.lane.b32.xlu0 %v473, 119
        %v1032 = vpop.permute.xlu0 %1031
        %1033 = vrot.lane.b32.xlu0 %v474, 119
        %v1034 = vpop.permute.xlu0 %1033
        %1035 = vrot.lane.b32.xlu0 %v475, 119
        %v1036 = vpop.permute.xlu0 %1035
        %1037 = vrot.lane.b32.xlu0 %v476, 119
        %v1038 = vpop.permute.xlu0 %1037
        %1039 = vrot.lane.b32.xlu0 %v477, 119
        %v1040 = vpop.permute.xlu0 %1039
        %1041 = vrot.lane.b32.xlu0 %v478, 119
        %v1042 = vpop.permute.xlu0 %1041
        %1043 = vrot.lane.b32.xlu0 %v479, 119
        %v1044 = vpop.permute.xlu0 %1043
        %1045 = vrot.lane.b32.xlu0 %v992, 119
        %v1046 = vpop.permute.xlu0 %1045
        %vm1047 = vcmask 973824
        %v1048 = vsel %vm1047, %v1032, %v1034
        %v1049 = vsel %vm1047, %v1034, %v1036
        %v1050 = vsel %vm1047, %v1036, %v1038
        %v1051 = vsel %vm1047, %v1038, %v1040
        %v1052 = vsel %vm1047, %v1040, %v1042
        %v1053 = vsel %vm1047, %v1042, %v1044
        %v1054 = vsel %vm1047, %v1044, %v1046
        %1062 = vst [vmem:[#allocation2 + $0x348] sm:$0xff] %v1048
        %1063 = vst [vmem:[#allocation2 + $0x350] sm:$0xff] %v1049
        %1064 = vst [vmem:[#allocation2 + $0x358] sm:$0xff] %v1050
        %1065 = vst [vmem:[#allocation2 + $0x360] sm:$0xff] %v1051
        %1066 = vst [vmem:[#allocation2 + $0x368] sm:$0xff] %v1052
        %1067 = vst [vmem:[#allocation2 + $0x370] sm:$0xff] %v1053
        %1068 = vst [vmem:[#allocation2 + $0x378] sm:$0xff] %v1054
        %1069 = vrot.lane.b32.xlu0 %v473, 118
        %v1070 = vpop.permute.xlu0 %1069
        %1071 = vrot.lane.b32.xlu0 %v474, 118
        %v1072 = vpop.permute.xlu0 %1071
        %1073 = vrot.lane.b32.xlu0 %v475, 118
        %v1074 = vpop.permute.xlu0 %1073
        %1075 = vrot.lane.b32.xlu0 %v476, 118
        %v1076 = vpop.permute.xlu0 %1075
        %1077 = vrot.lane.b32.xlu0 %v477, 118
        %v1078 = vpop.permute.xlu0 %1077
        %1079 = vrot.lane.b32.xlu0 %v478, 118
        %v1080 = vpop.permute.xlu0 %1079
        %1081 = vrot.lane.b32.xlu0 %v479, 118
        %v1082 = vpop.permute.xlu0 %1081
        %1083 = vrot.lane.b32.xlu0 %v992, 118
        %v1084 = vpop.permute.xlu0 %1083
        %vm1085 = vcmask 965632
        %v1086 = vsel %vm1085, %v1070, %v1072
        %v1087 = vsel %vm1085, %v1072, %v1074
        %v1088 = vsel %vm1085, %v1074, %v1076
        %v1089 = vsel %vm1085, %v1076, %v1078
        %v1090 = vsel %vm1085, %v1078, %v1080
        %v1091 = vsel %vm1085, %v1080, %v1082
        %v1092 = vsel %vm1085, %v1082, %v1084
        %1100 = vst [vmem:[#allocation2 + $0x380] sm:$0xff] %v1086
        %1101 = vst [vmem:[#allocation2 + $0x388] sm:$0xff] %v1087
        %1102 = vst [vmem:[#allocation2 + $0x390] sm:$0xff] %v1088
        %1103 = vst [vmem:[#allocation2 + $0x398] sm:$0xff] %v1089
        %1104 = vst [vmem:[#allocation2 + $0x3a0] sm:$0xff] %v1090
        %1105 = vst [vmem:[#allocation2 + $0x3a8] sm:$0xff] %v1091
        %1106 = vst [vmem:[#allocation2 + $0x3b0] sm:$0xff] %v1092
        %1107 = vrot.lane.b32.xlu0 %v473, 117
        %v1108 = vpop.permute.xlu0 %1107
        %1109 = vrot.lane.b32.xlu0 %v474, 117
        %v1110 = vpop.permute.xlu0 %1109
        %1111 = vrot.lane.b32.xlu0 %v475, 117
        %v1112 = vpop.permute.xlu0 %1111
        %1113 = vrot.lane.b32.xlu0 %v476, 117
        %v1114 = vpop.permute.xlu0 %1113
        %1115 = vrot.lane.b32.xlu0 %v477, 117
        %v1116 = vpop.permute.xlu0 %1115
        %1117 = vrot.lane.b32.xlu0 %v478, 117
        %v1118 = vpop.permute.xlu0 %1117
        %1119 = vrot.lane.b32.xlu0 %v479, 117
        %v1120 = vpop.permute.xlu0 %1119
        %1121 = vrot.lane.b32.xlu0 %v992, 117
        %v1122 = vpop.permute.xlu0 %1121
        %vm1123 = vcmask 957440
        %v1124 = vsel %vm1123, %v1108, %v1110
        %v1125 = vsel %vm1123, %v1110, %v1112
        %v1126 = vsel %vm1123, %v1112, %v1114
        %v1127 = vsel %vm1123, %v1114, %v1116
        %v1128 = vsel %vm1123, %v1116, %v1118
        %v1129 = vsel %vm1123, %v1118, %v1120
        %v1130 = vsel %vm1123, %v1120, %v1122
        %1138 = vst [vmem:[#allocation2 + $0x3b8] sm:$0xff] %v1124
        %1139 = vst [vmem:[#allocation2 + $0x3c0] sm:$0xff] %v1125
        %1140 = vst [vmem:[#allocation2 + $0x3c8] sm:$0xff] %v1126
        %1141 = vst [vmem:[#allocation2 + $0x3d0] sm:$0xff] %v1127
        %1142 = vst [vmem:[#allocation2 + $0x3d8] sm:$0xff] %v1128
        %1143 = vst [vmem:[#allocation2 + $0x3e0] sm:$0xff] %v1129
        %1144 = vst [vmem:[#allocation2 + $0x3e8] sm:$0xff] %v1130
        %1145 = vrot.lane.b32.xlu0 %v473, 39
        %v1146 = vpop.permute.xlu0 %1145
        %1147 = vrot.lane.b32.xlu0 %v474, 39
        %v1148 = vpop.permute.xlu0 %1147
        %1149 = vrot.lane.b32.xlu0 %v475, 39
        %v1150 = vpop.permute.xlu0 %1149
        %1151 = vrot.lane.b32.xlu0 %v476, 39
        %v1152 = vpop.permute.xlu0 %1151
        %1153 = vrot.lane.b32.xlu0 %v477, 39
        %v1154 = vpop.permute.xlu0 %1153
        %1155 = vrot.lane.b32.xlu0 %v478, 39
        %v1156 = vpop.permute.xlu0 %1155
        %1157 = vrot.lane.b32.xlu0 %v479, 39
        %v1158 = vpop.permute.xlu0 %1157
        %1159 = vrot.lane.b32.xlu0 %v992, 39
        %v1160 = vpop.permute.xlu0 %1159
        %vm1161 = vcmask 318464
        %v1162 = vsel %vm1161, %v1146, %v1148
        %v1163 = vsel %vm1161, %v1148, %v1150
        %v1164 = vsel %vm1161, %v1150, %v1152
        %v1165 = vsel %vm1161, %v1152, %v1154
        %v1166 = vsel %vm1161, %v1154, %v1156
        %v1167 = vsel %vm1161, %v1156, %v1158
        %v1168 = vsel %vm1161, %v1158, %v1160
        %1176 = vst [vmem:[#allocation2 + $0x3f0] sm:$0xff] %v1162
        %1177 = vst [vmem:[#allocation2 + $0x3f8] sm:$0xff] %v1163
        %1178 = vst [vmem:[#allocation2 + $0x400] sm:$0xff] %v1164
        %1179 = vst [vmem:[#allocation2 + $0x408] sm:$0xff] %v1165
        %1180 = vst [vmem:[#allocation2 + $0x410] sm:$0xff] %v1166
        %1181 = vst [vmem:[#allocation2 + $0x418] sm:$0xff] %v1167
        %1182 = vst [vmem:[#allocation2 + $0x420] sm:$0xff] %v1168
        %1183 = vrot.lane.b32.xlu0 %v473, 38
        %v1184 = vpop.permute.xlu0 %1183
        %1185 = vrot.lane.b32.xlu0 %v474, 38
        %v1186 = vpop.permute.xlu0 %1185
        %1187 = vrot.lane.b32.xlu0 %v475, 38
        %v1188 = vpop.permute.xlu0 %1187
        %1189 = vrot.lane.b32.xlu0 %v476, 38
        %v1190 = vpop.permute.xlu0 %1189
        %1191 = vrot.lane.b32.xlu0 %v477, 38
        %v1192 = vpop.permute.xlu0 %1191
        %1193 = vrot.lane.b32.xlu0 %v478, 38
        %v1194 = vpop.permute.xlu0 %1193
        %1195 = vrot.lane.b32.xlu0 %v479, 38
        %v1196 = vpop.permute.xlu0 %1195
        %1197 = vrot.lane.b32.xlu0 %v992, 38
        %v1198 = vpop.permute.xlu0 %1197
        %vm1199 = vcmask 310272
        %v1200 = vsel %vm1199, %v1184, %v1186
        %v1201 = vsel %vm1199, %v1186, %v1188
        %v1202 = vsel %vm1199, %v1188, %v1190
        %v1203 = vsel %vm1199, %v1190, %v1192
        %v1204 = vsel %vm1199, %v1192, %v1194
        %v1205 = vsel %vm1199, %v1194, %v1196
        %v1206 = vsel %vm1199, %v1196, %v1198
        %1214 = vst [vmem:[#allocation2 + $0x428] sm:$0xff] %v1200
        %1215 = vst [vmem:[#allocation2 + $0x430] sm:$0xff] %v1201
        %1216 = vst [vmem:[#allocation2 + $0x438] sm:$0xff] %v1202
        %1217 = vst [vmem:[#allocation2 + $0x440] sm:$0xff] %v1203
        %1218 = vst [vmem:[#allocation2 + $0x448] sm:$0xff] %v1204
        %1219 = vst [vmem:[#allocation2 + $0x450] sm:$0xff] %v1205
        %1220 = vst [vmem:[#allocation2 + $0x458] sm:$0xff] %v1206
        %1221 = vrot.lane.b32.xlu0 %v473, 37
        %v1222 = vpop.permute.xlu0 %1221
        %1223 = vrot.lane.b32.xlu0 %v474, 37
        %v1224 = vpop.permute.xlu0 %1223
        %1225 = vrot.lane.b32.xlu0 %v475, 37
        %v1226 = vpop.permute.xlu0 %1225
        %1227 = vrot.lane.b32.xlu0 %v476, 37
        %v1228 = vpop.permute.xlu0 %1227
        %1229 = vrot.lane.b32.xlu0 %v477, 37
        %v1230 = vpop.permute.xlu0 %1229
        %1231 = vrot.lane.b32.xlu0 %v478, 37
        %v1232 = vpop.permute.xlu0 %1231
        %1233 = vrot.lane.b32.xlu0 %v479, 37
        %v1234 = vpop.permute.xlu0 %1233
        %1235 = vrot.lane.b32.xlu0 %v992, 37
        %v1236 = vpop.permute.xlu0 %1235
        %vm1237 = vcmask 302080
        %v1238 = vsel %vm1237, %v1222, %v1224
        %v1239 = vsel %vm1237, %v1224, %v1226
        %v1240 = vsel %vm1237, %v1226, %v1228
        %v1241 = vsel %vm1237, %v1228, %v1230
        %v1242 = vsel %vm1237, %v1230, %v1232
        %v1243 = vsel %vm1237, %v1232, %v1234
        %v1244 = vsel %vm1237, %v1234, %v1236
        %1252 = vst [vmem:[#allocation2 + $0x460] sm:$0xff] %v1238
        %1253 = vst [vmem:[#allocation2 + $0x468] sm:$0xff] %v1239
        %1254 = vst [vmem:[#allocation2 + $0x470] sm:$0xff] %v1240
        %1255 = vst [vmem:[#allocation2 + $0x478] sm:$0xff] %v1241
        %1256 = vst [vmem:[#allocation2 + $0x480] sm:$0xff] %v1242
        %1257 = vst [vmem:[#allocation2 + $0x488] sm:$0xff] %v1243
        %1258 = vst [vmem:[#allocation2 + $0x490] sm:$0xff] %v1244
        %1259 = vrot.lane.b32.xlu0 %v473, 29
        %v1260 = vpop.permute.xlu0 %1259
        %1261 = vrot.lane.b32.xlu0 %v474, 29
        %v1262 = vpop.permute.xlu0 %1261
        %1263 = vrot.lane.b32.xlu0 %v475, 29
        %v1264 = vpop.permute.xlu0 %1263
        %1265 = vrot.lane.b32.xlu0 %v476, 29
        %v1266 = vpop.permute.xlu0 %1265
        %1267 = vrot.lane.b32.xlu0 %v477, 29
        %v1268 = vpop.permute.xlu0 %1267
        %1269 = vrot.lane.b32.xlu0 %v478, 29
        %v1270 = vpop.permute.xlu0 %1269
        %1271 = vrot.lane.b32.xlu0 %v479, 29
        %v1272 = vpop.permute.xlu0 %1271
        %1273 = vrot.lane.b32.xlu0 %v992, 29
        %v1274 = vpop.permute.xlu0 %1273
        %vm1275 = vcmask 236544
        %v1276 = vsel %vm1275, %v1260, %v1262
        %v1277 = vsel %vm1275, %v1262, %v1264
        %v1278 = vsel %vm1275, %v1264, %v1266
        %v1279 = vsel %vm1275, %v1266, %v1268
        %v1280 = vsel %vm1275, %v1268, %v1270
        %v1281 = vsel %vm1275, %v1270, %v1272
        %v1282 = vsel %vm1275, %v1272, %v1274
        %1290 = vst [vmem:[#allocation2 + $0x498] sm:$0xff] %v1276
        %1291 = vst [vmem:[#allocation2 + $0x4a0] sm:$0xff] %v1277
        %1292 = vst [vmem:[#allocation2 + $0x4a8] sm:$0xff] %v1278
        %1293 = vst [vmem:[#allocation2 + $0x4b0] sm:$0xff] %v1279
        %1294 = vst [vmem:[#allocation2 + $0x4b8] sm:$0xff] %v1280
        %1295 = vst [vmem:[#allocation2 + $0x4c0] sm:$0xff] %v1281
        %1296 = vst [vmem:[#allocation2 + $0x4c8] sm:$0xff] %v1282
        %1297 = vrot.lane.b32.xlu0 %v473, 28
        %v1298 = vpop.permute.xlu0 %1297
        %1299 = vrot.lane.b32.xlu0 %v474, 28
        %v1300 = vpop.permute.xlu0 %1299
        %1301 = vrot.lane.b32.xlu0 %v475, 28
        %v1302 = vpop.permute.xlu0 %1301
        %1303 = vrot.lane.b32.xlu0 %v476, 28
        %v1304 = vpop.permute.xlu0 %1303
        %1305 = vrot.lane.b32.xlu0 %v477, 28
        %v1306 = vpop.permute.xlu0 %1305
        %1307 = vrot.lane.b32.xlu0 %v478, 28
        %v1308 = vpop.permute.xlu0 %1307
        %1309 = vrot.lane.b32.xlu0 %v479, 28
        %v1310 = vpop.permute.xlu0 %1309
        %1311 = vrot.lane.b32.xlu0 %v992, 28
        %v1312 = vpop.permute.xlu0 %1311
        %vm1313 = vcmask 228352
        %v1314 = vsel %vm1313, %v1298, %v1300
        %v1315 = vsel %vm1313, %v1300, %v1302
        %v1316 = vsel %vm1313, %v1302, %v1304
        %v1317 = vsel %vm1313, %v1304, %v1306
        %v1318 = vsel %vm1313, %v1306, %v1308
        %v1319 = vsel %vm1313, %v1308, %v1310
        %v1320 = vsel %vm1313, %v1310, %v1312
        %1328 = vst [vmem:[#allocation2 + $0x4d0] sm:$0xff] %v1314
        %1329 = vst [vmem:[#allocation2 + $0x4d8] sm:$0xff] %v1315
        %1330 = vst [vmem:[#allocation2 + $0x4e0] sm:$0xff] %v1316
        %1331 = vst [vmem:[#allocation2 + $0x4e8] sm:$0xff] %v1317
        %1332 = vst [vmem:[#allocation2 + $0x4f0] sm:$0xff] %v1318
        %1333 = vst [vmem:[#allocation2 + $0x4f8] sm:$0xff] %v1319
        %1334 = vst [vmem:[#allocation2 + $0x500] sm:$0xff] %v1320
        %1335 = vrot.lane.b32.xlu0 %v473, 27
        %v1336 = vpop.permute.xlu0 %1335
        %1337 = vrot.lane.b32.xlu0 %v474, 27
        %v1338 = vpop.permute.xlu0 %1337
        %1339 = vrot.lane.b32.xlu0 %v475, 27
        %v1340 = vpop.permute.xlu0 %1339
        %1341 = vrot.lane.b32.xlu0 %v476, 27
        %v1342 = vpop.permute.xlu0 %1341
        %1343 = vrot.lane.b32.xlu0 %v477, 27
        %v1344 = vpop.permute.xlu0 %1343
        %1345 = vrot.lane.b32.xlu0 %v478, 27
        %v1346 = vpop.permute.xlu0 %1345
        %1347 = vrot.lane.b32.xlu0 %v479, 27
        %v1348 = vpop.permute.xlu0 %1347
        %1349 = vrot.lane.b32.xlu0 %v992, 27
        %v1350 = vpop.permute.xlu0 %1349
        %vm1351 = vcmask 220160
        %v1352 = vsel %vm1351, %v1336, %v1338
        %v1353 = vsel %vm1351, %v1338, %v1340
        %v1354 = vsel %vm1351, %v1340, %v1342
        %v1355 = vsel %vm1351, %v1342, %v1344
        %v1356 = vsel %vm1351, %v1344, %v1346
        %v1357 = vsel %vm1351, %v1346, %v1348
        %v1358 = vsel %vm1351, %v1348, %v1350
        %1366 = vst [vmem:[#allocation2 + $0x508] sm:$0xff] %v1352
        %1367 = vst [vmem:[#allocation2 + $0x510] sm:$0xff] %v1353
        %1368 = vst [vmem:[#allocation2 + $0x518] sm:$0xff] %v1354
        %1369 = vst [vmem:[#allocation2 + $0x520] sm:$0xff] %v1355
        %1370 = vst [vmem:[#allocation2 + $0x528] sm:$0xff] %v1356
        %1371 = vst [vmem:[#allocation2 + $0x530] sm:$0xff] %v1357
        %1372 = vst [vmem:[#allocation2 + $0x538] sm:$0xff] %v1358
        %1373 = vrot.lane.b32.xlu0 %v473, 19
        %v1374 = vpop.permute.xlu0 %1373
        %1375 = vrot.lane.b32.xlu0 %v474, 19
        %v1376 = vpop.permute.xlu0 %1375
        %1377 = vrot.lane.b32.xlu0 %v475, 19
        %v1378 = vpop.permute.xlu0 %1377
        %1379 = vrot.lane.b32.xlu0 %v476, 19
        %v1380 = vpop.permute.xlu0 %1379
        %1381 = vrot.lane.b32.xlu0 %v477, 19
        %v1382 = vpop.permute.xlu0 %1381
        %1383 = vrot.lane.b32.xlu0 %v478, 19
        %v1384 = vpop.permute.xlu0 %1383
        %1385 = vrot.lane.b32.xlu0 %v479, 19
        %v1386 = vpop.permute.xlu0 %1385
        %1387 = vrot.lane.b32.xlu0 %v992, 19
        %v1388 = vpop.permute.xlu0 %1387
        %vm1389 = vcmask 154624
        %v1390 = vsel %vm1389, %v1374, %v1376
        %v1391 = vsel %vm1389, %v1376, %v1378
        %v1392 = vsel %vm1389, %v1378, %v1380
        %v1393 = vsel %vm1389, %v1380, %v1382
        %v1394 = vsel %vm1389, %v1382, %v1384
        %v1395 = vsel %vm1389, %v1384, %v1386
        %v1396 = vsel %vm1389, %v1386, %v1388
        %1404 = vst [vmem:[#allocation2 + $0x540] sm:$0xff] %v1390
        %1405 = vst [vmem:[#allocation2 + $0x548] sm:$0xff] %v1391
        %1406 = vst [vmem:[#allocation2 + $0x550] sm:$0xff] %v1392
        %1407 = vst [vmem:[#allocation2 + $0x558] sm:$0xff] %v1393
        %1408 = vst [vmem:[#allocation2 + $0x560] sm:$0xff] %v1394
        %1409 = vst [vmem:[#allocation2 + $0x568] sm:$0xff] %v1395
        %1410 = vst [vmem:[#allocation2 + $0x570] sm:$0xff] %v1396
        %1411 = vrot.lane.b32.xlu0 %v473, 18
        %v1412 = vpop.permute.xlu0 %1411
        %1413 = vrot.lane.b32.xlu0 %v474, 18
        %v1414 = vpop.permute.xlu0 %1413
        %1415 = vrot.lane.b32.xlu0 %v475, 18
        %v1416 = vpop.permute.xlu0 %1415
        %1417 = vrot.lane.b32.xlu0 %v476, 18
        %v1418 = vpop.permute.xlu0 %1417
        %1419 = vrot.lane.b32.xlu0 %v477, 18
        %v1420 = vpop.permute.xlu0 %1419
        %1421 = vrot.lane.b32.xlu0 %v478, 18
        %v1422 = vpop.permute.xlu0 %1421
        %1423 = vrot.lane.b32.xlu0 %v479, 18
        %v1424 = vpop.permute.xlu0 %1423
        %1425 = vrot.lane.b32.xlu0 %v992, 18
        %v1426 = vpop.permute.xlu0 %1425
        %vm1427 = vcmask 146432
        %v1428 = vsel %vm1427, %v1412, %v1414
        %v1429 = vsel %vm1427, %v1414, %v1416
        %v1430 = vsel %vm1427, %v1416, %v1418
        %v1431 = vsel %vm1427, %v1418, %v1420
        %v1432 = vsel %vm1427, %v1420, %v1422
        %v1433 = vsel %vm1427, %v1422, %v1424
        %v1434 = vsel %vm1427, %v1424, %v1426
        %1442 = vst [vmem:[#allocation2 + $0x578] sm:$0xff] %v1428
        %1443 = vst [vmem:[#allocation2 + $0x580] sm:$0xff] %v1429
        %1444 = vst [vmem:[#allocation2 + $0x588] sm:$0xff] %v1430
        %1445 = vst [vmem:[#allocation2 + $0x590] sm:$0xff] %v1431
        %1446 = vst [vmem:[#allocation2 + $0x598] sm:$0xff] %v1432
        %1447 = vst [vmem:[#allocation2 + $0x5a0] sm:$0xff] %v1433
        %1448 = vst [vmem:[#allocation2 + $0x5a8] sm:$0xff] %v1434
        %1449 = vrot.lane.b32.xlu0 %v473, 17
        %v1450 = vpop.permute.xlu0 %1449
        %1451 = vrot.lane.b32.xlu0 %v474, 17
        %v1452 = vpop.permute.xlu0 %1451
        %1453 = vrot.lane.b32.xlu0 %v475, 17
        %v1454 = vpop.permute.xlu0 %1453
        %1455 = vrot.lane.b32.xlu0 %v476, 17
        %v1456 = vpop.permute.xlu0 %1455
        %1457 = vrot.lane.b32.xlu0 %v477, 17
        %v1458 = vpop.permute.xlu0 %1457
        %1459 = vrot.lane.b32.xlu0 %v478, 17
        %v1460 = vpop.permute.xlu0 %1459
        %1461 = vrot.lane.b32.xlu0 %v479, 17
        %v1462 = vpop.permute.xlu0 %1461
        %1463 = vrot.lane.b32.xlu0 %v992, 17
        %v1464 = vpop.permute.xlu0 %1463
        %vm1465 = vcmask 138240
        %v1466 = vsel %vm1465, %v1450, %v1452
        %v1467 = vsel %vm1465, %v1452, %v1454
        %v1468 = vsel %vm1465, %v1454, %v1456
        %v1469 = vsel %vm1465, %v1456, %v1458
        %v1470 = vsel %vm1465, %v1458, %v1460
        %v1471 = vsel %vm1465, %v1460, %v1462
        %v1472 = vsel %vm1465, %v1462, %v1464
        %1480 = vst [vmem:[#allocation2 + $0x5b0] sm:$0xff] %v1466
        %1481 = vst [vmem:[#allocation2 + $0x5b8] sm:$0xff] %v1467
        %1482 = vst [vmem:[#allocation2 + $0x5c0] sm:$0xff] %v1468
        %1483 = vst [vmem:[#allocation2 + $0x5c8] sm:$0xff] %v1469
        %1484 = vst [vmem:[#allocation2 + $0x5d0] sm:$0xff] %v1470
        %1485 = vst [vmem:[#allocation2 + $0x5d8] sm:$0xff] %v1471
        %1486 = vst [vmem:[#allocation2 + $0x5e0] sm:$0xff] %v1472
        %v1487 = vld [vmem:[%s1] sm:$0xff]
        %v1488 = vld [vmem:[%s1 + $0x8] sm:$0xff]
        %v1489 = vld [vmem:[%s1 + $0x10] sm:$0xff]
        %v1490 = vld [vmem:[%s1 + $0x18] sm:$0xff]
        %v1491 = vld [vmem:[#allocation2] sm:$0xff]
        %v1492 = vld [vmem:[#allocation2 + $0x8] sm:$0xff]
        %v1493 = vld [vmem:[#allocation2 + $0x10] sm:$0xff]
        %v1494 = vld [vmem:[#allocation2 + $0x18] sm:$0xff]
        %v1495 = vld [vmem:[#allocation2 + $0x20] sm:$0xff]
        %v1496 = vld [vmem:[#allocation2 + $0x28] sm:$0xff]
        %v1497 = vld [vmem:[#allocation2 + $0x30] sm:$0xff]
        %v1498 = vld [vmem:[#allocation2 + $0x38] sm:$0xff]
        %v1499 = vld [vmem:[#allocation2 + $0x40] sm:$0xff]
        %v1500 = vld [vmem:[#allocation2 + $0x48] sm:$0xff]
        %v1501 = vld [vmem:[#allocation2 + $0x50] sm:$0xff]
        %v1502 = vld [vmem:[#allocation2 + $0x58] sm:$0xff]
        %v1503 = vld [vmem:[#allocation2 + $0x60] sm:$0xff]
        %v1504 = vld [vmem:[#allocation2 + $0x68] sm:$0xff]
        %v1505 = vld [vmem:[#allocation2 + $0x70] sm:$0xff]
        %v1506 = vld [vmem:[#allocation2 + $0x78] sm:$0xff]
        %v1507 = vld [vmem:[#allocation2 + $0x80] sm:$0xff]
        %v1508 = vld [vmem:[#allocation2 + $0x88] sm:$0xff]
        %v1509 = vld [vmem:[#allocation2 + $0x90] sm:$0xff]
        %v1510 = vld [vmem:[#allocation2 + $0x98] sm:$0xff]
        %v1511 = vld [vmem:[#allocation2 + $0xa0] sm:$0xff]
        %v1512 = vld [vmem:[#allocation2 + $0xa8] sm:$0xff]
        %v1513 = vld [vmem:[#allocation2 + $0xb0] sm:$0xff]
        %v1514 = vld [vmem:[#allocation2 + $0xb8] sm:$0xff]
        %v1515 = vld [vmem:[#allocation2 + $0xc0] sm:$0xff]
        %v1516 = vld [vmem:[#allocation2 + $0xc8] sm:$0xff]
        %v1517 = vld [vmem:[#allocation2 + $0xd0] sm:$0xff]
        %v1518 = vld [vmem:[#allocation2 + $0xd8] sm:$0xff]
        %v1519 = vld [vmem:[#allocation2 + $0xe0] sm:$0xff]
        %v1520 = vld [vmem:[#allocation2 + $0xe8] sm:$0xff]
        %v1521 = vld [vmem:[#allocation2 + $0xf0] sm:$0xff]
        %v1522 = vld [vmem:[#allocation2 + $0xf8] sm:$0xff]
        %v1523 = vld [vmem:[#allocation2 + $0x100] sm:$0xff]
        %v1524 = vld [vmem:[#allocation2 + $0x108] sm:$0xff]
        %v1525 = vld [vmem:[#allocation2 + $0x110] sm:$0xff]
        %v1526 = vld [vmem:[#allocation2 + $0x118] sm:$0xff]
        %v1527 = vld [vmem:[#allocation2 + $0x120] sm:$0xff]
        %v1528 = vld [vmem:[#allocation2 + $0x128] sm:$0xff]
        %v1529 = vld [vmem:[#allocation2 + $0x130] sm:$0xff]
        %v1530 = vld [vmem:[#allocation2 + $0x138] sm:$0xff]
        %v1531 = vld [vmem:[#allocation2 + $0x140] sm:$0xff]
        %v1532 = vld [vmem:[#allocation2 + $0x148] sm:$0xff]
        %v1533 = vld [vmem:[#allocation2 + $0x150] sm:$0xff]
        %v1534 = vld [vmem:[#allocation2 + $0x158] sm:$0xff]
        %v1535 = vld [vmem:[#allocation2 + $0x160] sm:$0xff]
        %v1536 = vld [vmem:[#allocation2 + $0x168] sm:$0xff]
        %v1537 = vld [vmem:[#allocation2 + $0x170] sm:$0xff]
        %v1538 = vld [vmem:[#allocation2 + $0x178] sm:$0xff]
        %v1539 = vld [vmem:[#allocation2 + $0x180] sm:$0xff]
        %v1540 = vld [vmem:[#allocation2 + $0x188] sm:$0xff]
        %v1541 = vld [vmem:[#allocation2 + $0x190] sm:$0xff]
        %v1542 = vld [vmem:[#allocation2 + $0x198] sm:$0xff]
        %v1543 = vld [vmem:[#allocation2 + $0x1a0] sm:$0xff]
        %v1544 = vld [vmem:[#allocation2 + $0x1a8] sm:$0xff]
        %v1545 = vld [vmem:[#allocation2 + $0x1b0] sm:$0xff]
        %v1546 = vld [vmem:[#allocation2 + $0x1b8] sm:$0xff]
        %v1547 = vld [vmem:[#allocation2 + $0x1c0] sm:$0xff]
        %v1548 = vld [vmem:[#allocation2 + $0x1c8] sm:$0xff]
        %v1549 = vld [vmem:[#allocation2 + $0x1d0] sm:$0xff]
        %v1550 = vld [vmem:[#allocation2 + $0x1d8] sm:$0xff]
        %v1551 = vld [vmem:[#allocation2 + $0x1e0] sm:$0xff]
        %v1552 = vld [vmem:[#allocation2 + $0x1e8] sm:$0xff]
        %v1553 = vld [vmem:[#allocation2 + $0x1f0] sm:$0xff]
        %v1554 = vld [vmem:[#allocation2 + $0x1f8] sm:$0xff]
        %v1555 = vld [vmem:[#allocation2 + $0x200] sm:$0xff]
        %v1556 = vld [vmem:[#allocation2 + $0x208] sm:$0xff]
        %v1557 = vld [vmem:[#allocation2 + $0x210] sm:$0xff]
        %v1558 = vld [vmem:[#allocation2 + $0x218] sm:$0xff]
        %v1559 = vld [vmem:[#allocation2 + $0x220] sm:$0xff]
        %v1560 = vld [vmem:[#allocation2 + $0x228] sm:$0xff]
        %v1561 = vld [vmem:[#allocation2 + $0x230] sm:$0xff]
        %v1562 = vld [vmem:[#allocation2 + $0x238] sm:$0xff]
        %v1563 = vld [vmem:[#allocation2 + $0x240] sm:$0xff]
        %v1564 = vld [vmem:[#allocation2 + $0x248] sm:$0xff]
        %v1565 = vld [vmem:[#allocation2 + $0x250] sm:$0xff]
        %v1566 = vld [vmem:[#allocation2 + $0x258] sm:$0xff]
        %v1567 = vld [vmem:[#allocation2 + $0x260] sm:$0xff]
        %v1568 = vld [vmem:[#allocation2 + $0x268] sm:$0xff]
        %v1569 = vld [vmem:[#allocation2 + $0x270] sm:$0xff]
        %v1570 = vld [vmem:[#allocation2 + $0x278] sm:$0xff]
        %v1571 = vld [vmem:[#allocation2 + $0x280] sm:$0xff]
        %v1572 = vld [vmem:[#allocation2 + $0x288] sm:$0xff]
        %v1573 = vld [vmem:[#allocation2 + $0x290] sm:$0xff]
        %v1574 = vld [vmem:[#allocation2 + $0x298] sm:$0xff]
        %v1575 = vld [vmem:[#allocation2 + $0x2a0] sm:$0xff]
        %v1576 = vld [vmem:[#allocation2 + $0x2a8] sm:$0xff]
        %v1577 = vld [vmem:[#allocation2 + $0x2b0] sm:$0xff]
        %v1578 = vld [vmem:[#allocation2 + $0x2b8] sm:$0xff]
        %v1579 = vld [vmem:[#allocation2 + $0x2c0] sm:$0xff]
        %v1580 = vld [vmem:[#allocation2 + $0x2c8] sm:$0xff]
        %v1581 = vld [vmem:[#allocation2 + $0x2d0] sm:$0xff]
        %v1582 = vld [vmem:[#allocation2 + $0x2d8] sm:$0xff]
        %v1583 = vld [vmem:[#allocation2 + $0x2e0] sm:$0xff]
        %v1584 = vld [vmem:[#allocation2 + $0x2e8] sm:$0xff]
        %v1585 = vld [vmem:[#allocation2 + $0x2f0] sm:$0xff]
        %v1586 = vld [vmem:[#allocation2 + $0x2f8] sm:$0xff]
        %v1587 = vld [vmem:[#allocation2 + $0x300] sm:$0xff]
        %v1588 = vld [vmem:[#allocation2 + $0x308] sm:$0xff]
        %v1589 = vld [vmem:[#allocation2 + $0x310] sm:$0xff]
        %v1590 = vld [vmem:[#allocation2 + $0x318] sm:$0xff]
        %v1591 = vld [vmem:[#allocation2 + $0x320] sm:$0xff]
        %v1592 = vld [vmem:[#allocation2 + $0x328] sm:$0xff]
        %v1593 = vld [vmem:[#allocation2 + $0x330] sm:$0xff]
        %v1594 = vld [vmem:[#allocation2 + $0x338] sm:$0xff]
        %v1595 = vld [vmem:[#allocation2 + $0x340] sm:$0xff]
        %v1596 = vld [vmem:[#allocation2 + $0x348] sm:$0xff]
        %v1597 = vld [vmem:[#allocation2 + $0x350] sm:$0xff]
        %v1598 = vld [vmem:[#allocation2 + $0x358] sm:$0xff]
        %v1599 = vld [vmem:[#allocation2 + $0x360] sm:$0xff]
        %v1600 = vld [vmem:[#allocation2 + $0x368] sm:$0xff]
        %v1601 = vld [vmem:[#allocation2 + $0x370] sm:$0xff]
        %v1602 = vld [vmem:[#allocation2 + $0x378] sm:$0xff]
        %v1603 = vld [vmem:[#allocation2 + $0x380] sm:$0xff]
        %v1604 = vld [vmem:[#allocation2 + $0x388] sm:$0xff]
        %v1605 = vld [vmem:[#allocation2 + $0x390] sm:$0xff]
        %v1606 = vld [vmem:[#allocation2 + $0x398] sm:$0xff]
        %v1607 = vld [vmem:[#allocation2 + $0x3a0] sm:$0xff]
        %v1608 = vld [vmem:[#allocation2 + $0x3a8] sm:$0xff]
        %v1609 = vld [vmem:[#allocation2 + $0x3b0] sm:$0xff]
        %v1610 = vld [vmem:[#allocation2 + $0x3b8] sm:$0xff]
        %v1611 = vld [vmem:[#allocation2 + $0x3c0] sm:$0xff]
        %v1612 = vld [vmem:[#allocation2 + $0x3c8] sm:$0xff]
        %v1613 = vld [vmem:[#allocation2 + $0x3d0] sm:$0xff]
        %v1614 = vld [vmem:[#allocation2 + $0x3d8] sm:$0xff]
        %v1615 = vld [vmem:[#allocation2 + $0x3e0] sm:$0xff]
        %v1616 = vld [vmem:[#allocation2 + $0x3e8] sm:$0xff]
        %v1617 = vld [vmem:[#allocation2 + $0x3f0] sm:$0xff]
        %v1618 = vld [vmem:[#allocation2 + $0x3f8] sm:$0xff]
        %v1619 = vld [vmem:[#allocation2 + $0x400] sm:$0xff]
        %v1620 = vld [vmem:[#allocation2 + $0x408] sm:$0xff]
        %v1621 = vld [vmem:[#allocation2 + $0x410] sm:$0xff]
        %v1622 = vld [vmem:[#allocation2 + $0x418] sm:$0xff]
        %v1623 = vld [vmem:[#allocation2 + $0x420] sm:$0xff]
        %v1624 = vld [vmem:[#allocation2 + $0x428] sm:$0xff]
        %v1625 = vld [vmem:[#allocation2 + $0x430] sm:$0xff]
        %v1626 = vld [vmem:[#allocation2 + $0x438] sm:$0xff]
        %v1627 = vld [vmem:[#allocation2 + $0x440] sm:$0xff]
        %v1628 = vld [vmem:[#allocation2 + $0x448] sm:$0xff]
        %v1629 = vld [vmem:[#allocation2 + $0x450] sm:$0xff]
        %v1630 = vld [vmem:[#allocation2 + $0x458] sm:$0xff]
        %v1631 = vld [vmem:[#allocation2 + $0x460] sm:$0xff]
        %v1632 = vld [vmem:[#allocation2 + $0x468] sm:$0xff]
        %v1633 = vld [vmem:[#allocation2 + $0x470] sm:$0xff]
        %v1634 = vld [vmem:[#allocation2 + $0x478] sm:$0xff]
        %v1635 = vld [vmem:[#allocation2 + $0x480] sm:$0xff]
        %v1636 = vld [vmem:[#allocation2 + $0x488] sm:$0xff]
        %v1637 = vld [vmem:[#allocation2 + $0x490] sm:$0xff]
        %v1638 = vld [vmem:[#allocation2 + $0x498] sm:$0xff]
        %v1639 = vld [vmem:[#allocation2 + $0x4a0] sm:$0xff]
        %v1640 = vld [vmem:[#allocation2 + $0x4a8] sm:$0xff]
        %v1641 = vld [vmem:[#allocation2 + $0x4b0] sm:$0xff]
        %v1642 = vld [vmem:[#allocation2 + $0x4b8] sm:$0xff]
        %v1643 = vld [vmem:[#allocation2 + $0x4c0] sm:$0xff]
        %v1644 = vld [vmem:[#allocation2 + $0x4c8] sm:$0xff]
        %v1645 = vld [vmem:[#allocation2 + $0x4d0] sm:$0xff]
        %v1646 = vld [vmem:[#allocation2 + $0x4d8] sm:$0xff]
        %v1647 = vld [vmem:[#allocation2 + $0x4e0] sm:$0xff]
        %v1648 = vld [vmem:[#allocation2 + $0x4e8] sm:$0xff]
        %v1649 = vld [vmem:[#allocation2 + $0x4f0] sm:$0xff]
        %v1650 = vld [vmem:[#allocation2 + $0x4f8] sm:$0xff]
        %v1651 = vld [vmem:[#allocation2 + $0x500] sm:$0xff]
        %v1652 = vld [vmem:[#allocation2 + $0x508] sm:$0xff]
        %v1653 = vld [vmem:[#allocation2 + $0x510] sm:$0xff]
        %v1654 = vld [vmem:[#allocation2 + $0x518] sm:$0xff]
        %v1655 = vld [vmem:[#allocation2 + $0x520] sm:$0xff]
        %v1656 = vld [vmem:[#allocation2 + $0x528] sm:$0xff]
        %v1657 = vld [vmem:[#allocation2 + $0x530] sm:$0xff]
        %v1658 = vld [vmem:[#allocation2 + $0x538] sm:$0xff]
        %v1659 = vld [vmem:[#allocation2 + $0x540] sm:$0xff]
        %v1660 = vld [vmem:[#allocation2 + $0x548] sm:$0xff]
        %v1661 = vld [vmem:[#allocation2 + $0x550] sm:$0xff]
        %v1662 = vld [vmem:[#allocation2 + $0x558] sm:$0xff]
        %v1663 = vld [vmem:[#allocation2 + $0x560] sm:$0xff]
        %v1664 = vld [vmem:[#allocation2 + $0x568] sm:$0xff]
        %v1665 = vld [vmem:[#allocation2 + $0x570] sm:$0xff]
        %v1666 = vld [vmem:[#allocation2 + $0x578] sm:$0xff]
        %v1667 = vld [vmem:[#allocation2 + $0x580] sm:$0xff]
        %v1668 = vld [vmem:[#allocation2 + $0x588] sm:$0xff]
        %v1669 = vld [vmem:[#allocation2 + $0x590] sm:$0xff]
        %v1670 = vld [vmem:[#allocation2 + $0x598] sm:$0xff]
        %v1671 = vld [vmem:[#allocation2 + $0x5a0] sm:$0xff]
        %v1672 = vld [vmem:[#allocation2 + $0x5a8] sm:$0xff]
        %v1673 = vld [vmem:[#allocation2 + $0x5b0] sm:$0xff]
        %v1674 = vld [vmem:[#allocation2 + $0x5b8] sm:$0xff]
        %v1675 = vld [vmem:[#allocation2 + $0x5c0] sm:$0xff]
        %v1676 = vld [vmem:[#allocation2 + $0x5c8] sm:$0xff]
        %v1677 = vld [vmem:[#allocation2 + $0x5d0] sm:$0xff]
        %v1678 = vld [vmem:[#allocation2 + $0x5d8] sm:$0xff]
        %v1679 = vld [vmem:[#allocation2 + $0x5e0] sm:$0xff]
        %v1684 = vunpack.c.l.b16 %v1487
        %v1685 = vunpack.c.h.b16 %v1487
        %v1686 = vunpack.c.l.b16 %v1488
        %v1687 = vunpack.c.h.b16 %v1488
        %v1688 = vunpack.c.l.b16 %v1489
        %v1689 = vunpack.c.h.b16 %v1489
        %v1690 = vunpack.c.l.b16 %v1490
        %v1691 = vunpack.c.h.b16 %v1490
        %v1692 = vpack.c.b16 %v1688, %v1684
        %v1693 = vpack.c.b16 %v1689, %v1685
        %v1694 = vpack.c.b16 %v1690, %v1686
        %v1695 = vpack.c.b16 %v1691, %v1687
        %vm1699 = vcmask 392192
        %v1701 = vsel %vm1699, %v1695, 0
        %1703 = vmatprep.subr.bf16.mxu0 %v1492
        %1704 = vmatpush1.bf16.msra.mxu0 %v1491
        %1705 = vmatprep.subr.bf16.mxu0 %v1499
        %1706 = vmatpush1.bf16.msra.mxu0 %v1498
        %1707 = vmatprep.subr.bf16.mxu0 %v1506
        %1708 = vmatpush1.bf16.msra.mxu0 %v1505
        %1709 = vmatprep.subr.bf16.mxu0 %v1513
        %1710 = vmatpush1.bf16.msra.mxu0 %v1512
        %1711 = vmatprep.subr.bf16.mxu0 %v1520
        %1712 = vmatpush1.bf16.msra.mxu0 %v1519
        %1713 = vmatprep.subr.bf16.mxu0 %v1527
        %1714 = vmatpush1.bf16.msra.mxu0 %v1526
        %1715 = vmatprep.subr.bf16.mxu0 %v1534
        %1716 = vmatpush1.bf16.msra.mxu0 %v1533
        %1717 = vmatprep.subr.bf16.mxu0 %v1541
        %1718 = vmatpush1.bf16.msra.mxu0 %v1540
        %1719 = vmatprep.subr.bf16.mxu0 %v1548
        %1720 = vmatpush1.bf16.msra.mxu0 %v1547
        %1721 = vmatprep.subr.bf16.mxu0 %v1555
        %1722 = vmatpush1.bf16.msra.mxu0 %v1554
        %1723 = vmatprep.subr.bf16.mxu0 %v1562
        %1724 = vmatpush1.bf16.msra.mxu0 %v1561
        %1725 = vmatprep.subr.bf16.mxu0 %v1569
        %1726 = vmatpush1.bf16.msra.mxu0 %v1568
        %1727 = vmatprep.subr.bf16.mxu0 %v1576
        %1728 = vmatpush1.bf16.msra.mxu0 %v1575
        %1729 = vmatprep.subr.bf16.mxu0 %v1583
        %1730 = vmatpush1.bf16.msra.mxu0 %v1582
        %1731 = vmatprep.subr.bf16.mxu0 %v1590
        %1732 = vmatpush1.bf16.msra.mxu0 %v1589
        %1733 = vmatprep.subr.bf16.mxu0 %v1597
        %1734 = vmatpush1.bf16.msra.mxu0 %v1596
        %1735 = vmatprep.mubr.bf16.mxu0 %v1693
        %1736 = vmatmul.mubr.bf16.gmra.mrb[0].mxu0 %v1692
        %v1737 = vpop.f32.mrb[0].mxu0
        %v1738 = vadd.f32 0.0, %v1737
        %v1739 = vpop.f32.mrb[0].mxu0
        %v1740 = vadd.f32 0.0, %v1739
        %v1741 = vpop.f32.mrb[0].mxu0
        %v1742 = vadd.f32 0.0, %v1741
        %v1743 = vpop.f32.mrb[0].mxu0
        %v1744 = vadd.f32 0.0, %v1743
        %1745 = vdwg.mxu0
        %1746 = vmatprep.subr.bf16.mxu0 %v1604
        %1747 = vmatpush1.bf16.msra.mxu0 %v1603
        %1748 = vmatprep.subr.bf16.mxu0 %v1611
        %1749 = vmatpush1.bf16.msra.mxu0 %v1610
        %1750 = vmatprep.subr.bf16.mxu0 %v1618
        %1751 = vmatpush1.bf16.msra.mxu0 %v1617
        %1752 = vmatprep.subr.bf16.mxu0 %v1625
        %1753 = vmatpush1.bf16.msra.mxu0 %v1624
        %1754 = vmatprep.subr.bf16.mxu0 %v1632
        %1755 = vmatpush1.bf16.msra.mxu0 %v1631
        %1756 = vmatprep.subr.bf16.mxu0 %v1639
        %1757 = vmatpush1.bf16.msra.mxu0 %v1638
        %1758 = vmatprep.subr.bf16.mxu0 %v1646
        %1759 = vmatpush1.bf16.msra.mxu0 %v1645
        %1760 = vmatprep.subr.bf16.mxu0 %v1653
        %1761 = vmatpush1.bf16.msra.mxu0 %v1652
        %1762 = vmatprep.subr.bf16.mxu0 %v1660
        %1763 = vmatpush1.bf16.msra.mxu0 %v1659
        %1764 = vmatprep.subr.bf16.mxu0 %v1667
        %1765 = vmatpush1.bf16.msra.mxu0 %v1666
        %1766 = vmatprep.subr.bf16.mxu0 %v1674
        %1767 = vmatpush1.bf16.msra.mxu0 %v1673
        %1768 = vmatprep.subr.bf16.mxu0 0
        %1769 = vmatpush1.bf16.msra.mxu0 0
        %1770 = vmatprep.subr.bf16.mxu0 0
        %1771 = vmatpush1.bf16.msra.mxu0 0
        %1772 = vmatprep.subr.bf16.mxu0 0
        %1773 = vmatpush1.bf16.msra.mxu0 0
        %1774 = vmatprep.subr.bf16.mxu0 0
        %1775 = vmatpush1.bf16.msra.mxu0 0
        %1776 = vmatprep.subr.bf16.mxu0 0
        %1777 = vmatpush1.bf16.msra.mxu0 0
        %1778 = vmatprep.mubr.bf16.mxu0 %v1701
        %1779 = vmatmul.mubr.bf16.gmra.mrb[0].mxu0 %v1694
        %v1780 = vpop.f32.mrb[0].mxu0
        %v1781 = vadd.f32 %v1738, %v1780
        %v1782 = vpop.f32.mrb[0].mxu0
        %v1783 = vadd.f32 %v1740, %v1782
        %v1784 = vpop.f32.mrb[0].mxu0
        %v1785 = vadd.f32 %v1742, %v1784
        %v1786 = vpop.f32.mrb[0].mxu0
        %v1787 = vadd.f32 %v1744, %v1786
        %1788 = vdwg.mxu0
        %1789 = vmatprep.subr.bf16.mxu0 %v1494
        %1790 = vmatpush1.bf16.msra.mxu0 %v1493
        %1791 = vmatprep.subr.bf16.mxu0 %v1501
        %1792 = vmatpush1.bf16.msra.mxu0 %v1500
        %1793 = vmatprep.subr.bf16.mxu0 %v1508
        %1794 = vmatpush1.bf16.msra.mxu0 %v1507
        %1795 = vmatprep.subr.bf16.mxu0 %v1515
        %1796 = vmatpush1.bf16.msra.mxu0 %v1514
        %1797 = vmatprep.subr.bf16.mxu0 %v1522
        %1798 = vmatpush1.bf16.msra.mxu0 %v1521
        %1799 = vmatprep.subr.bf16.mxu0 %v1529
        %1800 = vmatpush1.bf16.msra.mxu0 %v1528
        %1801 = vmatprep.subr.bf16.mxu0 %v1536
        %1802 = vmatpush1.bf16.msra.mxu0 %v1535
        %1803 = vmatprep.subr.bf16.mxu0 %v1543
        %1804 = vmatpush1.bf16.msra.mxu0 %v1542
        %1805 = vmatprep.subr.bf16.mxu0 %v1550
        %1806 = vmatpush1.bf16.msra.mxu0 %v1549
        %1807 = vmatprep.subr.bf16.mxu0 %v1557
        %1808 = vmatpush1.bf16.msra.mxu0 %v1556
        %1809 = vmatprep.subr.bf16.mxu0 %v1564
        %1810 = vmatpush1.bf16.msra.mxu0 %v1563
        %1811 = vmatprep.subr.bf16.mxu0 %v1571
        %1812 = vmatpush1.bf16.msra.mxu0 %v1570
        %1813 = vmatprep.subr.bf16.mxu0 %v1578
        %1814 = vmatpush1.bf16.msra.mxu0 %v1577
        %1815 = vmatprep.subr.bf16.mxu0 %v1585
        %1816 = vmatpush1.bf16.msra.mxu0 %v1584
        %1817 = vmatprep.subr.bf16.mxu0 %v1592
        %1818 = vmatpush1.bf16.msra.mxu0 %v1591
        %1819 = vmatprep.subr.bf16.mxu0 %v1599
        %1820 = vmatpush1.bf16.msra.mxu0 %v1598
        %1821 = vmatprep.mubr.bf16.mxu0 %v1693
        %1822 = vmatmul.mubr.bf16.gmra.mrb[0].mxu0 %v1692
        %v1823 = vpop.f32.mrb[0].mxu0
        %v1824 = vadd.f32 0.0, %v1823
        %v1825 = vpop.f32.mrb[0].mxu0
        %v1826 = vadd.f32 0.0, %v1825
        %v1827 = vpop.f32.mrb[0].mxu0
        %v1828 = vadd.f32 0.0, %v1827
        %v1829 = vpop.f32.mrb[0].mxu0
        %v1830 = vadd.f32 0.0, %v1829
        %1831 = vdwg.mxu0
        %1832 = vmatprep.subr.bf16.mxu0 %v1606
        %1833 = vmatpush1.bf16.msra.mxu0 %v1605
        %1834 = vmatprep.subr.bf16.mxu0 %v1613
        %1835 = vmatpush1.bf16.msra.mxu0 %v1612
        %1836 = vmatprep.subr.bf16.mxu0 %v1620
        %1837 = vmatpush1.bf16.msra.mxu0 %v1619
        %1838 = vmatprep.subr.bf16.mxu0 %v1627
        %1839 = vmatpush1.bf16.msra.mxu0 %v1626
        %1840 = vmatprep.subr.bf16.mxu0 %v1634
        %1841 = vmatpush1.bf16.msra.mxu0 %v1633
        %1842 = vmatprep.subr.bf16.mxu0 %v1641
        %1843 = vmatpush1.bf16.msra.mxu0 %v1640
        %1844 = vmatprep.subr.bf16.mxu0 %v1648
        %1845 = vmatpush1.bf16.msra.mxu0 %v1647
        %1846 = vmatprep.subr.bf16.mxu0 %v1655
        %1847 = vmatpush1.bf16.msra.mxu0 %v1654
        %1848 = vmatprep.subr.bf16.mxu0 %v1662
        %1849 = vmatpush1.bf16.msra.mxu0 %v1661
        %1850 = vmatprep.subr.bf16.mxu0 %v1669
        %1851 = vmatpush1.bf16.msra.mxu0 %v1668
        %1852 = vmatprep.subr.bf16.mxu0 %v1676
        %1853 = vmatpush1.bf16.msra.mxu0 %v1675
        %1854 = vmatprep.subr.bf16.mxu0 0
        %1855 = vmatpush1.bf16.msra.mxu0 0
        %1856 = vmatprep.subr.bf16.mxu0 0
        %1857 = vmatpush1.bf16.msra.mxu0 0
        %1858 = vmatprep.subr.bf16.mxu0 0
        %1859 = vmatpush1.bf16.msra.mxu0 0
        %1860 = vmatprep.subr.bf16.mxu0 0
        %1861 = vmatpush1.bf16.msra.mxu0 0
        %1862 = vmatprep.subr.bf16.mxu0 0
        %1863 = vmatpush1.bf16.msra.mxu0 0
        %1864 = vmatprep.mubr.bf16.mxu0 %v1701
        %1865 = vmatmul.mubr.bf16.gmra.mrb[0].mxu0 %v1694
        %v1866 = vpop.f32.mrb[0].mxu0
        %v1867 = vadd.f32 %v1824, %v1866
        %v1868 = vpop.f32.mrb[0].mxu0
        %v1869 = vadd.f32 %v1826, %v1868
        %v1870 = vpop.f32.mrb[0].mxu0
        %v1871 = vadd.f32 %v1828, %v1870
        %v1872 = vpop.f32.mrb[0].mxu0
        %v1873 = vadd.f32 %v1830, %v1872
        %1874 = vdwg.mxu0
        %1875 = vmatprep.subr.bf16.mxu0 %v1496
        %1876 = vmatpush1.bf16.msra.mxu0 %v1495
        %1877 = vmatprep.subr.bf16.mxu0 %v1503
        %1878 = vmatpush1.bf16.msra.mxu0 %v1502
        %1879 = vmatprep.subr.bf16.mxu0 %v1510
        %1880 = vmatpush1.bf16.msra.mxu0 %v1509
        %1881 = vmatprep.subr.bf16.mxu0 %v1517
        %1882 = vmatpush1.bf16.msra.mxu0 %v1516
        %1883 = vmatprep.subr.bf16.mxu0 %v1524
        %1884 = vmatpush1.bf16.msra.mxu0 %v1523
        %1885 = vmatprep.subr.bf16.mxu0 %v1531
        %1886 = vmatpush1.bf16.msra.mxu0 %v1530
        %1887 = vmatprep.subr.bf16.mxu0 %v1538
        %1888 = vmatpush1.bf16.msra.mxu0 %v1537
        %1889 = vmatprep.subr.bf16.mxu0 %v1545
        %1890 = vmatpush1.bf16.msra.mxu0 %v1544
        %1891 = vmatprep.subr.bf16.mxu0 %v1552
        %1892 = vmatpush1.bf16.msra.mxu0 %v1551
        %1893 = vmatprep.subr.bf16.mxu0 %v1559
        %1894 = vmatpush1.bf16.msra.mxu0 %v1558
        %1895 = vmatprep.subr.bf16.mxu0 %v1566
        %1896 = vmatpush1.bf16.msra.mxu0 %v1565
        %1897 = vmatprep.subr.bf16.mxu0 %v1573
        %1898 = vmatpush1.bf16.msra.mxu0 %v1572
        %1899 = vmatprep.subr.bf16.mxu0 %v1580
        %1900 = vmatpush1.bf16.msra.mxu0 %v1579
        %1901 = vmatprep.subr.bf16.mxu0 %v1587
        %1902 = vmatpush1.bf16.msra.mxu0 %v1586
        %1903 = vmatprep.subr.bf16.mxu0 %v1594
        %1904 = vmatpush1.bf16.msra.mxu0 %v1593
        %1905 = vmatprep.subr.bf16.mxu0 %v1601
        %1906 = vmatpush1.bf16.msra.mxu0 %v1600
        %1907 = vmatprep.mubr.bf16.mxu0 %v1693
        %1908 = vmatmul.mubr.bf16.gmra.mrb[0].mxu0 %v1692
        %v1909 = vpop.f32.mrb[0].mxu0
        %v1910 = vadd.f32 0.0, %v1909
        %v1911 = vpop.f32.mrb[0].mxu0
        %v1912 = vadd.f32 0.0, %v1911
        %v1913 = vpop.f32.mrb[0].mxu0
        %v1914 = vadd.f32 0.0, %v1913
        %v1915 = vpop.f32.mrb[0].mxu0
        %v1916 = vadd.f32 0.0, %v1915
        %1917 = vdwg.mxu0
        %1918 = vmatprep.subr.bf16.mxu0 %v1608
        %1919 = vmatpush1.bf16.msra.mxu0 %v1607
        %1920 = vmatprep.subr.bf16.mxu0 %v1615
        %1921 = vmatpush1.bf16.msra.mxu0 %v1614
        %1922 = vmatprep.subr.bf16.mxu0 %v1622
        %1923 = vmatpush1.bf16.msra.mxu0 %v1621
        %1924 = vmatprep.subr.bf16.mxu0 %v1629
        %1925 = vmatpush1.bf16.msra.mxu0 %v1628
        %1926 = vmatprep.subr.bf16.mxu0 %v1636
        %1927 = vmatpush1.bf16.msra.mxu0 %v1635
        %1928 = vmatprep.subr.bf16.mxu0 %v1643
        %1929 = vmatpush1.bf16.msra.mxu0 %v1642
        %1930 = vmatprep.subr.bf16.mxu0 %v1650
        %1931 = vmatpush1.bf16.msra.mxu0 %v1649
        %1932 = vmatprep.subr.bf16.mxu0 %v1657
        %1933 = vmatpush1.bf16.msra.mxu0 %v1656
        %1934 = vmatprep.subr.bf16.mxu0 %v1664
        %1935 = vmatpush1.bf16.msra.mxu0 %v1663
        %1936 = vmatprep.subr.bf16.mxu0 %v1671
        %1937 = vmatpush1.bf16.msra.mxu0 %v1670
        %1938 = vmatprep.subr.bf16.mxu0 %v1678
        %1939 = vmatpush1.bf16.msra.mxu0 %v1677
        %1940 = vmatprep.subr.bf16.mxu0 0
        %1941 = vmatpush1.bf16.msra.mxu0 0
        %1942 = vmatprep.subr.bf16.mxu0 0
        %1943 = vmatpush1.bf16.msra.mxu0 0
        %1944 = vmatprep.subr.bf16.mxu0 0
        %1945 = vmatpush1.bf16.msra.mxu0 0
        %1946 = vmatprep.subr.bf16.mxu0 0
        %1947 = vmatpush1.bf16.msra.mxu0 0
        %1948 = vmatprep.subr.bf16.mxu0 0
        %1949 = vmatpush1.bf16.msra.mxu0 0
        %1950 = vmatprep.mubr.bf16.mxu0 %v1701
        %1951 = vmatmul.mubr.bf16.gmra.mrb[0].mxu0 %v1694
        %v1952 = vpop.f32.mrb[0].mxu0
        %v1953 = vadd.f32 %v1910, %v1952
        %v1954 = vpop.f32.mrb[0].mxu0
        %v1955 = vadd.f32 %v1912, %v1954
        %v1956 = vpop.f32.mrb[0].mxu0
        %v1957 = vadd.f32 %v1914, %v1956
        %v1958 = vpop.f32.mrb[0].mxu0
        %v1959 = vadd.f32 %v1916, %v1958
        %1960 = vdwg.mxu0
        %1961 = vmatprep.subr.bf16.mxu0 0
        %1962 = vmatpush1.bf16.msra.mxu0 %v1497
        %1963 = vmatprep.subr.bf16.mxu0 0
        %1964 = vmatpush1.bf16.msra.mxu0 %v1504
        %1965 = vmatprep.subr.bf16.mxu0 0
        %1966 = vmatpush1.bf16.msra.mxu0 %v1511
        %1967 = vmatprep.subr.bf16.mxu0 0
        %1968 = vmatpush1.bf16.msra.mxu0 %v1518
        %1969 = vmatprep.subr.bf16.mxu0 0
        %1970 = vmatpush1.bf16.msra.mxu0 %v1525
        %1971 = vmatprep.subr.bf16.mxu0 0
        %1972 = vmatpush1.bf16.msra.mxu0 %v1532
        %1973 = vmatprep.subr.bf16.mxu0 0
        %1974 = vmatpush1.bf16.msra.mxu0 %v1539
        %1975 = vmatprep.subr.bf16.mxu0 0
        %1976 = vmatpush1.bf16.msra.mxu0 %v1546
        %1977 = vmatprep.subr.bf16.mxu0 0
        %1978 = vmatpush1.bf16.msra.mxu0 %v1553
        %1979 = vmatprep.subr.bf16.mxu0 0
        %1980 = vmatpush1.bf16.msra.mxu0 %v1560
        %1981 = vmatprep.subr.bf16.mxu0 0
        %1982 = vmatpush1.bf16.msra.mxu0 %v1567
        %1983 = vmatprep.subr.bf16.mxu0 0
        %1984 = vmatpush1.bf16.msra.mxu0 %v1574
        %1985 = vmatprep.subr.bf16.mxu0 0
        %1986 = vmatpush1.bf16.msra.mxu0 %v1581
        %1987 = vmatprep.subr.bf16.mxu0 0
        %1988 = vmatpush1.bf16.msra.mxu0 %v1588
        %1989 = vmatprep.subr.bf16.mxu0 0
        %1990 = vmatpush1.bf16.msra.mxu0 %v1595
        %1991 = vmatprep.subr.bf16.mxu0 0
        %1992 = vmatpush1.bf16.msra.mxu0 %v1602
        %1993 = vmatprep.mubr.bf16.mxu0 %v1693
        %1994 = vmatmul.mubr.bf16.gmra.mrb[0].mxu0 %v1692
        %v1995 = vpop.f32.mrb[0].mxu0
        %v1996 = vadd.f32 0.0, %v1995
        %v1997 = vpop.f32.mrb[0].mxu0
        %v1998 = vpop.f32.mrb[0].mxu0
        %v1999 = vadd.f32 0.0, %v1998
        %v2000 = vpop.f32.mrb[0].mxu0
        %2001 = vdwg.mxu0
        %2002 = vmatprep.subr.bf16.mxu0 0
        %2003 = vmatpush1.bf16.msra.mxu0 %v1609
        %2004 = vmatprep.subr.bf16.mxu0 0
        %2005 = vmatpush1.bf16.msra.mxu0 %v1616
        %2006 = vmatprep.subr.bf16.mxu0 0
        %2007 = vmatpush1.bf16.msra.mxu0 %v1623
        %2008 = vmatprep.subr.bf16.mxu0 0
        %2009 = vmatpush1.bf16.msra.mxu0 %v1630
        %2010 = vmatprep.subr.bf16.mxu0 0
        %2011 = vmatpush1.bf16.msra.mxu0 %v1637
        %2012 = vmatprep.subr.bf16.mxu0 0
        %2013 = vmatpush1.bf16.msra.mxu0 %v1644
        %2014 = vmatprep.subr.bf16.mxu0 0
        %2015 = vmatpush1.bf16.msra.mxu0 %v1651
        %2016 = vmatprep.subr.bf16.mxu0 0
        %2017 = vmatpush1.bf16.msra.mxu0 %v1658
        %2018 = vmatprep.subr.bf16.mxu0 0
        %2019 = vmatpush1.bf16.msra.mxu0 %v1665
        %2020 = vmatprep.subr.bf16.mxu0 0
        %2021 = vmatpush1.bf16.msra.mxu0 %v1672
        %2022 = vmatprep.subr.bf16.mxu0 0
        %2023 = vmatpush1.bf16.msra.mxu0 %v1679
        %2024 = vmatprep.subr.bf16.mxu0 0
        %2025 = vmatpush1.bf16.msra.mxu0 0
        %2026 = vmatprep.subr.bf16.mxu0 0
        %2027 = vmatpush1.bf16.msra.mxu0 0
        %2028 = vmatprep.subr.bf16.mxu0 0
        %2029 = vmatpush1.bf16.msra.mxu0 0
        %2030 = vmatprep.subr.bf16.mxu0 0
        %2031 = vmatpush1.bf16.msra.mxu0 0
        %2032 = vmatprep.subr.bf16.mxu0 0
        %2033 = vmatpush1.bf16.msra.mxu0 0
        %2034 = vmatprep.mubr.bf16.mxu0 %v1701
        %2035 = vmatmul.mubr.bf16.gmra.mrb[0].mxu0 %v1694
        %v2036 = vpop.f32.mrb[0].mxu0
        %v2037 = vadd.f32 %v1996, %v2036
        %v2038 = vpop.f32.mrb[0].mxu0
        %v2039 = vpop.f32.mrb[0].mxu0
        %v2040 = vadd.f32 %v1999, %v2039
        %v2041 = vpop.f32.mrb[0].mxu0
        %2042 = vdwg.mxu0
        %v2044 = vlaneseq
        %v2045 = vshrl.u32 %v2044, 7
        %v2046 = vsub.s32 0, %v2045
        %v2047 = vrot.slane %v433, %v2046
        %v2048 = vlaneseq
        %v2049 = vshrl.u32 %v2048, 7
        %v2050 = vsub.s32 1, %v2049
        %v2051 = vrot.slane %v433, %v2050
        %v2052 = vlaneseq
        %v2053 = vshrl.u32 %v2052, 7
        %v2054 = vsub.s32 2, %v2053
        %v2055 = vrot.slane %v433, %v2054
        %v2056 = vlaneseq
        %v2057 = vshrl.u32 %v2056, 7
        %v2058 = vsub.s32 3, %v2057
        %v2059 = vrot.slane %v433, %v2058
        %v2060 = vlaneseq
        %v2061 = vshrl.u32 %v2060, 7
        %v2062 = vsub.s32 4, %v2061
        %v2063 = vrot.slane %v433, %v2062
        %v2064 = vlaneseq
        %v2065 = vshrl.u32 %v2064, 7
        %v2066 = vsub.s32 5, %v2065
        %v2067 = vrot.slane %v433, %v2066
        %v2068 = vlaneseq
        %v2069 = vshrl.u32 %v2068, 7
        %v2070 = vsub.s32 6, %v2069
        %v2071 = vrot.slane %v433, %v2070
        %v2079 = vmul.f32 %v1781, %v2047
        %v2080 = vmul.f32 %v1783, %v2051
        %v2081 = vmul.f32 %v1867, %v2055
        %v2082 = vmul.f32 %v1869, %v2059
        %v2083 = vmul.f32 %v1953, %v2063
        %v2084 = vmul.f32 %v1955, %v2067
        %v2085 = vmul.f32 %v2037, %v2071
        %v2086 = vmul.f32 %v1785, %v2047
        %v2087 = vmul.f32 %v1787, %v2051
        %v2088 = vmul.f32 %v1871, %v2055
        %v2089 = vmul.f32 %v1873, %v2059
        %v2090 = vmul.f32 %v1957, %v2063
        %v2091 = vmul.f32 %v1959, %v2067
        %v2092 = vmul.f32 %v2040, %v2071
        %v2093 = vadd.f32 %v2079, %v2080
        %v2094 = vadd.f32 %v2093, %v2081
        %v2095 = vadd.f32 %v2094, %v2082
        %v2096 = vadd.f32 %v2095, %v2083
        %v2097 = vadd.f32 %v2096, %v2084
        %v2098 = vadd.f32 %v2097, %v2085
        %2099 = vadd.xlane.f32.xlu0 %v2098
        %v2100 = vpop.xlane.xlu0 %2099
        %v2101 = vadd.f32 %v2086, %v2087
        %v2102 = vadd.f32 %v2101, %v2088
        %v2103 = vadd.f32 %v2102, %v2089
        %v2104 = vadd.f32 %v2103, %v2090
        %v2105 = vadd.f32 %v2104, %v2091
        %v2106 = vadd.f32 %v2105, %v2092
        %2107 = vadd.xlane.f32.xlu0 %v2106
        %v2108 = vpop.xlane.xlu0 %2107
        %vm2109 = vcmask 130048
        %v2111 = vsel %vm2109, %v434, 0
        %v2114 = vsel %vm2109, %v435, 0
        %2116 = vmatprep.subr.mxu0 0.0
        %2117 = vmatpush1.msra.mxu0 %v2100
        %2118 = vmatprep.subr.mxu0 0.0
        %2119 = vmatpush1.msra.mxu0 %v2108
        %2120 = vmatprep.subr.mxu0 0.0
        %2121 = vmatpush1.msra.mxu0 0.0
        %2122 = vmatprep.subr.mxu0 0.0
        %2123 = vmatpush1.msra.mxu0 0.0
        %2124 = vmatprep.subr.mxu0 0.0
        %2125 = vmatpush1.msra.mxu0 0.0
        %2126 = vmatprep.subr.mxu0 0.0
        %2127 = vmatpush1.msra.mxu0 0.0
        %2128 = vmatprep.subr.mxu0 0.0
        %2129 = vmatpush1.msra.mxu0 0.0
        %2130 = vmatprep.subr.mxu0 0.0
        %2131 = vmatpush1.msra.mxu0 0.0
        %2132 = vmatprep.subr.mxu0 0.0
        %2133 = vmatpush1.msra.mxu0 0.0
        %2134 = vmatprep.subr.mxu0 0.0
        %2135 = vmatpush1.msra.mxu0 0.0
        %2136 = vmatprep.subr.mxu0 0.0
        %2137 = vmatpush1.msra.mxu0 0.0
        %2138 = vmatprep.subr.mxu0 0.0
        %2139 = vmatpush1.msra.mxu0 0.0
        %2140 = vmatprep.subr.mxu0 0.0
        %2141 = vmatpush1.msra.mxu0 0.0
        %2142 = vmatprep.subr.mxu0 0.0
        %2143 = vmatpush1.msra.mxu0 0.0
        %2144 = vmatprep.subr.mxu0 0.0
        %2145 = vmatpush1.msra.mxu0 0.0
        %2146 = vmatprep.subr.mxu0 0.0
        %2147 = vmatpush1.msra.mxu0 0.0
        %2148 = vmatprep.subr.mxu0 0.0
        %2149 = vmatpush1.msra.mxu0 0.0
        %2150 = vmatprep.subr.mxu0 0.0
        %2151 = vmatpush1.msra.mxu0 0.0
        %2152 = vmatprep.subr.mxu0 0.0
        %2153 = vmatpush1.msra.mxu0 0.0
        %2154 = vmatprep.subr.mxu0 0.0
        %2155 = vmatpush1.msra.mxu0 0.0
        %2156 = vmatprep.subr.mxu0 0.0
        %2157 = vmatpush1.msra.mxu0 0.0
        %2158 = vmatprep.subr.mxu0 0.0
        %2159 = vmatpush1.msra.mxu0 0.0
        %2160 = vmatprep.subr.mxu0 0.0
        %2161 = vmatpush1.msra.mxu0 0.0
        %2162 = vmatprep.subr.mxu0 0.0
        %2163 = vmatpush1.msra.mxu0 0.0
        %2164 = vmatprep.subr.mxu0 0.0
        %2165 = vmatpush1.msra.mxu0 0.0
        %2166 = vmatprep.subr.mxu0 0.0
        %2167 = vmatpush1.msra.mxu0 0.0
        %2168 = vmatprep.subr.mxu0 0.0
        %2169 = vmatpush1.msra.mxu0 0.0
        %2170 = vmatprep.subr.mxu0 0.0
        %2171 = vmatpush1.msra.mxu0 0.0
        %2172 = vmatprep.subr.mxu0 0.0
        %2173 = vmatpush1.msra.mxu0 0.0
        %2174 = vmatprep.subr.mxu0 0.0
        %2175 = vmatpush1.msra.mxu0 0.0
        %2176 = vmatprep.subr.mxu0 0.0
        %2177 = vmatpush1.msra.mxu0 0.0
        %2178 = vmatprep.subr.mxu0 0.0
        %2179 = vmatpush1.msra.mxu0 0.0
        %2180 = vmatprep.mubr.f32.mxu0 0.0
        %2181 = vmatmul.mubr.f32.gmra.mrb[0].mxu0 %v2111
        %v2182 = vpop.f32.mrb[0].mxu0
        %v2183 = vadd.f32 0.0, %v2182
        %v2184 = vpop.f32.mrb[0].mxu0
        %2185 = vmatprep.mubr.f32.mxu0 0.0
        %2186 = vmatmul.mubr.f32.gmra.mrb[0].mxu0 %v2114
        %v2187 = vpop.f32.mrb[0].mxu0
        %v2188 = vadd.f32 0.0, %v2187
        %v2189 = vpop.f32.mrb[0].mxu0
        %2190 = vdwg.mxu0
        %2192 = vset.pattern.permute.xlu0 0
        %2193 = vperm.xlu0 %2192, %v2183
        %v2194 = vpop.permute.xlu0 %2193
        %2197 = vset.pattern.permute.xlu0 0
        %2198 = vperm.xlu0 %2197, %v2188
        %v2199 = vpop.permute.xlu0 %2198
        %v2201 = vsub.f32 %v1781, %v2194
        %v2202 = vsub.f32 %v1783, %v2194
        %v2203 = vsub.f32 %v1867, %v2194
        %v2204 = vsub.f32 %v1869, %v2194
        %v2205 = vsub.f32 %v1953, %v2194
        %v2206 = vsub.f32 %v1955, %v2194
        %v2207 = vsub.f32 %v2037, %v2194
        %v2208 = vsub.f32 %v1785, %v2199
        %v2209 = vsub.f32 %v1787, %v2199
        %v2210 = vsub.f32 %v1871, %v2199
        %v2211 = vsub.f32 %v1873, %v2199
        %v2212 = vsub.f32 %v1957, %v2199
        %v2213 = vsub.f32 %v1959, %v2199
        %v2214 = vsub.f32 %v2040, %v2199
        %v2215 = vmul.f32 %v2201, %v2047
        %v2216 = vmul.f32 %v2202, %v2051
        %v2217 = vmul.f32 %v2203, %v2055
        %v2218 = vmul.f32 %v2204, %v2059
        %v2219 = vmul.f32 %v2205, %v2063
        %v2220 = vmul.f32 %v2206, %v2067
        %v2221 = vmul.f32 %v2207, %v2071
        %v2222 = vmul.f32 %v2208, %v2047
        %v2223 = vmul.f32 %v2209, %v2051
        %v2224 = vmul.f32 %v2210, %v2055
        %v2225 = vmul.f32 %v2211, %v2059
        %v2226 = vmul.f32 %v2212, %v2063
        %v2227 = vmul.f32 %v2213, %v2067
        %v2228 = vmul.f32 %v2214, %v2071
        %v2229 = vmul.f32 %v2215, %v2215
        %v2230 = vmul.f32 %v2216, %v2216
        %v2231 = vmul.f32 %v2217, %v2217
        %v2232 = vmul.f32 %v2218, %v2218
        %v2233 = vmul.f32 %v2219, %v2219
        %v2234 = vmul.f32 %v2220, %v2220
        %v2235 = vmul.f32 %v2221, %v2221
        %v2236 = vmul.f32 %v2222, %v2222
        %v2237 = vmul.f32 %v2223, %v2223
        %v2238 = vmul.f32 %v2224, %v2224
        %v2239 = vmul.f32 %v2225, %v2225
        %v2240 = vmul.f32 %v2226, %v2226
        %v2241 = vmul.f32 %v2227, %v2227
        %v2242 = vmul.f32 %v2228, %v2228
        %v2243 = vadd.f32 %v2229, %v2230
        %v2244 = vadd.f32 %v2243, %v2231
        %v2245 = vadd.f32 %v2244, %v2232
        %v2246 = vadd.f32 %v2245, %v2233
        %v2247 = vadd.f32 %v2246, %v2234
        %v2248 = vadd.f32 %v2247, %v2235
        %2249 = vadd.xlane.f32.xlu0 %v2248
        %v2250 = vpop.xlane.xlu0 %2249
        %v2251 = vadd.f32 %v2236, %v2237
        %v2252 = vadd.f32 %v2251, %v2238
        %v2253 = vadd.f32 %v2252, %v2239
        %v2254 = vadd.f32 %v2253, %v2240
        %v2255 = vadd.f32 %v2254, %v2241
        %v2256 = vadd.f32 %v2255, %v2242
        %2257 = vadd.xlane.f32.xlu0 %v2256
        %v2258 = vpop.xlane.xlu0 %2257
        %2259 = vmatprep.subr.mxu0 0.0
        %2260 = vmatpush1.msra.mxu0 %v2250
        %2261 = vmatprep.subr.mxu0 0.0
        %2262 = vmatpush1.msra.mxu0 %v2258
        %2263 = vmatprep.subr.mxu0 0.0
        %2264 = vmatpush1.msra.mxu0 0.0
        %2265 = vmatprep.subr.mxu0 0.0
        %2266 = vmatpush1.msra.mxu0 0.0
        %2267 = vmatprep.subr.mxu0 0.0
        %2268 = vmatpush1.msra.mxu0 0.0
        %2269 = vmatprep.subr.mxu0 0.0
        %2270 = vmatpush1.msra.mxu0 0.0
        %2271 = vmatprep.subr.mxu0 0.0
        %2272 = vmatpush1.msra.mxu0 0.0
        %2273 = vmatprep.subr.mxu0 0.0
        %2274 = vmatpush1.msra.mxu0 0.0
        %2275 = vmatprep.subr.mxu0 0.0
        %2276 = vmatpush1.msra.mxu0 0.0
        %2277 = vmatprep.subr.mxu0 0.0
        %2278 = vmatpush1.msra.mxu0 0.0
        %2279 = vmatprep.subr.mxu0 0.0
        %2280 = vmatpush1.msra.mxu0 0.0
        %2281 = vmatprep.subr.mxu0 0.0
        %2282 = vmatpush1.msra.mxu0 0.0
        %2283 = vmatprep.subr.mxu0 0.0
        %2284 = vmatpush1.msra.mxu0 0.0
        %2285 = vmatprep.subr.mxu0 0.0
        %2286 = vmatpush1.msra.mxu0 0.0
        %2287 = vmatprep.subr.mxu0 0.0
        %2288 = vmatpush1.msra.mxu0 0.0
        %2289 = vmatprep.subr.mxu0 0.0
        %2290 = vmatpush1.msra.mxu0 0.0
        %2291 = vmatprep.subr.mxu0 0.0
        %2292 = vmatpush1.msra.mxu0 0.0
        %2293 = vmatprep.subr.mxu0 0.0
        %2294 = vmatpush1.msra.mxu0 0.0
        %2295 = vmatprep.subr.mxu0 0.0
        %2296 = vmatpush1.msra.mxu0 0.0
        %2297 = vmatprep.subr.mxu0 0.0
        %2298 = vmatpush1.msra.mxu0 0.0
        %2299 = vmatprep.subr.mxu0 0.0
        %2300 = vmatpush1.msra.mxu0 0.0
        %2301 = vmatprep.subr.mxu0 0.0
        %2302 = vmatpush1.msra.mxu0 0.0
        %2303 = vmatprep.subr.mxu0 0.0
        %2304 = vmatpush1.msra.mxu0 0.0
        %2305 = vmatprep.subr.mxu0 0.0
        %2306 = vmatpush1.msra.mxu0 0.0
        %2307 = vmatprep.subr.mxu0 0.0
        %2308 = vmatpush1.msra.mxu0 0.0
        %2309 = vmatprep.subr.mxu0 0.0
        %2310 = vmatpush1.msra.mxu0 0.0
        %2311 = vmatprep.subr.mxu0 0.0
        %2312 = vmatpush1.msra.mxu0 0.0
        %2313 = vmatprep.subr.mxu0 0.0
        %2314 = vmatpush1.msra.mxu0 0.0
        %2315 = vmatprep.subr.mxu0 0.0
        %2316 = vmatpush1.msra.mxu0 0.0
        %2317 = vmatprep.subr.mxu0 0.0
        %2318 = vmatpush1.msra.mxu0 0.0
        %2319 = vmatprep.subr.mxu0 0.0
        %2320 = vmatpush1.msra.mxu0 0.0
        %2321 = vmatprep.subr.mxu0 0.0
        %2322 = vmatpush1.msra.mxu0 0.0
        %2323 = vmatprep.mubr.f32.mxu0 0.0
        %2324 = vmatmul.mubr.f32.gmra.mrb[0].mxu0 %v2111
        %v2325 = vpop.f32.mrb[0].mxu0
        %v2326 = vadd.f32 1e-05, %v2325
        %v2327 = vpop.f32.mrb[0].mxu0
        %2328 = vmatprep.mubr.f32.mxu0 0.0
        %2329 = vmatmul.mubr.f32.gmra.mrb[0].mxu0 %v2114
        %v2330 = vpop.f32.mrb[0].mxu0
        %v2331 = vadd.f32 1e-05, %v2330
        %v2332 = vpop.f32.mrb[0].mxu0
        %2333 = vdwg.mxu0
        %v2334 = vrsqrt.pop %v2326
        %v2335 = vrsqrt.pop %v2331
        %v2336 = vld [vmem:[%s4] sm:$0xff]
        %v2337 = vld [vmem:[%s4 + $0x8] sm:$0xff]
        %v2338 = vmul.f32 %v2334, %v2336
        %v2339 = vmul.f32 %v2335, %v2337
        %2341 = vset.pattern.permute.xlu0 0
        %2342 = vperm.xlu0 %2341, %v2338
        %v2343 = vpop.permute.xlu0 %2342
        %2346 = vset.pattern.permute.xlu0 0
        %2347 = vperm.xlu0 %2346, %v2339
        %v2348 = vpop.permute.xlu0 %2347
        %v2350 = vmul.f32 %v2201, %v2343
        %v2351 = vmul.f32 %v2202, %v2343
        %v2352 = vmul.f32 %v2203, %v2343
        %v2353 = vmul.f32 %v2204, %v2343
        %v2354 = vmul.f32 %v2205, %v2343
        %v2355 = vmul.f32 %v2206, %v2343
        %v2356 = vmul.f32 %v2207, %v2343
        %v2357 = vmul.f32 %v2208, %v2348
        %v2358 = vmul.f32 %v2209, %v2348
        %v2359 = vmul.f32 %v2210, %v2348
        %v2360 = vmul.f32 %v2211, %v2348
        %v2361 = vmul.f32 %v2212, %v2348
        %v2362 = vmul.f32 %v2213, %v2348
        %v2363 = vmul.f32 %v2214, %v2348
        %v2364 = vld [vmem:[%s5] sm:$0xff]
        %v2365 = vld [vmem:[%s5 + $0x8] sm:$0xff]
        %2367 = vset.pattern.permute.xlu0 0
        %2368 = vperm.xlu0 %2367, %v2364
        %v2369 = vpop.permute.xlu0 %2368
        %2372 = vset.pattern.permute.xlu0 0
        %2373 = vperm.xlu0 %2372, %v2365
        %v2374 = vpop.permute.xlu0 %2373
        %v2376 = vadd.f32 %v2350, %v2369
        %v2377 = vadd.f32 %v2351, %v2369
        %v2378 = vadd.f32 %v2352, %v2369
        %v2379 = vadd.f32 %v2353, %v2369
        %v2380 = vadd.f32 %v2354, %v2369
        %v2381 = vadd.f32 %v2355, %v2369
        %v2382 = vadd.f32 %v2356, %v2369
        %v2383 = vadd.f32 %v2357, %v2374
        %v2384 = vadd.f32 %v2358, %v2374
        %v2385 = vadd.f32 %v2359, %v2374
        %v2386 = vadd.f32 %v2360, %v2374
        %v2387 = vadd.f32 %v2361, %v2374
        %v2388 = vadd.f32 %v2362, %v2374
        %v2389 = vadd.f32 %v2363, %v2374
        %vm2390 = vcmp.gt.f32.partialorder %v2376, 0.0
        %vm2391 = vcmp.gt.f32.partialorder %v2377, 0.0
        %vm2392 = vcmp.gt.f32.partialorder %v2378, 0.0
        %vm2393 = vcmp.gt.f32.partialorder %v2379, 0.0
        %vm2394 = vcmp.gt.f32.partialorder %v2380, 0.0
        %vm2395 = vcmp.gt.f32.partialorder %v2381, 0.0
        %vm2396 = vcmp.gt.f32.partialorder %v2382, 0.0
        %vm2397 = vcmp.gt.f32.partialorder %v2383, 0.0
        %vm2398 = vcmp.gt.f32.partialorder %v2384, 0.0
        %vm2399 = vcmp.gt.f32.partialorder %v2385, 0.0
        %vm2400 = vcmp.gt.f32.partialorder %v2386, 0.0
        %vm2401 = vcmp.gt.f32.partialorder %v2387, 0.0
        %vm2402 = vcmp.gt.f32.partialorder %v2388, 0.0
        %vm2403 = vcmp.gt.f32.partialorder %v2389, 0.0
        %v2404 = vmin.f32 %v2376, 0.0
        %v2405 = vmin.f32 %v2377, 0.0
        %v2406 = vmin.f32 %v2378, 0.0
        %v2407 = vmin.f32 %v2379, 0.0
        %v2408 = vmin.f32 %v2380, 0.0
        %v2409 = vmin.f32 %v2381, 0.0
        %v2410 = vmin.f32 %v2382, 0.0
        %v2411 = vmin.f32 %v2383, 0.0
        %v2412 = vmin.f32 %v2384, 0.0
        %v2413 = vmin.f32 %v2385, 0.0
        %v2414 = vmin.f32 %v2386, 0.0
        %v2415 = vmin.f32 %v2387, 0.0
        %v2416 = vmin.f32 %v2388, 0.0
        %v2417 = vmin.f32 %v2389, 0.0
        %v2418 = vmul.f32 %v2404, 1.442695
        %v2419 = vpow.pop %v2418
        %v2420 = vmul.f32 %v2405, 1.442695
        %v2421 = vpow.pop %v2420
        %v2422 = vmul.f32 %v2406, 1.442695
        %v2423 = vpow.pop %v2422
        %v2424 = vmul.f32 %v2407, 1.442695
        %v2425 = vpow.pop %v2424
        %v2426 = vmul.f32 %v2408, 1.442695
        %v2427 = vpow.pop %v2426
        %v2428 = vmul.f32 %v2409, 1.442695
        %v2429 = vpow.pop %v2428
        %v2430 = vmul.f32 %v2410, 1.442695
        %v2431 = vpow.pop %v2430
        %v2432 = vmul.f32 %v2411, 1.442695
        %v2433 = vpow.pop %v2432
        %v2434 = vmul.f32 %v2412, 1.442695
        %v2435 = vpow.pop %v2434
        %v2436 = vmul.f32 %v2413, 1.442695
        %v2437 = vpow.pop %v2436
        %v2438 = vmul.f32 %v2414, 1.442695
        %v2439 = vpow.pop %v2438
        %v2440 = vmul.f32 %v2415, 1.442695
        %v2441 = vpow.pop %v2440
        %v2442 = vmul.f32 %v2416, 1.442695
        %v2443 = vpow.pop %v2442
        %v2444 = vmul.f32 %v2417, 1.442695
        %v2445 = vpow.pop %v2444
        %v2446 = vsub.f32 %v2419, 1.0
        %v2447 = vsub.f32 %v2421, 1.0
        %v2448 = vsub.f32 %v2423, 1.0
        %v2449 = vsub.f32 %v2425, 1.0
        %v2450 = vsub.f32 %v2427, 1.0
        %v2451 = vsub.f32 %v2429, 1.0
        %v2452 = vsub.f32 %v2431, 1.0
        %v2453 = vsub.f32 %v2433, 1.0
        %v2454 = vsub.f32 %v2435, 1.0
        %v2455 = vsub.f32 %v2437, 1.0
        %v2456 = vsub.f32 %v2439, 1.0
        %v2457 = vsub.f32 %v2441, 1.0
        %v2458 = vsub.f32 %v2443, 1.0
        %v2459 = vsub.f32 %v2445, 1.0
        %v2460 = vsel %vm2390, %v2376, %v2446
        %v2461 = vsel %vm2391, %v2377, %v2447
        %v2462 = vsel %vm2392, %v2378, %v2448
        %v2463 = vsel %vm2393, %v2379, %v2449
        %v2464 = vsel %vm2394, %v2380, %v2450
        %v2465 = vsel %vm2395, %v2381, %v2451
        %v2466 = vsel %vm2396, %v2382, %v2452
        %v2467 = vsel %vm2397, %v2383, %v2453
        %v2468 = vsel %vm2398, %v2384, %v2454
        %v2469 = vsel %vm2399, %v2385, %v2455
        %v2470 = vsel %vm2400, %v2386, %v2456
        %v2471 = vsel %vm2401, %v2387, %v2457
        %v2472 = vsel %vm2402, %v2388, %v2458
        %v2473 = vsel %vm2403, %v2389, %v2459
        %2474 = vst [vmem:[#allocation4] sm:$0xff] %v2460
        %2475 = vst [vmem:[#allocation4 + $0x8] sm:$0xff] %v2461
        %2476 = vst [vmem:[#allocation4 + $0x10] sm:$0xff] %v2462
        %2477 = vst [vmem:[#allocation4 + $0x18] sm:$0xff] %v2463
        %2478 = vst [vmem:[#allocation4 + $0x20] sm:$0xff] %v2464
        %2479 = vst [vmem:[#allocation4 + $0x28] sm:$0xff] %v2465
        %2480 = vst [vmem:[#allocation4 + $0x30] sm:$0xff] %v2466
        %2481 = vst [vmem:[#allocation4 + $0x38] sm:$0xff] %v2467
        %2482 = vst [vmem:[#allocation4 + $0x40] sm:$0xff] %v2468
        %2483 = vst [vmem:[#allocation4 + $0x48] sm:$0xff] %v2469
        %2484 = vst [vmem:[#allocation4 + $0x50] sm:$0xff] %v2470
        %2485 = vst [vmem:[#allocation4 + $0x58] sm:$0xff] %v2471
        %2486 = vst [vmem:[#allocation4 + $0x60] sm:$0xff] %v2472
        %2487 = vst [vmem:[#allocation4 + $0x68] sm:$0xff] %v2473
        %v2488 = vmul.f32 %v2460, %v2047
        %v2489 = vmul.f32 %v2461, %v2051
        %v2490 = vmul.f32 %v2462, %v2055
        %v2491 = vmul.f32 %v2463, %v2059
        %v2492 = vmul.f32 %v2464, %v2063
        %v2493 = vmul.f32 %v2465, %v2067
        %v2494 = vmul.f32 %v2466, %v2071
        %v2495 = vmul.f32 %v2467, %v2047
        %v2496 = vmul.f32 %v2468, %v2051
        %v2497 = vmul.f32 %v2469, %v2055
        %v2498 = vmul.f32 %v2470, %v2059
        %v2499 = vmul.f32 %v2471, %v2063
        %v2500 = vmul.f32 %v2472, %v2067
        %v2501 = vmul.f32 %v2473, %v2071
        %v2502 = vpack.c.bf16 %v2495, %v2488
        %v2503 = vpack.c.bf16 %v2496, %v2489
        %v2504 = vpack.c.bf16 %v2497, %v2490
        %v2505 = vpack.c.bf16 %v2498, %v2491
        %v2506 = vpack.c.bf16 %v2499, %v2492
        %v2507 = vpack.c.bf16 %v2500, %v2493
        %v2508 = vpack.c.bf16 %v2501, %v2494
        %2509 = vst [vmem:[#allocation3 + $0x8] sm:$0xff] %v2502
        %2510 = vst [vmem:[#allocation3 + $0x10] sm:$0xff] %v2503
        %2511 = vst [vmem:[#allocation3 + $0x18] sm:$0xff] %v2504
        %2512 = vst [vmem:[#allocation3 + $0x20] sm:$0xff] %v2505
        %2513 = vst [vmem:[#allocation3 + $0x28] sm:$0xff] %v2506
        %2514 = vst [vmem:[#allocation3 + $0x30] sm:$0xff] %v2507
        %2515 = vst [vmem:[#allocation3 + $0x38] sm:$0xff] %v2508
        %v2516 = vld [vmem:[#allocation3] sm:$0xff]
        %v2517 = vld [vmem:[#allocation3 + $0x8] sm:$0xff]
        %v2518 = vld [vmem:[#allocation3 + $0x10] sm:$0xff]
        %v2519 = vld [vmem:[#allocation3 + $0x18] sm:$0xff]
        %v2520 = vld [vmem:[#allocation3 + $0x20] sm:$0xff]
        %v2521 = vld [vmem:[#allocation3 + $0x28] sm:$0xff]
        %v2522 = vld [vmem:[#allocation3 + $0x30] sm:$0xff]
        %v2523 = vld [vmem:[#allocation3 + $0x38] sm:$0xff]
        %v2524 = vld [vmem:[#allocation3 + $0x40] sm:$0xff]
        %2533 = vrot.lane.b32.xlu0 %v2516, 111
        %v2534 = vpop.permute.xlu0 %2533
        %2535 = vrot.lane.b32.xlu0 %v2517, 111
        %v2536 = vpop.permute.xlu0 %2535
        %2537 = vrot.lane.b32.xlu0 %v2518, 111
        %v2538 = vpop.permute.xlu0 %2537
        %2539 = vrot.lane.b32.xlu0 %v2519, 111
        %v2540 = vpop.permute.xlu0 %2539
        %2541 = vrot.lane.b32.xlu0 %v2520, 111
        %v2542 = vpop.permute.xlu0 %2541
        %2543 = vrot.lane.b32.xlu0 %v2521, 111
        %v2544 = vpop.permute.xlu0 %2543
        %2545 = vrot.lane.b32.xlu0 %v2522, 111
        %v2546 = vpop.permute.xlu0 %2545
        %2547 = vrot.lane.b32.xlu0 %v2523, 111
        %v2548 = vpop.permute.xlu0 %2547
        %v2549 = vsel %vm496, %v2534, %v2536
        %v2550 = vsel %vm496, %v2536, %v2538
        %v2551 = vsel %vm496, %v2538, %v2540
        %v2552 = vsel %vm496, %v2540, %v2542
        %v2553 = vsel %vm496, %v2542, %v2544
        %v2554 = vsel %vm496, %v2544, %v2546
        %v2555 = vsel %vm496, %v2546, %v2548
        %2563 = vst [vmem:[#allocation2] sm:$0xff] %v2549
        %2564 = vst [vmem:[#allocation2 + $0x8] sm:$0xff] %v2550
        %2565 = vst [vmem:[#allocation2 + $0x10] sm:$0xff] %v2551
        %2566 = vst [vmem:[#allocation2 + $0x18] sm:$0xff] %v2552
        %2567 = vst [vmem:[#allocation2 + $0x20] sm:$0xff] %v2553
        %2568 = vst [vmem:[#allocation2 + $0x28] sm:$0xff] %v2554
        %2569 = vst [vmem:[#allocation2 + $0x30] sm:$0xff] %v2555
        %2570 = vrot.lane.b32.xlu0 %v2516, 110
        %v2571 = vpop.permute.xlu0 %2570
        %2572 = vrot.lane.b32.xlu0 %v2517, 110
        %v2573 = vpop.permute.xlu0 %2572
        %2574 = vrot.lane.b32.xlu0 %v2518, 110
        %v2575 = vpop.permute.xlu0 %2574
        %2576 = vrot.lane.b32.xlu0 %v2519, 110
        %v2577 = vpop.permute.xlu0 %2576
        %2578 = vrot.lane.b32.xlu0 %v2520, 110
        %v2579 = vpop.permute.xlu0 %2578
        %2580 = vrot.lane.b32.xlu0 %v2521, 110
        %v2581 = vpop.permute.xlu0 %2580
        %2582 = vrot.lane.b32.xlu0 %v2522, 110
        %v2583 = vpop.permute.xlu0 %2582
        %2584 = vrot.lane.b32.xlu0 %v2523, 110
        %v2585 = vpop.permute.xlu0 %2584
        %v2586 = vsel %vm534, %v2571, %v2573
        %v2587 = vsel %vm534, %v2573, %v2575
        %v2588 = vsel %vm534, %v2575, %v2577
        %v2589 = vsel %vm534, %v2577, %v2579
        %v2590 = vsel %vm534, %v2579, %v2581
        %v2591 = vsel %vm534, %v2581, %v2583
        %v2592 = vsel %vm534, %v2583, %v2585
        %2600 = vst [vmem:[#allocation2 + $0x38] sm:$0xff] %v2586
        %2601 = vst [vmem:[#allocation2 + $0x40] sm:$0xff] %v2587
        %2602 = vst [vmem:[#allocation2 + $0x48] sm:$0xff] %v2588
        %2603 = vst [vmem:[#allocation2 + $0x50] sm:$0xff] %v2589
        %2604 = vst [vmem:[#allocation2 + $0x58] sm:$0xff] %v2590
        %2605 = vst [vmem:[#allocation2 + $0x60] sm:$0xff] %v2591
        %2606 = vst [vmem:[#allocation2 + $0x68] sm:$0xff] %v2592
        %2607 = vrot.lane.b32.xlu0 %v2516, 109
        %v2608 = vpop.permute.xlu0 %2607
        %2609 = vrot.lane.b32.xlu0 %v2517, 109
        %v2610 = vpop.permute.xlu0 %2609
        %2611 = vrot.lane.b32.xlu0 %v2518, 109
        %v2612 = vpop.permute.xlu0 %2611
        %2613 = vrot.lane.b32.xlu0 %v2519, 109
        %v2614 = vpop.permute.xlu0 %2613
        %2615 = vrot.lane.b32.xlu0 %v2520, 109
        %v2616 = vpop.permute.xlu0 %2615
        %2617 = vrot.lane.b32.xlu0 %v2521, 109
        %v2618 = vpop.permute.xlu0 %2617
        %2619 = vrot.lane.b32.xlu0 %v2522, 109
        %v2620 = vpop.permute.xlu0 %2619
        %2621 = vrot.lane.b32.xlu0 %v2523, 109
        %v2622 = vpop.permute.xlu0 %2621
        %v2623 = vsel %vm572, %v2608, %v2610
        %v2624 = vsel %vm572, %v2610, %v2612
        %v2625 = vsel %vm572, %v2612, %v2614
        %v2626 = vsel %vm572, %v2614, %v2616
        %v2627 = vsel %vm572, %v2616, %v2618
        %v2628 = vsel %vm572, %v2618, %v2620
        %v2629 = vsel %vm572, %v2620, %v2622
        %2637 = vst [vmem:[#allocation2 + $0x70] sm:$0xff] %v2623
        %2638 = vst [vmem:[#allocation2 + $0x78] sm:$0xff] %v2624
        %2639 = vst [vmem:[#allocation2 + $0x80] sm:$0xff] %v2625
        %2640 = vst [vmem:[#allocation2 + $0x88] sm:$0xff] %v2626
        %2641 = vst [vmem:[#allocation2 + $0x90] sm:$0xff] %v2627
        %2642 = vst [vmem:[#allocation2 + $0x98] sm:$0xff] %v2628
        %2643 = vst [vmem:[#allocation2 + $0xa0] sm:$0xff] %v2629
        %2644 = vrot.lane.b32.xlu0 %v2516, 101
        %v2645 = vpop.permute.xlu0 %2644
        %2646 = vrot.lane.b32.xlu0 %v2517, 101
        %v2647 = vpop.permute.xlu0 %2646
        %2648 = vrot.lane.b32.xlu0 %v2518, 101
        %v2649 = vpop.permute.xlu0 %2648
        %2650 = vrot.lane.b32.xlu0 %v2519, 101
        %v2651 = vpop.permute.xlu0 %2650
        %2652 = vrot.lane.b32.xlu0 %v2520, 101
        %v2653 = vpop.permute.xlu0 %2652
        %2654 = vrot.lane.b32.xlu0 %v2521, 101
        %v2655 = vpop.permute.xlu0 %2654
        %2656 = vrot.lane.b32.xlu0 %v2522, 101
        %v2657 = vpop.permute.xlu0 %2656
        %2658 = vrot.lane.b32.xlu0 %v2523, 101
        %v2659 = vpop.permute.xlu0 %2658
        %v2660 = vsel %vm610, %v2645, %v2647
        %v2661 = vsel %vm610, %v2647, %v2649
        %v2662 = vsel %vm610, %v2649, %v2651
        %v2663 = vsel %vm610, %v2651, %v2653
        %v2664 = vsel %vm610, %v2653, %v2655
        %v2665 = vsel %vm610, %v2655, %v2657
        %v2666 = vsel %vm610, %v2657, %v2659
        %2674 = vst [vmem:[#allocation2 + $0xa8] sm:$0xff] %v2660
        %2675 = vst [vmem:[#allocation2 + $0xb0] sm:$0xff] %v2661
        %2676 = vst [vmem:[#allocation2 + $0xb8] sm:$0xff] %v2662
        %2677 = vst [vmem:[#allocation2 + $0xc0] sm:$0xff] %v2663
        %2678 = vst [vmem:[#allocation2 + $0xc8] sm:$0xff] %v2664
        %2679 = vst [vmem:[#allocation2 + $0xd0] sm:$0xff] %v2665
        %2680 = vst [vmem:[#allocation2 + $0xd8] sm:$0xff] %v2666
        %2681 = vrot.lane.b32.xlu0 %v2516, 100
        %v2682 = vpop.permute.xlu0 %2681
        %2683 = vrot.lane.b32.xlu0 %v2517, 100
        %v2684 = vpop.permute.xlu0 %2683
        %2685 = vrot.lane.b32.xlu0 %v2518, 100
        %v2686 = vpop.permute.xlu0 %2685
        %2687 = vrot.lane.b32.xlu0 %v2519, 100
        %v2688 = vpop.permute.xlu0 %2687
        %2689 = vrot.lane.b32.xlu0 %v2520, 100
        %v2690 = vpop.permute.xlu0 %2689
        %2691 = vrot.lane.b32.xlu0 %v2521, 100
        %v2692 = vpop.permute.xlu0 %2691
        %2693 = vrot.lane.b32.xlu0 %v2522, 100
        %v2694 = vpop.permute.xlu0 %2693
        %2695 = vrot.lane.b32.xlu0 %v2523, 100
        %v2696 = vpop.permute.xlu0 %2695
        %v2697 = vsel %vm648, %v2682, %v2684
        %v2698 = vsel %vm648, %v2684, %v2686
        %v2699 = vsel %vm648, %v2686, %v2688
        %v2700 = vsel %vm648, %v2688, %v2690
        %v2701 = vsel %vm648, %v2690, %v2692
        %v2702 = vsel %vm648, %v2692, %v2694
        %v2703 = vsel %vm648, %v2694, %v2696
        %2711 = vst [vmem:[#allocation2 + $0xe0] sm:$0xff] %v2697
        %2712 = vst [vmem:[#allocation2 + $0xe8] sm:$0xff] %v2698
        %2713 = vst [vmem:[#allocation2 + $0xf0] sm:$0xff] %v2699
        %2714 = vst [vmem:[#allocation2 + $0xf8] sm:$0xff] %v2700
        %2715 = vst [vmem:[#allocation2 + $0x100] sm:$0xff] %v2701
        %2716 = vst [vmem:[#allocation2 + $0x108] sm:$0xff] %v2702
        %2717 = vst [vmem:[#allocation2 + $0x110] sm:$0xff] %v2703
        %2718 = vrot.lane.b32.xlu0 %v2516, 99
        %v2719 = vpop.permute.xlu0 %2718
        %2720 = vrot.lane.b32.xlu0 %v2517, 99
        %v2721 = vpop.permute.xlu0 %2720
        %2722 = vrot.lane.b32.xlu0 %v2518, 99
        %v2723 = vpop.permute.xlu0 %2722
        %2724 = vrot.lane.b32.xlu0 %v2519, 99
        %v2725 = vpop.permute.xlu0 %2724
        %2726 = vrot.lane.b32.xlu0 %v2520, 99
        %v2727 = vpop.permute.xlu0 %2726
        %2728 = vrot.lane.b32.xlu0 %v2521, 99
        %v2729 = vpop.permute.xlu0 %2728
        %2730 = vrot.lane.b32.xlu0 %v2522, 99
        %v2731 = vpop.permute.xlu0 %2730
        %2732 = vrot.lane.b32.xlu0 %v2523, 99
        %v2733 = vpop.permute.xlu0 %2732
        %v2734 = vsel %vm686, %v2719, %v2721
        %v2735 = vsel %vm686, %v2721, %v2723
        %v2736 = vsel %vm686, %v2723, %v2725
        %v2737 = vsel %vm686, %v2725, %v2727
        %v2738 = vsel %vm686, %v2727, %v2729
        %v2739 = vsel %vm686, %v2729, %v2731
        %v2740 = vsel %vm686, %v2731, %v2733
        %2748 = vst [vmem:[#allocation2 + $0x118] sm:$0xff] %v2734
        %2749 = vst [vmem:[#allocation2 + $0x120] sm:$0xff] %v2735
        %2750 = vst [vmem:[#allocation2 + $0x128] sm:$0xff] %v2736
        %2751 = vst [vmem:[#allocation2 + $0x130] sm:$0xff] %v2737
        %2752 = vst [vmem:[#allocation2 + $0x138] sm:$0xff] %v2738
        %2753 = vst [vmem:[#allocation2 + $0x140] sm:$0xff] %v2739
        %2754 = vst [vmem:[#allocation2 + $0x148] sm:$0xff] %v2740
        %2755 = vrot.lane.b32.xlu0 %v2516, 91
        %v2756 = vpop.permute.xlu0 %2755
        %2757 = vrot.lane.b32.xlu0 %v2517, 91
        %v2758 = vpop.permute.xlu0 %2757
        %2759 = vrot.lane.b32.xlu0 %v2518, 91
        %v2760 = vpop.permute.xlu0 %2759
        %2761 = vrot.lane.b32.xlu0 %v2519, 91
        %v2762 = vpop.permute.xlu0 %2761
        %2763 = vrot.lane.b32.xlu0 %v2520, 91
        %v2764 = vpop.permute.xlu0 %2763
        %2765 = vrot.lane.b32.xlu0 %v2521, 91
        %v2766 = vpop.permute.xlu0 %2765
        %2767 = vrot.lane.b32.xlu0 %v2522, 91
        %v2768 = vpop.permute.xlu0 %2767
        %2769 = vrot.lane.b32.xlu0 %v2523, 91
        %v2770 = vpop.permute.xlu0 %2769
        %v2771 = vsel %vm724, %v2756, %v2758
        %v2772 = vsel %vm724, %v2758, %v2760
        %v2773 = vsel %vm724, %v2760, %v2762
        %v2774 = vsel %vm724, %v2762, %v2764
        %v2775 = vsel %vm724, %v2764, %v2766
        %v2776 = vsel %vm724, %v2766, %v2768
        %v2777 = vsel %vm724, %v2768, %v2770
        %2785 = vst [vmem:[#allocation2 + $0x150] sm:$0xff] %v2771
        %2786 = vst [vmem:[#allocation2 + $0x158] sm:$0xff] %v2772
        %2787 = vst [vmem:[#allocation2 + $0x160] sm:$0xff] %v2773
        %2788 = vst [vmem:[#allocation2 + $0x168] sm:$0xff] %v2774
        %2789 = vst [vmem:[#allocation2 + $0x170] sm:$0xff] %v2775
        %2790 = vst [vmem:[#allocation2 + $0x178] sm:$0xff] %v2776
        %2791 = vst [vmem:[#allocation2 + $0x180] sm:$0xff] %v2777
        %2792 = vrot.lane.b32.xlu0 %v2516, 90
        %v2793 = vpop.permute.xlu0 %2792
        %2794 = vrot.lane.b32.xlu0 %v2517, 90
        %v2795 = vpop.permute.xlu0 %2794
        %2796 = vrot.lane.b32.xlu0 %v2518, 90
        %v2797 = vpop.permute.xlu0 %2796
        %2798 = vrot.lane.b32.xlu0 %v2519, 90
        %v2799 = vpop.permute.xlu0 %2798
        %2800 = vrot.lane.b32.xlu0 %v2520, 90
        %v2801 = vpop.permute.xlu0 %2800
        %2802 = vrot.lane.b32.xlu0 %v2521, 90
        %v2803 = vpop.permute.xlu0 %2802
        %2804 = vrot.lane.b32.xlu0 %v2522, 90
        %v2805 = vpop.permute.xlu0 %2804
        %2806 = vrot.lane.b32.xlu0 %v2523, 90
        %v2807 = vpop.permute.xlu0 %2806
        %v2808 = vsel %vm762, %v2793, %v2795
        %v2809 = vsel %vm762, %v2795, %v2797
        %v2810 = vsel %vm762, %v2797, %v2799
        %v2811 = vsel %vm762, %v2799, %v2801
        %v2812 = vsel %vm762, %v2801, %v2803
        %v2813 = vsel %vm762, %v2803, %v2805
        %v2814 = vsel %vm762, %v2805, %v2807
        %2822 = vst [vmem:[#allocation2 + $0x188] sm:$0xff] %v2808
        %2823 = vst [vmem:[#allocation2 + $0x190] sm:$0xff] %v2809
        %2824 = vst [vmem:[#allocation2 + $0x198] sm:$0xff] %v2810
        %2825 = vst [vmem:[#allocation2 + $0x1a0] sm:$0xff] %v2811
        %2826 = vst [vmem:[#allocation2 + $0x1a8] sm:$0xff] %v2812
        %2827 = vst [vmem:[#allocation2 + $0x1b0] sm:$0xff] %v2813
        %2828 = vst [vmem:[#allocation2 + $0x1b8] sm:$0xff] %v2814
        %2829 = vrot.lane.b32.xlu0 %v2516, 89
        %v2830 = vpop.permute.xlu0 %2829
        %2831 = vrot.lane.b32.xlu0 %v2517, 89
        %v2832 = vpop.permute.xlu0 %2831
        %2833 = vrot.lane.b32.xlu0 %v2518, 89
        %v2834 = vpop.permute.xlu0 %2833
        %2835 = vrot.lane.b32.xlu0 %v2519, 89
        %v2836 = vpop.permute.xlu0 %2835
        %2837 = vrot.lane.b32.xlu0 %v2520, 89
        %v2838 = vpop.permute.xlu0 %2837
        %2839 = vrot.lane.b32.xlu0 %v2521, 89
        %v2840 = vpop.permute.xlu0 %2839
        %2841 = vrot.lane.b32.xlu0 %v2522, 89
        %v2842 = vpop.permute.xlu0 %2841
        %2843 = vrot.lane.b32.xlu0 %v2523, 89
        %v2844 = vpop.permute.xlu0 %2843
        %v2845 = vsel %vm800, %v2830, %v2832
        %v2846 = vsel %vm800, %v2832, %v2834
        %v2847 = vsel %vm800, %v2834, %v2836
        %v2848 = vsel %vm800, %v2836, %v2838
        %v2849 = vsel %vm800, %v2838, %v2840
        %v2850 = vsel %vm800, %v2840, %v2842
        %v2851 = vsel %vm800, %v2842, %v2844
        %2859 = vst [vmem:[#allocation2 + $0x1c0] sm:$0xff] %v2845
        %2860 = vst [vmem:[#allocation2 + $0x1c8] sm:$0xff] %v2846
        %2861 = vst [vmem:[#allocation2 + $0x1d0] sm:$0xff] %v2847
        %2862 = vst [vmem:[#allocation2 + $0x1d8] sm:$0xff] %v2848
        %2863 = vst [vmem:[#allocation2 + $0x1e0] sm:$0xff] %v2849
        %2864 = vst [vmem:[#allocation2 + $0x1e8] sm:$0xff] %v2850
        %2865 = vst [vmem:[#allocation2 + $0x1f0] sm:$0xff] %v2851
        %2866 = vrot.lane.b32.xlu0 %v2516, 11
        %v2867 = vpop.permute.xlu0 %2866
        %2868 = vrot.lane.b32.xlu0 %v2517, 11
        %v2869 = vpop.permute.xlu0 %2868
        %2870 = vrot.lane.b32.xlu0 %v2518, 11
        %v2871 = vpop.permute.xlu0 %2870
        %2872 = vrot.lane.b32.xlu0 %v2519, 11
        %v2873 = vpop.permute.xlu0 %2872
        %2874 = vrot.lane.b32.xlu0 %v2520, 11
        %v2875 = vpop.permute.xlu0 %2874
        %2876 = vrot.lane.b32.xlu0 %v2521, 11
        %v2877 = vpop.permute.xlu0 %2876
        %2878 = vrot.lane.b32.xlu0 %v2522, 11
        %v2879 = vpop.permute.xlu0 %2878
        %2880 = vrot.lane.b32.xlu0 %v2523, 11
        %v2881 = vpop.permute.xlu0 %2880
        %v2882 = vsel %vm838, %v2867, %v2869
        %v2883 = vsel %vm838, %v2869, %v2871
        %v2884 = vsel %vm838, %v2871, %v2873
        %v2885 = vsel %vm838, %v2873, %v2875
        %v2886 = vsel %vm838, %v2875, %v2877
        %v2887 = vsel %vm838, %v2877, %v2879
        %v2888 = vsel %vm838, %v2879, %v2881
        %2896 = vst [vmem:[#allocation2 + $0x1f8] sm:$0xff] %v2882
        %2897 = vst [vmem:[#allocation2 + $0x200] sm:$0xff] %v2883
        %2898 = vst [vmem:[#allocation2 + $0x208] sm:$0xff] %v2884
        %2899 = vst [vmem:[#allocation2 + $0x210] sm:$0xff] %v2885
        %2900 = vst [vmem:[#allocation2 + $0x218] sm:$0xff] %v2886
        %2901 = vst [vmem:[#allocation2 + $0x220] sm:$0xff] %v2887
        %2902 = vst [vmem:[#allocation2 + $0x228] sm:$0xff] %v2888
        %2903 = vrot.lane.b32.xlu0 %v2516, 10
        %v2904 = vpop.permute.xlu0 %2903
        %2905 = vrot.lane.b32.xlu0 %v2517, 10
        %v2906 = vpop.permute.xlu0 %2905
        %2907 = vrot.lane.b32.xlu0 %v2518, 10
        %v2908 = vpop.permute.xlu0 %2907
        %2909 = vrot.lane.b32.xlu0 %v2519, 10
        %v2910 = vpop.permute.xlu0 %2909
        %2911 = vrot.lane.b32.xlu0 %v2520, 10
        %v2912 = vpop.permute.xlu0 %2911
        %2913 = vrot.lane.b32.xlu0 %v2521, 10
        %v2914 = vpop.permute.xlu0 %2913
        %2915 = vrot.lane.b32.xlu0 %v2522, 10
        %v2916 = vpop.permute.xlu0 %2915
        %2917 = vrot.lane.b32.xlu0 %v2523, 10
        %v2918 = vpop.permute.xlu0 %2917
        %v2919 = vsel %vm876, %v2904, %v2906
        %v2920 = vsel %vm876, %v2906, %v2908
        %v2921 = vsel %vm876, %v2908, %v2910
        %v2922 = vsel %vm876, %v2910, %v2912
        %v2923 = vsel %vm876, %v2912, %v2914
        %v2924 = vsel %vm876, %v2914, %v2916
        %v2925 = vsel %vm876, %v2916, %v2918
        %2933 = vst [vmem:[#allocation2 + $0x230] sm:$0xff] %v2919
        %2934 = vst [vmem:[#allocation2 + $0x238] sm:$0xff] %v2920
        %2935 = vst [vmem:[#allocation2 + $0x240] sm:$0xff] %v2921
        %2936 = vst [vmem:[#allocation2 + $0x248] sm:$0xff] %v2922
        %2937 = vst [vmem:[#allocation2 + $0x250] sm:$0xff] %v2923
        %2938 = vst [vmem:[#allocation2 + $0x258] sm:$0xff] %v2924
        %2939 = vst [vmem:[#allocation2 + $0x260] sm:$0xff] %v2925
        %2940 = vrot.lane.b32.xlu0 %v2516, 9
        %v2941 = vpop.permute.xlu0 %2940
        %2942 = vrot.lane.b32.xlu0 %v2517, 9
        %v2943 = vpop.permute.xlu0 %2942
        %2944 = vrot.lane.b32.xlu0 %v2518, 9
        %v2945 = vpop.permute.xlu0 %2944
        %2946 = vrot.lane.b32.xlu0 %v2519, 9
        %v2947 = vpop.permute.xlu0 %2946
        %2948 = vrot.lane.b32.xlu0 %v2520, 9
        %v2949 = vpop.permute.xlu0 %2948
        %2950 = vrot.lane.b32.xlu0 %v2521, 9
        %v2951 = vpop.permute.xlu0 %2950
        %2952 = vrot.lane.b32.xlu0 %v2522, 9
        %v2953 = vpop.permute.xlu0 %2952
        %2954 = vrot.lane.b32.xlu0 %v2523, 9
        %v2955 = vpop.permute.xlu0 %2954
        %v2956 = vsel %vm914, %v2941, %v2943
        %v2957 = vsel %vm914, %v2943, %v2945
        %v2958 = vsel %vm914, %v2945, %v2947
        %v2959 = vsel %vm914, %v2947, %v2949
        %v2960 = vsel %vm914, %v2949, %v2951
        %v2961 = vsel %vm914, %v2951, %v2953
        %v2962 = vsel %vm914, %v2953, %v2955
        %2970 = vst [vmem:[#allocation2 + $0x268] sm:$0xff] %v2956
        %2971 = vst [vmem:[#allocation2 + $0x270] sm:$0xff] %v2957
        %2972 = vst [vmem:[#allocation2 + $0x278] sm:$0xff] %v2958
        %2973 = vst [vmem:[#allocation2 + $0x280] sm:$0xff] %v2959
        %2974 = vst [vmem:[#allocation2 + $0x288] sm:$0xff] %v2960
        %2975 = vst [vmem:[#allocation2 + $0x290] sm:$0xff] %v2961
        %2976 = vst [vmem:[#allocation2 + $0x298] sm:$0xff] %v2962
        %2977 = vrot.lane.b32.xlu0 %v2516, 1
        %v2978 = vpop.permute.xlu0 %2977
        %2979 = vrot.lane.b32.xlu0 %v2517, 1
        %v2980 = vpop.permute.xlu0 %2979
        %2981 = vrot.lane.b32.xlu0 %v2518, 1
        %v2982 = vpop.permute.xlu0 %2981
        %2983 = vrot.lane.b32.xlu0 %v2519, 1
        %v2984 = vpop.permute.xlu0 %2983
        %2985 = vrot.lane.b32.xlu0 %v2520, 1
        %v2986 = vpop.permute.xlu0 %2985
        %2987 = vrot.lane.b32.xlu0 %v2521, 1
        %v2988 = vpop.permute.xlu0 %2987
        %2989 = vrot.lane.b32.xlu0 %v2522, 1
        %v2990 = vpop.permute.xlu0 %2989
        %2991 = vrot.lane.b32.xlu0 %v2523, 1
        %v2992 = vpop.permute.xlu0 %2991
        %v2993 = vsel %vm952, %v2978, %v2980
        %v2994 = vsel %vm952, %v2980, %v2982
        %v2995 = vsel %vm952, %v2982, %v2984
        %v2996 = vsel %vm952, %v2984, %v2986
        %v2997 = vsel %vm952, %v2986, %v2988
        %v2998 = vsel %vm952, %v2988, %v2990
        %v2999 = vsel %vm952, %v2990, %v2992
        %3007 = vst [vmem:[#allocation2 + $0x2a0] sm:$0xff] %v2993
        %3008 = vst [vmem:[#allocation2 + $0x2a8] sm:$0xff] %v2994
        %3009 = vst [vmem:[#allocation2 + $0x2b0] sm:$0xff] %v2995
        %3010 = vst [vmem:[#allocation2 + $0x2b8] sm:$0xff] %v2996
        %3011 = vst [vmem:[#allocation2 + $0x2c0] sm:$0xff] %v2997
        %3012 = vst [vmem:[#allocation2 + $0x2c8] sm:$0xff] %v2998
        %3013 = vst [vmem:[#allocation2 + $0x2d0] sm:$0xff] %v2999
        %3014 = vst [vmem:[#allocation2 + $0x2d8] sm:$0xff] %v2517
        %3015 = vst [vmem:[#allocation2 + $0x2e0] sm:$0xff] %v2518
        %3016 = vst [vmem:[#allocation2 + $0x2e8] sm:$0xff] %v2519
        %3017 = vst [vmem:[#allocation2 + $0x2f0] sm:$0xff] %v2520
        %3018 = vst [vmem:[#allocation2 + $0x2f8] sm:$0xff] %v2521
        %3019 = vst [vmem:[#allocation2 + $0x300] sm:$0xff] %v2522
        %3020 = vst [vmem:[#allocation2 + $0x308] sm:$0xff] %v2523
        %3022 = vrot.lane.b32.xlu0 %v2517, 127
        %v3023 = vpop.permute.xlu0 %3022
        %3024 = vrot.lane.b32.xlu0 %v2518, 127
        %v3025 = vpop.permute.xlu0 %3024
        %3026 = vrot.lane.b32.xlu0 %v2519, 127
        %v3027 = vpop.permute.xlu0 %3026
        %3028 = vrot.lane.b32.xlu0 %v2520, 127
        %v3029 = vpop.permute.xlu0 %3028
        %3030 = vrot.lane.b32.xlu0 %v2521, 127
        %v3031 = vpop.permute.xlu0 %3030
        %3032 = vrot.lane.b32.xlu0 %v2522, 127
        %v3033 = vpop.permute.xlu0 %3032
        %3034 = vrot.lane.b32.xlu0 %v2523, 127
        %v3035 = vpop.permute.xlu0 %3034
        %3036 = vrot.lane.b32.xlu0 %v2524, 127
        %v3037 = vpop.permute.xlu0 %3036
        %v3038 = vsel %vm1009, %v3023, %v3025
        %v3039 = vsel %vm1009, %v3025, %v3027
        %v3040 = vsel %vm1009, %v3027, %v3029
        %v3041 = vsel %vm1009, %v3029, %v3031
        %v3042 = vsel %vm1009, %v3031, %v3033
        %v3043 = vsel %vm1009, %v3033, %v3035
        %v3044 = vsel %vm1009, %v3035, %v3037
        %3052 = vst [vmem:[#allocation2 + $0x310] sm:$0xff] %v3038
        %3053 = vst [vmem:[#allocation2 + $0x318] sm:$0xff] %v3039
        %3054 = vst [vmem:[#allocation2 + $0x320] sm:$0xff] %v3040
        %3055 = vst [vmem:[#allocation2 + $0x328] sm:$0xff] %v3041
        %3056 = vst [vmem:[#allocation2 + $0x330] sm:$0xff] %v3042
        %3057 = vst [vmem:[#allocation2 + $0x338] sm:$0xff] %v3043
        %3058 = vst [vmem:[#allocation2 + $0x340] sm:$0xff] %v3044
        %3059 = vrot.lane.b32.xlu0 %v2517, 119
        %v3060 = vpop.permute.xlu0 %3059
        %3061 = vrot.lane.b32.xlu0 %v2518, 119
        %v3062 = vpop.permute.xlu0 %3061
        %3063 = vrot.lane.b32.xlu0 %v2519, 119
        %v3064 = vpop.permute.xlu0 %3063
        %3065 = vrot.lane.b32.xlu0 %v2520, 119
        %v3066 = vpop.permute.xlu0 %3065
        %3067 = vrot.lane.b32.xlu0 %v2521, 119
        %v3068 = vpop.permute.xlu0 %3067
        %3069 = vrot.lane.b32.xlu0 %v2522, 119
        %v3070 = vpop.permute.xlu0 %3069
        %3071 = vrot.lane.b32.xlu0 %v2523, 119
        %v3072 = vpop.permute.xlu0 %3071
        %3073 = vrot.lane.b32.xlu0 %v2524, 119
        %v3074 = vpop.permute.xlu0 %3073
        %v3075 = vsel %vm1047, %v3060, %v3062
        %v3076 = vsel %vm1047, %v3062, %v3064
        %v3077 = vsel %vm1047, %v3064, %v3066
        %v3078 = vsel %vm1047, %v3066, %v3068
        %v3079 = vsel %vm1047, %v3068, %v3070
        %v3080 = vsel %vm1047, %v3070, %v3072
        %v3081 = vsel %vm1047, %v3072, %v3074
        %3089 = vst [vmem:[#allocation2 + $0x348] sm:$0xff] %v3075
        %3090 = vst [vmem:[#allocation2 + $0x350] sm:$0xff] %v3076
        %3091 = vst [vmem:[#allocation2 + $0x358] sm:$0xff] %v3077
        %3092 = vst [vmem:[#allocation2 + $0x360] sm:$0xff] %v3078
        %3093 = vst [vmem:[#allocation2 + $0x368] sm:$0xff] %v3079
        %3094 = vst [vmem:[#allocation2 + $0x370] sm:$0xff] %v3080
        %3095 = vst [vmem:[#allocation2 + $0x378] sm:$0xff] %v3081
        %3096 = vrot.lane.b32.xlu0 %v2517, 118
        %v3097 = vpop.permute.xlu0 %3096
        %3098 = vrot.lane.b32.xlu0 %v2518, 118
        %v3099 = vpop.permute.xlu0 %3098
        %3100 = vrot.lane.b32.xlu0 %v2519, 118
        %v3101 = vpop.permute.xlu0 %3100
        %3102 = vrot.lane.b32.xlu0 %v2520, 118
        %v3103 = vpop.permute.xlu0 %3102
        %3104 = vrot.lane.b32.xlu0 %v2521, 118
        %v3105 = vpop.permute.xlu0 %3104
        %3106 = vrot.lane.b32.xlu0 %v2522, 118
        %v3107 = vpop.permute.xlu0 %3106
        %3108 = vrot.lane.b32.xlu0 %v2523, 118
        %v3109 = vpop.permute.xlu0 %3108
        %3110 = vrot.lane.b32.xlu0 %v2524, 118
        %v3111 = vpop.permute.xlu0 %3110
        %v3112 = vsel %vm1085, %v3097, %v3099
        %v3113 = vsel %vm1085, %v3099, %v3101
        %v3114 = vsel %vm1085, %v3101, %v3103
        %v3115 = vsel %vm1085, %v3103, %v3105
        %v3116 = vsel %vm1085, %v3105, %v3107
        %v3117 = vsel %vm1085, %v3107, %v3109
        %v3118 = vsel %vm1085, %v3109, %v3111
        %3126 = vst [vmem:[#allocation2 + $0x380] sm:$0xff] %v3112
        %3127 = vst [vmem:[#allocation2 + $0x388] sm:$0xff] %v3113
        %3128 = vst [vmem:[#allocation2 + $0x390] sm:$0xff] %v3114
        %3129 = vst [vmem:[#allocation2 + $0x398] sm:$0xff] %v3115
        %3130 = vst [vmem:[#allocation2 + $0x3a0] sm:$0xff] %v3116
        %3131 = vst [vmem:[#allocation2 + $0x3a8] sm:$0xff] %v3117
        %3132 = vst [vmem:[#allocation2 + $0x3b0] sm:$0xff] %v3118
        %3133 = vrot.lane.b32.xlu0 %v2517, 117
        %v3134 = vpop.permute.xlu0 %3133
        %3135 = vrot.lane.b32.xlu0 %v2518, 117
        %v3136 = vpop.permute.xlu0 %3135
        %3137 = vrot.lane.b32.xlu0 %v2519, 117
        %v3138 = vpop.permute.xlu0 %3137
        %3139 = vrot.lane.b32.xlu0 %v2520, 117
        %v3140 = vpop.permute.xlu0 %3139
        %3141 = vrot.lane.b32.xlu0 %v2521, 117
        %v3142 = vpop.permute.xlu0 %3141
        %3143 = vrot.lane.b32.xlu0 %v2522, 117
        %v3144 = vpop.permute.xlu0 %3143
        %3145 = vrot.lane.b32.xlu0 %v2523, 117
        %v3146 = vpop.permute.xlu0 %3145
        %3147 = vrot.lane.b32.xlu0 %v2524, 117
        %v3148 = vpop.permute.xlu0 %3147
        %v3149 = vsel %vm1123, %v3134, %v3136
        %v3150 = vsel %vm1123, %v3136, %v3138
        %v3151 = vsel %vm1123, %v3138, %v3140
        %v3152 = vsel %vm1123, %v3140, %v3142
        %v3153 = vsel %vm1123, %v3142, %v3144
        %v3154 = vsel %vm1123, %v3144, %v3146
        %v3155 = vsel %vm1123, %v3146, %v3148
        %3163 = vst [vmem:[#allocation2 + $0x3b8] sm:$0xff] %v3149
        %3164 = vst [vmem:[#allocation2 + $0x3c0] sm:$0xff] %v3150
        %3165 = vst [vmem:[#allocation2 + $0x3c8] sm:$0xff] %v3151
        %3166 = vst [vmem:[#allocation2 + $0x3d0] sm:$0xff] %v3152
        %3167 = vst [vmem:[#allocation2 + $0x3d8] sm:$0xff] %v3153
        %3168 = vst [vmem:[#allocation2 + $0x3e0] sm:$0xff] %v3154
        %3169 = vst [vmem:[#allocation2 + $0x3e8] sm:$0xff] %v3155
        %3170 = vrot.lane.b32.xlu0 %v2517, 39
        %v3171 = vpop.permute.xlu0 %3170
        %3172 = vrot.lane.b32.xlu0 %v2518, 39
        %v3173 = vpop.permute.xlu0 %3172
        %3174 = vrot.lane.b32.xlu0 %v2519, 39
        %v3175 = vpop.permute.xlu0 %3174
        %3176 = vrot.lane.b32.xlu0 %v2520, 39
        %v3177 = vpop.permute.xlu0 %3176
        %3178 = vrot.lane.b32.xlu0 %v2521, 39
        %v3179 = vpop.permute.xlu0 %3178
        %3180 = vrot.lane.b32.xlu0 %v2522, 39
        %v3181 = vpop.permute.xlu0 %3180
        %3182 = vrot.lane.b32.xlu0 %v2523, 39
        %v3183 = vpop.permute.xlu0 %3182
        %3184 = vrot.lane.b32.xlu0 %v2524, 39
        %v3185 = vpop.permute.xlu0 %3184
        %v3186 = vsel %vm1161, %v3171, %v3173
        %v3187 = vsel %vm1161, %v3173, %v3175
        %v3188 = vsel %vm1161, %v3175, %v3177
        %v3189 = vsel %vm1161, %v3177, %v3179
        %v3190 = vsel %vm1161, %v3179, %v3181
        %v3191 = vsel %vm1161, %v3181, %v3183
        %v3192 = vsel %vm1161, %v3183, %v3185
        %3200 = vst [vmem:[#allocation2 + $0x3f0] sm:$0xff] %v3186
        %3201 = vst [vmem:[#allocation2 + $0x3f8] sm:$0xff] %v3187
        %3202 = vst [vmem:[#allocation2 + $0x400] sm:$0xff] %v3188
        %3203 = vst [vmem:[#allocation2 + $0x408] sm:$0xff] %v3189
        %3204 = vst [vmem:[#allocation2 + $0x410] sm:$0xff] %v3190
        %3205 = vst [vmem:[#allocation2 + $0x418] sm:$0xff] %v3191
        %3206 = vst [vmem:[#allocation2 + $0x420] sm:$0xff] %v3192
        %3207 = vrot.lane.b32.xlu0 %v2517, 38
        %v3208 = vpop.permute.xlu0 %3207
        %3209 = vrot.lane.b32.xlu0 %v2518, 38
        %v3210 = vpop.permute.xlu0 %3209
        %3211 = vrot.lane.b32.xlu0 %v2519, 38
        %v3212 = vpop.permute.xlu0 %3211
        %3213 = vrot.lane.b32.xlu0 %v2520, 38
        %v3214 = vpop.permute.xlu0 %3213
        %3215 = vrot.lane.b32.xlu0 %v2521, 38
        %v3216 = vpop.permute.xlu0 %3215
        %3217 = vrot.lane.b32.xlu0 %v2522, 38
        %v3218 = vpop.permute.xlu0 %3217
        %3219 = vrot.lane.b32.xlu0 %v2523, 38
        %v3220 = vpop.permute.xlu0 %3219
        %3221 = vrot.lane.b32.xlu0 %v2524, 38
        %v3222 = vpop.permute.xlu0 %3221
        %v3223 = vsel %vm1199, %v3208, %v3210
        %v3224 = vsel %vm1199, %v3210, %v3212
        %v3225 = vsel %vm1199, %v3212, %v3214
        %v3226 = vsel %vm1199, %v3214, %v3216
        %v3227 = vsel %vm1199, %v3216, %v3218
        %v3228 = vsel %vm1199, %v3218, %v3220
        %v3229 = vsel %vm1199, %v3220, %v3222
        %3237 = vst [vmem:[#allocation2 + $0x428] sm:$0xff] %v3223
        %3238 = vst [vmem:[#allocation2 + $0x430] sm:$0xff] %v3224
        %3239 = vst [vmem:[#allocation2 + $0x438] sm:$0xff] %v3225
        %3240 = vst [vmem:[#allocation2 + $0x440] sm:$0xff] %v3226
        %3241 = vst [vmem:[#allocation2 + $0x448] sm:$0xff] %v3227
        %3242 = vst [vmem:[#allocation2 + $0x450] sm:$0xff] %v3228
        %3243 = vst [vmem:[#allocation2 + $0x458] sm:$0xff] %v3229
        %3244 = vrot.lane.b32.xlu0 %v2517, 37
        %v3245 = vpop.permute.xlu0 %3244
        %3246 = vrot.lane.b32.xlu0 %v2518, 37
        %v3247 = vpop.permute.xlu0 %3246
        %3248 = vrot.lane.b32.xlu0 %v2519, 37
        %v3249 = vpop.permute.xlu0 %3248
        %3250 = vrot.lane.b32.xlu0 %v2520, 37
        %v3251 = vpop.permute.xlu0 %3250
        %3252 = vrot.lane.b32.xlu0 %v2521, 37
        %v3253 = vpop.permute.xlu0 %3252
        %3254 = vrot.lane.b32.xlu0 %v2522, 37
        %v3255 = vpop.permute.xlu0 %3254
        %3256 = vrot.lane.b32.xlu0 %v2523, 37
        %v3257 = vpop.permute.xlu0 %3256
        %3258 = vrot.lane.b32.xlu0 %v2524, 37
        %v3259 = vpop.permute.xlu0 %3258
        %v3260 = vsel %vm1237, %v3245, %v3247
        %v3261 = vsel %vm1237, %v3247, %v3249
        %v3262 = vsel %vm1237, %v3249, %v3251
        %v3263 = vsel %vm1237, %v3251, %v3253
        %v3264 = vsel %vm1237, %v3253, %v3255
        %v3265 = vsel %vm1237, %v3255, %v3257
        %v3266 = vsel %vm1237, %v3257, %v3259
        %3274 = vst [vmem:[#allocation2 + $0x460] sm:$0xff] %v3260
        %3275 = vst [vmem:[#allocation2 + $0x468] sm:$0xff] %v3261
        %3276 = vst [vmem:[#allocation2 + $0x470] sm:$0xff] %v3262
        %3277 = vst [vmem:[#allocation2 + $0x478] sm:$0xff] %v3263
        %3278 = vst [vmem:[#allocation2 + $0x480] sm:$0xff] %v3264
        %3279 = vst [vmem:[#allocation2 + $0x488] sm:$0xff] %v3265
        %3280 = vst [vmem:[#allocation2 + $0x490] sm:$0xff] %v3266
        %3281 = vrot.lane.b32.xlu0 %v2517, 29
        %v3282 = vpop.permute.xlu0 %3281
        %3283 = vrot.lane.b32.xlu0 %v2518, 29
        %v3284 = vpop.permute.xlu0 %3283
        %3285 = vrot.lane.b32.xlu0 %v2519, 29
        %v3286 = vpop.permute.xlu0 %3285
        %3287 = vrot.lane.b32.xlu0 %v2520, 29
        %v3288 = vpop.permute.xlu0 %3287
        %3289 = vrot.lane.b32.xlu0 %v2521, 29
        %v3290 = vpop.permute.xlu0 %3289
        %3291 = vrot.lane.b32.xlu0 %v2522, 29
        %v3292 = vpop.permute.xlu0 %3291
        %3293 = vrot.lane.b32.xlu0 %v2523, 29
        %v3294 = vpop.permute.xlu0 %3293
        %3295 = vrot.lane.b32.xlu0 %v2524, 29
        %v3296 = vpop.permute.xlu0 %3295
        %v3297 = vsel %vm1275, %v3282, %v3284
        %v3298 = vsel %vm1275, %v3284, %v3286
        %v3299 = vsel %vm1275, %v3286, %v3288
        %v3300 = vsel %vm1275, %v3288, %v3290
        %v3301 = vsel %vm1275, %v3290, %v3292
        %v3302 = vsel %vm1275, %v3292, %v3294
        %v3303 = vsel %vm1275, %v3294, %v3296
        %3311 = vst [vmem:[#allocation2 + $0x498] sm:$0xff] %v3297
        %3312 = vst [vmem:[#allocation2 + $0x4a0] sm:$0xff] %v3298
        %3313 = vst [vmem:[#allocation2 + $0x4a8] sm:$0xff] %v3299
        %3314 = vst [vmem:[#allocation2 + $0x4b0] sm:$0xff] %v3300
        %3315 = vst [vmem:[#allocation2 + $0x4b8] sm:$0xff] %v3301
        %3316 = vst [vmem:[#allocation2 + $0x4c0] sm:$0xff] %v3302
        %3317 = vst [vmem:[#allocation2 + $0x4c8] sm:$0xff] %v3303
        %3318 = vrot.lane.b32.xlu0 %v2517, 28
        %v3319 = vpop.permute.xlu0 %3318
        %3320 = vrot.lane.b32.xlu0 %v2518, 28
        %v3321 = vpop.permute.xlu0 %3320
        %3322 = vrot.lane.b32.xlu0 %v2519, 28
        %v3323 = vpop.permute.xlu0 %3322
        %3324 = vrot.lane.b32.xlu0 %v2520, 28
        %v3325 = vpop.permute.xlu0 %3324
        %3326 = vrot.lane.b32.xlu0 %v2521, 28
        %v3327 = vpop.permute.xlu0 %3326
        %3328 = vrot.lane.b32.xlu0 %v2522, 28
        %v3329 = vpop.permute.xlu0 %3328
        %3330 = vrot.lane.b32.xlu0 %v2523, 28
        %v3331 = vpop.permute.xlu0 %3330
        %3332 = vrot.lane.b32.xlu0 %v2524, 28
        %v3333 = vpop.permute.xlu0 %3332
        %v3334 = vsel %vm1313, %v3319, %v3321
        %v3335 = vsel %vm1313, %v3321, %v3323
        %v3336 = vsel %vm1313, %v3323, %v3325
        %v3337 = vsel %vm1313, %v3325, %v3327
        %v3338 = vsel %vm1313, %v3327, %v3329
        %v3339 = vsel %vm1313, %v3329, %v3331
        %v3340 = vsel %vm1313, %v3331, %v3333
        %3348 = vst [vmem:[#allocation2 + $0x4d0] sm:$0xff] %v3334
        %3349 = vst [vmem:[#allocation2 + $0x4d8] sm:$0xff] %v3335
        %3350 = vst [vmem:[#allocation2 + $0x4e0] sm:$0xff] %v3336
        %3351 = vst [vmem:[#allocation2 + $0x4e8] sm:$0xff] %v3337
        %3352 = vst [vmem:[#allocation2 + $0x4f0] sm:$0xff] %v3338
        %3353 = vst [vmem:[#allocation2 + $0x4f8] sm:$0xff] %v3339
        %3354 = vst [vmem:[#allocation2 + $0x500] sm:$0xff] %v3340
        %3355 = vrot.lane.b32.xlu0 %v2517, 27
        %v3356 = vpop.permute.xlu0 %3355
        %3357 = vrot.lane.b32.xlu0 %v2518, 27
        %v3358 = vpop.permute.xlu0 %3357
        %3359 = vrot.lane.b32.xlu0 %v2519, 27
        %v3360 = vpop.permute.xlu0 %3359
        %3361 = vrot.lane.b32.xlu0 %v2520, 27
        %v3362 = vpop.permute.xlu0 %3361
        %3363 = vrot.lane.b32.xlu0 %v2521, 27
        %v3364 = vpop.permute.xlu0 %3363
        %3365 = vrot.lane.b32.xlu0 %v2522, 27
        %v3366 = vpop.permute.xlu0 %3365
        %3367 = vrot.lane.b32.xlu0 %v2523, 27
        %v3368 = vpop.permute.xlu0 %3367
        %3369 = vrot.lane.b32.xlu0 %v2524, 27
        %v3370 = vpop.permute.xlu0 %3369
        %v3371 = vsel %vm1351, %v3356, %v3358
        %v3372 = vsel %vm1351, %v3358, %v3360
        %v3373 = vsel %vm1351, %v3360, %v3362
        %v3374 = vsel %vm1351, %v3362, %v3364
        %v3375 = vsel %vm1351, %v3364, %v3366
        %v3376 = vsel %vm1351, %v3366, %v3368
        %v3377 = vsel %vm1351, %v3368, %v3370
        %3385 = vst [vmem:[#allocation2 + $0x508] sm:$0xff] %v3371
        %3386 = vst [vmem:[#allocation2 + $0x510] sm:$0xff] %v3372
        %3387 = vst [vmem:[#allocation2 + $0x518] sm:$0xff] %v3373
        %3388 = vst [vmem:[#allocation2 + $0x520] sm:$0xff] %v3374
        %3389 = vst [vmem:[#allocation2 + $0x528] sm:$0xff] %v3375
        %3390 = vst [vmem:[#allocation2 + $0x530] sm:$0xff] %v3376
        %3391 = vst [vmem:[#allocation2 + $0x538] sm:$0xff] %v3377
        %3392 = vrot.lane.b32.xlu0 %v2517, 19
        %v3393 = vpop.permute.xlu0 %3392
        %3394 = vrot.lane.b32.xlu0 %v2518, 19
        %v3395 = vpop.permute.xlu0 %3394
        %3396 = vrot.lane.b32.xlu0 %v2519, 19
        %v3397 = vpop.permute.xlu0 %3396
        %3398 = vrot.lane.b32.xlu0 %v2520, 19
        %v3399 = vpop.permute.xlu0 %3398
        %3400 = vrot.lane.b32.xlu0 %v2521, 19
        %v3401 = vpop.permute.xlu0 %3400
        %3402 = vrot.lane.b32.xlu0 %v2522, 19
        %v3403 = vpop.permute.xlu0 %3402
        %3404 = vrot.lane.b32.xlu0 %v2523, 19
        %v3405 = vpop.permute.xlu0 %3404
        %3406 = vrot.lane.b32.xlu0 %v2524, 19
        %v3407 = vpop.permute.xlu0 %3406
        %v3408 = vsel %vm1389, %v3393, %v3395
        %v3409 = vsel %vm1389, %v3395, %v3397
        %v3410 = vsel %vm1389, %v3397, %v3399
        %v3411 = vsel %vm1389, %v3399, %v3401
        %v3412 = vsel %vm1389, %v3401, %v3403
        %v3413 = vsel %vm1389, %v3403, %v3405
        %v3414 = vsel %vm1389, %v3405, %v3407
        %3422 = vst [vmem:[#allocation2 + $0x540] sm:$0xff] %v3408
        %3423 = vst [vmem:[#allocation2 + $0x548] sm:$0xff] %v3409
        %3424 = vst [vmem:[#allocation2 + $0x550] sm:$0xff] %v3410
        %3425 = vst [vmem:[#allocation2 + $0x558] sm:$0xff] %v3411
        %3426 = vst [vmem:[#allocation2 + $0x560] sm:$0xff] %v3412
        %3427 = vst [vmem:[#allocation2 + $0x568] sm:$0xff] %v3413
        %3428 = vst [vmem:[#allocation2 + $0x570] sm:$0xff] %v3414
        %3429 = vrot.lane.b32.xlu0 %v2517, 18
        %v3430 = vpop.permute.xlu0 %3429
        %3431 = vrot.lane.b32.xlu0 %v2518, 18
        %v3432 = vpop.permute.xlu0 %3431
        %3433 = vrot.lane.b32.xlu0 %v2519, 18
        %v3434 = vpop.permute.xlu0 %3433
        %3435 = vrot.lane.b32.xlu0 %v2520, 18
        %v3436 = vpop.permute.xlu0 %3435
        %3437 = vrot.lane.b32.xlu0 %v2521, 18
        %v3438 = vpop.permute.xlu0 %3437
        %3439 = vrot.lane.b32.xlu0 %v2522, 18
        %v3440 = vpop.permute.xlu0 %3439
        %3441 = vrot.lane.b32.xlu0 %v2523, 18
        %v3442 = vpop.permute.xlu0 %3441
        %3443 = vrot.lane.b32.xlu0 %v2524, 18
        %v3444 = vpop.permute.xlu0 %3443
        %v3445 = vsel %vm1427, %v3430, %v3432
        %v3446 = vsel %vm1427, %v3432, %v3434
        %v3447 = vsel %vm1427, %v3434, %v3436
        %v3448 = vsel %vm1427, %v3436, %v3438
        %v3449 = vsel %vm1427, %v3438, %v3440
        %v3450 = vsel %vm1427, %v3440, %v3442
        %v3451 = vsel %vm1427, %v3442, %v3444
        %3459 = vst [vmem:[#allocation2 + $0x578] sm:$0xff] %v3445
        %3460 = vst [vmem:[#allocation2 + $0x580] sm:$0xff] %v3446
        %3461 = vst [vmem:[#allocation2 + $0x588] sm:$0xff] %v3447
        %3462 = vst [vmem:[#allocation2 + $0x590] sm:$0xff] %v3448
        %3463 = vst [vmem:[#allocation2 + $0x598] sm:$0xff] %v3449
        %3464 = vst [vmem:[#allocation2 + $0x5a0] sm:$0xff] %v3450
        %3465 = vst [vmem:[#allocation2 + $0x5a8] sm:$0xff] %v3451
        %3466 = vrot.lane.b32.xlu0 %v2517, 17
        %v3467 = vpop.permute.xlu0 %3466
        %3468 = vrot.lane.b32.xlu0 %v2518, 17
        %v3469 = vpop.permute.xlu0 %3468
        %3470 = vrot.lane.b32.xlu0 %v2519, 17
        %v3471 = vpop.permute.xlu0 %3470
        %3472 = vrot.lane.b32.xlu0 %v2520, 17
        %v3473 = vpop.permute.xlu0 %3472
        %3474 = vrot.lane.b32.xlu0 %v2521, 17
        %v3475 = vpop.permute.xlu0 %3474
        %3476 = vrot.lane.b32.xlu0 %v2522, 17
        %v3477 = vpop.permute.xlu0 %3476
        %3478 = vrot.lane.b32.xlu0 %v2523, 17
        %v3479 = vpop.permute.xlu0 %3478
        %3480 = vrot.lane.b32.xlu0 %v2524, 17
        %v3481 = vpop.permute.xlu0 %3480
        %v3482 = vsel %vm1465, %v3467, %v3469
        %v3483 = vsel %vm1465, %v3469, %v3471
        %v3484 = vsel %vm1465, %v3471, %v3473
        %v3485 = vsel %vm1465, %v3473, %v3475
        %v3486 = vsel %vm1465, %v3475, %v3477
        %v3487 = vsel %vm1465, %v3477, %v3479
        %v3488 = vsel %vm1465, %v3479, %v3481
        %3496 = vst [vmem:[#allocation2 + $0x5b0] sm:$0xff] %v3482
        %3497 = vst [vmem:[#allocation2 + $0x5b8] sm:$0xff] %v3483
        %3498 = vst [vmem:[#allocation2 + $0x5c0] sm:$0xff] %v3484
        %3499 = vst [vmem:[#allocation2 + $0x5c8] sm:$0xff] %v3485
        %3500 = vst [vmem:[#allocation2 + $0x5d0] sm:$0xff] %v3486
        %3501 = vst [vmem:[#allocation2 + $0x5d8] sm:$0xff] %v3487
        %3502 = vst [vmem:[#allocation2 + $0x5e0] sm:$0xff] %v3488
        %v3503 = vld [vmem:[%s2] sm:$0xff]
        %v3504 = vld [vmem:[%s2 + $0x8] sm:$0xff]
        %v3505 = vld [vmem:[%s2 + $0x10] sm:$0xff]
        %v3506 = vld [vmem:[%s2 + $0x18] sm:$0xff]
        %v3507 = vld [vmem:[#allocation2] sm:$0xff]
        %v3508 = vld [vmem:[#allocation2 + $0x8] sm:$0xff]
        %v3509 = vld [vmem:[#allocation2 + $0x10] sm:$0xff]
        %v3510 = vld [vmem:[#allocation2 + $0x18] sm:$0xff]
        %v3511 = vld [vmem:[#allocation2 + $0x20] sm:$0xff]
        %v3512 = vld [vmem:[#allocation2 + $0x28] sm:$0xff]
        %v3513 = vld [vmem:[#allocation2 + $0x30] sm:$0xff]
        %v3514 = vld [vmem:[#allocation2 + $0x38] sm:$0xff]
        %v3515 = vld [vmem:[#allocation2 + $0x40] sm:$0xff]
        %v3516 = vld [vmem:[#allocation2 + $0x48] sm:$0xff]
        %v3517 = vld [vmem:[#allocation2 + $0x50] sm:$0xff]
        %v3518 = vld [vmem:[#allocation2 + $0x58] sm:$0xff]
        %v3519 = vld [vmem:[#allocation2 + $0x60] sm:$0xff]
        %v3520 = vld [vmem:[#allocation2 + $0x68] sm:$0xff]
        %v3521 = vld [vmem:[#allocation2 + $0x70] sm:$0xff]
        %v3522 = vld [vmem:[#allocation2 + $0x78] sm:$0xff]
        %v3523 = vld [vmem:[#allocation2 + $0x80] sm:$0xff]
        %v3524 = vld [vmem:[#allocation2 + $0x88] sm:$0xff]
        %v3525 = vld [vmem:[#allocation2 + $0x90] sm:$0xff]
        %v3526 = vld [vmem:[#allocation2 + $0x98] sm:$0xff]
        %v3527 = vld [vmem:[#allocation2 + $0xa0] sm:$0xff]
        %v3528 = vld [vmem:[#allocation2 + $0xa8] sm:$0xff]
        %v3529 = vld [vmem:[#allocation2 + $0xb0] sm:$0xff]
        %v3530 = vld [vmem:[#allocation2 + $0xb8] sm:$0xff]
        %v3531 = vld [vmem:[#allocation2 + $0xc0] sm:$0xff]
        %v3532 = vld [vmem:[#allocation2 + $0xc8] sm:$0xff]
        %v3533 = vld [vmem:[#allocation2 + $0xd0] sm:$0xff]
        %v3534 = vld [vmem:[#allocation2 + $0xd8] sm:$0xff]
        %v3535 = vld [vmem:[#allocation2 + $0xe0] sm:$0xff]
        %v3536 = vld [vmem:[#allocation2 + $0xe8] sm:$0xff]
        %v3537 = vld [vmem:[#allocation2 + $0xf0] sm:$0xff]
        %v3538 = vld [vmem:[#allocation2 + $0xf8] sm:$0xff]
        %v3539 = vld [vmem:[#allocation2 + $0x100] sm:$0xff]
        %v3540 = vld [vmem:[#allocation2 + $0x108] sm:$0xff]
        %v3541 = vld [vmem:[#allocation2 + $0x110] sm:$0xff]
        %v3542 = vld [vmem:[#allocation2 + $0x118] sm:$0xff]
        %v3543 = vld [vmem:[#allocation2 + $0x120] sm:$0xff]
        %v3544 = vld [vmem:[#allocation2 + $0x128] sm:$0xff]
        %v3545 = vld [vmem:[#allocation2 + $0x130] sm:$0xff]
        %v3546 = vld [vmem:[#allocation2 + $0x138] sm:$0xff]
        %v3547 = vld [vmem:[#allocation2 + $0x140] sm:$0xff]
        %v3548 = vld [vmem:[#allocation2 + $0x148] sm:$0xff]
        %v3549 = vld [vmem:[#allocation2 + $0x150] sm:$0xff]
        %v3550 = vld [vmem:[#allocation2 + $0x158] sm:$0xff]
        %v3551 = vld [vmem:[#allocation2 + $0x160] sm:$0xff]
        %v3552 = vld [vmem:[#allocation2 + $0x168] sm:$0xff]
        %v3553 = vld [vmem:[#allocation2 + $0x170] sm:$0xff]
        %v3554 = vld [vmem:[#allocation2 + $0x178] sm:$0xff]
        %v3555 = vld [vmem:[#allocation2 + $0x180] sm:$0xff]
        %v3556 = vld [vmem:[#allocation2 + $0x188] sm:$0xff]
        %v3557 = vld [vmem:[#allocation2 + $0x190] sm:$0xff]
        %v3558 = vld [vmem:[#allocation2 + $0x198] sm:$0xff]
        %v3559 = vld [vmem:[#allocation2 + $0x1a0] sm:$0xff]
        %v3560 = vld [vmem:[#allocation2 + $0x1a8] sm:$0xff]
        %v3561 = vld [vmem:[#allocation2 + $0x1b0] sm:$0xff]
        %v3562 = vld [vmem:[#allocation2 + $0x1b8] sm:$0xff]
        %v3563 = vld [vmem:[#allocation2 + $0x1c0] sm:$0xff]
        %v3564 = vld [vmem:[#allocation2 + $0x1c8] sm:$0xff]
        %v3565 = vld [vmem:[#allocation2 + $0x1d0] sm:$0xff]
        %v3566 = vld [vmem:[#allocation2 + $0x1d8] sm:$0xff]
        %v3567 = vld [vmem:[#allocation2 + $0x1e0] sm:$0xff]
        %v3568 = vld [vmem:[#allocation2 + $0x1e8] sm:$0xff]
        %v3569 = vld [vmem:[#allocation2 + $0x1f0] sm:$0xff]
        %v3570 = vld [vmem:[#allocation2 + $0x1f8] sm:$0xff]
        %v3571 = vld [vmem:[#allocation2 + $0x200] sm:$0xff]
        %v3572 = vld [vmem:[#allocation2 + $0x208] sm:$0xff]
        %v3573 = vld [vmem:[#allocation2 + $0x210] sm:$0xff]
        %v3574 = vld [vmem:[#allocation2 + $0x218] sm:$0xff]
        %v3575 = vld [vmem:[#allocation2 + $0x220] sm:$0xff]
        %v3576 = vld [vmem:[#allocation2 + $0x228] sm:$0xff]
        %v3577 = vld [vmem:[#allocation2 + $0x230] sm:$0xff]
        %v3578 = vld [vmem:[#allocation2 + $0x238] sm:$0xff]
        %v3579 = vld [vmem:[#allocation2 + $0x240] sm:$0xff]
        %v3580 = vld [vmem:[#allocation2 + $0x248] sm:$0xff]
        %v3581 = vld [vmem:[#allocation2 + $0x250] sm:$0xff]
        %v3582 = vld [vmem:[#allocation2 + $0x258] sm:$0xff]
        %v3583 = vld [vmem:[#allocation2 + $0x260] sm:$0xff]
        %v3584 = vld [vmem:[#allocation2 + $0x268] sm:$0xff]
        %v3585 = vld [vmem:[#allocation2 + $0x270] sm:$0xff]
        %v3586 = vld [vmem:[#allocation2 + $0x278] sm:$0xff]
        %v3587 = vld [vmem:[#allocation2 + $0x280] sm:$0xff]
        %v3588 = vld [vmem:[#allocation2 + $0x288] sm:$0xff]
        %v3589 = vld [vmem:[#allocation2 + $0x290] sm:$0xff]
        %v3590 = vld [vmem:[#allocation2 + $0x298] sm:$0xff]
        %v3591 = vld [vmem:[#allocation2 + $0x2a0] sm:$0xff]
        %v3592 = vld [vmem:[#allocation2 + $0x2a8] sm:$0xff]
        %v3593 = vld [vmem:[#allocation2 + $0x2b0] sm:$0xff]
        %v3594 = vld [vmem:[#allocation2 + $0x2b8] sm:$0xff]
        %v3595 = vld [vmem:[#allocation2 + $0x2c0] sm:$0xff]
        %v3596 = vld [vmem:[#allocation2 + $0x2c8] sm:$0xff]
        %v3597 = vld [vmem:[#allocation2 + $0x2d0] sm:$0xff]
        %v3598 = vld [vmem:[#allocation2 + $0x2d8] sm:$0xff]
        %v3599 = vld [vmem:[#allocation2 + $0x2e0] sm:$0xff]
        %v3600 = vld [vmem:[#allocation2 + $0x2e8] sm:$0xff]
        %v3601 = vld [vmem:[#allocation2 + $0x2f0] sm:$0xff]
        %v3602 = vld [vmem:[#allocation2 + $0x2f8] sm:$0xff]
        %v3603 = vld [vmem:[#allocation2 + $0x300] sm:$0xff]
        %v3604 = vld [vmem:[#allocation2 + $0x308] sm:$0xff]
        %v3605 = vld [vmem:[#allocation2 + $0x310] sm:$0xff]
        %v3606 = vld [vmem:[#allocation2 + $0x318] sm:$0xff]
        %v3607 = vld [vmem:[#allocation2 + $0x320] sm:$0xff]
        %v3608 = vld [vmem:[#allocation2 + $0x328] sm:$0xff]
        %v3609 = vld [vmem:[#allocation2 + $0x330] sm:$0xff]
        %v3610 = vld [vmem:[#allocation2 + $0x338] sm:$0xff]
        %v3611 = vld [vmem:[#allocation2 + $0x340] sm:$0xff]
        %v3612 = vld [vmem:[#allocation2 + $0x348] sm:$0xff]
        %v3613 = vld [vmem:[#allocation2 + $0x350] sm:$0xff]
        %v3614 = vld [vmem:[#allocation2 + $0x358] sm:$0xff]
        %v3615 = vld [vmem:[#allocation2 + $0x360] sm:$0xff]
        %v3616 = vld [vmem:[#allocation2 + $0x368] sm:$0xff]
        %v3617 = vld [vmem:[#allocation2 + $0x370] sm:$0xff]
        %v3618 = vld [vmem:[#allocation2 + $0x378] sm:$0xff]
        %v3619 = vld [vmem:[#allocation2 + $0x380] sm:$0xff]
        %v3620 = vld [vmem:[#allocation2 + $0x388] sm:$0xff]
        %v3621 = vld [vmem:[#allocation2 + $0x390] sm:$0xff]
        %v3622 = vld [vmem:[#allocation2 + $0x398] sm:$0xff]
        %v3623 = vld [vmem:[#allocation2 + $0x3a0] sm:$0xff]
        %v3624 = vld [vmem:[#allocation2 + $0x3a8] sm:$0xff]
        %v3625 = vld [vmem:[#allocation2 + $0x3b0] sm:$0xff]
        %v3626 = vld [vmem:[#allocation2 + $0x3b8] sm:$0xff]
        %v3627 = vld [vmem:[#allocation2 + $0x3c0] sm:$0xff]
        %v3628 = vld [vmem:[#allocation2 + $0x3c8] sm:$0xff]
        %v3629 = vld [vmem:[#allocation2 + $0x3d0] sm:$0xff]
        %v3630 = vld [vmem:[#allocation2 + $0x3d8] sm:$0xff]
        %v3631 = vld [vmem:[#allocation2 + $0x3e0] sm:$0xff]
        %v3632 = vld [vmem:[#allocation2 + $0x3e8] sm:$0xff]
        %v3633 = vld [vmem:[#allocation2 + $0x3f0] sm:$0xff]
        %v3634 = vld [vmem:[#allocation2 + $0x3f8] sm:$0xff]
        %v3635 = vld [vmem:[#allocation2 + $0x400] sm:$0xff]
        %v3636 = vld [vmem:[#allocation2 + $0x408] sm:$0xff]
        %v3637 = vld [vmem:[#allocation2 + $0x410] sm:$0xff]
        %v3638 = vld [vmem:[#allocation2 + $0x418] sm:$0xff]
        %v3639 = vld [vmem:[#allocation2 + $0x420] sm:$0xff]
        %v3640 = vld [vmem:[#allocation2 + $0x428] sm:$0xff]
        %v3641 = vld [vmem:[#allocation2 + $0x430] sm:$0xff]
        %v3642 = vld [vmem:[#allocation2 + $0x438] sm:$0xff]
        %v3643 = vld [vmem:[#allocation2 + $0x440] sm:$0xff]
        %v3644 = vld [vmem:[#allocation2 + $0x448] sm:$0xff]
        %v3645 = vld [vmem:[#allocation2 + $0x450] sm:$0xff]
        %v3646 = vld [vmem:[#allocation2 + $0x458] sm:$0xff]
        %v3647 = vld [vmem:[#allocation2 + $0x460] sm:$0xff]
        %v3648 = vld [vmem:[#allocation2 + $0x468] sm:$0xff]
        %v3649 = vld [vmem:[#allocation2 + $0x470] sm:$0xff]
        %v3650 = vld [vmem:[#allocation2 + $0x478] sm:$0xff]
        %v3651 = vld [vmem:[#allocation2 + $0x480] sm:$0xff]
        %v3652 = vld [vmem:[#allocation2 + $0x488] sm:$0xff]
        %v3653 = vld [vmem:[#allocation2 + $0x490] sm:$0xff]
        %v3654 = vld [vmem:[#allocation2 + $0x498] sm:$0xff]
        %v3655 = vld [vmem:[#allocation2 + $0x4a0] sm:$0xff]
        %v3656 = vld [vmem:[#allocation2 + $0x4a8] sm:$0xff]
        %v3657 = vld [vmem:[#allocation2 + $0x4b0] sm:$0xff]
        %v3658 = vld [vmem:[#allocation2 + $0x4b8] sm:$0xff]
        %v3659 = vld [vmem:[#allocation2 + $0x4c0] sm:$0xff]
        %v3660 = vld [vmem:[#allocation2 + $0x4c8] sm:$0xff]
        %v3661 = vld [vmem:[#allocation2 + $0x4d0] sm:$0xff]
        %v3662 = vld [vmem:[#allocation2 + $0x4d8] sm:$0xff]
        %v3663 = vld [vmem:[#allocation2 + $0x4e0] sm:$0xff]
        %v3664 = vld [vmem:[#allocation2 + $0x4e8] sm:$0xff]
        %v3665 = vld [vmem:[#allocation2 + $0x4f0] sm:$0xff]
        %v3666 = vld [vmem:[#allocation2 + $0x4f8] sm:$0xff]
        %v3667 = vld [vmem:[#allocation2 + $0x500] sm:$0xff]
        %v3668 = vld [vmem:[#allocation2 + $0x508] sm:$0xff]
        %v3669 = vld [vmem:[#allocation2 + $0x510] sm:$0xff]
        %v3670 = vld [vmem:[#allocation2 + $0x518] sm:$0xff]
        %v3671 = vld [vmem:[#allocation2 + $0x520] sm:$0xff]
        %v3672 = vld [vmem:[#allocation2 + $0x528] sm:$0xff]
        %v3673 = vld [vmem:[#allocation2 + $0x530] sm:$0xff]
        %v3674 = vld [vmem:[#allocation2 + $0x538] sm:$0xff]
        %v3675 = vld [vmem:[#allocation2 + $0x540] sm:$0xff]
        %v3676 = vld [vmem:[#allocation2 + $0x548] sm:$0xff]
        %v3677 = vld [vmem:[#allocation2 + $0x550] sm:$0xff]
        %v3678 = vld [vmem:[#allocation2 + $0x558] sm:$0xff]
        %v3679 = vld [vmem:[#allocation2 + $0x560] sm:$0xff]
        %v3680 = vld [vmem:[#allocation2 + $0x568] sm:$0xff]
        %v3681 = vld [vmem:[#allocation2 + $0x570] sm:$0xff]
        %v3682 = vld [vmem:[#allocation2 + $0x578] sm:$0xff]
        %v3683 = vld [vmem:[#allocation2 + $0x580] sm:$0xff]
        %v3684 = vld [vmem:[#allocation2 + $0x588] sm:$0xff]
        %v3685 = vld [vmem:[#allocation2 + $0x590] sm:$0xff]
        %v3686 = vld [vmem:[#allocation2 + $0x598] sm:$0xff]
        %v3687 = vld [vmem:[#allocation2 + $0x5a0] sm:$0xff]
        %v3688 = vld [vmem:[#allocation2 + $0x5a8] sm:$0xff]
        %v3689 = vld [vmem:[#allocation2 + $0x5b0] sm:$0xff]
        %v3690 = vld [vmem:[#allocation2 + $0x5b8] sm:$0xff]
        %v3691 = vld [vmem:[#allocation2 + $0x5c0] sm:$0xff]
        %v3692 = vld [vmem:[#allocation2 + $0x5c8] sm:$0xff]
        %v3693 = vld [vmem:[#allocation2 + $0x5d0] sm:$0xff]
        %v3694 = vld [vmem:[#allocation2 + $0x5d8] sm:$0xff]
        %v3695 = vld [vmem:[#allocation2 + $0x5e0] sm:$0xff]
        %v3700 = vunpack.c.l.b16 %v3503
        %v3701 = vunpack.c.h.b16 %v3503
        %v3702 = vunpack.c.l.b16 %v3504
        %v3703 = vunpack.c.h.b16 %v3504
        %v3704 = vunpack.c.l.b16 %v3505
        %v3705 = vunpack.c.h.b16 %v3505
        %v3706 = vunpack.c.l.b16 %v3506
        %v3707 = vunpack.c.h.b16 %v3506
        %v3708 = vpack.c.b16 %v3704, %v3700
        %v3709 = vpack.c.b16 %v3705, %v3701
        %v3710 = vpack.c.b16 %v3706, %v3702
        %v3711 = vpack.c.b16 %v3707, %v3703
        %v3716 = vsel %vm1699, %v3711, 0
        %3718 = vmatprep.subr.bf16.mxu0 %v3508
        %3719 = vmatpush1.bf16.msra.mxu0 %v3507
        %3720 = vmatprep.subr.bf16.mxu0 %v3515
        %3721 = vmatpush1.bf16.msra.mxu0 %v3514
        %3722 = vmatprep.subr.bf16.mxu0 %v3522
        %3723 = vmatpush1.bf16.msra.mxu0 %v3521
        %3724 = vmatprep.subr.bf16.mxu0 %v3529
        %3725 = vmatpush1.bf16.msra.mxu0 %v3528
        %3726 = vmatprep.subr.bf16.mxu0 %v3536
        %3727 = vmatpush1.bf16.msra.mxu0 %v3535
        %3728 = vmatprep.subr.bf16.mxu0 %v3543
        %3729 = vmatpush1.bf16.msra.mxu0 %v3542
        %3730 = vmatprep.subr.bf16.mxu0 %v3550
        %3731 = vmatpush1.bf16.msra.mxu0 %v3549
        %3732 = vmatprep.subr.bf16.mxu0 %v3557
        %3733 = vmatpush1.bf16.msra.mxu0 %v3556
        %3734 = vmatprep.subr.bf16.mxu0 %v3564
        %3735 = vmatpush1.bf16.msra.mxu0 %v3563
        %3736 = vmatprep.subr.bf16.mxu0 %v3571
        %3737 = vmatpush1.bf16.msra.mxu0 %v3570
        %3738 = vmatprep.subr.bf16.mxu0 %v3578
        %3739 = vmatpush1.bf16.msra.mxu0 %v3577
        %3740 = vmatprep.subr.bf16.mxu0 %v3585
        %3741 = vmatpush1.bf16.msra.mxu0 %v3584
        %3742 = vmatprep.subr.bf16.mxu0 %v3592
        %3743 = vmatpush1.bf16.msra.mxu0 %v3591
        %3744 = vmatprep.subr.bf16.mxu0 %v3599
        %3745 = vmatpush1.bf16.msra.mxu0 %v3598
        %3746 = vmatprep.subr.bf16.mxu0 %v3606
        %3747 = vmatpush1.bf16.msra.mxu0 %v3605
        %3748 = vmatprep.subr.bf16.mxu0 %v3613
        %3749 = vmatpush1.bf16.msra.mxu0 %v3612
        %3750 = vmatprep.mubr.bf16.mxu0 %v3709
        %3751 = vmatmul.mubr.bf16.gmra.mrb[0].mxu0 %v3708
        %v3752 = vpop.f32.mrb[0].mxu0
        %v3753 = vadd.f32 0.0, %v3752
        %v3754 = vpop.f32.mrb[0].mxu0
        %v3755 = vadd.f32 0.0, %v3754
        %v3756 = vpop.f32.mrb[0].mxu0
        %v3757 = vadd.f32 0.0, %v3756
        %v3758 = vpop.f32.mrb[0].mxu0
        %v3759 = vadd.f32 0.0, %v3758
        %3760 = vdwg.mxu0
        %3761 = vmatprep.subr.bf16.mxu0 %v3620
        %3762 = vmatpush1.bf16.msra.mxu0 %v3619
        %3763 = vmatprep.subr.bf16.mxu0 %v3627
        %3764 = vmatpush1.bf16.msra.mxu0 %v3626
        %3765 = vmatprep.subr.bf16.mxu0 %v3634
        %3766 = vmatpush1.bf16.msra.mxu0 %v3633
        %3767 = vmatprep.subr.bf16.mxu0 %v3641
        %3768 = vmatpush1.bf16.msra.mxu0 %v3640
        %3769 = vmatprep.subr.bf16.mxu0 %v3648
        %3770 = vmatpush1.bf16.msra.mxu0 %v3647
        %3771 = vmatprep.subr.bf16.mxu0 %v3655
        %3772 = vmatpush1.bf16.msra.mxu0 %v3654
        %3773 = vmatprep.subr.bf16.mxu0 %v3662
        %3774 = vmatpush1.bf16.msra.mxu0 %v3661
        %3775 = vmatprep.subr.bf16.mxu0 %v3669
        %3776 = vmatpush1.bf16.msra.mxu0 %v3668
        %3777 = vmatprep.subr.bf16.mxu0 %v3676
        %3778 = vmatpush1.bf16.msra.mxu0 %v3675
        %3779 = vmatprep.subr.bf16.mxu0 %v3683
        %3780 = vmatpush1.bf16.msra.mxu0 %v3682
        %3781 = vmatprep.subr.bf16.mxu0 %v3690
        %3782 = vmatpush1.bf16.msra.mxu0 %v3689
        %3783 = vmatprep.subr.bf16.mxu0 0
        %3784 = vmatpush1.bf16.msra.mxu0 0
        %3785 = vmatprep.subr.bf16.mxu0 0
        %3786 = vmatpush1.bf16.msra.mxu0 0
        %3787 = vmatprep.subr.bf16.mxu0 0
        %3788 = vmatpush1.bf16.msra.mxu0 0
        %3789 = vmatprep.subr.bf16.mxu0 0
        %3790 = vmatpush1.bf16.msra.mxu0 0
        %3791 = vmatprep.subr.bf16.mxu0 0
        %3792 = vmatpush1.bf16.msra.mxu0 0
        %3793 = vmatprep.mubr.bf16.mxu0 %v3716
        %3794 = vmatmul.mubr.bf16.gmra.mrb[0].mxu0 %v3710
        %v3795 = vpop.f32.mrb[0].mxu0
        %v3796 = vadd.f32 %v3753, %v3795
        %v3797 = vpop.f32.mrb[0].mxu0
        %v3798 = vadd.f32 %v3755, %v3797
        %v3799 = vpop.f32.mrb[0].mxu0
        %v3800 = vadd.f32 %v3757, %v3799
        %v3801 = vpop.f32.mrb[0].mxu0
        %v3802 = vadd.f32 %v3759, %v3801
        %3803 = vdwg.mxu0
        %3804 = vmatprep.subr.bf16.mxu0 %v3510
        %3805 = vmatpush1.bf16.msra.mxu0 %v3509
        %3806 = vmatprep.subr.bf16.mxu0 %v3517
        %3807 = vmatpush1.bf16.msra.mxu0 %v3516
        %3808 = vmatprep.subr.bf16.mxu0 %v3524
        %3809 = vmatpush1.bf16.msra.mxu0 %v3523
        %3810 = vmatprep.subr.bf16.mxu0 %v3531
        %3811 = vmatpush1.bf16.msra.mxu0 %v3530
        %3812 = vmatprep.subr.bf16.mxu0 %v3538
        %3813 = vmatpush1.bf16.msra.mxu0 %v3537
        %3814 = vmatprep.subr.bf16.mxu0 %v3545
        %3815 = vmatpush1.bf16.msra.mxu0 %v3544
        %3816 = vmatprep.subr.bf16.mxu0 %v3552
        %3817 = vmatpush1.bf16.msra.mxu0 %v3551
        %3818 = vmatprep.subr.bf16.mxu0 %v3559
        %3819 = vmatpush1.bf16.msra.mxu0 %v3558
        %3820 = vmatprep.subr.bf16.mxu0 %v3566
        %3821 = vmatpush1.bf16.msra.mxu0 %v3565
        %3822 = vmatprep.subr.bf16.mxu0 %v3573
        %3823 = vmatpush1.bf16.msra.mxu0 %v3572
        %3824 = vmatprep.subr.bf16.mxu0 %v3580
        %3825 = vmatpush1.bf16.msra.mxu0 %v3579
        %3826 = vmatprep.subr.bf16.mxu0 %v3587
        %3827 = vmatpush1.bf16.msra.mxu0 %v3586
        %3828 = vmatprep.subr.bf16.mxu0 %v3594
        %3829 = vmatpush1.bf16.msra.mxu0 %v3593
        %3830 = vmatprep.subr.bf16.mxu0 %v3601
        %3831 = vmatpush1.bf16.msra.mxu0 %v3600
        %3832 = vmatprep.subr.bf16.mxu0 %v3608
        %3833 = vmatpush1.bf16.msra.mxu0 %v3607
        %3834 = vmatprep.subr.bf16.mxu0 %v3615
        %3835 = vmatpush1.bf16.msra.mxu0 %v3614
        %3836 = vmatprep.mubr.bf16.mxu0 %v3709
        %3837 = vmatmul.mubr.bf16.gmra.mrb[0].mxu0 %v3708
        %v3838 = vpop.f32.mrb[0].mxu0
        %v3839 = vadd.f32 0.0, %v3838
        %v3840 = vpop.f32.mrb[0].mxu0
        %v3841 = vadd.f32 0.0, %v3840
        %v3842 = vpop.f32.mrb[0].mxu0
        %v3843 = vadd.f32 0.0, %v3842
        %v3844 = vpop.f32.mrb[0].mxu0
        %v3845 = vadd.f32 0.0, %v3844
        %3846 = vdwg.mxu0
        %3847 = vmatprep.subr.bf16.mxu0 %v3622
        %3848 = vmatpush1.bf16.msra.mxu0 %v3621
        %3849 = vmatprep.subr.bf16.mxu0 %v3629
        %3850 = vmatpush1.bf16.msra.mxu0 %v3628
        %3851 = vmatprep.subr.bf16.mxu0 %v3636
        %3852 = vmatpush1.bf16.msra.mxu0 %v3635
        %3853 = vmatprep.subr.bf16.mxu0 %v3643
        %3854 = vmatpush1.bf16.msra.mxu0 %v3642
        %3855 = vmatprep.subr.bf16.mxu0 %v3650
        %3856 = vmatpush1.bf16.msra.mxu0 %v3649
        %3857 = vmatprep.subr.bf16.mxu0 %v3657
        %3858 = vmatpush1.bf16.msra.mxu0 %v3656
        %3859 = vmatprep.subr.bf16.mxu0 %v3664
        %3860 = vmatpush1.bf16.msra.mxu0 %v3663
        %3861 = vmatprep.subr.bf16.mxu0 %v3671
        %3862 = vmatpush1.bf16.msra.mxu0 %v3670
        %3863 = vmatprep.subr.bf16.mxu0 %v3678
        %3864 = vmatpush1.bf16.msra.mxu0 %v3677
        %3865 = vmatprep.subr.bf16.mxu0 %v3685
        %3866 = vmatpush1.bf16.msra.mxu0 %v3684
        %3867 = vmatprep.subr.bf16.mxu0 %v3692
        %3868 = vmatpush1.bf16.msra.mxu0 %v3691
        %3869 = vmatprep.subr.bf16.mxu0 0
        %3870 = vmatpush1.bf16.msra.mxu0 0
        %3871 = vmatprep.subr.bf16.mxu0 0
        %3872 = vmatpush1.bf16.msra.mxu0 0
        %3873 = vmatprep.subr.bf16.mxu0 0
        %3874 = vmatpush1.bf16.msra.mxu0 0
        %3875 = vmatprep.subr.bf16.mxu0 0
        %3876 = vmatpush1.bf16.msra.mxu0 0
        %3877 = vmatprep.subr.bf16.mxu0 0
        %3878 = vmatpush1.bf16.msra.mxu0 0
        %3879 = vmatprep.mubr.bf16.mxu0 %v3716
        %3880 = vmatmul.mubr.bf16.gmra.mrb[0].mxu0 %v3710
        %v3881 = vpop.f32.mrb[0].mxu0
        %v3882 = vadd.f32 %v3839, %v3881
        %v3883 = vpop.f32.mrb[0].mxu0
        %v3884 = vadd.f32 %v3841, %v3883
        %v3885 = vpop.f32.mrb[0].mxu0
        %v3886 = vadd.f32 %v3843, %v3885
        %v3887 = vpop.f32.mrb[0].mxu0
        %v3888 = vadd.f32 %v3845, %v3887
        %3889 = vdwg.mxu0
        %3890 = vmatprep.subr.bf16.mxu0 %v3512
        %3891 = vmatpush1.bf16.msra.mxu0 %v3511
        %3892 = vmatprep.subr.bf16.mxu0 %v3519
        %3893 = vmatpush1.bf16.msra.mxu0 %v3518
        %3894 = vmatprep.subr.bf16.mxu0 %v3526
        %3895 = vmatpush1.bf16.msra.mxu0 %v3525
        %3896 = vmatprep.subr.bf16.mxu0 %v3533
        %3897 = vmatpush1.bf16.msra.mxu0 %v3532
        %3898 = vmatprep.subr.bf16.mxu0 %v3540
        %3899 = vmatpush1.bf16.msra.mxu0 %v3539
        %3900 = vmatprep.subr.bf16.mxu0 %v3547
        %3901 = vmatpush1.bf16.msra.mxu0 %v3546
        %3902 = vmatprep.subr.bf16.mxu0 %v3554
        %3903 = vmatpush1.bf16.msra.mxu0 %v3553
        %3904 = vmatprep.subr.bf16.mxu0 %v3561
        %3905 = vmatpush1.bf16.msra.mxu0 %v3560
        %3906 = vmatprep.subr.bf16.mxu0 %v3568
        %3907 = vmatpush1.bf16.msra.mxu0 %v3567
        %3908 = vmatprep.subr.bf16.mxu0 %v3575
        %3909 = vmatpush1.bf16.msra.mxu0 %v3574
        %3910 = vmatprep.subr.bf16.mxu0 %v3582
        %3911 = vmatpush1.bf16.msra.mxu0 %v3581
        %3912 = vmatprep.subr.bf16.mxu0 %v3589
        %3913 = vmatpush1.bf16.msra.mxu0 %v3588
        %3914 = vmatprep.subr.bf16.mxu0 %v3596
        %3915 = vmatpush1.bf16.msra.mxu0 %v3595
        %3916 = vmatprep.subr.bf16.mxu0 %v3603
        %3917 = vmatpush1.bf16.msra.mxu0 %v3602
        %3918 = vmatprep.subr.bf16.mxu0 %v3610
        %3919 = vmatpush1.bf16.msra.mxu0 %v3609
        %3920 = vmatprep.subr.bf16.mxu0 %v3617
        %3921 = vmatpush1.bf16.msra.mxu0 %v3616
        %3922 = vmatprep.mubr.bf16.mxu0 %v3709
        %3923 = vmatmul.mubr.bf16.gmra.mrb[0].mxu0 %v3708
        %v3924 = vpop.f32.mrb[0].mxu0
        %v3925 = vadd.f32 0.0, %v3924
        %v3926 = vpop.f32.mrb[0].mxu0
        %v3927 = vadd.f32 0.0, %v3926
        %v3928 = vpop.f32.mrb[0].mxu0
        %v3929 = vadd.f32 0.0, %v3928
        %v3930 = vpop.f32.mrb[0].mxu0
        %v3931 = vadd.f32 0.0, %v3930
        %3932 = vdwg.mxu0
        %3933 = vmatprep.subr.bf16.mxu0 %v3624
        %3934 = vmatpush1.bf16.msra.mxu0 %v3623
        %3935 = vmatprep.subr.bf16.mxu0 %v3631
        %3936 = vmatpush1.bf16.msra.mxu0 %v3630
        %3937 = vmatprep.subr.bf16.mxu0 %v3638
        %3938 = vmatpush1.bf16.msra.mxu0 %v3637
        %3939 = vmatprep.subr.bf16.mxu0 %v3645
        %3940 = vmatpush1.bf16.msra.mxu0 %v3644
        %3941 = vmatprep.subr.bf16.mxu0 %v3652
        %3942 = vmatpush1.bf16.msra.mxu0 %v3651
        %3943 = vmatprep.subr.bf16.mxu0 %v3659
        %3944 = vmatpush1.bf16.msra.mxu0 %v3658
        %3945 = vmatprep.subr.bf16.mxu0 %v3666
        %3946 = vmatpush1.bf16.msra.mxu0 %v3665
        %3947 = vmatprep.subr.bf16.mxu0 %v3673
        %3948 = vmatpush1.bf16.msra.mxu0 %v3672
        %3949 = vmatprep.subr.bf16.mxu0 %v3680
        %3950 = vmatpush1.bf16.msra.mxu0 %v3679
        %3951 = vmatprep.subr.bf16.mxu0 %v3687
        %3952 = vmatpush1.bf16.msra.mxu0 %v3686
        %3953 = vmatprep.subr.bf16.mxu0 %v3694
        %3954 = vmatpush1.bf16.msra.mxu0 %v3693
        %3955 = vmatprep.subr.bf16.mxu0 0
        %3956 = vmatpush1.bf16.msra.mxu0 0
        %3957 = vmatprep.subr.bf16.mxu0 0
        %3958 = vmatpush1.bf16.msra.mxu0 0
        %3959 = vmatprep.subr.bf16.mxu0 0
        %3960 = vmatpush1.bf16.msra.mxu0 0
        %3961 = vmatprep.subr.bf16.mxu0 0
        %3962 = vmatpush1.bf16.msra.mxu0 0
        %3963 = vmatprep.subr.bf16.mxu0 0
        %3964 = vmatpush1.bf16.msra.mxu0 0
        %3965 = vmatprep.mubr.bf16.mxu0 %v3716
        %3966 = vmatmul.mubr.bf16.gmra.mrb[0].mxu0 %v3710
        %v3967 = vpop.f32.mrb[0].mxu0
        %v3968 = vadd.f32 %v3925, %v3967
        %v3969 = vpop.f32.mrb[0].mxu0
        %v3970 = vadd.f32 %v3927, %v3969
        %v3971 = vpop.f32.mrb[0].mxu0
        %v3972 = vadd.f32 %v3929, %v3971
        %v3973 = vpop.f32.mrb[0].mxu0
        %v3974 = vadd.f32 %v3931, %v3973
        %3975 = vdwg.mxu0
        %3976 = vmatprep.subr.bf16.mxu0 0
        %3977 = vmatpush1.bf16.msra.mxu0 %v3513
        %3978 = vmatprep.subr.bf16.mxu0 0
        %3979 = vmatpush1.bf16.msra.mxu0 %v3520
        %3980 = vmatprep.subr.bf16.mxu0 0
        %3981 = vmatpush1.bf16.msra.mxu0 %v3527
        %3982 = vmatprep.subr.bf16.mxu0 0
        %3983 = vmatpush1.bf16.msra.mxu0 %v3534
        %3984 = vmatprep.subr.bf16.mxu0 0
        %3985 = vmatpush1.bf16.msra.mxu0 %v3541
        %3986 = vmatprep.subr.bf16.mxu0 0
        %3987 = vmatpush1.bf16.msra.mxu0 %v3548
        %3988 = vmatprep.subr.bf16.mxu0 0
        %3989 = vmatpush1.bf16.msra.mxu0 %v3555
        %3990 = vmatprep.subr.bf16.mxu0 0
        %3991 = vmatpush1.bf16.msra.mxu0 %v3562
        %3992 = vmatprep.subr.bf16.mxu0 0
        %3993 = vmatpush1.bf16.msra.mxu0 %v3569
        %3994 = vmatprep.subr.bf16.mxu0 0
        %3995 = vmatpush1.bf16.msra.mxu0 %v3576
        %3996 = vmatprep.subr.bf16.mxu0 0
        %3997 = vmatpush1.bf16.msra.mxu0 %v3583
        %3998 = vmatprep.subr.bf16.mxu0 0
        %3999 = vmatpush1.bf16.msra.mxu0 %v3590
        %4000 = vmatprep.subr.bf16.mxu0 0
        %4001 = vmatpush1.bf16.msra.mxu0 %v3597
        %4002 = vmatprep.subr.bf16.mxu0 0
        %4003 = vmatpush1.bf16.msra.mxu0 %v3604
        %4004 = vmatprep.subr.bf16.mxu0 0
        %4005 = vmatpush1.bf16.msra.mxu0 %v3611
        %4006 = vmatprep.subr.bf16.mxu0 0
        %4007 = vmatpush1.bf16.msra.mxu0 %v3618
        %4008 = vmatprep.mubr.bf16.mxu0 %v3709
        %4009 = vmatmul.mubr.bf16.gmra.mrb[0].mxu0 %v3708
        %v4010 = vpop.f32.mrb[0].mxu0
        %v4011 = vadd.f32 0.0, %v4010
        %v4012 = vpop.f32.mrb[0].mxu0
        %v4013 = vpop.f32.mrb[0].mxu0
        %v4014 = vadd.f32 0.0, %v4013
        %v4015 = vpop.f32.mrb[0].mxu0
        %4016 = vdwg.mxu0
        %4017 = vmatprep.subr.bf16.mxu0 0
        %4018 = vmatpush1.bf16.msra.mxu0 %v3625
        %4019 = vmatprep.subr.bf16.mxu0 0
        %4020 = vmatpush1.bf16.msra.mxu0 %v3632
        %4021 = vmatprep.subr.bf16.mxu0 0
        %4022 = vmatpush1.bf16.msra.mxu0 %v3639
        %4023 = vmatprep.subr.bf16.mxu0 0
        %4024 = vmatpush1.bf16.msra.mxu0 %v3646
        %4025 = vmatprep.subr.bf16.mxu0 0
        %4026 = vmatpush1.bf16.msra.mxu0 %v3653
        %4027 = vmatprep.subr.bf16.mxu0 0
        %4028 = vmatpush1.bf16.msra.mxu0 %v3660
        %4029 = vmatprep.subr.bf16.mxu0 0
        %4030 = vmatpush1.bf16.msra.mxu0 %v3667
        %4031 = vmatprep.subr.bf16.mxu0 0
        %4032 = vmatpush1.bf16.msra.mxu0 %v3674
        %4033 = vmatprep.subr.bf16.mxu0 0
        %4034 = vmatpush1.bf16.msra.mxu0 %v3681
        %4035 = vmatprep.subr.bf16.mxu0 0
        %4036 = vmatpush1.bf16.msra.mxu0 %v3688
        %4037 = vmatprep.subr.bf16.mxu0 0
        %4038 = vmatpush1.bf16.msra.mxu0 %v3695
        %4039 = vmatprep.subr.bf16.mxu0 0
        %4040 = vmatpush1.bf16.msra.mxu0 0
        %4041 = vmatprep.subr.bf16.mxu0 0
        %4042 = vmatpush1.bf16.msra.mxu0 0
        %4043 = vmatprep.subr.bf16.mxu0 0
        %4044 = vmatpush1.bf16.msra.mxu0 0
        %4045 = vmatprep.subr.bf16.mxu0 0
        %4046 = vmatpush1.bf16.msra.mxu0 0
        %4047 = vmatprep.subr.bf16.mxu0 0
        %4048 = vmatpush1.bf16.msra.mxu0 0
        %4049 = vmatprep.mubr.bf16.mxu0 %v3716
        %4050 = vmatmul.mubr.bf16.gmra.mrb[0].mxu0 %v3710
        %v4051 = vpop.f32.mrb[0].mxu0
        %v4052 = vadd.f32 %v4011, %v4051
        %v4053 = vpop.f32.mrb[0].mxu0
        %v4054 = vpop.f32.mrb[0].mxu0
        %v4055 = vadd.f32 %v4014, %v4054
        %v4056 = vpop.f32.mrb[0].mxu0
        %4057 = vdwg.mxu0
        %v4058 = vmul.f32 %v3796, %v2047
        %v4059 = vmul.f32 %v3798, %v2051
        %v4060 = vmul.f32 %v3882, %v2055
        %v4061 = vmul.f32 %v3884, %v2059
        %v4062 = vmul.f32 %v3968, %v2063
        %v4063 = vmul.f32 %v3970, %v2067
        %v4064 = vmul.f32 %v4052, %v2071
        %v4065 = vmul.f32 %v3800, %v2047
        %v4066 = vmul.f32 %v3802, %v2051
        %v4067 = vmul.f32 %v3886, %v2055
        %v4068 = vmul.f32 %v3888, %v2059
        %v4069 = vmul.f32 %v3972, %v2063
        %v4070 = vmul.f32 %v3974, %v2067
        %v4071 = vmul.f32 %v4055, %v2071
        %v4072 = vadd.f32 %v4058, %v4059
        %v4073 = vadd.f32 %v4072, %v4060
        %v4074 = vadd.f32 %v4073, %v4061
        %v4075 = vadd.f32 %v4074, %v4062
        %v4076 = vadd.f32 %v4075, %v4063
        %v4077 = vadd.f32 %v4076, %v4064
        %4078 = vadd.xlane.f32.xlu0 %v4077
        %v4079 = vpop.xlane.xlu0 %4078
        %v4080 = vadd.f32 %v4065, %v4066
        %v4081 = vadd.f32 %v4080, %v4067
        %v4082 = vadd.f32 %v4081, %v4068
        %v4083 = vadd.f32 %v4082, %v4069
        %v4084 = vadd.f32 %v4083, %v4070
        %v4085 = vadd.f32 %v4084, %v4071
        %4086 = vadd.xlane.f32.xlu0 %v4085
        %v4087 = vpop.xlane.xlu0 %4086
        %4088 = vmatprep.subr.mxu0 0.0
        %4089 = vmatpush1.msra.mxu0 %v4079
        %4090 = vmatprep.subr.mxu0 0.0
        %4091 = vmatpush1.msra.mxu0 %v4087
        %4092 = vmatprep.subr.mxu0 0.0
        %4093 = vmatpush1.msra.mxu0 0.0
        %4094 = vmatprep.subr.mxu0 0.0
        %4095 = vmatpush1.msra.mxu0 0.0
        %4096 = vmatprep.subr.mxu0 0.0
        %4097 = vmatpush1.msra.mxu0 0.0
        %4098 = vmatprep.subr.mxu0 0.0
        %4099 = vmatpush1.msra.mxu0 0.0
        %4100 = vmatprep.subr.mxu0 0.0
        %4101 = vmatpush1.msra.mxu0 0.0
        %4102 = vmatprep.subr.mxu0 0.0
        %4103 = vmatpush1.msra.mxu0 0.0
        %4104 = vmatprep.subr.mxu0 0.0
        %4105 = vmatpush1.msra.mxu0 0.0
        %4106 = vmatprep.subr.mxu0 0.0
        %4107 = vmatpush1.msra.mxu0 0.0
        %4108 = vmatprep.subr.mxu0 0.0
        %4109 = vmatpush1.msra.mxu0 0.0
        %4110 = vmatprep.subr.mxu0 0.0
        %4111 = vmatpush1.msra.mxu0 0.0
        %4112 = vmatprep.subr.mxu0 0.0
        %4113 = vmatpush1.msra.mxu0 0.0
        %4114 = vmatprep.subr.mxu0 0.0
        %4115 = vmatpush1.msra.mxu0 0.0
        %4116 = vmatprep.subr.mxu0 0.0
        %4117 = vmatpush1.msra.mxu0 0.0
        %4118 = vmatprep.subr.mxu0 0.0
        %4119 = vmatpush1.msra.mxu0 0.0
        %4120 = vmatprep.subr.mxu0 0.0
        %4121 = vmatpush1.msra.mxu0 0.0
        %4122 = vmatprep.subr.mxu0 0.0
        %4123 = vmatpush1.msra.mxu0 0.0
        %4124 = vmatprep.subr.mxu0 0.0
        %4125 = vmatpush1.msra.mxu0 0.0
        %4126 = vmatprep.subr.mxu0 0.0
        %4127 = vmatpush1.msra.mxu0 0.0
        %4128 = vmatprep.subr.mxu0 0.0
        %4129 = vmatpush1.msra.mxu0 0.0
        %4130 = vmatprep.subr.mxu0 0.0
        %4131 = vmatpush1.msra.mxu0 0.0
        %4132 = vmatprep.subr.mxu0 0.0
        %4133 = vmatpush1.msra.mxu0 0.0
        %4134 = vmatprep.subr.mxu0 0.0
        %4135 = vmatpush1.msra.mxu0 0.0
        %4136 = vmatprep.subr.mxu0 0.0
        %4137 = vmatpush1.msra.mxu0 0.0
        %4138 = vmatprep.subr.mxu0 0.0
        %4139 = vmatpush1.msra.mxu0 0.0
        %4140 = vmatprep.subr.mxu0 0.0
        %4141 = vmatpush1.msra.mxu0 0.0
        %4142 = vmatprep.subr.mxu0 0.0
        %4143 = vmatpush1.msra.mxu0 0.0
        %4144 = vmatprep.subr.mxu0 0.0
        %4145 = vmatpush1.msra.mxu0 0.0
        %4146 = vmatprep.subr.mxu0 0.0
        %4147 = vmatpush1.msra.mxu0 0.0
        %4148 = vmatprep.subr.mxu0 0.0
        %4149 = vmatpush1.msra.mxu0 0.0
        %4150 = vmatprep.subr.mxu0 0.0
        %4151 = vmatpush1.msra.mxu0 0.0
        %4152 = vmatprep.mubr.f32.mxu0 0.0
        %4153 = vmatmul.mubr.f32.gmra.mrb[0].mxu0 %v2111
        %v4154 = vpop.f32.mrb[0].mxu0
        %v4155 = vadd.f32 0.0, %v4154
        %v4156 = vpop.f32.mrb[0].mxu0
        %4157 = vmatprep.mubr.f32.mxu0 0.0
        %4158 = vmatmul.mubr.f32.gmra.mrb[0].mxu0 %v2114
        %v4159 = vpop.f32.mrb[0].mxu0
        %v4160 = vadd.f32 0.0, %v4159
        %v4161 = vpop.f32.mrb[0].mxu0
        %4162 = vdwg.mxu0
        %4164 = vset.pattern.permute.xlu0 0
        %4165 = vperm.xlu0 %4164, %v4155
        %v4166 = vpop.permute.xlu0 %4165
        %4169 = vset.pattern.permute.xlu0 0
        %4170 = vperm.xlu0 %4169, %v4160
        %v4171 = vpop.permute.xlu0 %4170
        %v4173 = vsub.f32 %v3796, %v4166
        %v4174 = vsub.f32 %v3798, %v4166
        %v4175 = vsub.f32 %v3882, %v4166
        %v4176 = vsub.f32 %v3884, %v4166
        %v4177 = vsub.f32 %v3968, %v4166
        %v4178 = vsub.f32 %v3970, %v4166
        %v4179 = vsub.f32 %v4052, %v4166
        %v4180 = vsub.f32 %v3800, %v4171
        %v4181 = vsub.f32 %v3802, %v4171
        %v4182 = vsub.f32 %v3886, %v4171
        %v4183 = vsub.f32 %v3888, %v4171
        %v4184 = vsub.f32 %v3972, %v4171
        %v4185 = vsub.f32 %v3974, %v4171
        %v4186 = vsub.f32 %v4055, %v4171
        %v4187 = vmul.f32 %v4173, %v2047
        %v4188 = vmul.f32 %v4174, %v2051
        %v4189 = vmul.f32 %v4175, %v2055
        %v4190 = vmul.f32 %v4176, %v2059
        %v4191 = vmul.f32 %v4177, %v2063
        %v4192 = vmul.f32 %v4178, %v2067
        %v4193 = vmul.f32 %v4179, %v2071
        %v4194 = vmul.f32 %v4180, %v2047
        %v4195 = vmul.f32 %v4181, %v2051
        %v4196 = vmul.f32 %v4182, %v2055
        %v4197 = vmul.f32 %v4183, %v2059
        %v4198 = vmul.f32 %v4184, %v2063
        %v4199 = vmul.f32 %v4185, %v2067
        %v4200 = vmul.f32 %v4186, %v2071
        %v4201 = vmul.f32 %v4187, %v4187
        %v4202 = vmul.f32 %v4188, %v4188
        %v4203 = vmul.f32 %v4189, %v4189
        %v4204 = vmul.f32 %v4190, %v4190
        %v4205 = vmul.f32 %v4191, %v4191
        %v4206 = vmul.f32 %v4192, %v4192
        %v4207 = vmul.f32 %v4193, %v4193
        %v4208 = vmul.f32 %v4194, %v4194
        %v4209 = vmul.f32 %v4195, %v4195
        %v4210 = vmul.f32 %v4196, %v4196
        %v4211 = vmul.f32 %v4197, %v4197
        %v4212 = vmul.f32 %v4198, %v4198
        %v4213 = vmul.f32 %v4199, %v4199
        %v4214 = vmul.f32 %v4200, %v4200
        %v4215 = vadd.f32 %v4201, %v4202
        %v4216 = vadd.f32 %v4215, %v4203
        %v4217 = vadd.f32 %v4216, %v4204
        %v4218 = vadd.f32 %v4217, %v4205
        %v4219 = vadd.f32 %v4218, %v4206
        %v4220 = vadd.f32 %v4219, %v4207
        %4221 = vadd.xlane.f32.xlu0 %v4220
        %v4222 = vpop.xlane.xlu0 %4221
        %v4223 = vadd.f32 %v4208, %v4209
        %v4224 = vadd.f32 %v4223, %v4210
        %v4225 = vadd.f32 %v4224, %v4211
        %v4226 = vadd.f32 %v4225, %v4212
        %v4227 = vadd.f32 %v4226, %v4213
        %v4228 = vadd.f32 %v4227, %v4214
        %4229 = vadd.xlane.f32.xlu0 %v4228
        %v4230 = vpop.xlane.xlu0 %4229
        %4231 = vmatprep.subr.mxu0 0.0
        %4232 = vmatpush1.msra.mxu0 %v4222
        %4233 = vmatprep.subr.mxu0 0.0
        %4234 = vmatpush1.msra.mxu0 %v4230
        %4235 = vmatprep.subr.mxu0 0.0
        %4236 = vmatpush1.msra.mxu0 0.0
        %4237 = vmatprep.subr.mxu0 0.0
        %4238 = vmatpush1.msra.mxu0 0.0
        %4239 = vmatprep.subr.mxu0 0.0
        %4240 = vmatpush1.msra.mxu0 0.0
        %4241 = vmatprep.subr.mxu0 0.0
        %4242 = vmatpush1.msra.mxu0 0.0
        %4243 = vmatprep.subr.mxu0 0.0
        %4244 = vmatpush1.msra.mxu0 0.0
        %4245 = vmatprep.subr.mxu0 0.0
        %4246 = vmatpush1.msra.mxu0 0.0
        %4247 = vmatprep.subr.mxu0 0.0
        %4248 = vmatpush1.msra.mxu0 0.0
        %4249 = vmatprep.subr.mxu0 0.0
        %4250 = vmatpush1.msra.mxu0 0.0
        %4251 = vmatprep.subr.mxu0 0.0
        %4252 = vmatpush1.msra.mxu0 0.0
        %4253 = vmatprep.subr.mxu0 0.0
        %4254 = vmatpush1.msra.mxu0 0.0
        %4255 = vmatprep.subr.mxu0 0.0
        %4256 = vmatpush1.msra.mxu0 0.0
        %4257 = vmatprep.subr.mxu0 0.0
        %4258 = vmatpush1.msra.mxu0 0.0
        %4259 = vmatprep.subr.mxu0 0.0
        %4260 = vmatpush1.msra.mxu0 0.0
        %4261 = vmatprep.subr.mxu0 0.0
        %4262 = vmatpush1.msra.mxu0 0.0
        %4263 = vmatprep.subr.mxu0 0.0
        %4264 = vmatpush1.msra.mxu0 0.0
        %4265 = vmatprep.subr.mxu0 0.0
        %4266 = vmatpush1.msra.mxu0 0.0
        %4267 = vmatprep.subr.mxu0 0.0
        %4268 = vmatpush1.msra.mxu0 0.0
        %4269 = vmatprep.subr.mxu0 0.0
        %4270 = vmatpush1.msra.mxu0 0.0
        %4271 = vmatprep.subr.mxu0 0.0
        %4272 = vmatpush1.msra.mxu0 0.0
        %4273 = vmatprep.subr.mxu0 0.0
        %4274 = vmatpush1.msra.mxu0 0.0
        %4275 = vmatprep.subr.mxu0 0.0
        %4276 = vmatpush1.msra.mxu0 0.0
        %4277 = vmatprep.subr.mxu0 0.0
        %4278 = vmatpush1.msra.mxu0 0.0
        %4279 = vmatprep.subr.mxu0 0.0
        %4280 = vmatpush1.msra.mxu0 0.0
        %4281 = vmatprep.subr.mxu0 0.0
        %4282 = vmatpush1.msra.mxu0 0.0
        %4283 = vmatprep.subr.mxu0 0.0
        %4284 = vmatpush1.msra.mxu0 0.0
        %4285 = vmatprep.subr.mxu0 0.0
        %4286 = vmatpush1.msra.mxu0 0.0
        %4287 = vmatprep.subr.mxu0 0.0
        %4288 = vmatpush1.msra.mxu0 0.0
        %4289 = vmatprep.subr.mxu0 0.0
        %4290 = vmatpush1.msra.mxu0 0.0
        %4291 = vmatprep.subr.mxu0 0.0
        %4292 = vmatpush1.msra.mxu0 0.0
        %4293 = vmatprep.subr.mxu0 0.0
        %4294 = vmatpush1.msra.mxu0 0.0
        %4295 = vmatprep.mubr.f32.mxu0 0.0
        %4296 = vmatmul.mubr.f32.gmra.mrb[0].mxu0 %v2111
        %v4297 = vpop.f32.mrb[0].mxu0
        %v4298 = vadd.f32 1e-05, %v4297
        %v4299 = vpop.f32.mrb[0].mxu0
        %4300 = vmatprep.mubr.f32.mxu0 0.0
        %4301 = vmatmul.mubr.f32.gmra.mrb[0].mxu0 %v2114
        %v4302 = vpop.f32.mrb[0].mxu0
        %v4303 = vadd.f32 1e-05, %v4302
        %v4304 = vpop.f32.mrb[0].mxu0
        %4305 = vdwg.mxu0
        %v4306 = vrsqrt.pop %v4298
        %v4307 = vrsqrt.pop %v4303
        %v4308 = vld [vmem:[%s6] sm:$0xff]
        %v4309 = vld [vmem:[%s6 + $0x8] sm:$0xff]
        %v4310 = vmul.f32 %v4306, %v4308
        %v4311 = vmul.f32 %v4307, %v4309
        %4313 = vset.pattern.permute.xlu0 0
        %4314 = vperm.xlu0 %4313, %v4310
        %v4315 = vpop.permute.xlu0 %4314
        %4318 = vset.pattern.permute.xlu0 0
        %4319 = vperm.xlu0 %4318, %v4311
        %v4320 = vpop.permute.xlu0 %4319
        %v4322 = vmul.f32 %v4173, %v4315
        %v4323 = vmul.f32 %v4174, %v4315
        %v4324 = vmul.f32 %v4175, %v4315
        %v4325 = vmul.f32 %v4176, %v4315
        %v4326 = vmul.f32 %v4177, %v4315
        %v4327 = vmul.f32 %v4178, %v4315
        %v4328 = vmul.f32 %v4179, %v4315
        %v4329 = vmul.f32 %v4180, %v4320
        %v4330 = vmul.f32 %v4181, %v4320
        %v4331 = vmul.f32 %v4182, %v4320
        %v4332 = vmul.f32 %v4183, %v4320
        %v4333 = vmul.f32 %v4184, %v4320
        %v4334 = vmul.f32 %v4185, %v4320
        %v4335 = vmul.f32 %v4186, %v4320
        %v4336 = vld [vmem:[%s7] sm:$0xff]
        %v4337 = vld [vmem:[%s7 + $0x8] sm:$0xff]
        %4339 = vset.pattern.permute.xlu0 0
        %4340 = vperm.xlu0 %4339, %v4336
        %v4341 = vpop.permute.xlu0 %4340
        %4344 = vset.pattern.permute.xlu0 0
        %4345 = vperm.xlu0 %4344, %v4337
        %v4346 = vpop.permute.xlu0 %4345
        %v4348 = vadd.f32 %v4322, %v4341
        %v4349 = vadd.f32 %v4323, %v4341
        %v4350 = vadd.f32 %v4324, %v4341
        %v4351 = vadd.f32 %v4325, %v4341
        %v4352 = vadd.f32 %v4326, %v4341
        %v4353 = vadd.f32 %v4327, %v4341
        %v4354 = vadd.f32 %v4328, %v4341
        %v4355 = vadd.f32 %v4329, %v4346
        %v4356 = vadd.f32 %v4330, %v4346
        %v4357 = vadd.f32 %v4331, %v4346
        %v4358 = vadd.f32 %v4332, %v4346
        %v4359 = vadd.f32 %v4333, %v4346
        %v4360 = vadd.f32 %v4334, %v4346
        %v4361 = vadd.f32 %v4335, %v4346
        %vm4362 = vcmp.gt.f32.partialorder %v4348, 0.0
        %vm4363 = vcmp.gt.f32.partialorder %v4349, 0.0
        %vm4364 = vcmp.gt.f32.partialorder %v4350, 0.0
        %vm4365 = vcmp.gt.f32.partialorder %v4351, 0.0
        %vm4366 = vcmp.gt.f32.partialorder %v4352, 0.0
        %vm4367 = vcmp.gt.f32.partialorder %v4353, 0.0
        %vm4368 = vcmp.gt.f32.partialorder %v4354, 0.0
        %vm4369 = vcmp.gt.f32.partialorder %v4355, 0.0
        %vm4370 = vcmp.gt.f32.partialorder %v4356, 0.0
        %vm4371 = vcmp.gt.f32.partialorder %v4357, 0.0
        %vm4372 = vcmp.gt.f32.partialorder %v4358, 0.0
        %vm4373 = vcmp.gt.f32.partialorder %v4359, 0.0
        %vm4374 = vcmp.gt.f32.partialorder %v4360, 0.0
        %vm4375 = vcmp.gt.f32.partialorder %v4361, 0.0
        %v4376 = vmin.f32 %v4348, 0.0
        %v4377 = vmin.f32 %v4349, 0.0
        %v4378 = vmin.f32 %v4350, 0.0
        %v4379 = vmin.f32 %v4351, 0.0
        %v4380 = vmin.f32 %v4352, 0.0
        %v4381 = vmin.f32 %v4353, 0.0
        %v4382 = vmin.f32 %v4354, 0.0
        %v4383 = vmin.f32 %v4355, 0.0
        %v4384 = vmin.f32 %v4356, 0.0
        %v4385 = vmin.f32 %v4357, 0.0
        %v4386 = vmin.f32 %v4358, 0.0
        %v4387 = vmin.f32 %v4359, 0.0
        %v4388 = vmin.f32 %v4360, 0.0
        %v4389 = vmin.f32 %v4361, 0.0
        %v4390 = vmul.f32 %v4376, 1.442695
        %v4391 = vpow.pop %v4390
        %v4392 = vmul.f32 %v4377, 1.442695
        %v4393 = vpow.pop %v4392
        %v4394 = vmul.f32 %v4378, 1.442695
        %v4395 = vpow.pop %v4394
        %v4396 = vmul.f32 %v4379, 1.442695
        %v4397 = vpow.pop %v4396
        %v4398 = vmul.f32 %v4380, 1.442695
        %v4399 = vpow.pop %v4398
        %v4400 = vmul.f32 %v4381, 1.442695
        %v4401 = vpow.pop %v4400
        %v4402 = vmul.f32 %v4382, 1.442695
        %v4403 = vpow.pop %v4402
        %v4404 = vmul.f32 %v4383, 1.442695
        %v4405 = vpow.pop %v4404
        %v4406 = vmul.f32 %v4384, 1.442695
        %v4407 = vpow.pop %v4406
        %v4408 = vmul.f32 %v4385, 1.442695
        %v4409 = vpow.pop %v4408
        %v4410 = vmul.f32 %v4386, 1.442695
        %v4411 = vpow.pop %v4410
        %v4412 = vmul.f32 %v4387, 1.442695
        %v4413 = vpow.pop %v4412
        %v4414 = vmul.f32 %v4388, 1.442695
        %v4415 = vpow.pop %v4414
        %v4416 = vmul.f32 %v4389, 1.442695
        %v4417 = vpow.pop %v4416
        %v4418 = vsub.f32 %v4391, 1.0
        %v4419 = vsub.f32 %v4393, 1.0
        %v4420 = vsub.f32 %v4395, 1.0
        %v4421 = vsub.f32 %v4397, 1.0
        %v4422 = vsub.f32 %v4399, 1.0
        %v4423 = vsub.f32 %v4401, 1.0
        %v4424 = vsub.f32 %v4403, 1.0
        %v4425 = vsub.f32 %v4405, 1.0
        %v4426 = vsub.f32 %v4407, 1.0
        %v4427 = vsub.f32 %v4409, 1.0
        %v4428 = vsub.f32 %v4411, 1.0
        %v4429 = vsub.f32 %v4413, 1.0
        %v4430 = vsub.f32 %v4415, 1.0
        %v4431 = vsub.f32 %v4417, 1.0
        %v4432 = vsel %vm4362, %v4348, %v4418
        %v4433 = vsel %vm4363, %v4349, %v4419
        %v4434 = vsel %vm4364, %v4350, %v4420
        %v4435 = vsel %vm4365, %v4351, %v4421
        %v4436 = vsel %vm4366, %v4352, %v4422
        %v4437 = vsel %vm4367, %v4353, %v4423
        %v4438 = vsel %vm4368, %v4354, %v4424
        %v4439 = vsel %vm4369, %v4355, %v4425
        %v4440 = vsel %vm4370, %v4356, %v4426
        %v4441 = vsel %vm4371, %v4357, %v4427
        %v4442 = vsel %vm4372, %v4358, %v4428
        %v4443 = vsel %vm4373, %v4359, %v4429
        %v4444 = vsel %vm4374, %v4360, %v4430
        %v4445 = vsel %vm4375, %v4361, %v4431
        %v4446 = vmul.f32 %v4432, %v2047
        %v4447 = vmul.f32 %v4433, %v2051
        %v4448 = vmul.f32 %v4434, %v2055
        %v4449 = vmul.f32 %v4435, %v2059
        %v4450 = vmul.f32 %v4436, %v2063
        %v4451 = vmul.f32 %v4437, %v2067
        %v4452 = vmul.f32 %v4438, %v2071
        %v4453 = vmul.f32 %v4439, %v2047
        %v4454 = vmul.f32 %v4440, %v2051
        %v4455 = vmul.f32 %v4441, %v2055
        %v4456 = vmul.f32 %v4442, %v2059
        %v4457 = vmul.f32 %v4443, %v2063
        %v4458 = vmul.f32 %v4444, %v2067
        %v4459 = vmul.f32 %v4445, %v2071
        %v4460 = vpack.c.bf16 %v4453, %v4446
        %v4461 = vpack.c.bf16 %v4454, %v4447
        %v4462 = vpack.c.bf16 %v4455, %v4448
        %v4463 = vpack.c.bf16 %v4456, %v4449
        %v4464 = vpack.c.bf16 %v4457, %v4450
        %v4465 = vpack.c.bf16 %v4458, %v4451
        %v4466 = vpack.c.bf16 %v4459, %v4452
        %4467 = vst [vmem:[#allocation3 + $0x8] sm:$0xff] %v4460
        %4468 = vst [vmem:[#allocation3 + $0x10] sm:$0xff] %v4461
        %4469 = vst [vmem:[#allocation3 + $0x18] sm:$0xff] %v4462
        %4470 = vst [vmem:[#allocation3 + $0x20] sm:$0xff] %v4463
        %4471 = vst [vmem:[#allocation3 + $0x28] sm:$0xff] %v4464
        %4472 = vst [vmem:[#allocation3 + $0x30] sm:$0xff] %v4465
        %4473 = vst [vmem:[#allocation3 + $0x38] sm:$0xff] %v4466
        %v4474 = vld [vmem:[#allocation3] sm:$0xff]
        %v4475 = vld [vmem:[#allocation3 + $0x8] sm:$0xff]
        %v4476 = vld [vmem:[#allocation3 + $0x10] sm:$0xff]
        %v4477 = vld [vmem:[#allocation3 + $0x18] sm:$0xff]
        %v4478 = vld [vmem:[#allocation3 + $0x20] sm:$0xff]
        %v4479 = vld [vmem:[#allocation3 + $0x28] sm:$0xff]
        %v4480 = vld [vmem:[#allocation3 + $0x30] sm:$0xff]
        %v4481 = vld [vmem:[#allocation3 + $0x38] sm:$0xff]
        %v4482 = vld [vmem:[#allocation3 + $0x40] sm:$0xff]
        %4491 = vrot.lane.b32.xlu0 %v4474, 111
        %v4492 = vpop.permute.xlu0 %4491
        %4493 = vrot.lane.b32.xlu0 %v4475, 111
        %v4494 = vpop.permute.xlu0 %4493
        %4495 = vrot.lane.b32.xlu0 %v4476, 111
        %v4496 = vpop.permute.xlu0 %4495
        %4497 = vrot.lane.b32.xlu0 %v4477, 111
        %v4498 = vpop.permute.xlu0 %4497
        %4499 = vrot.lane.b32.xlu0 %v4478, 111
        %v4500 = vpop.permute.xlu0 %4499
        %4501 = vrot.lane.b32.xlu0 %v4479, 111
        %v4502 = vpop.permute.xlu0 %4501
        %4503 = vrot.lane.b32.xlu0 %v4480, 111
        %v4504 = vpop.permute.xlu0 %4503
        %4505 = vrot.lane.b32.xlu0 %v4481, 111
        %v4506 = vpop.permute.xlu0 %4505
        %v4507 = vsel %vm496, %v4492, %v4494
        %v4508 = vsel %vm496, %v4494, %v4496
        %v4509 = vsel %vm496, %v4496, %v4498
        %v4510 = vsel %vm496, %v4498, %v4500
        %v4511 = vsel %vm496, %v4500, %v4502
        %v4512 = vsel %vm496, %v4502, %v4504
        %v4513 = vsel %vm496, %v4504, %v4506
        %4521 = vst [vmem:[#allocation2] sm:$0xff] %v4507
        %4522 = vst [vmem:[#allocation2 + $0x8] sm:$0xff] %v4508
        %4523 = vst [vmem:[#allocation2 + $0x10] sm:$0xff] %v4509
        %4524 = vst [vmem:[#allocation2 + $0x18] sm:$0xff] %v4510
        %4525 = vst [vmem:[#allocation2 + $0x20] sm:$0xff] %v4511
        %4526 = vst [vmem:[#allocation2 + $0x28] sm:$0xff] %v4512
        %4527 = vst [vmem:[#allocation2 + $0x30] sm:$0xff] %v4513
        %4528 = vrot.lane.b32.xlu0 %v4474, 110
        %v4529 = vpop.permute.xlu0 %4528
        %4530 = vrot.lane.b32.xlu0 %v4475, 110
        %v4531 = vpop.permute.xlu0 %4530
        %4532 = vrot.lane.b32.xlu0 %v4476, 110
        %v4533 = vpop.permute.xlu0 %4532
        %4534 = vrot.lane.b32.xlu0 %v4477, 110
        %v4535 = vpop.permute.xlu0 %4534
        %4536 = vrot.lane.b32.xlu0 %v4478, 110
        %v4537 = vpop.permute.xlu0 %4536
        %4538 = vrot.lane.b32.xlu0 %v4479, 110
        %v4539 = vpop.permute.xlu0 %4538
        %4540 = vrot.lane.b32.xlu0 %v4480, 110
        %v4541 = vpop.permute.xlu0 %4540
        %4542 = vrot.lane.b32.xlu0 %v4481, 110
        %v4543 = vpop.permute.xlu0 %4542
        %v4544 = vsel %vm534, %v4529, %v4531
        %v4545 = vsel %vm534, %v4531, %v4533
        %v4546 = vsel %vm534, %v4533, %v4535
        %v4547 = vsel %vm534, %v4535, %v4537
        %v4548 = vsel %vm534, %v4537, %v4539
        %v4549 = vsel %vm534, %v4539, %v4541
        %v4550 = vsel %vm534, %v4541, %v4543
        %4558 = vst [vmem:[#allocation2 + $0x38] sm:$0xff] %v4544
        %4559 = vst [vmem:[#allocation2 + $0x40] sm:$0xff] %v4545
        %4560 = vst [vmem:[#allocation2 + $0x48] sm:$0xff] %v4546
        %4561 = vst [vmem:[#allocation2 + $0x50] sm:$0xff] %v4547
        %4562 = vst [vmem:[#allocation2 + $0x58] sm:$0xff] %v4548
        %4563 = vst [vmem:[#allocation2 + $0x60] sm:$0xff] %v4549
        %4564 = vst [vmem:[#allocation2 + $0x68] sm:$0xff] %v4550
        %4565 = vrot.lane.b32.xlu0 %v4474, 109
        %v4566 = vpop.permute.xlu0 %4565
        %4567 = vrot.lane.b32.xlu0 %v4475, 109
        %v4568 = vpop.permute.xlu0 %4567
        %4569 = vrot.lane.b32.xlu0 %v4476, 109
        %v4570 = vpop.permute.xlu0 %4569
        %4571 = vrot.lane.b32.xlu0 %v4477, 109
        %v4572 = vpop.permute.xlu0 %4571
        %4573 = vrot.lane.b32.xlu0 %v4478, 109
        %v4574 = vpop.permute.xlu0 %4573
        %4575 = vrot.lane.b32.xlu0 %v4479, 109
        %v4576 = vpop.permute.xlu0 %4575
        %4577 = vrot.lane.b32.xlu0 %v4480, 109
        %v4578 = vpop.permute.xlu0 %4577
        %4579 = vrot.lane.b32.xlu0 %v4481, 109
        %v4580 = vpop.permute.xlu0 %4579
        %v4581 = vsel %vm572, %v4566, %v4568
        %v4582 = vsel %vm572, %v4568, %v4570
        %v4583 = vsel %vm572, %v4570, %v4572
        %v4584 = vsel %vm572, %v4572, %v4574
        %v4585 = vsel %vm572, %v4574, %v4576
        %v4586 = vsel %vm572, %v4576, %v4578
        %v4587 = vsel %vm572, %v4578, %v4580
        %4595 = vst [vmem:[#allocation2 + $0x70] sm:$0xff] %v4581
        %4596 = vst [vmem:[#allocation2 + $0x78] sm:$0xff] %v4582
        %4597 = vst [vmem:[#allocation2 + $0x80] sm:$0xff] %v4583
        %4598 = vst [vmem:[#allocation2 + $0x88] sm:$0xff] %v4584
        %4599 = vst [vmem:[#allocation2 + $0x90] sm:$0xff] %v4585
        %4600 = vst [vmem:[#allocation2 + $0x98] sm:$0xff] %v4586
        %4601 = vst [vmem:[#allocation2 + $0xa0] sm:$0xff] %v4587
        %4602 = vrot.lane.b32.xlu0 %v4474, 101
        %v4603 = vpop.permute.xlu0 %4602
        %4604 = vrot.lane.b32.xlu0 %v4475, 101
        %v4605 = vpop.permute.xlu0 %4604
        %4606 = vrot.lane.b32.xlu0 %v4476, 101
        %v4607 = vpop.permute.xlu0 %4606
        %4608 = vrot.lane.b32.xlu0 %v4477, 101
        %v4609 = vpop.permute.xlu0 %4608
        %4610 = vrot.lane.b32.xlu0 %v4478, 101
        %v4611 = vpop.permute.xlu0 %4610
        %4612 = vrot.lane.b32.xlu0 %v4479, 101
        %v4613 = vpop.permute.xlu0 %4612
        %4614 = vrot.lane.b32.xlu0 %v4480, 101
        %v4615 = vpop.permute.xlu0 %4614
        %4616 = vrot.lane.b32.xlu0 %v4481, 101
        %v4617 = vpop.permute.xlu0 %4616
        %v4618 = vsel %vm610, %v4603, %v4605
        %v4619 = vsel %vm610, %v4605, %v4607
        %v4620 = vsel %vm610, %v4607, %v4609
        %v4621 = vsel %vm610, %v4609, %v4611
        %v4622 = vsel %vm610, %v4611, %v4613
        %v4623 = vsel %vm610, %v4613, %v4615
        %v4624 = vsel %vm610, %v4615, %v4617
        %4632 = vst [vmem:[#allocation2 + $0xa8] sm:$0xff] %v4618
        %4633 = vst [vmem:[#allocation2 + $0xb0] sm:$0xff] %v4619
        %4634 = vst [vmem:[#allocation2 + $0xb8] sm:$0xff] %v4620
        %4635 = vst [vmem:[#allocation2 + $0xc0] sm:$0xff] %v4621
        %4636 = vst [vmem:[#allocation2 + $0xc8] sm:$0xff] %v4622
        %4637 = vst [vmem:[#allocation2 + $0xd0] sm:$0xff] %v4623
        %4638 = vst [vmem:[#allocation2 + $0xd8] sm:$0xff] %v4624
        %4639 = vrot.lane.b32.xlu0 %v4474, 100
        %v4640 = vpop.permute.xlu0 %4639
        %4641 = vrot.lane.b32.xlu0 %v4475, 100
        %v4642 = vpop.permute.xlu0 %4641
        %4643 = vrot.lane.b32.xlu0 %v4476, 100
        %v4644 = vpop.permute.xlu0 %4643
        %4645 = vrot.lane.b32.xlu0 %v4477, 100
        %v4646 = vpop.permute.xlu0 %4645
        %4647 = vrot.lane.b32.xlu0 %v4478, 100
        %v4648 = vpop.permute.xlu0 %4647
        %4649 = vrot.lane.b32.xlu0 %v4479, 100
        %v4650 = vpop.permute.xlu0 %4649
        %4651 = vrot.lane.b32.xlu0 %v4480, 100
        %v4652 = vpop.permute.xlu0 %4651
        %4653 = vrot.lane.b32.xlu0 %v4481, 100
        %v4654 = vpop.permute.xlu0 %4653
        %v4655 = vsel %vm648, %v4640, %v4642
        %v4656 = vsel %vm648, %v4642, %v4644
        %v4657 = vsel %vm648, %v4644, %v4646
        %v4658 = vsel %vm648, %v4646, %v4648
        %v4659 = vsel %vm648, %v4648, %v4650
        %v4660 = vsel %vm648, %v4650, %v4652
        %v4661 = vsel %vm648, %v4652, %v4654
        %4669 = vst [vmem:[#allocation2 + $0xe0] sm:$0xff] %v4655
        %4670 = vst [vmem:[#allocation2 + $0xe8] sm:$0xff] %v4656
        %4671 = vst [vmem:[#allocation2 + $0xf0] sm:$0xff] %v4657
        %4672 = vst [vmem:[#allocation2 + $0xf8] sm:$0xff] %v4658
        %4673 = vst [vmem:[#allocation2 + $0x100] sm:$0xff] %v4659
        %4674 = vst [vmem:[#allocation2 + $0x108] sm:$0xff] %v4660
        %4675 = vst [vmem:[#allocation2 + $0x110] sm:$0xff] %v4661
        %4676 = vrot.lane.b32.xlu0 %v4474, 99
        %v4677 = vpop.permute.xlu0 %4676
        %4678 = vrot.lane.b32.xlu0 %v4475, 99
        %v4679 = vpop.permute.xlu0 %4678
        %4680 = vrot.lane.b32.xlu0 %v4476, 99
        %v4681 = vpop.permute.xlu0 %4680
        %4682 = vrot.lane.b32.xlu0 %v4477, 99
        %v4683 = vpop.permute.xlu0 %4682
        %4684 = vrot.lane.b32.xlu0 %v4478, 99
        %v4685 = vpop.permute.xlu0 %4684
        %4686 = vrot.lane.b32.xlu0 %v4479, 99
        %v4687 = vpop.permute.xlu0 %4686
        %4688 = vrot.lane.b32.xlu0 %v4480, 99
        %v4689 = vpop.permute.xlu0 %4688
        %4690 = vrot.lane.b32.xlu0 %v4481, 99
        %v4691 = vpop.permute.xlu0 %4690
        %v4692 = vsel %vm686, %v4677, %v4679
        %v4693 = vsel %vm686, %v4679, %v4681
        %v4694 = vsel %vm686, %v4681, %v4683
        %v4695 = vsel %vm686, %v4683, %v4685
        %v4696 = vsel %vm686, %v4685, %v4687
        %v4697 = vsel %vm686, %v4687, %v4689
        %v4698 = vsel %vm686, %v4689, %v4691
        %4706 = vst [vmem:[#allocation2 + $0x118] sm:$0xff] %v4692
        %4707 = vst [vmem:[#allocation2 + $0x120] sm:$0xff] %v4693
        %4708 = vst [vmem:[#allocation2 + $0x128] sm:$0xff] %v4694
        %4709 = vst [vmem:[#allocation2 + $0x130] sm:$0xff] %v4695
        %4710 = vst [vmem:[#allocation2 + $0x138] sm:$0xff] %v4696
        %4711 = vst [vmem:[#allocation2 + $0x140] sm:$0xff] %v4697
        %4712 = vst [vmem:[#allocation2 + $0x148] sm:$0xff] %v4698
        %4713 = vrot.lane.b32.xlu0 %v4474, 91
        %v4714 = vpop.permute.xlu0 %4713
        %4715 = vrot.lane.b32.xlu0 %v4475, 91
        %v4716 = vpop.permute.xlu0 %4715
        %4717 = vrot.lane.b32.xlu0 %v4476, 91
        %v4718 = vpop.permute.xlu0 %4717
        %4719 = vrot.lane.b32.xlu0 %v4477, 91
        %v4720 = vpop.permute.xlu0 %4719
        %4721 = vrot.lane.b32.xlu0 %v4478, 91
        %v4722 = vpop.permute.xlu0 %4721
        %4723 = vrot.lane.b32.xlu0 %v4479, 91
        %v4724 = vpop.permute.xlu0 %4723
        %4725 = vrot.lane.b32.xlu0 %v4480, 91
        %v4726 = vpop.permute.xlu0 %4725
        %4727 = vrot.lane.b32.xlu0 %v4481, 91
        %v4728 = vpop.permute.xlu0 %4727
        %v4729 = vsel %vm724, %v4714, %v4716
        %v4730 = vsel %vm724, %v4716, %v4718
        %v4731 = vsel %vm724, %v4718, %v4720
        %v4732 = vsel %vm724, %v4720, %v4722
        %v4733 = vsel %vm724, %v4722, %v4724
        %v4734 = vsel %vm724, %v4724, %v4726
        %v4735 = vsel %vm724, %v4726, %v4728
        %4743 = vst [vmem:[#allocation2 + $0x150] sm:$0xff] %v4729
        %4744 = vst [vmem:[#allocation2 + $0x158] sm:$0xff] %v4730
        %4745 = vst [vmem:[#allocation2 + $0x160] sm:$0xff] %v4731
        %4746 = vst [vmem:[#allocation2 + $0x168] sm:$0xff] %v4732
        %4747 = vst [vmem:[#allocation2 + $0x170] sm:$0xff] %v4733
        %4748 = vst [vmem:[#allocation2 + $0x178] sm:$0xff] %v4734
        %4749 = vst [vmem:[#allocation2 + $0x180] sm:$0xff] %v4735
        %4750 = vrot.lane.b32.xlu0 %v4474, 90
        %v4751 = vpop.permute.xlu0 %4750
        %4752 = vrot.lane.b32.xlu0 %v4475, 90
        %v4753 = vpop.permute.xlu0 %4752
        %4754 = vrot.lane.b32.xlu0 %v4476, 90
        %v4755 = vpop.permute.xlu0 %4754
        %4756 = vrot.lane.b32.xlu0 %v4477, 90
        %v4757 = vpop.permute.xlu0 %4756
        %4758 = vrot.lane.b32.xlu0 %v4478, 90
        %v4759 = vpop.permute.xlu0 %4758
        %4760 = vrot.lane.b32.xlu0 %v4479, 90
        %v4761 = vpop.permute.xlu0 %4760
        %4762 = vrot.lane.b32.xlu0 %v4480, 90
        %v4763 = vpop.permute.xlu0 %4762
        %4764 = vrot.lane.b32.xlu0 %v4481, 90
        %v4765 = vpop.permute.xlu0 %4764
        %v4766 = vsel %vm762, %v4751, %v4753
        %v4767 = vsel %vm762, %v4753, %v4755
        %v4768 = vsel %vm762, %v4755, %v4757
        %v4769 = vsel %vm762, %v4757, %v4759
        %v4770 = vsel %vm762, %v4759, %v4761
        %v4771 = vsel %vm762, %v4761, %v4763
        %v4772 = vsel %vm762, %v4763, %v4765
        %4780 = vst [vmem:[#allocation2 + $0x188] sm:$0xff] %v4766
        %4781 = vst [vmem:[#allocation2 + $0x190] sm:$0xff] %v4767
        %4782 = vst [vmem:[#allocation2 + $0x198] sm:$0xff] %v4768
        %4783 = vst [vmem:[#allocation2 + $0x1a0] sm:$0xff] %v4769
        %4784 = vst [vmem:[#allocation2 + $0x1a8] sm:$0xff] %v4770
        %4785 = vst [vmem:[#allocation2 + $0x1b0] sm:$0xff] %v4771
        %4786 = vst [vmem:[#allocation2 + $0x1b8] sm:$0xff] %v4772
        %4787 = vrot.lane.b32.xlu0 %v4474, 89
        %v4788 = vpop.permute.xlu0 %4787
        %4789 = vrot.lane.b32.xlu0 %v4475, 89
        %v4790 = vpop.permute.xlu0 %4789
        %4791 = vrot.lane.b32.xlu0 %v4476, 89
        %v4792 = vpop.permute.xlu0 %4791
        %4793 = vrot.lane.b32.xlu0 %v4477, 89
        %v4794 = vpop.permute.xlu0 %4793
        %4795 = vrot.lane.b32.xlu0 %v4478, 89
        %v4796 = vpop.permute.xlu0 %4795
        %4797 = vrot.lane.b32.xlu0 %v4479, 89
        %v4798 = vpop.permute.xlu0 %4797
        %4799 = vrot.lane.b32.xlu0 %v4480, 89
        %v4800 = vpop.permute.xlu0 %4799
        %4801 = vrot.lane.b32.xlu0 %v4481, 89
        %v4802 = vpop.permute.xlu0 %4801
        %v4803 = vsel %vm800, %v4788, %v4790
        %v4804 = vsel %vm800, %v4790, %v4792
        %v4805 = vsel %vm800, %v4792, %v4794
        %v4806 = vsel %vm800, %v4794, %v4796
        %v4807 = vsel %vm800, %v4796, %v4798
        %v4808 = vsel %vm800, %v4798, %v4800
        %v4809 = vsel %vm800, %v4800, %v4802
        %4817 = vst [vmem:[#allocation2 + $0x1c0] sm:$0xff] %v4803
        %4818 = vst [vmem:[#allocation2 + $0x1c8] sm:$0xff] %v4804
        %4819 = vst [vmem:[#allocation2 + $0x1d0] sm:$0xff] %v4805
        %4820 = vst [vmem:[#allocation2 + $0x1d8] sm:$0xff] %v4806
        %4821 = vst [vmem:[#allocation2 + $0x1e0] sm:$0xff] %v4807
        %4822 = vst [vmem:[#allocation2 + $0x1e8] sm:$0xff] %v4808
        %4823 = vst [vmem:[#allocation2 + $0x1f0] sm:$0xff] %v4809
        %4824 = vrot.lane.b32.xlu0 %v4474, 11
        %v4825 = vpop.permute.xlu0 %4824
        %4826 = vrot.lane.b32.xlu0 %v4475, 11
        %v4827 = vpop.permute.xlu0 %4826
        %4828 = vrot.lane.b32.xlu0 %v4476, 11
        %v4829 = vpop.permute.xlu0 %4828
        %4830 = vrot.lane.b32.xlu0 %v4477, 11
        %v4831 = vpop.permute.xlu0 %4830
        %4832 = vrot.lane.b32.xlu0 %v4478, 11
        %v4833 = vpop.permute.xlu0 %4832
        %4834 = vrot.lane.b32.xlu0 %v4479, 11
        %v4835 = vpop.permute.xlu0 %4834
        %4836 = vrot.lane.b32.xlu0 %v4480, 11
        %v4837 = vpop.permute.xlu0 %4836
        %4838 = vrot.lane.b32.xlu0 %v4481, 11
        %v4839 = vpop.permute.xlu0 %4838
        %v4840 = vsel %vm838, %v4825, %v4827
        %v4841 = vsel %vm838, %v4827, %v4829
        %v4842 = vsel %vm838, %v4829, %v4831
        %v4843 = vsel %vm838, %v4831, %v4833
        %v4844 = vsel %vm838, %v4833, %v4835
        %v4845 = vsel %vm838, %v4835, %v4837
        %v4846 = vsel %vm838, %v4837, %v4839
        %4854 = vst [vmem:[#allocation2 + $0x1f8] sm:$0xff] %v4840
        %4855 = vst [vmem:[#allocation2 + $0x200] sm:$0xff] %v4841
        %4856 = vst [vmem:[#allocation2 + $0x208] sm:$0xff] %v4842
        %4857 = vst [vmem:[#allocation2 + $0x210] sm:$0xff] %v4843
        %4858 = vst [vmem:[#allocation2 + $0x218] sm:$0xff] %v4844
        %4859 = vst [vmem:[#allocation2 + $0x220] sm:$0xff] %v4845
        %4860 = vst [vmem:[#allocation2 + $0x228] sm:$0xff] %v4846
        %4861 = vrot.lane.b32.xlu0 %v4474, 10
        %v4862 = vpop.permute.xlu0 %4861
        %4863 = vrot.lane.b32.xlu0 %v4475, 10
        %v4864 = vpop.permute.xlu0 %4863
        %4865 = vrot.lane.b32.xlu0 %v4476, 10
        %v4866 = vpop.permute.xlu0 %4865
        %4867 = vrot.lane.b32.xlu0 %v4477, 10
        %v4868 = vpop.permute.xlu0 %4867
        %4869 = vrot.lane.b32.xlu0 %v4478, 10
        %v4870 = vpop.permute.xlu0 %4869
        %4871 = vrot.lane.b32.xlu0 %v4479, 10
        %v4872 = vpop.permute.xlu0 %4871
        %4873 = vrot.lane.b32.xlu0 %v4480, 10
        %v4874 = vpop.permute.xlu0 %4873
        %4875 = vrot.lane.b32.xlu0 %v4481, 10
        %v4876 = vpop.permute.xlu0 %4875
        %v4877 = vsel %vm876, %v4862, %v4864
        %v4878 = vsel %vm876, %v4864, %v4866
        %v4879 = vsel %vm876, %v4866, %v4868
        %v4880 = vsel %vm876, %v4868, %v4870
        %v4881 = vsel %vm876, %v4870, %v4872
        %v4882 = vsel %vm876, %v4872, %v4874
        %v4883 = vsel %vm876, %v4874, %v4876
        %4891 = vst [vmem:[#allocation2 + $0x230] sm:$0xff] %v4877
        %4892 = vst [vmem:[#allocation2 + $0x238] sm:$0xff] %v4878
        %4893 = vst [vmem:[#allocation2 + $0x240] sm:$0xff] %v4879
        %4894 = vst [vmem:[#allocation2 + $0x248] sm:$0xff] %v4880
        %4895 = vst [vmem:[#allocation2 + $0x250] sm:$0xff] %v4881
        %4896 = vst [vmem:[#allocation2 + $0x258] sm:$0xff] %v4882
        %4897 = vst [vmem:[#allocation2 + $0x260] sm:$0xff] %v4883
        %4898 = vrot.lane.b32.xlu0 %v4474, 9
        %v4899 = vpop.permute.xlu0 %4898
        %4900 = vrot.lane.b32.xlu0 %v4475, 9
        %v4901 = vpop.permute.xlu0 %4900
        %4902 = vrot.lane.b32.xlu0 %v4476, 9
        %v4903 = vpop.permute.xlu0 %4902
        %4904 = vrot.lane.b32.xlu0 %v4477, 9
        %v4905 = vpop.permute.xlu0 %4904
        %4906 = vrot.lane.b32.xlu0 %v4478, 9
        %v4907 = vpop.permute.xlu0 %4906
        %4908 = vrot.lane.b32.xlu0 %v4479, 9
        %v4909 = vpop.permute.xlu0 %4908
        %4910 = vrot.lane.b32.xlu0 %v4480, 9
        %v4911 = vpop.permute.xlu0 %4910
        %4912 = vrot.lane.b32.xlu0 %v4481, 9
        %v4913 = vpop.permute.xlu0 %4912
        %v4914 = vsel %vm914, %v4899, %v4901
        %v4915 = vsel %vm914, %v4901, %v4903
        %v4916 = vsel %vm914, %v4903, %v4905
        %v4917 = vsel %vm914, %v4905, %v4907
        %v4918 = vsel %vm914, %v4907, %v4909
        %v4919 = vsel %vm914, %v4909, %v4911
        %v4920 = vsel %vm914, %v4911, %v4913
        %4928 = vst [vmem:[#allocation2 + $0x268] sm:$0xff] %v4914
        %4929 = vst [vmem:[#allocation2 + $0x270] sm:$0xff] %v4915
        %4930 = vst [vmem:[#allocation2 + $0x278] sm:$0xff] %v4916
        %4931 = vst [vmem:[#allocation2 + $0x280] sm:$0xff] %v4917
        %4932 = vst [vmem:[#allocation2 + $0x288] sm:$0xff] %v4918
        %4933 = vst [vmem:[#allocation2 + $0x290] sm:$0xff] %v4919
        %4934 = vst [vmem:[#allocation2 + $0x298] sm:$0xff] %v4920
        %4935 = vrot.lane.b32.xlu0 %v4474, 1
        %v4936 = vpop.permute.xlu0 %4935
        %4937 = vrot.lane.b32.xlu0 %v4475, 1
        %v4938 = vpop.permute.xlu0 %4937
        %4939 = vrot.lane.b32.xlu0 %v4476, 1
        %v4940 = vpop.permute.xlu0 %4939
        %4941 = vrot.lane.b32.xlu0 %v4477, 1
        %v4942 = vpop.permute.xlu0 %4941
        %4943 = vrot.lane.b32.xlu0 %v4478, 1
        %v4944 = vpop.permute.xlu0 %4943
        %4945 = vrot.lane.b32.xlu0 %v4479, 1
        %v4946 = vpop.permute.xlu0 %4945
        %4947 = vrot.lane.b32.xlu0 %v4480, 1
        %v4948 = vpop.permute.xlu0 %4947
        %4949 = vrot.lane.b32.xlu0 %v4481, 1
        %v4950 = vpop.permute.xlu0 %4949
        %v4951 = vsel %vm952, %v4936, %v4938
        %v4952 = vsel %vm952, %v4938, %v4940
        %v4953 = vsel %vm952, %v4940, %v4942
        %v4954 = vsel %vm952, %v4942, %v4944
        %v4955 = vsel %vm952, %v4944, %v4946
        %v4956 = vsel %vm952, %v4946, %v4948
        %v4957 = vsel %vm952, %v4948, %v4950
        %4965 = vst [vmem:[#allocation2 + $0x2a0] sm:$0xff] %v4951
        %4966 = vst [vmem:[#allocation2 + $0x2a8] sm:$0xff] %v4952
        %4967 = vst [vmem:[#allocation2 + $0x2b0] sm:$0xff] %v4953
        %4968 = vst [vmem:[#allocation2 + $0x2b8] sm:$0xff] %v4954
        %4969 = vst [vmem:[#allocation2 + $0x2c0] sm:$0xff] %v4955
        %4970 = vst [vmem:[#allocation2 + $0x2c8] sm:$0xff] %v4956
        %4971 = vst [vmem:[#allocation2 + $0x2d0] sm:$0xff] %v4957
        %4972 = vst [vmem:[#allocation2 + $0x2d8] sm:$0xff] %v4475
        %4973 = vst [vmem:[#allocation2 + $0x2e0] sm:$0xff] %v4476
        %4974 = vst [vmem:[#allocation2 + $0x2e8] sm:$0xff] %v4477
        %4975 = vst [vmem:[#allocation2 + $0x2f0] sm:$0xff] %v4478
        %4976 = vst [vmem:[#allocation2 + $0x2f8] sm:$0xff] %v4479
        %4977 = vst [vmem:[#allocation2 + $0x300] sm:$0xff] %v4480
        %4978 = vst [vmem:[#allocation2 + $0x308] sm:$0xff] %v4481
        %4980 = vrot.lane.b32.xlu0 %v4475, 127
        %v4981 = vpop.permute.xlu0 %4980
        %4982 = vrot.lane.b32.xlu0 %v4476, 127
        %v4983 = vpop.permute.xlu0 %4982
        %4984 = vrot.lane.b32.xlu0 %v4477, 127
        %v4985 = vpop.permute.xlu0 %4984
        %4986 = vrot.lane.b32.xlu0 %v4478, 127
        %v4987 = vpop.permute.xlu0 %4986
        %4988 = vrot.lane.b32.xlu0 %v4479, 127
        %v4989 = vpop.permute.xlu0 %4988
        %4990 = vrot.lane.b32.xlu0 %v4480, 127
        %v4991 = vpop.permute.xlu0 %4990
        %4992 = vrot.lane.b32.xlu0 %v4481, 127
        %v4993 = vpop.permute.xlu0 %4992
        %4994 = vrot.lane.b32.xlu0 %v4482, 127
        %v4995 = vpop.permute.xlu0 %4994
        %v4996 = vsel %vm1009, %v4981, %v4983
        %v4997 = vsel %vm1009, %v4983, %v4985
        %v4998 = vsel %vm1009, %v4985, %v4987
        %v4999 = vsel %vm1009, %v4987, %v4989
        %v5000 = vsel %vm1009, %v4989, %v4991
        %v5001 = vsel %vm1009, %v4991, %v4993
        %v5002 = vsel %vm1009, %v4993, %v4995
        %5010 = vst [vmem:[#allocation2 + $0x310] sm:$0xff] %v4996
        %5011 = vst [vmem:[#allocation2 + $0x318] sm:$0xff] %v4997
        %5012 = vst [vmem:[#allocation2 + $0x320] sm:$0xff] %v4998
        %5013 = vst [vmem:[#allocation2 + $0x328] sm:$0xff] %v4999
        %5014 = vst [vmem:[#allocation2 + $0x330] sm:$0xff] %v5000
        %5015 = vst [vmem:[#allocation2 + $0x338] sm:$0xff] %v5001
        %5016 = vst [vmem:[#allocation2 + $0x340] sm:$0xff] %v5002
        %5017 = vrot.lane.b32.xlu0 %v4475, 119
        %v5018 = vpop.permute.xlu0 %5017
        %5019 = vrot.lane.b32.xlu0 %v4476, 119
        %v5020 = vpop.permute.xlu0 %5019
        %5021 = vrot.lane.b32.xlu0 %v4477, 119
        %v5022 = vpop.permute.xlu0 %5021
        %5023 = vrot.lane.b32.xlu0 %v4478, 119
        %v5024 = vpop.permute.xlu0 %5023
        %5025 = vrot.lane.b32.xlu0 %v4479, 119
        %v5026 = vpop.permute.xlu0 %5025
        %5027 = vrot.lane.b32.xlu0 %v4480, 119
        %v5028 = vpop.permute.xlu0 %5027
        %5029 = vrot.lane.b32.xlu0 %v4481, 119
        %v5030 = vpop.permute.xlu0 %5029
        %5031 = vrot.lane.b32.xlu0 %v4482, 119
        %v5032 = vpop.permute.xlu0 %5031
        %v5033 = vsel %vm1047, %v5018, %v5020
        %v5034 = vsel %vm1047, %v5020, %v5022
        %v5035 = vsel %vm1047, %v5022, %v5024
        %v5036 = vsel %vm1047, %v5024, %v5026
        %v5037 = vsel %vm1047, %v5026, %v5028
        %v5038 = vsel %vm1047, %v5028, %v5030
        %v5039 = vsel %vm1047, %v5030, %v5032
        %5047 = vst [vmem:[#allocation2 + $0x348] sm:$0xff] %v5033
        %5048 = vst [vmem:[#allocation2 + $0x350] sm:$0xff] %v5034
        %5049 = vst [vmem:[#allocation2 + $0x358] sm:$0xff] %v5035
        %5050 = vst [vmem:[#allocation2 + $0x360] sm:$0xff] %v5036
        %5051 = vst [vmem:[#allocation2 + $0x368] sm:$0xff] %v5037
        %5052 = vst [vmem:[#allocation2 + $0x370] sm:$0xff] %v5038
        %5053 = vst [vmem:[#allocation2 + $0x378] sm:$0xff] %v5039
        %5054 = vrot.lane.b32.xlu0 %v4475, 118
        %v5055 = vpop.permute.xlu0 %5054
        %5056 = vrot.lane.b32.xlu0 %v4476, 118
        %v5057 = vpop.permute.xlu0 %5056
        %5058 = vrot.lane.b32.xlu0 %v4477, 118
        %v5059 = vpop.permute.xlu0 %5058
        %5060 = vrot.lane.b32.xlu0 %v4478, 118
        %v5061 = vpop.permute.xlu0 %5060
        %5062 = vrot.lane.b32.xlu0 %v4479, 118
        %v5063 = vpop.permute.xlu0 %5062
        %5064 = vrot.lane.b32.xlu0 %v4480, 118
        %v5065 = vpop.permute.xlu0 %5064
        %5066 = vrot.lane.b32.xlu0 %v4481, 118
        %v5067 = vpop.permute.xlu0 %5066
        %5068 = vrot.lane.b32.xlu0 %v4482, 118
        %v5069 = vpop.permute.xlu0 %5068
        %v5070 = vsel %vm1085, %v5055, %v5057
        %v5071 = vsel %vm1085, %v5057, %v5059
        %v5072 = vsel %vm1085, %v5059, %v5061
        %v5073 = vsel %vm1085, %v5061, %v5063
        %v5074 = vsel %vm1085, %v5063, %v5065
        %v5075 = vsel %vm1085, %v5065, %v5067
        %v5076 = vsel %vm1085, %v5067, %v5069
        %5084 = vst [vmem:[#allocation2 + $0x380] sm:$0xff] %v5070
        %5085 = vst [vmem:[#allocation2 + $0x388] sm:$0xff] %v5071
        %5086 = vst [vmem:[#allocation2 + $0x390] sm:$0xff] %v5072
        %5087 = vst [vmem:[#allocation2 + $0x398] sm:$0xff] %v5073
        %5088 = vst [vmem:[#allocation2 + $0x3a0] sm:$0xff] %v5074
        %5089 = vst [vmem:[#allocation2 + $0x3a8] sm:$0xff] %v5075
        %5090 = vst [vmem:[#allocation2 + $0x3b0] sm:$0xff] %v5076
        %5091 = vrot.lane.b32.xlu0 %v4475, 117
        %v5092 = vpop.permute.xlu0 %5091
        %5093 = vrot.lane.b32.xlu0 %v4476, 117
        %v5094 = vpop.permute.xlu0 %5093
        %5095 = vrot.lane.b32.xlu0 %v4477, 117
        %v5096 = vpop.permute.xlu0 %5095
        %5097 = vrot.lane.b32.xlu0 %v4478, 117
        %v5098 = vpop.permute.xlu0 %5097
        %5099 = vrot.lane.b32.xlu0 %v4479, 117
        %v5100 = vpop.permute.xlu0 %5099
        %5101 = vrot.lane.b32.xlu0 %v4480, 117
        %v5102 = vpop.permute.xlu0 %5101
        %5103 = vrot.lane.b32.xlu0 %v4481, 117
        %v5104 = vpop.permute.xlu0 %5103
        %5105 = vrot.lane.b32.xlu0 %v4482, 117
        %v5106 = vpop.permute.xlu0 %5105
        %v5107 = vsel %vm1123, %v5092, %v5094
        %v5108 = vsel %vm1123, %v5094, %v5096
        %v5109 = vsel %vm1123, %v5096, %v5098
        %v5110 = vsel %vm1123, %v5098, %v5100
        %v5111 = vsel %vm1123, %v5100, %v5102
        %v5112 = vsel %vm1123, %v5102, %v5104
        %v5113 = vsel %vm1123, %v5104, %v5106
        %5121 = vst [vmem:[#allocation2 + $0x3b8] sm:$0xff] %v5107
        %5122 = vst [vmem:[#allocation2 + $0x3c0] sm:$0xff] %v5108
        %5123 = vst [vmem:[#allocation2 + $0x3c8] sm:$0xff] %v5109
        %5124 = vst [vmem:[#allocation2 + $0x3d0] sm:$0xff] %v5110
        %5125 = vst [vmem:[#allocation2 + $0x3d8] sm:$0xff] %v5111
        %5126 = vst [vmem:[#allocation2 + $0x3e0] sm:$0xff] %v5112
        %5127 = vst [vmem:[#allocation2 + $0x3e8] sm:$0xff] %v5113
        %5128 = vrot.lane.b32.xlu0 %v4475, 39
        %v5129 = vpop.permute.xlu0 %5128
        %5130 = vrot.lane.b32.xlu0 %v4476, 39
        %v5131 = vpop.permute.xlu0 %5130
        %5132 = vrot.lane.b32.xlu0 %v4477, 39
        %v5133 = vpop.permute.xlu0 %5132
        %5134 = vrot.lane.b32.xlu0 %v4478, 39
        %v5135 = vpop.permute.xlu0 %5134
        %5136 = vrot.lane.b32.xlu0 %v4479, 39
        %v5137 = vpop.permute.xlu0 %5136
        %5138 = vrot.lane.b32.xlu0 %v4480, 39
        %v5139 = vpop.permute.xlu0 %5138
        %5140 = vrot.lane.b32.xlu0 %v4481, 39
        %v5141 = vpop.permute.xlu0 %5140
        %5142 = vrot.lane.b32.xlu0 %v4482, 39
        %v5143 = vpop.permute.xlu0 %5142
        %v5144 = vsel %vm1161, %v5129, %v5131
        %v5145 = vsel %vm1161, %v5131, %v5133
        %v5146 = vsel %vm1161, %v5133, %v5135
        %v5147 = vsel %vm1161, %v5135, %v5137
        %v5148 = vsel %vm1161, %v5137, %v5139
        %v5149 = vsel %vm1161, %v5139, %v5141
        %v5150 = vsel %vm1161, %v5141, %v5143
        %5158 = vst [vmem:[#allocation2 + $0x3f0] sm:$0xff] %v5144
        %5159 = vst [vmem:[#allocation2 + $0x3f8] sm:$0xff] %v5145
        %5160 = vst [vmem:[#allocation2 + $0x400] sm:$0xff] %v5146
        %5161 = vst [vmem:[#allocation2 + $0x408] sm:$0xff] %v5147
        %5162 = vst [vmem:[#allocation2 + $0x410] sm:$0xff] %v5148
        %5163 = vst [vmem:[#allocation2 + $0x418] sm:$0xff] %v5149
        %5164 = vst [vmem:[#allocation2 + $0x420] sm:$0xff] %v5150
        %5165 = vrot.lane.b32.xlu0 %v4475, 38
        %v5166 = vpop.permute.xlu0 %5165
        %5167 = vrot.lane.b32.xlu0 %v4476, 38
        %v5168 = vpop.permute.xlu0 %5167
        %5169 = vrot.lane.b32.xlu0 %v4477, 38
        %v5170 = vpop.permute.xlu0 %5169
        %5171 = vrot.lane.b32.xlu0 %v4478, 38
        %v5172 = vpop.permute.xlu0 %5171
        %5173 = vrot.lane.b32.xlu0 %v4479, 38
        %v5174 = vpop.permute.xlu0 %5173
        %5175 = vrot.lane.b32.xlu0 %v4480, 38
        %v5176 = vpop.permute.xlu0 %5175
        %5177 = vrot.lane.b32.xlu0 %v4481, 38
        %v5178 = vpop.permute.xlu0 %5177
        %5179 = vrot.lane.b32.xlu0 %v4482, 38
        %v5180 = vpop.permute.xlu0 %5179
        %v5181 = vsel %vm1199, %v5166, %v5168
        %v5182 = vsel %vm1199, %v5168, %v5170
        %v5183 = vsel %vm1199, %v5170, %v5172
        %v5184 = vsel %vm1199, %v5172, %v5174
        %v5185 = vsel %vm1199, %v5174, %v5176
        %v5186 = vsel %vm1199, %v5176, %v5178
        %v5187 = vsel %vm1199, %v5178, %v5180
        %5195 = vst [vmem:[#allocation2 + $0x428] sm:$0xff] %v5181
        %5196 = vst [vmem:[#allocation2 + $0x430] sm:$0xff] %v5182
        %5197 = vst [vmem:[#allocation2 + $0x438] sm:$0xff] %v5183
        %5198 = vst [vmem:[#allocation2 + $0x440] sm:$0xff] %v5184
        %5199 = vst [vmem:[#allocation2 + $0x448] sm:$0xff] %v5185
        %5200 = vst [vmem:[#allocation2 + $0x450] sm:$0xff] %v5186
        %5201 = vst [vmem:[#allocation2 + $0x458] sm:$0xff] %v5187
        %5202 = vrot.lane.b32.xlu0 %v4475, 37
        %v5203 = vpop.permute.xlu0 %5202
        %5204 = vrot.lane.b32.xlu0 %v4476, 37
        %v5205 = vpop.permute.xlu0 %5204
        %5206 = vrot.lane.b32.xlu0 %v4477, 37
        %v5207 = vpop.permute.xlu0 %5206
        %5208 = vrot.lane.b32.xlu0 %v4478, 37
        %v5209 = vpop.permute.xlu0 %5208
        %5210 = vrot.lane.b32.xlu0 %v4479, 37
        %v5211 = vpop.permute.xlu0 %5210
        %5212 = vrot.lane.b32.xlu0 %v4480, 37
        %v5213 = vpop.permute.xlu0 %5212
        %5214 = vrot.lane.b32.xlu0 %v4481, 37
        %v5215 = vpop.permute.xlu0 %5214
        %5216 = vrot.lane.b32.xlu0 %v4482, 37
        %v5217 = vpop.permute.xlu0 %5216
        %v5218 = vsel %vm1237, %v5203, %v5205
        %v5219 = vsel %vm1237, %v5205, %v5207
        %v5220 = vsel %vm1237, %v5207, %v5209
        %v5221 = vsel %vm1237, %v5209, %v5211
        %v5222 = vsel %vm1237, %v5211, %v5213
        %v5223 = vsel %vm1237, %v5213, %v5215
        %v5224 = vsel %vm1237, %v5215, %v5217
        %5232 = vst [vmem:[#allocation2 + $0x460] sm:$0xff] %v5218
        %5233 = vst [vmem:[#allocation2 + $0x468] sm:$0xff] %v5219
        %5234 = vst [vmem:[#allocation2 + $0x470] sm:$0xff] %v5220
        %5235 = vst [vmem:[#allocation2 + $0x478] sm:$0xff] %v5221
        %5236 = vst [vmem:[#allocation2 + $0x480] sm:$0xff] %v5222
        %5237 = vst [vmem:[#allocation2 + $0x488] sm:$0xff] %v5223
        %5238 = vst [vmem:[#allocation2 + $0x490] sm:$0xff] %v5224
        %5239 = vrot.lane.b32.xlu0 %v4475, 29
        %v5240 = vpop.permute.xlu0 %5239
        %5241 = vrot.lane.b32.xlu0 %v4476, 29
        %v5242 = vpop.permute.xlu0 %5241
        %5243 = vrot.lane.b32.xlu0 %v4477, 29
        %v5244 = vpop.permute.xlu0 %5243
        %5245 = vrot.lane.b32.xlu0 %v4478, 29
        %v5246 = vpop.permute.xlu0 %5245
        %5247 = vrot.lane.b32.xlu0 %v4479, 29
        %v5248 = vpop.permute.xlu0 %5247
        %5249 = vrot.lane.b32.xlu0 %v4480, 29
        %v5250 = vpop.permute.xlu0 %5249
        %5251 = vrot.lane.b32.xlu0 %v4481, 29
        %v5252 = vpop.permute.xlu0 %5251
        %5253 = vrot.lane.b32.xlu0 %v4482, 29
        %v5254 = vpop.permute.xlu0 %5253
        %v5255 = vsel %vm1275, %v5240, %v5242
        %v5256 = vsel %vm1275, %v5242, %v5244
        %v5257 = vsel %vm1275, %v5244, %v5246
        %v5258 = vsel %vm1275, %v5246, %v5248
        %v5259 = vsel %vm1275, %v5248, %v5250
        %v5260 = vsel %vm1275, %v5250, %v5252
        %v5261 = vsel %vm1275, %v5252, %v5254
        %5269 = vst [vmem:[#allocation2 + $0x498] sm:$0xff] %v5255
        %5270 = vst [vmem:[#allocation2 + $0x4a0] sm:$0xff] %v5256
        %5271 = vst [vmem:[#allocation2 + $0x4a8] sm:$0xff] %v5257
        %5272 = vst [vmem:[#allocation2 + $0x4b0] sm:$0xff] %v5258
        %5273 = vst [vmem:[#allocation2 + $0x4b8] sm:$0xff] %v5259
        %5274 = vst [vmem:[#allocation2 + $0x4c0] sm:$0xff] %v5260
        %5275 = vst [vmem:[#allocation2 + $0x4c8] sm:$0xff] %v5261
        %5276 = vrot.lane.b32.xlu0 %v4475, 28
        %v5277 = vpop.permute.xlu0 %5276
        %5278 = vrot.lane.b32.xlu0 %v4476, 28
        %v5279 = vpop.permute.xlu0 %5278
        %5280 = vrot.lane.b32.xlu0 %v4477, 28
        %v5281 = vpop.permute.xlu0 %5280
        %5282 = vrot.lane.b32.xlu0 %v4478, 28
        %v5283 = vpop.permute.xlu0 %5282
        %5284 = vrot.lane.b32.xlu0 %v4479, 28
        %v5285 = vpop.permute.xlu0 %5284
        %5286 = vrot.lane.b32.xlu0 %v4480, 28
        %v5287 = vpop.permute.xlu0 %5286
        %5288 = vrot.lane.b32.xlu0 %v4481, 28
        %v5289 = vpop.permute.xlu0 %5288
        %5290 = vrot.lane.b32.xlu0 %v4482, 28
        %v5291 = vpop.permute.xlu0 %5290
        %v5292 = vsel %vm1313, %v5277, %v5279
        %v5293 = vsel %vm1313, %v5279, %v5281
        %v5294 = vsel %vm1313, %v5281, %v5283
        %v5295 = vsel %vm1313, %v5283, %v5285
        %v5296 = vsel %vm1313, %v5285, %v5287
        %v5297 = vsel %vm1313, %v5287, %v5289
        %v5298 = vsel %vm1313, %v5289, %v5291
        %5306 = vst [vmem:[#allocation2 + $0x4d0] sm:$0xff] %v5292
        %5307 = vst [vmem:[#allocation2 + $0x4d8] sm:$0xff] %v5293
        %5308 = vst [vmem:[#allocation2 + $0x4e0] sm:$0xff] %v5294
        %5309 = vst [vmem:[#allocation2 + $0x4e8] sm:$0xff] %v5295
        %5310 = vst [vmem:[#allocation2 + $0x4f0] sm:$0xff] %v5296
        %5311 = vst [vmem:[#allocation2 + $0x4f8] sm:$0xff] %v5297
        %5312 = vst [vmem:[#allocation2 + $0x500] sm:$0xff] %v5298
        %5313 = vrot.lane.b32.xlu0 %v4475, 27
        %v5314 = vpop.permute.xlu0 %5313
        %5315 = vrot.lane.b32.xlu0 %v4476, 27
        %v5316 = vpop.permute.xlu0 %5315
        %5317 = vrot.lane.b32.xlu0 %v4477, 27
        %v5318 = vpop.permute.xlu0 %5317
        %5319 = vrot.lane.b32.xlu0 %v4478, 27
        %v5320 = vpop.permute.xlu0 %5319
        %5321 = vrot.lane.b32.xlu0 %v4479, 27
        %v5322 = vpop.permute.xlu0 %5321
        %5323 = vrot.lane.b32.xlu0 %v4480, 27
        %v5324 = vpop.permute.xlu0 %5323
        %5325 = vrot.lane.b32.xlu0 %v4481, 27
        %v5326 = vpop.permute.xlu0 %5325
        %5327 = vrot.lane.b32.xlu0 %v4482, 27
        %v5328 = vpop.permute.xlu0 %5327
        %v5329 = vsel %vm1351, %v5314, %v5316
        %v5330 = vsel %vm1351, %v5316, %v5318
        %v5331 = vsel %vm1351, %v5318, %v5320
        %v5332 = vsel %vm1351, %v5320, %v5322
        %v5333 = vsel %vm1351, %v5322, %v5324
        %v5334 = vsel %vm1351, %v5324, %v5326
        %v5335 = vsel %vm1351, %v5326, %v5328
        %5343 = vst [vmem:[#allocation2 + $0x508] sm:$0xff] %v5329
        %5344 = vst [vmem:[#allocation2 + $0x510] sm:$0xff] %v5330
        %5345 = vst [vmem:[#allocation2 + $0x518] sm:$0xff] %v5331
        %5346 = vst [vmem:[#allocation2 + $0x520] sm:$0xff] %v5332
        %5347 = vst [vmem:[#allocation2 + $0x528] sm:$0xff] %v5333
        %5348 = vst [vmem:[#allocation2 + $0x530] sm:$0xff] %v5334
        %5349 = vst [vmem:[#allocation2 + $0x538] sm:$0xff] %v5335
        %5350 = vrot.lane.b32.xlu0 %v4475, 19
        %v5351 = vpop.permute.xlu0 %5350
        %5352 = vrot.lane.b32.xlu0 %v4476, 19
        %v5353 = vpop.permute.xlu0 %5352
        %5354 = vrot.lane.b32.xlu0 %v4477, 19
        %v5355 = vpop.permute.xlu0 %5354
        %5356 = vrot.lane.b32.xlu0 %v4478, 19
        %v5357 = vpop.permute.xlu0 %5356
        %5358 = vrot.lane.b32.xlu0 %v4479, 19
        %v5359 = vpop.permute.xlu0 %5358
        %5360 = vrot.lane.b32.xlu0 %v4480, 19
        %v5361 = vpop.permute.xlu0 %5360
        %5362 = vrot.lane.b32.xlu0 %v4481, 19
        %v5363 = vpop.permute.xlu0 %5362
        %5364 = vrot.lane.b32.xlu0 %v4482, 19
        %v5365 = vpop.permute.xlu0 %5364
        %v5366 = vsel %vm1389, %v5351, %v5353
        %v5367 = vsel %vm1389, %v5353, %v5355
        %v5368 = vsel %vm1389, %v5355, %v5357
        %v5369 = vsel %vm1389, %v5357, %v5359
        %v5370 = vsel %vm1389, %v5359, %v5361
        %v5371 = vsel %vm1389, %v5361, %v5363
        %v5372 = vsel %vm1389, %v5363, %v5365
        %5380 = vst [vmem:[#allocation2 + $0x540] sm:$0xff] %v5366
        %5381 = vst [vmem:[#allocation2 + $0x548] sm:$0xff] %v5367
        %5382 = vst [vmem:[#allocation2 + $0x550] sm:$0xff] %v5368
        %5383 = vst [vmem:[#allocation2 + $0x558] sm:$0xff] %v5369
        %5384 = vst [vmem:[#allocation2 + $0x560] sm:$0xff] %v5370
        %5385 = vst [vmem:[#allocation2 + $0x568] sm:$0xff] %v5371
        %5386 = vst [vmem:[#allocation2 + $0x570] sm:$0xff] %v5372
        %5387 = vrot.lane.b32.xlu0 %v4475, 18
        %v5388 = vpop.permute.xlu0 %5387
        %5389 = vrot.lane.b32.xlu0 %v4476, 18
        %v5390 = vpop.permute.xlu0 %5389
        %5391 = vrot.lane.b32.xlu0 %v4477, 18
        %v5392 = vpop.permute.xlu0 %5391
        %5393 = vrot.lane.b32.xlu0 %v4478, 18
        %v5394 = vpop.permute.xlu0 %5393
        %5395 = vrot.lane.b32.xlu0 %v4479, 18
        %v5396 = vpop.permute.xlu0 %5395
        %5397 = vrot.lane.b32.xlu0 %v4480, 18
        %v5398 = vpop.permute.xlu0 %5397
        %5399 = vrot.lane.b32.xlu0 %v4481, 18
        %v5400 = vpop.permute.xlu0 %5399
        %5401 = vrot.lane.b32.xlu0 %v4482, 18
        %v5402 = vpop.permute.xlu0 %5401
        %v5403 = vsel %vm1427, %v5388, %v5390
        %v5404 = vsel %vm1427, %v5390, %v5392
        %v5405 = vsel %vm1427, %v5392, %v5394
        %v5406 = vsel %vm1427, %v5394, %v5396
        %v5407 = vsel %vm1427, %v5396, %v5398
        %v5408 = vsel %vm1427, %v5398, %v5400
        %v5409 = vsel %vm1427, %v5400, %v5402
        %5417 = vst [vmem:[#allocation2 + $0x578] sm:$0xff] %v5403
        %5418 = vst [vmem:[#allocation2 + $0x580] sm:$0xff] %v5404
        %5419 = vst [vmem:[#allocation2 + $0x588] sm:$0xff] %v5405
        %5420 = vst [vmem:[#allocation2 + $0x590] sm:$0xff] %v5406
        %5421 = vst [vmem:[#allocation2 + $0x598] sm:$0xff] %v5407
        %5422 = vst [vmem:[#allocation2 + $0x5a0] sm:$0xff] %v5408
        %5423 = vst [vmem:[#allocation2 + $0x5a8] sm:$0xff] %v5409
        %5424 = vrot.lane.b32.xlu0 %v4475, 17
        %v5425 = vpop.permute.xlu0 %5424
        %5426 = vrot.lane.b32.xlu0 %v4476, 17
        %v5427 = vpop.permute.xlu0 %5426
        %5428 = vrot.lane.b32.xlu0 %v4477, 17
        %v5429 = vpop.permute.xlu0 %5428
        %5430 = vrot.lane.b32.xlu0 %v4478, 17
        %v5431 = vpop.permute.xlu0 %5430
        %5432 = vrot.lane.b32.xlu0 %v4479, 17
        %v5433 = vpop.permute.xlu0 %5432
        %5434 = vrot.lane.b32.xlu0 %v4480, 17
        %v5435 = vpop.permute.xlu0 %5434
        %5436 = vrot.lane.b32.xlu0 %v4481, 17
        %v5437 = vpop.permute.xlu0 %5436
        %5438 = vrot.lane.b32.xlu0 %v4482, 17
        %v5439 = vpop.permute.xlu0 %5438
        %v5440 = vsel %vm1465, %v5425, %v5427
        %v5441 = vsel %vm1465, %v5427, %v5429
        %v5442 = vsel %vm1465, %v5429, %v5431
        %v5443 = vsel %vm1465, %v5431, %v5433
        %v5444 = vsel %vm1465, %v5433, %v5435
        %v5445 = vsel %vm1465, %v5435, %v5437
        %v5446 = vsel %vm1465, %v5437, %v5439
        %5454 = vst [vmem:[#allocation2 + $0x5b0] sm:$0xff] %v5440
        %5455 = vst [vmem:[#allocation2 + $0x5b8] sm:$0xff] %v5441
        %5456 = vst [vmem:[#allocation2 + $0x5c0] sm:$0xff] %v5442
        %5457 = vst [vmem:[#allocation2 + $0x5c8] sm:$0xff] %v5443
        %5458 = vst [vmem:[#allocation2 + $0x5d0] sm:$0xff] %v5444
        %5459 = vst [vmem:[#allocation2 + $0x5d8] sm:$0xff] %v5445
        %5460 = vst [vmem:[#allocation2 + $0x5e0] sm:$0xff] %v5446
        %v5461 = vld [vmem:[%s3] sm:$0xff]
        %v5462 = vld [vmem:[%s3 + $0x8] sm:$0xff]
        %v5463 = vld [vmem:[%s3 + $0x10] sm:$0xff]
        %v5464 = vld [vmem:[%s3 + $0x18] sm:$0xff]
        %v5465 = vld [vmem:[#allocation2] sm:$0xff]
        %v5466 = vld [vmem:[#allocation2 + $0x8] sm:$0xff]
        %v5467 = vld [vmem:[#allocation2 + $0x10] sm:$0xff]
        %v5468 = vld [vmem:[#allocation2 + $0x18] sm:$0xff]
        %v5469 = vld [vmem:[#allocation2 + $0x20] sm:$0xff]
        %v5470 = vld [vmem:[#allocation2 + $0x28] sm:$0xff]
        %v5471 = vld [vmem:[#allocation2 + $0x30] sm:$0xff]
        %v5472 = vld [vmem:[#allocation2 + $0x38] sm:$0xff]
        %v5473 = vld [vmem:[#allocation2 + $0x40] sm:$0xff]
        %v5474 = vld [vmem:[#allocation2 + $0x48] sm:$0xff]
        %v5475 = vld [vmem:[#allocation2 + $0x50] sm:$0xff]
        %v5476 = vld [vmem:[#allocation2 + $0x58] sm:$0xff]
        %v5477 = vld [vmem:[#allocation2 + $0x60] sm:$0xff]
        %v5478 = vld [vmem:[#allocation2 + $0x68] sm:$0xff]
        %v5479 = vld [vmem:[#allocation2 + $0x70] sm:$0xff]
        %v5480 = vld [vmem:[#allocation2 + $0x78] sm:$0xff]
        %v5481 = vld [vmem:[#allocation2 + $0x80] sm:$0xff]
        %v5482 = vld [vmem:[#allocation2 + $0x88] sm:$0xff]
        %v5483 = vld [vmem:[#allocation2 + $0x90] sm:$0xff]
        %v5484 = vld [vmem:[#allocation2 + $0x98] sm:$0xff]
        %v5485 = vld [vmem:[#allocation2 + $0xa0] sm:$0xff]
        %v5486 = vld [vmem:[#allocation2 + $0xa8] sm:$0xff]
        %v5487 = vld [vmem:[#allocation2 + $0xb0] sm:$0xff]
        %v5488 = vld [vmem:[#allocation2 + $0xb8] sm:$0xff]
        %v5489 = vld [vmem:[#allocation2 + $0xc0] sm:$0xff]
        %v5490 = vld [vmem:[#allocation2 + $0xc8] sm:$0xff]
        %v5491 = vld [vmem:[#allocation2 + $0xd0] sm:$0xff]
        %v5492 = vld [vmem:[#allocation2 + $0xd8] sm:$0xff]
        %v5493 = vld [vmem:[#allocation2 + $0xe0] sm:$0xff]
        %v5494 = vld [vmem:[#allocation2 + $0xe8] sm:$0xff]
        %v5495 = vld [vmem:[#allocation2 + $0xf0] sm:$0xff]
        %v5496 = vld [vmem:[#allocation2 + $0xf8] sm:$0xff]
        %v5497 = vld [vmem:[#allocation2 + $0x100] sm:$0xff]
        %v5498 = vld [vmem:[#allocation2 + $0x108] sm:$0xff]
        %v5499 = vld [vmem:[#allocation2 + $0x110] sm:$0xff]
        %v5500 = vld [vmem:[#allocation2 + $0x118] sm:$0xff]
        %v5501 = vld [vmem:[#allocation2 + $0x120] sm:$0xff]
        %v5502 = vld [vmem:[#allocation2 + $0x128] sm:$0xff]
        %v5503 = vld [vmem:[#allocation2 + $0x130] sm:$0xff]
        %v5504 = vld [vmem:[#allocation2 + $0x138] sm:$0xff]
        %v5505 = vld [vmem:[#allocation2 + $0x140] sm:$0xff]
        %v5506 = vld [vmem:[#allocation2 + $0x148] sm:$0xff]
        %v5507 = vld [vmem:[#allocation2 + $0x150] sm:$0xff]
        %v5508 = vld [vmem:[#allocation2 + $0x158] sm:$0xff]
        %v5509 = vld [vmem:[#allocation2 + $0x160] sm:$0xff]
        %v5510 = vld [vmem:[#allocation2 + $0x168] sm:$0xff]
        %v5511 = vld [vmem:[#allocation2 + $0x170] sm:$0xff]
        %v5512 = vld [vmem:[#allocation2 + $0x178] sm:$0xff]
        %v5513 = vld [vmem:[#allocation2 + $0x180] sm:$0xff]
        %v5514 = vld [vmem:[#allocation2 + $0x188] sm:$0xff]
        %v5515 = vld [vmem:[#allocation2 + $0x190] sm:$0xff]
        %v5516 = vld [vmem:[#allocation2 + $0x198] sm:$0xff]
        %v5517 = vld [vmem:[#allocation2 + $0x1a0] sm:$0xff]
        %v5518 = vld [vmem:[#allocation2 + $0x1a8] sm:$0xff]
        %v5519 = vld [vmem:[#allocation2 + $0x1b0] sm:$0xff]
        %v5520 = vld [vmem:[#allocation2 + $0x1b8] sm:$0xff]
        %v5521 = vld [vmem:[#allocation2 + $0x1c0] sm:$0xff]
        %v5522 = vld [vmem:[#allocation2 + $0x1c8] sm:$0xff]
        %v5523 = vld [vmem:[#allocation2 + $0x1d0] sm:$0xff]
        %v5524 = vld [vmem:[#allocation2 + $0x1d8] sm:$0xff]
        %v5525 = vld [vmem:[#allocation2 + $0x1e0] sm:$0xff]
        %v5526 = vld [vmem:[#allocation2 + $0x1e8] sm:$0xff]
        %v5527 = vld [vmem:[#allocation2 + $0x1f0] sm:$0xff]
        %v5528 = vld [vmem:[#allocation2 + $0x1f8] sm:$0xff]
        %v5529 = vld [vmem:[#allocation2 + $0x200] sm:$0xff]
        %v5530 = vld [vmem:[#allocation2 + $0x208] sm:$0xff]
        %v5531 = vld [vmem:[#allocation2 + $0x210] sm:$0xff]
        %v5532 = vld [vmem:[#allocation2 + $0x218] sm:$0xff]
        %v5533 = vld [vmem:[#allocation2 + $0x220] sm:$0xff]
        %v5534 = vld [vmem:[#allocation2 + $0x228] sm:$0xff]
        %v5535 = vld [vmem:[#allocation2 + $0x230] sm:$0xff]
        %v5536 = vld [vmem:[#allocation2 + $0x238] sm:$0xff]
        %v5537 = vld [vmem:[#allocation2 + $0x240] sm:$0xff]
        %v5538 = vld [vmem:[#allocation2 + $0x248] sm:$0xff]
        %v5539 = vld [vmem:[#allocation2 + $0x250] sm:$0xff]
        %v5540 = vld [vmem:[#allocation2 + $0x258] sm:$0xff]
        %v5541 = vld [vmem:[#allocation2 + $0x260] sm:$0xff]
        %v5542 = vld [vmem:[#allocation2 + $0x268] sm:$0xff]
        %v5543 = vld [vmem:[#allocation2 + $0x270] sm:$0xff]
        %v5544 = vld [vmem:[#allocation2 + $0x278] sm:$0xff]
        %v5545 = vld [vmem:[#allocation2 + $0x280] sm:$0xff]
        %v5546 = vld [vmem:[#allocation2 + $0x288] sm:$0xff]
        %v5547 = vld [vmem:[#allocation2 + $0x290] sm:$0xff]
        %v5548 = vld [vmem:[#allocation2 + $0x298] sm:$0xff]
        %v5549 = vld [vmem:[#allocation2 + $0x2a0] sm:$0xff]
        %v5550 = vld [vmem:[#allocation2 + $0x2a8] sm:$0xff]
        %v5551 = vld [vmem:[#allocation2 + $0x2b0] sm:$0xff]
        %v5552 = vld [vmem:[#allocation2 + $0x2b8] sm:$0xff]
        %v5553 = vld [vmem:[#allocation2 + $0x2c0] sm:$0xff]
        %v5554 = vld [vmem:[#allocation2 + $0x2c8] sm:$0xff]
        %v5555 = vld [vmem:[#allocation2 + $0x2d0] sm:$0xff]
        %v5556 = vld [vmem:[#allocation2 + $0x2d8] sm:$0xff]
        %v5557 = vld [vmem:[#allocation2 + $0x2e0] sm:$0xff]
        %v5558 = vld [vmem:[#allocation2 + $0x2e8] sm:$0xff]
        %v5559 = vld [vmem:[#allocation2 + $0x2f0] sm:$0xff]
        %v5560 = vld [vmem:[#allocation2 + $0x2f8] sm:$0xff]
        %v5561 = vld [vmem:[#allocation2 + $0x300] sm:$0xff]
        %v5562 = vld [vmem:[#allocation2 + $0x308] sm:$0xff]
        %v5563 = vld [vmem:[#allocation2 + $0x310] sm:$0xff]
        %v5564 = vld [vmem:[#allocation2 + $0x318] sm:$0xff]
        %v5565 = vld [vmem:[#allocation2 + $0x320] sm:$0xff]
        %v5566 = vld [vmem:[#allocation2 + $0x328] sm:$0xff]
        %v5567 = vld [vmem:[#allocation2 + $0x330] sm:$0xff]
        %v5568 = vld [vmem:[#allocation2 + $0x338] sm:$0xff]
        %v5569 = vld [vmem:[#allocation2 + $0x340] sm:$0xff]
        %v5570 = vld [vmem:[#allocation2 + $0x348] sm:$0xff]
        %v5571 = vld [vmem:[#allocation2 + $0x350] sm:$0xff]
        %v5572 = vld [vmem:[#allocation2 + $0x358] sm:$0xff]
        %v5573 = vld [vmem:[#allocation2 + $0x360] sm:$0xff]
        %v5574 = vld [vmem:[#allocation2 + $0x368] sm:$0xff]
        %v5575 = vld [vmem:[#allocation2 + $0x370] sm:$0xff]
        %v5576 = vld [vmem:[#allocation2 + $0x378] sm:$0xff]
        %v5577 = vld [vmem:[#allocation2 + $0x380] sm:$0xff]
        %v5578 = vld [vmem:[#allocation2 + $0x388] sm:$0xff]
        %v5579 = vld [vmem:[#allocation2 + $0x390] sm:$0xff]
        %v5580 = vld [vmem:[#allocation2 + $0x398] sm:$0xff]
        %v5581 = vld [vmem:[#allocation2 + $0x3a0] sm:$0xff]
        %v5582 = vld [vmem:[#allocation2 + $0x3a8] sm:$0xff]
        %v5583 = vld [vmem:[#allocation2 + $0x3b0] sm:$0xff]
        %v5584 = vld [vmem:[#allocation2 + $0x3b8] sm:$0xff]
        %v5585 = vld [vmem:[#allocation2 + $0x3c0] sm:$0xff]
        %v5586 = vld [vmem:[#allocation2 + $0x3c8] sm:$0xff]
        %v5587 = vld [vmem:[#allocation2 + $0x3d0] sm:$0xff]
        %v5588 = vld [vmem:[#allocation2 + $0x3d8] sm:$0xff]
        %v5589 = vld [vmem:[#allocation2 + $0x3e0] sm:$0xff]
        %v5590 = vld [vmem:[#allocation2 + $0x3e8] sm:$0xff]
        %v5591 = vld [vmem:[#allocation2 + $0x3f0] sm:$0xff]
        %v5592 = vld [vmem:[#allocation2 + $0x3f8] sm:$0xff]
        %v5593 = vld [vmem:[#allocation2 + $0x400] sm:$0xff]
        %v5594 = vld [vmem:[#allocation2 + $0x408] sm:$0xff]
        %v5595 = vld [vmem:[#allocation2 + $0x410] sm:$0xff]
        %v5596 = vld [vmem:[#allocation2 + $0x418] sm:$0xff]
        %v5597 = vld [vmem:[#allocation2 + $0x420] sm:$0xff]
        %v5598 = vld [vmem:[#allocation2 + $0x428] sm:$0xff]
        %v5599 = vld [vmem:[#allocation2 + $0x430] sm:$0xff]
        %v5600 = vld [vmem:[#allocation2 + $0x438] sm:$0xff]
        %v5601 = vld [vmem:[#allocation2 + $0x440] sm:$0xff]
        %v5602 = vld [vmem:[#allocation2 + $0x448] sm:$0xff]
        %v5603 = vld [vmem:[#allocation2 + $0x450] sm:$0xff]
        %v5604 = vld [vmem:[#allocation2 + $0x458] sm:$0xff]
        %v5605 = vld [vmem:[#allocation2 + $0x460] sm:$0xff]
        %v5606 = vld [vmem:[#allocation2 + $0x468] sm:$0xff]
        %v5607 = vld [vmem:[#allocation2 + $0x470] sm:$0xff]
        %v5608 = vld [vmem:[#allocation2 + $0x478] sm:$0xff]
        %v5609 = vld [vmem:[#allocation2 + $0x480] sm:$0xff]
        %v5610 = vld [vmem:[#allocation2 + $0x488] sm:$0xff]
        %v5611 = vld [vmem:[#allocation2 + $0x490] sm:$0xff]
        %v5612 = vld [vmem:[#allocation2 + $0x498] sm:$0xff]
        %v5613 = vld [vmem:[#allocation2 + $0x4a0] sm:$0xff]
        %v5614 = vld [vmem:[#allocation2 + $0x4a8] sm:$0xff]
        %v5615 = vld [vmem:[#allocation2 + $0x4b0] sm:$0xff]
        %v5616 = vld [vmem:[#allocation2 + $0x4b8] sm:$0xff]
        %v5617 = vld [vmem:[#allocation2 + $0x4c0] sm:$0xff]
        %v5618 = vld [vmem:[#allocation2 + $0x4c8] sm:$0xff]
        %v5619 = vld [vmem:[#allocation2 + $0x4d0] sm:$0xff]
        %v5620 = vld [vmem:[#allocation2 + $0x4d8] sm:$0xff]
        %v5621 = vld [vmem:[#allocation2 + $0x4e0] sm:$0xff]
        %v5622 = vld [vmem:[#allocation2 + $0x4e8] sm:$0xff]
        %v5623 = vld [vmem:[#allocation2 + $0x4f0] sm:$0xff]
        %v5624 = vld [vmem:[#allocation2 + $0x4f8] sm:$0xff]
        %v5625 = vld [vmem:[#allocation2 + $0x500] sm:$0xff]
        %v5626 = vld [vmem:[#allocation2 + $0x508] sm:$0xff]
        %v5627 = vld [vmem:[#allocation2 + $0x510] sm:$0xff]
        %v5628 = vld [vmem:[#allocation2 + $0x518] sm:$0xff]
        %v5629 = vld [vmem:[#allocation2 + $0x520] sm:$0xff]
        %v5630 = vld [vmem:[#allocation2 + $0x528] sm:$0xff]
        %v5631 = vld [vmem:[#allocation2 + $0x530] sm:$0xff]
        %v5632 = vld [vmem:[#allocation2 + $0x538] sm:$0xff]
        %v5633 = vld [vmem:[#allocation2 + $0x540] sm:$0xff]
        %v5634 = vld [vmem:[#allocation2 + $0x548] sm:$0xff]
        %v5635 = vld [vmem:[#allocation2 + $0x550] sm:$0xff]
        %v5636 = vld [vmem:[#allocation2 + $0x558] sm:$0xff]
        %v5637 = vld [vmem:[#allocation2 + $0x560] sm:$0xff]
        %v5638 = vld [vmem:[#allocation2 + $0x568] sm:$0xff]
        %v5639 = vld [vmem:[#allocation2 + $0x570] sm:$0xff]
        %v5640 = vld [vmem:[#allocation2 + $0x578] sm:$0xff]
        %v5641 = vld [vmem:[#allocation2 + $0x580] sm:$0xff]
        %v5642 = vld [vmem:[#allocation2 + $0x588] sm:$0xff]
        %v5643 = vld [vmem:[#allocation2 + $0x590] sm:$0xff]
        %v5644 = vld [vmem:[#allocation2 + $0x598] sm:$0xff]
        %v5645 = vld [vmem:[#allocation2 + $0x5a0] sm:$0xff]
        %v5646 = vld [vmem:[#allocation2 + $0x5a8] sm:$0xff]
        %v5647 = vld [vmem:[#allocation2 + $0x5b0] sm:$0xff]
        %v5648 = vld [vmem:[#allocation2 + $0x5b8] sm:$0xff]
        %v5649 = vld [vmem:[#allocation2 + $0x5c0] sm:$0xff]
        %v5650 = vld [vmem:[#allocation2 + $0x5c8] sm:$0xff]
        %v5651 = vld [vmem:[#allocation2 + $0x5d0] sm:$0xff]
        %v5652 = vld [vmem:[#allocation2 + $0x5d8] sm:$0xff]
        %v5653 = vld [vmem:[#allocation2 + $0x5e0] sm:$0xff]
        %v5658 = vunpack.c.l.b16 %v5461
        %v5659 = vunpack.c.h.b16 %v5461
        %v5660 = vunpack.c.l.b16 %v5462
        %v5661 = vunpack.c.h.b16 %v5462
        %v5662 = vunpack.c.l.b16 %v5463
        %v5663 = vunpack.c.h.b16 %v5463
        %v5664 = vunpack.c.l.b16 %v5464
        %v5665 = vunpack.c.h.b16 %v5464
        %v5666 = vpack.c.b16 %v5662, %v5658
        %v5667 = vpack.c.b16 %v5663, %v5659
        %v5668 = vpack.c.b16 %v5664, %v5660
        %v5669 = vpack.c.b16 %v5665, %v5661
        %v5674 = vsel %vm1699, %v5669, 0
        %5676 = vmatprep.subr.bf16.mxu0 %v5466
        %5677 = vmatpush1.bf16.msra.mxu0 %v5465
        %5678 = vmatprep.subr.bf16.mxu0 %v5473
        %5679 = vmatpush1.bf16.msra.mxu0 %v5472
        %5680 = vmatprep.subr.bf16.mxu0 %v5480
        %5681 = vmatpush1.bf16.msra.mxu0 %v5479
        %5682 = vmatprep.subr.bf16.mxu0 %v5487
        %5683 = vmatpush1.bf16.msra.mxu0 %v5486
        %5684 = vmatprep.subr.bf16.mxu0 %v5494
        %5685 = vmatpush1.bf16.msra.mxu0 %v5493
        %5686 = vmatprep.subr.bf16.mxu0 %v5501
        %5687 = vmatpush1.bf16.msra.mxu0 %v5500
        %5688 = vmatprep.subr.bf16.mxu0 %v5508
        %5689 = vmatpush1.bf16.msra.mxu0 %v5507
        %5690 = vmatprep.subr.bf16.mxu0 %v5515
        %5691 = vmatpush1.bf16.msra.mxu0 %v5514
        %5692 = vmatprep.subr.bf16.mxu0 %v5522
        %5693 = vmatpush1.bf16.msra.mxu0 %v5521
        %5694 = vmatprep.subr.bf16.mxu0 %v5529
        %5695 = vmatpush1.bf16.msra.mxu0 %v5528
        %5696 = vmatprep.subr.bf16.mxu0 %v5536
        %5697 = vmatpush1.bf16.msra.mxu0 %v5535
        %5698 = vmatprep.subr.bf16.mxu0 %v5543
        %5699 = vmatpush1.bf16.msra.mxu0 %v5542
        %5700 = vmatprep.subr.bf16.mxu0 %v5550
        %5701 = vmatpush1.bf16.msra.mxu0 %v5549
        %5702 = vmatprep.subr.bf16.mxu0 %v5557
        %5703 = vmatpush1.bf16.msra.mxu0 %v5556
        %5704 = vmatprep.subr.bf16.mxu0 %v5564
        %5705 = vmatpush1.bf16.msra.mxu0 %v5563
        %5706 = vmatprep.subr.bf16.mxu0 %v5571
        %5707 = vmatpush1.bf16.msra.mxu0 %v5570
        %5708 = vmatprep.mubr.bf16.mxu0 %v5667
        %5709 = vmatmul.mubr.bf16.gmra.mrb[0].mxu0 %v5666
        %v5710 = vpop.f32.mrb[0].mxu0
        %v5711 = vadd.f32 0.0, %v5710
        %v5712 = vpop.f32.mrb[0].mxu0
        %v5713 = vadd.f32 0.0, %v5712
        %v5714 = vpop.f32.mrb[0].mxu0
        %v5715 = vadd.f32 0.0, %v5714
        %v5716 = vpop.f32.mrb[0].mxu0
        %v5717 = vadd.f32 0.0, %v5716
        %5718 = vdwg.mxu0
        %5719 = vmatprep.subr.bf16.mxu0 %v5578
        %5720 = vmatpush1.bf16.msra.mxu0 %v5577
        %5721 = vmatprep.subr.bf16.mxu0 %v5585
        %5722 = vmatpush1.bf16.msra.mxu0 %v5584
        %5723 = vmatprep.subr.bf16.mxu0 %v5592
        %5724 = vmatpush1.bf16.msra.mxu0 %v5591
        %5725 = vmatprep.subr.bf16.mxu0 %v5599
        %5726 = vmatpush1.bf16.msra.mxu0 %v5598
        %5727 = vmatprep.subr.bf16.mxu0 %v5606
        %5728 = vmatpush1.bf16.msra.mxu0 %v5605
        %5729 = vmatprep.subr.bf16.mxu0 %v5613
        %5730 = vmatpush1.bf16.msra.mxu0 %v5612
        %5731 = vmatprep.subr.bf16.mxu0 %v5620
        %5732 = vmatpush1.bf16.msra.mxu0 %v5619
        %5733 = vmatprep.subr.bf16.mxu0 %v5627
        %5734 = vmatpush1.bf16.msra.mxu0 %v5626
        %5735 = vmatprep.subr.bf16.mxu0 %v5634
        %5736 = vmatpush1.bf16.msra.mxu0 %v5633
        %5737 = vmatprep.subr.bf16.mxu0 %v5641
        %5738 = vmatpush1.bf16.msra.mxu0 %v5640
        %5739 = vmatprep.subr.bf16.mxu0 %v5648
        %5740 = vmatpush1.bf16.msra.mxu0 %v5647
        %5741 = vmatprep.subr.bf16.mxu0 0
        %5742 = vmatpush1.bf16.msra.mxu0 0
        %5743 = vmatprep.subr.bf16.mxu0 0
        %5744 = vmatpush1.bf16.msra.mxu0 0
        %5745 = vmatprep.subr.bf16.mxu0 0
        %5746 = vmatpush1.bf16.msra.mxu0 0
        %5747 = vmatprep.subr.bf16.mxu0 0
        %5748 = vmatpush1.bf16.msra.mxu0 0
        %5749 = vmatprep.subr.bf16.mxu0 0
        %5750 = vmatpush1.bf16.msra.mxu0 0
        %5751 = vmatprep.mubr.bf16.mxu0 %v5674
        %5752 = vmatmul.mubr.bf16.gmra.mrb[0].mxu0 %v5668
        %v5753 = vpop.f32.mrb[0].mxu0
        %v5754 = vadd.f32 %v5711, %v5753
        %v5755 = vpop.f32.mrb[0].mxu0
        %v5756 = vadd.f32 %v5713, %v5755
        %v5757 = vpop.f32.mrb[0].mxu0
        %v5758 = vadd.f32 %v5715, %v5757
        %v5759 = vpop.f32.mrb[0].mxu0
        %v5760 = vadd.f32 %v5717, %v5759
        %5761 = vdwg.mxu0
        %5762 = vmatprep.subr.bf16.mxu0 %v5468
        %5763 = vmatpush1.bf16.msra.mxu0 %v5467
        %5764 = vmatprep.subr.bf16.mxu0 %v5475
        %5765 = vmatpush1.bf16.msra.mxu0 %v5474
        %5766 = vmatprep.subr.bf16.mxu0 %v5482
        %5767 = vmatpush1.bf16.msra.mxu0 %v5481
        %5768 = vmatprep.subr.bf16.mxu0 %v5489
        %5769 = vmatpush1.bf16.msra.mxu0 %v5488
        %5770 = vmatprep.subr.bf16.mxu0 %v5496
        %5771 = vmatpush1.bf16.msra.mxu0 %v5495
        %5772 = vmatprep.subr.bf16.mxu0 %v5503
        %5773 = vmatpush1.bf16.msra.mxu0 %v5502
        %5774 = vmatprep.subr.bf16.mxu0 %v5510
        %5775 = vmatpush1.bf16.msra.mxu0 %v5509
        %5776 = vmatprep.subr.bf16.mxu0 %v5517
        %5777 = vmatpush1.bf16.msra.mxu0 %v5516
        %5778 = vmatprep.subr.bf16.mxu0 %v5524
        %5779 = vmatpush1.bf16.msra.mxu0 %v5523
        %5780 = vmatprep.subr.bf16.mxu0 %v5531
        %5781 = vmatpush1.bf16.msra.mxu0 %v5530
        %5782 = vmatprep.subr.bf16.mxu0 %v5538
        %5783 = vmatpush1.bf16.msra.mxu0 %v5537
        %5784 = vmatprep.subr.bf16.mxu0 %v5545
        %5785 = vmatpush1.bf16.msra.mxu0 %v5544
        %5786 = vmatprep.subr.bf16.mxu0 %v5552
        %5787 = vmatpush1.bf16.msra.mxu0 %v5551
        %5788 = vmatprep.subr.bf16.mxu0 %v5559
        %5789 = vmatpush1.bf16.msra.mxu0 %v5558
        %5790 = vmatprep.subr.bf16.mxu0 %v5566
        %5791 = vmatpush1.bf16.msra.mxu0 %v5565
        %5792 = vmatprep.subr.bf16.mxu0 %v5573
        %5793 = vmatpush1.bf16.msra.mxu0 %v5572
        %5794 = vmatprep.mubr.bf16.mxu0 %v5667
        %5795 = vmatmul.mubr.bf16.gmra.mrb[0].mxu0 %v5666
        %v5796 = vpop.f32.mrb[0].mxu0
        %v5797 = vadd.f32 0.0, %v5796
        %v5798 = vpop.f32.mrb[0].mxu0
        %v5799 = vadd.f32 0.0, %v5798
        %v5800 = vpop.f32.mrb[0].mxu0
        %v5801 = vadd.f32 0.0, %v5800
        %v5802 = vpop.f32.mrb[0].mxu0
        %v5803 = vadd.f32 0.0, %v5802
        %5804 = vdwg.mxu0
        %5805 = vmatprep.subr.bf16.mxu0 %v5580
        %5806 = vmatpush1.bf16.msra.mxu0 %v5579
        %5807 = vmatprep.subr.bf16.mxu0 %v5587
        %5808 = vmatpush1.bf16.msra.mxu0 %v5586
        %5809 = vmatprep.subr.bf16.mxu0 %v5594
        %5810 = vmatpush1.bf16.msra.mxu0 %v5593
        %5811 = vmatprep.subr.bf16.mxu0 %v5601
        %5812 = vmatpush1.bf16.msra.mxu0 %v5600
        %5813 = vmatprep.subr.bf16.mxu0 %v5608
        %5814 = vmatpush1.bf16.msra.mxu0 %v5607
        %5815 = vmatprep.subr.bf16.mxu0 %v5615
        %5816 = vmatpush1.bf16.msra.mxu0 %v5614
        %5817 = vmatprep.subr.bf16.mxu0 %v5622
        %5818 = vmatpush1.bf16.msra.mxu0 %v5621
        %5819 = vmatprep.subr.bf16.mxu0 %v5629
        %5820 = vmatpush1.bf16.msra.mxu0 %v5628
        %5821 = vmatprep.subr.bf16.mxu0 %v5636
        %5822 = vmatpush1.bf16.msra.mxu0 %v5635
        %5823 = vmatprep.subr.bf16.mxu0 %v5643
        %5824 = vmatpush1.bf16.msra.mxu0 %v5642
        %5825 = vmatprep.subr.bf16.mxu0 %v5650
        %5826 = vmatpush1.bf16.msra.mxu0 %v5649
        %5827 = vmatprep.subr.bf16.mxu0 0
        %5828 = vmatpush1.bf16.msra.mxu0 0
        %5829 = vmatprep.subr.bf16.mxu0 0
        %5830 = vmatpush1.bf16.msra.mxu0 0
        %5831 = vmatprep.subr.bf16.mxu0 0
        %5832 = vmatpush1.bf16.msra.mxu0 0
        %5833 = vmatprep.subr.bf16.mxu0 0
        %5834 = vmatpush1.bf16.msra.mxu0 0
        %5835 = vmatprep.subr.bf16.mxu0 0
        %5836 = vmatpush1.bf16.msra.mxu0 0
        %5837 = vmatprep.mubr.bf16.mxu0 %v5674
        %5838 = vmatmul.mubr.bf16.gmra.mrb[0].mxu0 %v5668
        %v5839 = vpop.f32.mrb[0].mxu0
        %v5840 = vadd.f32 %v5797, %v5839
        %v5841 = vpop.f32.mrb[0].mxu0
        %v5842 = vadd.f32 %v5799, %v5841
        %v5843 = vpop.f32.mrb[0].mxu0
        %v5844 = vadd.f32 %v5801, %v5843
        %v5845 = vpop.f32.mrb[0].mxu0
        %v5846 = vadd.f32 %v5803, %v5845
        %5847 = vdwg.mxu0
        %5848 = vmatprep.subr.bf16.mxu0 %v5470
        %5849 = vmatpush1.bf16.msra.mxu0 %v5469
        %5850 = vmatprep.subr.bf16.mxu0 %v5477
        %5851 = vmatpush1.bf16.msra.mxu0 %v5476
        %5852 = vmatprep.subr.bf16.mxu0 %v5484
        %5853 = vmatpush1.bf16.msra.mxu0 %v5483
        %5854 = vmatprep.subr.bf16.mxu0 %v5491
        %5855 = vmatpush1.bf16.msra.mxu0 %v5490
        %5856 = vmatprep.subr.bf16.mxu0 %v5498
        %5857 = vmatpush1.bf16.msra.mxu0 %v5497
        %5858 = vmatprep.subr.bf16.mxu0 %v5505
        %5859 = vmatpush1.bf16.msra.mxu0 %v5504
        %5860 = vmatprep.subr.bf16.mxu0 %v5512
        %5861 = vmatpush1.bf16.msra.mxu0 %v5511
        %5862 = vmatprep.subr.bf16.mxu0 %v5519
        %5863 = vmatpush1.bf16.msra.mxu0 %v5518
        %5864 = vmatprep.subr.bf16.mxu0 %v5526
        %5865 = vmatpush1.bf16.msra.mxu0 %v5525
        %5866 = vmatprep.subr.bf16.mxu0 %v5533
        %5867 = vmatpush1.bf16.msra.mxu0 %v5532
        %5868 = vmatprep.subr.bf16.mxu0 %v5540
        %5869 = vmatpush1.bf16.msra.mxu0 %v5539
        %5870 = vmatprep.subr.bf16.mxu0 %v5547
        %5871 = vmatpush1.bf16.msra.mxu0 %v5546
        %5872 = vmatprep.subr.bf16.mxu0 %v5554
        %5873 = vmatpush1.bf16.msra.mxu0 %v5553
        %5874 = vmatprep.subr.bf16.mxu0 %v5561
        %5875 = vmatpush1.bf16.msra.mxu0 %v5560
        %5876 = vmatprep.subr.bf16.mxu0 %v5568
        %5877 = vmatpush1.bf16.msra.mxu0 %v5567
        %5878 = vmatprep.subr.bf16.mxu0 %v5575
        %5879 = vmatpush1.bf16.msra.mxu0 %v5574
        %5880 = vmatprep.mubr.bf16.mxu0 %v5667
        %5881 = vmatmul.mubr.bf16.gmra.mrb[0].mxu0 %v5666
        %v5882 = vpop.f32.mrb[0].mxu0
        %v5883 = vadd.f32 0.0, %v5882
        %v5884 = vpop.f32.mrb[0].mxu0
        %v5885 = vadd.f32 0.0, %v5884
        %v5886 = vpop.f32.mrb[0].mxu0
        %v5887 = vadd.f32 0.0, %v5886
        %v5888 = vpop.f32.mrb[0].mxu0
        %v5889 = vadd.f32 0.0, %v5888
        %5890 = vdwg.mxu0
        %5891 = vmatprep.subr.bf16.mxu0 %v5582
        %5892 = vmatpush1.bf16.msra.mxu0 %v5581
        %5893 = vmatprep.subr.bf16.mxu0 %v5589
        %5894 = vmatpush1.bf16.msra.mxu0 %v5588
        %5895 = vmatprep.subr.bf16.mxu0 %v5596
        %5896 = vmatpush1.bf16.msra.mxu0 %v5595
        %5897 = vmatprep.subr.bf16.mxu0 %v5603
        %5898 = vmatpush1.bf16.msra.mxu0 %v5602
        %5899 = vmatprep.subr.bf16.mxu0 %v5610
        %5900 = vmatpush1.bf16.msra.mxu0 %v5609
        %5901 = vmatprep.subr.bf16.mxu0 %v5617
        %5902 = vmatpush1.bf16.msra.mxu0 %v5616
        %5903 = vmatprep.subr.bf16.mxu0 %v5624
        %5904 = vmatpush1.bf16.msra.mxu0 %v5623
        %5905 = vmatprep.subr.bf16.mxu0 %v5631
        %5906 = vmatpush1.bf16.msra.mxu0 %v5630
        %5907 = vmatprep.subr.bf16.mxu0 %v5638
        %5908 = vmatpush1.bf16.msra.mxu0 %v5637
        %5909 = vmatprep.subr.bf16.mxu0 %v5645
        %5910 = vmatpush1.bf16.msra.mxu0 %v5644
        %5911 = vmatprep.subr.bf16.mxu0 %v5652
        %5912 = vmatpush1.bf16.msra.mxu0 %v5651
        %5913 = vmatprep.subr.bf16.mxu0 0
        %5914 = vmatpush1.bf16.msra.mxu0 0
        %5915 = vmatprep.subr.bf16.mxu0 0
        %5916 = vmatpush1.bf16.msra.mxu0 0
        %5917 = vmatprep.subr.bf16.mxu0 0
        %5918 = vmatpush1.bf16.msra.mxu0 0
        %5919 = vmatprep.subr.bf16.mxu0 0
        %5920 = vmatpush1.bf16.msra.mxu0 0
        %5921 = vmatprep.subr.bf16.mxu0 0
        %5922 = vmatpush1.bf16.msra.mxu0 0
        %5923 = vmatprep.mubr.bf16.mxu0 %v5674
        %5924 = vmatmul.mubr.bf16.gmra.mrb[0].mxu0 %v5668
        %v5925 = vpop.f32.mrb[0].mxu0
        %v5926 = vadd.f32 %v5883, %v5925
        %v5927 = vpop.f32.mrb[0].mxu0
        %v5928 = vadd.f32 %v5885, %v5927
        %v5929 = vpop.f32.mrb[0].mxu0
        %v5930 = vadd.f32 %v5887, %v5929
        %v5931 = vpop.f32.mrb[0].mxu0
        %v5932 = vadd.f32 %v5889, %v5931
        %5933 = vdwg.mxu0
        %5934 = vmatprep.subr.bf16.mxu0 0
        %5935 = vmatpush1.bf16.msra.mxu0 %v5471
        %5936 = vmatprep.subr.bf16.mxu0 0
        %5937 = vmatpush1.bf16.msra.mxu0 %v5478
        %5938 = vmatprep.subr.bf16.mxu0 0
        %5939 = vmatpush1.bf16.msra.mxu0 %v5485
        %5940 = vmatprep.subr.bf16.mxu0 0
        %5941 = vmatpush1.bf16.msra.mxu0 %v5492
        %5942 = vmatprep.subr.bf16.mxu0 0
        %5943 = vmatpush1.bf16.msra.mxu0 %v5499
        %5944 = vmatprep.subr.bf16.mxu0 0
        %5945 = vmatpush1.bf16.msra.mxu0 %v5506
        %5946 = vmatprep.subr.bf16.mxu0 0
        %5947 = vmatpush1.bf16.msra.mxu0 %v5513
        %5948 = vmatprep.subr.bf16.mxu0 0
        %5949 = vmatpush1.bf16.msra.mxu0 %v5520
        %5950 = vmatprep.subr.bf16.mxu0 0
        %5951 = vmatpush1.bf16.msra.mxu0 %v5527
        %5952 = vmatprep.subr.bf16.mxu0 0
        %5953 = vmatpush1.bf16.msra.mxu0 %v5534
        %5954 = vmatprep.subr.bf16.mxu0 0
        %5955 = vmatpush1.bf16.msra.mxu0 %v5541
        %5956 = vmatprep.subr.bf16.mxu0 0
        %5957 = vmatpush1.bf16.msra.mxu0 %v5548
        %5958 = vmatprep.subr.bf16.mxu0 0
        %5959 = vmatpush1.bf16.msra.mxu0 %v5555
        %5960 = vmatprep.subr.bf16.mxu0 0
        %5961 = vmatpush1.bf16.msra.mxu0 %v5562
        %5962 = vmatprep.subr.bf16.mxu0 0
        %5963 = vmatpush1.bf16.msra.mxu0 %v5569
        %5964 = vmatprep.subr.bf16.mxu0 0
        %5965 = vmatpush1.bf16.msra.mxu0 %v5576
        %5966 = vmatprep.mubr.bf16.mxu0 %v5667
        %5967 = vmatmul.mubr.bf16.gmra.mrb[0].mxu0 %v5666
        %v5968 = vpop.f32.mrb[0].mxu0
        %v5969 = vadd.f32 0.0, %v5968
        %v5970 = vpop.f32.mrb[0].mxu0
        %v5971 = vpop.f32.mrb[0].mxu0
        %v5972 = vadd.f32 0.0, %v5971
        %v5973 = vpop.f32.mrb[0].mxu0
        %5974 = vdwg.mxu0
        %5975 = vmatprep.subr.bf16.mxu0 0
        %5976 = vmatpush1.bf16.msra.mxu0 %v5583
        %5977 = vmatprep.subr.bf16.mxu0 0
        %5978 = vmatpush1.bf16.msra.mxu0 %v5590
        %5979 = vmatprep.subr.bf16.mxu0 0
        %5980 = vmatpush1.bf16.msra.mxu0 %v5597
        %5981 = vmatprep.subr.bf16.mxu0 0
        %5982 = vmatpush1.bf16.msra.mxu0 %v5604
        %5983 = vmatprep.subr.bf16.mxu0 0
        %5984 = vmatpush1.bf16.msra.mxu0 %v5611
        %5985 = vmatprep.subr.bf16.mxu0 0
        %5986 = vmatpush1.bf16.msra.mxu0 %v5618
        %5987 = vmatprep.subr.bf16.mxu0 0
        %5988 = vmatpush1.bf16.msra.mxu0 %v5625
        %5989 = vmatprep.subr.bf16.mxu0 0
        %5990 = vmatpush1.bf16.msra.mxu0 %v5632
        %5991 = vmatprep.subr.bf16.mxu0 0
        %5992 = vmatpush1.bf16.msra.mxu0 %v5639
        %5993 = vmatprep.subr.bf16.mxu0 0
        %5994 = vmatpush1.bf16.msra.mxu0 %v5646
        %5995 = vmatprep.subr.bf16.mxu0 0
        %5996 = vmatpush1.bf16.msra.mxu0 %v5653
        %5997 = vmatprep.subr.bf16.mxu0 0
        %5998 = vmatpush1.bf16.msra.mxu0 0
        %5999 = vmatprep.subr.bf16.mxu0 0
        %6000 = vmatpush1.bf16.msra.mxu0 0
        %6001 = vmatprep.subr.bf16.mxu0 0
        %6002 = vmatpush1.bf16.msra.mxu0 0
        %6003 = vmatprep.subr.bf16.mxu0 0
        %6004 = vmatpush1.bf16.msra.mxu0 0
        %6005 = vmatprep.subr.bf16.mxu0 0
        %6006 = vmatpush1.bf16.msra.mxu0 0
        %6007 = vmatprep.mubr.bf16.mxu0 %v5674
        %6008 = vmatmul.mubr.bf16.gmra.mrb[0].mxu0 %v5668
        %v6009 = vpop.f32.mrb[0].mxu0
        %v6010 = vadd.f32 %v5969, %v6009
        %v6011 = vpop.f32.mrb[0].mxu0
        %v6012 = vpop.f32.mrb[0].mxu0
        %v6013 = vadd.f32 %v5972, %v6012
        %v6014 = vpop.f32.mrb[0].mxu0
        %6015 = vdwg.mxu0
        %v6016 = vmul.f32 %v5754, %v2047
        %v6017 = vmul.f32 %v5756, %v2051
        %v6018 = vmul.f32 %v5840, %v2055
        %v6019 = vmul.f32 %v5842, %v2059
        %v6020 = vmul.f32 %v5926, %v2063
        %v6021 = vmul.f32 %v5928, %v2067
        %v6022 = vmul.f32 %v6010, %v2071
        %v6023 = vmul.f32 %v5758, %v2047
        %v6024 = vmul.f32 %v5760, %v2051
        %v6025 = vmul.f32 %v5844, %v2055
        %v6026 = vmul.f32 %v5846, %v2059
        %v6027 = vmul.f32 %v5930, %v2063
        %v6028 = vmul.f32 %v5932, %v2067
        %v6029 = vmul.f32 %v6013, %v2071
        %v6030 = vadd.f32 %v6016, %v6017
        %v6031 = vadd.f32 %v6030, %v6018
        %v6032 = vadd.f32 %v6031, %v6019
        %v6033 = vadd.f32 %v6032, %v6020
        %v6034 = vadd.f32 %v6033, %v6021
        %v6035 = vadd.f32 %v6034, %v6022
        %6036 = vadd.xlane.f32.xlu0 %v6035
        %v6037 = vpop.xlane.xlu0 %6036
        %v6038 = vadd.f32 %v6023, %v6024
        %v6039 = vadd.f32 %v6038, %v6025
        %v6040 = vadd.f32 %v6039, %v6026
        %v6041 = vadd.f32 %v6040, %v6027
        %v6042 = vadd.f32 %v6041, %v6028
        %v6043 = vadd.f32 %v6042, %v6029
        %6044 = vadd.xlane.f32.xlu0 %v6043
        %v6045 = vpop.xlane.xlu0 %6044
        %6046 = vmatprep.subr.mxu0 0.0
        %6047 = vmatpush1.msra.mxu0 %v6037
        %6048 = vmatprep.subr.mxu0 0.0
        %6049 = vmatpush1.msra.mxu0 %v6045
        %6050 = vmatprep.subr.mxu0 0.0
        %6051 = vmatpush1.msra.mxu0 0.0
        %6052 = vmatprep.subr.mxu0 0.0
        %6053 = vmatpush1.msra.mxu0 0.0
        %6054 = vmatprep.subr.mxu0 0.0
        %6055 = vmatpush1.msra.mxu0 0.0
        %6056 = vmatprep.subr.mxu0 0.0
        %6057 = vmatpush1.msra.mxu0 0.0
        %6058 = vmatprep.subr.mxu0 0.0
        %6059 = vmatpush1.msra.mxu0 0.0
        %6060 = vmatprep.subr.mxu0 0.0
        %6061 = vmatpush1.msra.mxu0 0.0
        %6062 = vmatprep.subr.mxu0 0.0
        %6063 = vmatpush1.msra.mxu0 0.0
        %6064 = vmatprep.subr.mxu0 0.0
        %6065 = vmatpush1.msra.mxu0 0.0
        %6066 = vmatprep.subr.mxu0 0.0
        %6067 = vmatpush1.msra.mxu0 0.0
        %6068 = vmatprep.subr.mxu0 0.0
        %6069 = vmatpush1.msra.mxu0 0.0
        %6070 = vmatprep.subr.mxu0 0.0
        %6071 = vmatpush1.msra.mxu0 0.0
        %6072 = vmatprep.subr.mxu0 0.0
        %6073 = vmatpush1.msra.mxu0 0.0
        %6074 = vmatprep.subr.mxu0 0.0
        %6075 = vmatpush1.msra.mxu0 0.0
        %6076 = vmatprep.subr.mxu0 0.0
        %6077 = vmatpush1.msra.mxu0 0.0
        %6078 = vmatprep.subr.mxu0 0.0
        %6079 = vmatpush1.msra.mxu0 0.0
        %6080 = vmatprep.subr.mxu0 0.0
        %6081 = vmatpush1.msra.mxu0 0.0
        %6082 = vmatprep.subr.mxu0 0.0
        %6083 = vmatpush1.msra.mxu0 0.0
        %6084 = vmatprep.subr.mxu0 0.0
        %6085 = vmatpush1.msra.mxu0 0.0
        %6086 = vmatprep.subr.mxu0 0.0
        %6087 = vmatpush1.msra.mxu0 0.0
        %6088 = vmatprep.subr.mxu0 0.0
        %6089 = vmatpush1.msra.mxu0 0.0
        %6090 = vmatprep.subr.mxu0 0.0
        %6091 = vmatpush1.msra.mxu0 0.0
        %6092 = vmatprep.subr.mxu0 0.0
        %6093 = vmatpush1.msra.mxu0 0.0
        %6094 = vmatprep.subr.mxu0 0.0
        %6095 = vmatpush1.msra.mxu0 0.0
        %6096 = vmatprep.subr.mxu0 0.0
        %6097 = vmatpush1.msra.mxu0 0.0
        %6098 = vmatprep.subr.mxu0 0.0
        %6099 = vmatpush1.msra.mxu0 0.0
        %6100 = vmatprep.subr.mxu0 0.0
        %6101 = vmatpush1.msra.mxu0 0.0
        %6102 = vmatprep.subr.mxu0 0.0
        %6103 = vmatpush1.msra.mxu0 0.0
        %6104 = vmatprep.subr.mxu0 0.0
        %6105 = vmatpush1.msra.mxu0 0.0
        %6106 = vmatprep.subr.mxu0 0.0
        %6107 = vmatpush1.msra.mxu0 0.0
        %6108 = vmatprep.subr.mxu0 0.0
        %6109 = vmatpush1.msra.mxu0 0.0
        %6110 = vmatprep.mubr.f32.mxu0 0.0
        %6111 = vmatmul.mubr.f32.gmra.mrb[0].mxu0 %v2111
        %v6112 = vpop.f32.mrb[0].mxu0
        %v6113 = vadd.f32 0.0, %v6112
        %v6114 = vpop.f32.mrb[0].mxu0
        %6115 = vmatprep.mubr.f32.mxu0 0.0
        %6116 = vmatmul.mubr.f32.gmra.mrb[0].mxu0 %v2114
        %v6117 = vpop.f32.mrb[0].mxu0
        %v6118 = vadd.f32 0.0, %v6117
        %v6119 = vpop.f32.mrb[0].mxu0
        %6120 = vdwg.mxu0
        %6122 = vset.pattern.permute.xlu0 0
        %6123 = vperm.xlu0 %6122, %v6113
        %v6124 = vpop.permute.xlu0 %6123
        %6127 = vset.pattern.permute.xlu0 0
        %6128 = vperm.xlu0 %6127, %v6118
        %v6129 = vpop.permute.xlu0 %6128
        %v6131 = vsub.f32 %v5754, %v6124
        %v6132 = vsub.f32 %v5756, %v6124
        %v6133 = vsub.f32 %v5840, %v6124
        %v6134 = vsub.f32 %v5842, %v6124
        %v6135 = vsub.f32 %v5926, %v6124
        %v6136 = vsub.f32 %v5928, %v6124
        %v6137 = vsub.f32 %v6010, %v6124
        %v6138 = vsub.f32 %v5758, %v6129
        %v6139 = vsub.f32 %v5760, %v6129
        %v6140 = vsub.f32 %v5844, %v6129
        %v6141 = vsub.f32 %v5846, %v6129
        %v6142 = vsub.f32 %v5930, %v6129
        %v6143 = vsub.f32 %v5932, %v6129
        %v6144 = vsub.f32 %v6013, %v6129
        %v6145 = vmul.f32 %v6131, %v2047
        %v6146 = vmul.f32 %v6132, %v2051
        %v6147 = vmul.f32 %v6133, %v2055
        %v6148 = vmul.f32 %v6134, %v2059
        %v6149 = vmul.f32 %v6135, %v2063
        %v6150 = vmul.f32 %v6136, %v2067
        %v6151 = vmul.f32 %v6137, %v2071
        %v6152 = vmul.f32 %v6138, %v2047
        %v6153 = vmul.f32 %v6139, %v2051
        %v6154 = vmul.f32 %v6140, %v2055
        %v6155 = vmul.f32 %v6141, %v2059
        %v6156 = vmul.f32 %v6142, %v2063
        %v6157 = vmul.f32 %v6143, %v2067
        %v6158 = vmul.f32 %v6144, %v2071
        %v6159 = vmul.f32 %v6145, %v6145
        %v6160 = vmul.f32 %v6146, %v6146
        %v6161 = vmul.f32 %v6147, %v6147
        %v6162 = vmul.f32 %v6148, %v6148
        %v6163 = vmul.f32 %v6149, %v6149
        %v6164 = vmul.f32 %v6150, %v6150
        %v6165 = vmul.f32 %v6151, %v6151
        %v6166 = vmul.f32 %v6152, %v6152
        %v6167 = vmul.f32 %v6153, %v6153
        %v6168 = vmul.f32 %v6154, %v6154
        %v6169 = vmul.f32 %v6155, %v6155
        %v6170 = vmul.f32 %v6156, %v6156
        %v6171 = vmul.f32 %v6157, %v6157
        %v6172 = vmul.f32 %v6158, %v6158
        %v6173 = vadd.f32 %v6159, %v6160
        %v6174 = vadd.f32 %v6173, %v6161
        %v6175 = vadd.f32 %v6174, %v6162
        %v6176 = vadd.f32 %v6175, %v6163
        %v6177 = vadd.f32 %v6176, %v6164
        %v6178 = vadd.f32 %v6177, %v6165
        %6179 = vadd.xlane.f32.xlu0 %v6178
        %v6180 = vpop.xlane.xlu0 %6179
        %v6181 = vadd.f32 %v6166, %v6167
        %v6182 = vadd.f32 %v6181, %v6168
        %v6183 = vadd.f32 %v6182, %v6169
        %v6184 = vadd.f32 %v6183, %v6170
        %v6185 = vadd.f32 %v6184, %v6171
        %v6186 = vadd.f32 %v6185, %v6172
        %6187 = vadd.xlane.f32.xlu0 %v6186
        %v6188 = vpop.xlane.xlu0 %6187
        %6189 = vmatprep.subr.mxu0 0.0
        %6190 = vmatpush1.msra.mxu0 %v6180
        %6191 = vmatprep.subr.mxu0 0.0
        %6192 = vmatpush1.msra.mxu0 %v6188
        %6193 = vmatprep.subr.mxu0 0.0
        %6194 = vmatpush1.msra.mxu0 0.0
        %6195 = vmatprep.subr.mxu0 0.0
        %6196 = vmatpush1.msra.mxu0 0.0
        %6197 = vmatprep.subr.mxu0 0.0
        %6198 = vmatpush1.msra.mxu0 0.0
        %6199 = vmatprep.subr.mxu0 0.0
        %6200 = vmatpush1.msra.mxu0 0.0
        %6201 = vmatprep.subr.mxu0 0.0
        %6202 = vmatpush1.msra.mxu0 0.0
        %6203 = vmatprep.subr.mxu0 0.0
        %6204 = vmatpush1.msra.mxu0 0.0
        %6205 = vmatprep.subr.mxu0 0.0
        %6206 = vmatpush1.msra.mxu0 0.0
        %6207 = vmatprep.subr.mxu0 0.0
        %6208 = vmatpush1.msra.mxu0 0.0
        %6209 = vmatprep.subr.mxu0 0.0
        %6210 = vmatpush1.msra.mxu0 0.0
        %6211 = vmatprep.subr.mxu0 0.0
        %6212 = vmatpush1.msra.mxu0 0.0
        %6213 = vmatprep.subr.mxu0 0.0
        %6214 = vmatpush1.msra.mxu0 0.0
        %6215 = vmatprep.subr.mxu0 0.0
        %6216 = vmatpush1.msra.mxu0 0.0
        %6217 = vmatprep.subr.mxu0 0.0
        %6218 = vmatpush1.msra.mxu0 0.0
        %6219 = vmatprep.subr.mxu0 0.0
        %6220 = vmatpush1.msra.mxu0 0.0
        %6221 = vmatprep.subr.mxu0 0.0
        %6222 = vmatpush1.msra.mxu0 0.0
        %6223 = vmatprep.subr.mxu0 0.0
        %6224 = vmatpush1.msra.mxu0 0.0
        %6225 = vmatprep.subr.mxu0 0.0
        %6226 = vmatpush1.msra.mxu0 0.0
        %6227 = vmatprep.subr.mxu0 0.0
        %6228 = vmatpush1.msra.mxu0 0.0
        %6229 = vmatprep.subr.mxu0 0.0
        %6230 = vmatpush1.msra.mxu0 0.0
        %6231 = vmatprep.subr.mxu0 0.0
        %6232 = vmatpush1.msra.mxu0 0.0
        %6233 = vmatprep.subr.mxu0 0.0
        %6234 = vmatpush1.msra.mxu0 0.0
        %6235 = vmatprep.subr.mxu0 0.0
        %6236 = vmatpush1.msra.mxu0 0.0
        %6237 = vmatprep.subr.mxu0 0.0
        %6238 = vmatpush1.msra.mxu0 0.0
        %6239 = vmatprep.subr.mxu0 0.0
        %6240 = vmatpush1.msra.mxu0 0.0
        %6241 = vmatprep.subr.mxu0 0.0
        %6242 = vmatpush1.msra.mxu0 0.0
        %6243 = vmatprep.subr.mxu0 0.0
        %6244 = vmatpush1.msra.mxu0 0.0
        %6245 = vmatprep.subr.mxu0 0.0
        %6246 = vmatpush1.msra.mxu0 0.0
        %6247 = vmatprep.subr.mxu0 0.0
        %6248 = vmatpush1.msra.mxu0 0.0
        %6249 = vmatprep.subr.mxu0 0.0
        %6250 = vmatpush1.msra.mxu0 0.0
        %6251 = vmatprep.subr.mxu0 0.0
        %6252 = vmatpush1.msra.mxu0 0.0
        %6253 = vmatprep.mubr.f32.mxu0 0.0
        %6254 = vmatmul.mubr.f32.gmra.mrb[0].mxu0 %v2111
        %v6255 = vpop.f32.mrb[0].mxu0
        %v6256 = vadd.f32 1e-05, %v6255
        %v6257 = vpop.f32.mrb[0].mxu0
        %6258 = vmatprep.mubr.f32.mxu0 0.0
        %6259 = vmatmul.mubr.f32.gmra.mrb[0].mxu0 %v2114
        %v6260 = vpop.f32.mrb[0].mxu0
        %v6261 = vadd.f32 1e-05, %v6260
        %v6262 = vpop.f32.mrb[0].mxu0
        %6263 = vdwg.mxu0
        %v6264 = vrsqrt.pop %v6256
        %v6265 = vrsqrt.pop %v6261
        %v6266 = vld [vmem:[%s8] sm:$0xff]
        %v6267 = vld [vmem:[%s8 + $0x8] sm:$0xff]
        %v6268 = vmul.f32 %v6264, %v6266
        %v6269 = vmul.f32 %v6265, %v6267
        %6271 = vset.pattern.permute.xlu0 0
        %6272 = vperm.xlu0 %6271, %v6268
        %v6273 = vpop.permute.xlu0 %6272
        %6276 = vset.pattern.permute.xlu0 0
        %6277 = vperm.xlu0 %6276, %v6269
        %v6278 = vpop.permute.xlu0 %6277
        %v6280 = vmul.f32 %v6131, %v6273
        %v6281 = vmul.f32 %v6132, %v6273
        %v6282 = vmul.f32 %v6133, %v6273
        %v6283 = vmul.f32 %v6134, %v6273
        %v6284 = vmul.f32 %v6135, %v6273
        %v6285 = vmul.f32 %v6136, %v6273
        %v6286 = vmul.f32 %v6137, %v6273
        %v6287 = vmul.f32 %v6138, %v6278
        %v6288 = vmul.f32 %v6139, %v6278
        %v6289 = vmul.f32 %v6140, %v6278
        %v6290 = vmul.f32 %v6141, %v6278
        %v6291 = vmul.f32 %v6142, %v6278
        %v6292 = vmul.f32 %v6143, %v6278
        %v6293 = vmul.f32 %v6144, %v6278
        %v6294 = vld [vmem:[%s9] sm:$0xff]
        %v6295 = vld [vmem:[%s9 + $0x8] sm:$0xff]
        %6297 = vset.pattern.permute.xlu0 0
        %6298 = vperm.xlu0 %6297, %v6294
        %v6299 = vpop.permute.xlu0 %6298
        %6302 = vset.pattern.permute.xlu0 0
        %6303 = vperm.xlu0 %6302, %v6295
        %v6304 = vpop.permute.xlu0 %6303
        %v6306 = vadd.f32 %v6280, %v6299
        %v6307 = vadd.f32 %v6281, %v6299
        %v6308 = vadd.f32 %v6282, %v6299
        %v6309 = vadd.f32 %v6283, %v6299
        %v6310 = vadd.f32 %v6284, %v6299
        %v6311 = vadd.f32 %v6285, %v6299
        %v6312 = vadd.f32 %v6286, %v6299
        %v6313 = vadd.f32 %v6287, %v6304
        %v6314 = vadd.f32 %v6288, %v6304
        %v6315 = vadd.f32 %v6289, %v6304
        %v6316 = vadd.f32 %v6290, %v6304
        %v6317 = vadd.f32 %v6291, %v6304
        %v6318 = vadd.f32 %v6292, %v6304
        %v6319 = vadd.f32 %v6293, %v6304
        %v6320 = vld [vmem:[#allocation4] sm:$0xff]
        %v6321 = vld [vmem:[#allocation4 + $0x8] sm:$0xff]
        %v6322 = vld [vmem:[#allocation4 + $0x10] sm:$0xff]
        %v6323 = vld [vmem:[#allocation4 + $0x18] sm:$0xff]
        %v6324 = vld [vmem:[#allocation4 + $0x20] sm:$0xff]
        %v6325 = vld [vmem:[#allocation4 + $0x28] sm:$0xff]
        %v6326 = vld [vmem:[#allocation4 + $0x30] sm:$0xff]
        %v6327 = vld [vmem:[#allocation4 + $0x38] sm:$0xff]
        %v6328 = vld [vmem:[#allocation4 + $0x40] sm:$0xff]
        %v6329 = vld [vmem:[#allocation4 + $0x48] sm:$0xff]
        %v6330 = vld [vmem:[#allocation4 + $0x50] sm:$0xff]
        %v6331 = vld [vmem:[#allocation4 + $0x58] sm:$0xff]
        %v6332 = vld [vmem:[#allocation4 + $0x60] sm:$0xff]
        %v6333 = vld [vmem:[#allocation4 + $0x68] sm:$0xff]
        %v6334 = vadd.f32 %v6306, %v6320
        %v6335 = vadd.f32 %v6307, %v6321
        %v6336 = vadd.f32 %v6308, %v6322
        %v6337 = vadd.f32 %v6309, %v6323
        %v6338 = vadd.f32 %v6310, %v6324
        %v6339 = vadd.f32 %v6311, %v6325
        %v6340 = vadd.f32 %v6312, %v6326
        %v6341 = vadd.f32 %v6313, %v6327
        %v6342 = vadd.f32 %v6314, %v6328
        %v6343 = vadd.f32 %v6315, %v6329
        %v6344 = vadd.f32 %v6316, %v6330
        %v6345 = vadd.f32 %v6317, %v6331
        %v6346 = vadd.f32 %v6318, %v6332
        %v6347 = vadd.f32 %v6319, %v6333
        %vm6348 = vcmp.gt.f32.partialorder %v6334, 0.0
        %vm6349 = vcmp.gt.f32.partialorder %v6335, 0.0
        %vm6350 = vcmp.gt.f32.partialorder %v6336, 0.0
        %vm6351 = vcmp.gt.f32.partialorder %v6337, 0.0
        %vm6352 = vcmp.gt.f32.partialorder %v6338, 0.0
        %vm6353 = vcmp.gt.f32.partialorder %v6339, 0.0
        %vm6354 = vcmp.gt.f32.partialorder %v6340, 0.0
        %vm6355 = vcmp.gt.f32.partialorder %v6341, 0.0
        %vm6356 = vcmp.gt.f32.partialorder %v6342, 0.0
        %vm6357 = vcmp.gt.f32.partialorder %v6343, 0.0
        %vm6358 = vcmp.gt.f32.partialorder %v6344, 0.0
        %vm6359 = vcmp.gt.f32.partialorder %v6345, 0.0
        %vm6360 = vcmp.gt.f32.partialorder %v6346, 0.0
        %vm6361 = vcmp.gt.f32.partialorder %v6347, 0.0
        %v6362 = vmin.f32 %v6334, 0.0
        %v6363 = vmin.f32 %v6335, 0.0
        %v6364 = vmin.f32 %v6336, 0.0
        %v6365 = vmin.f32 %v6337, 0.0
        %v6366 = vmin.f32 %v6338, 0.0
        %v6367 = vmin.f32 %v6339, 0.0
        %v6368 = vmin.f32 %v6340, 0.0
        %v6369 = vmin.f32 %v6341, 0.0
        %v6370 = vmin.f32 %v6342, 0.0
        %v6371 = vmin.f32 %v6343, 0.0
        %v6372 = vmin.f32 %v6344, 0.0
        %v6373 = vmin.f32 %v6345, 0.0
        %v6374 = vmin.f32 %v6346, 0.0
        %v6375 = vmin.f32 %v6347, 0.0
        %v6376 = vmul.f32 %v6362, 1.442695
        %v6377 = vpow.pop %v6376
        %v6378 = vmul.f32 %v6363, 1.442695
        %v6379 = vpow.pop %v6378
        %v6380 = vmul.f32 %v6364, 1.442695
        %v6381 = vpow.pop %v6380
        %v6382 = vmul.f32 %v6365, 1.442695
        %v6383 = vpow.pop %v6382
        %v6384 = vmul.f32 %v6366, 1.442695
        %v6385 = vpow.pop %v6384
        %v6386 = vmul.f32 %v6367, 1.442695
        %v6387 = vpow.pop %v6386
        %v6388 = vmul.f32 %v6368, 1.442695
        %v6389 = vpow.pop %v6388
        %v6390 = vmul.f32 %v6369, 1.442695
        %v6391 = vpow.pop %v6390
        %v6392 = vmul.f32 %v6370, 1.442695
        %v6393 = vpow.pop %v6392
        %v6394 = vmul.f32 %v6371, 1.442695
        %v6395 = vpow.pop %v6394
        %v6396 = vmul.f32 %v6372, 1.442695
        %v6397 = vpow.pop %v6396
        %v6398 = vmul.f32 %v6373, 1.442695
        %v6399 = vpow.pop %v6398
        %v6400 = vmul.f32 %v6374, 1.442695
        %v6401 = vpow.pop %v6400
        %v6402 = vmul.f32 %v6375, 1.442695
        %v6403 = vpow.pop %v6402
        %v6404 = vsub.f32 %v6377, 1.0
        %v6405 = vsub.f32 %v6379, 1.0
        %v6406 = vsub.f32 %v6381, 1.0
        %v6407 = vsub.f32 %v6383, 1.0
        %v6408 = vsub.f32 %v6385, 1.0
        %v6409 = vsub.f32 %v6387, 1.0
        %v6410 = vsub.f32 %v6389, 1.0
        %v6411 = vsub.f32 %v6391, 1.0
        %v6412 = vsub.f32 %v6393, 1.0
        %v6413 = vsub.f32 %v6395, 1.0
        %v6414 = vsub.f32 %v6397, 1.0
        %v6415 = vsub.f32 %v6399, 1.0
        %v6416 = vsub.f32 %v6401, 1.0
        %v6417 = vsub.f32 %v6403, 1.0
        %v6418 = vsel %vm6348, %v6334, %v6404
        %v6419 = vsel %vm6349, %v6335, %v6405
        %v6420 = vsel %vm6350, %v6336, %v6406
        %v6421 = vsel %vm6351, %v6337, %v6407
        %v6422 = vsel %vm6352, %v6338, %v6408
        %v6423 = vsel %vm6353, %v6339, %v6409
        %v6424 = vsel %vm6354, %v6340, %v6410
        %v6425 = vsel %vm6355, %v6341, %v6411
        %v6426 = vsel %vm6356, %v6342, %v6412
        %v6427 = vsel %vm6357, %v6343, %v6413
        %v6428 = vsel %vm6358, %v6344, %v6414
        %v6429 = vsel %vm6359, %v6345, %v6415
        %v6430 = vsel %vm6360, %v6346, %v6416
        %v6431 = vsel %vm6361, %v6347, %v6417
        %v6432 = vmul.f32 %v6418, %v2047
        %v6433 = vmul.f32 %v6419, %v2051
        %v6434 = vmul.f32 %v6420, %v2055
        %v6435 = vmul.f32 %v6421, %v2059
        %v6436 = vmul.f32 %v6422, %v2063
        %v6437 = vmul.f32 %v6423, %v2067
        %v6438 = vmul.f32 %v6424, %v2071
        %v6439 = vmul.f32 %v6425, %v2047
        %v6440 = vmul.f32 %v6426, %v2051
        %v6441 = vmul.f32 %v6427, %v2055
        %v6442 = vmul.f32 %v6428, %v2059
        %v6443 = vmul.f32 %v6429, %v2063
        %v6444 = vmul.f32 %v6430, %v2067
        %v6445 = vmul.f32 %v6431, %v2071
        %6446 = vst [vmem:[%s431] sm:$0xff] %v6432
        %6447 = vst [vmem:[%s431 + $0x8] sm:$0xff] %v6433
        %6448 = vst [vmem:[%s431 + $0x10] sm:$0xff] %v6434
        %6449 = vst [vmem:[%s431 + $0x18] sm:$0xff] %v6435
        %6450 = vst [vmem:[%s431 + $0x20] sm:$0xff] %v6436
        %6451 = vst [vmem:[%s431 + $0x28] sm:$0xff] %v6437
        %6452 = vst [vmem:[%s431 + $0x30] sm:$0xff] %v6438
        %6453 = vst [vmem:[%s431 + $0x38] sm:$0xff] %v6439
        %6454 = vst [vmem:[%s431 + $0x40] sm:$0xff] %v6440
        %6455 = vst [vmem:[%s431 + $0x48] sm:$0xff] %v6441
        %6456 = vst [vmem:[%s431 + $0x50] sm:$0xff] %v6442
        %6457 = vst [vmem:[%s431 + $0x58] sm:$0xff] %v6443
        %6458 = vst [vmem:[%s431 + $0x60] sm:$0xff] %v6444
        %6459 = vst [vmem:[%s431 + $0x68] sm:$0xff] %v6445
        %s6460 = sand.u32 %s294, 1
        %s6461 = scalar_lea.sflag [#allocation7], %s6460
        %s6462 = sand.u32 %s294, 1
        %s6463 = smul.addr %s6462, 112
        %s6464 = scalar_lea.vmem [#allocation8], %s6463
        // Predicated region
        $region73: #{tpu_custom_call.1} parent=67 // pred_check
          %p6465 = pneg %p304
        $region74: #{tpu_custom_call.1} parent=67 // pred_check_branch
          %6467 = sbr.rel (%p6465) target = $region76
        $region75: #{tpu_custom_call.1} parent=67 // pred_region
          %s6469 = ssub.s32 1792, 1792
          %6470 = vsyncadd %s6461, %s6469
          %s6471 = smul.addr %s29, 14
          %s6472 = smul.addr %s6471, 128
          %s6473 = scalar_lea.hbm %s12, %s6472
          %s6474 = sshll.u32 %s6464, 4
          %s6475 = int_to_ptr.vmem [resolvable:$true] %s6474
          %6480 = dma.vmem_to_hbm [thread:$0]  %s6475, 1792, %s6473, %s6461, 896, 896, 56
        $region76: #{tpu_custom_call.1} parent=67 // pred_fallthru
          _
      $region68: #{tpu_custom_call.1} parent=5 // pred_fallthru
        _
      %p6481 = scmp.le.s32.totalorder 2, %s24
      // Predicated region
      $region77: #{tpu_custom_call.1} parent=5 // pred_check
        %p6482 = pneg %p6481
      $region78: #{tpu_custom_call.1} parent=5 // pred_check_branch
        %6484 = sbr.rel (%p6482) target = $region80
      $region79: #{tpu_custom_call.1} parent=5 // pred_region
        %s6485 = ssub.s32 %s24, 2
        // Predicated region
        $region81: #{tpu_custom_call.1} parent=79 // pred_check
          %p6486 = pneg %p310
        $region82: #{tpu_custom_call.1} parent=79 // pred_check_branch
          %6488 = sbr.rel (%p6486) target = $region84
        $region83: #{tpu_custom_call.1} parent=79 // pred_region
          %s6489 = sand.u32 %s295, 1
          %s6490 = scalar_lea.sflag [#allocation7], %s6489
          %s6491 = sand.u32 %s295, 1
          %s6492 = smul.addr %s6491, 112
          %s6493 = scalar_lea.vmem [#allocation8], %s6492
          %6494 = dma.done %s6490, 1792
        $region84: #{tpu_custom_call.1} parent=79 // pred_fallthru
          _
      $region80: #{tpu_custom_call.1} parent=5 // pred_fallthru
        _
    $region6: #{tpu_custom_call.1} parent=1 // loop_footer
      %s28 = sadd.s32 1, %s24
    $region7: #{tpu_custom_call.1} parent=1 // loop_footer_branch
      %23 = sbr.rel target = $region3
    $region8: #{tpu_custom_call.1} parent=1 // loop_exit
      _
    %6495 = vsyncpa [#allocation6], 1
    %s6496 = scalar_lea.sflag [#allocation6], 1
    %6497 = vsyncpa %s6496, 1
    %6498 = vsyncpa [#allocation7], 1
    %s6499 = scalar_lea.sflag [#allocation7], 1
    %6500 = vsyncpa %s6499, 1

</llo_original>
